<compile_context>
chip_gen: v7x
topology: tpu7x:2x2x1
jax: 0.10.0
libtpu: 0.0.40
codegen_flags: <defaults>
</compile_context>

<pallas_src>
import functools

import jax
import jax.numpy as jnp
import numpy as np
from jax.experimental import pallas as pl
from jax.experimental.pallas import tpu as pltpu

LEAKY_SLOPE = 0.2
BN_EPS = 1e-5
KW = 4        # conv kernel size
PADW = 1      # conv spatial padding


def _round_up(x, m):
    return (x + m - 1) // m * m


# ------------------------------------------------------------------
# Pallas kernels
# ------------------------------------------------------------------
def _make_conv_kernel(*, stride, w_out, c_out, fuse_leaky, collect_stats):
    """Builds a kernel computing one output row (w_out, c_out) of a 4x4 conv.

    refs layout:
      stride == 2: [even_rows01, even_rows23, odd_rows01, odd_rows23,
                    w, b, out, (stats)]
      stride == 1: [row0, row1, row2, row3, w, b, out, (stats)]
    """

    def kernel(*refs):
        if stride == 2:
            ev_a, ev_b, od_a, od_b = refs[0:4]
            # input rows (2*oh + di) for di = 0..3, split by column parity
            even = (ev_a[0, 0], ev_a[0, 1], ev_b[0, 0], ev_b[0, 1])
            odd = (od_a[0, 0], od_a[0, 1], od_b[0, 0], od_b[0, 1])

            def tap(di, dj):
                src = even[di] if dj % 2 == 0 else odd[di]
                c0 = dj // 2
                return src[c0:c0 + w_out, :]
        else:
            rows = tuple(refs[k][0, 0] for k in range(KW))   # rows oh + di

            def tap(di, dj):
                return rows[di][dj:dj + w_out, :]

        w_ref, b_ref, o_ref = refs[4], refs[5], refs[6]

        acc = jnp.zeros((w_out, c_out), jnp.float32)
        for di in range(KW):
            for dj in range(KW):
                # bf16 x bf16 -> f32 accumulation on the MXU
                acc = acc + jnp.dot(tap(di, dj), w_ref[di * KW + dj],
                                    preferred_element_type=jnp.float32)
        acc = acc + b_ref[...]

        if collect_stats:
            st_ref = refs[7]

            @pl.when(pl.program_id(1) == 0)
            def _init():
                st_ref[...] = jnp.zeros_like(st_ref)

            st_ref[0, 0:1, :] += jnp.sum(acc, axis=0, keepdims=True)
            st_ref[0, 1:2, :] += jnp.sum(acc * acc, axis=0, keepdims=True)

        if fuse_leaky:
            acc = jnp.where(acc >= 0.0, acc, LEAKY_SLOPE * acc)
        o_ref[0, 0] = acc.astype(o_ref.dtype)

    return kernel


def _bn_apply_kernel(x_ref, st_ref, g_ref, bt_ref, o_ref, *, inv_count):
    """Apply train-mode BatchNorm (precomputed sum/sumsq) + LeakyReLU to one row."""
    x = x_ref[0, 0].astype(jnp.float32)                   # (Wo, C)
    mean = st_ref[0:1, :] * inv_count                     # (1, C)
    var = st_ref[1:2, :] * inv_count - mean * mean        # biased variance
    y = (x - mean) * jax.lax.rsqrt(var + BN_EPS) * g_ref[...] + bt_ref[...]
    o_ref[0, 0] = jnp.where(y >= 0.0, y, LEAKY_SLOPE * y).astype(o_ref.dtype)


# ------------------------------------------------------------------
# Pallas wrappers
# ------------------------------------------------------------------
def conv4x4(x, w, b, *, stride, fuse_leaky, collect_stats, out_dtype):
    """x: (N,H,W,Cin) bf16, w: (4,4,Cin,Cout) f32, b: (Cout,) f32.

    Returns (conv_out (N,Ho,Wo,Cout), per-image stats (N,2,Cout) or None).
    """
    N, H, W, Cin = x.shape
    Cout = w.shape[-1]
    Ho = (H + 2 * PADW - KW) // stride + 1
    Wo = (W + 2 * PADW - KW) // stride + 1

    # Channel-pad to a multiple of 8 (only triggers on the RGB input layer),
    # spatial halo pad; for stride 2 pad H/W to even so the 2-row blocks and
    # even/odd column phases tile exactly.
    Cin_p = _round_up(Cin, 8)
    extra_h = (H + 2 * PADW) % 2 if stride == 2 else 0
    extra_w = (W + 2 * PADW) % 2 if stride == 2 else 0
    xp = jnp.pad(x, ((0, 0), (PADW, PADW + extra_h),
                     (PADW, PADW + extra_w), (0, Cin_p - Cin)))

    w3 = w.reshape(KW * KW, Cin, Cout)
    if Cin_p != Cin:
        w3 = jnp.pad(w3, ((0, 0), (0, Cin_p - Cin), (0, 0)))
    w3 = w3.astype(jnp.bfloat16)
    b2 = b.reshape(1, Cout).astype(jnp.float32)

    if stride == 2:
        # Column-phase split so in-kernel tap slices are contiguous.
        xe = xp[:, :, 0::2, :]
        xo = xp[:, :, 1::2, :]
        wph = xe.shape[2]
        row_args = (xe, xe, xo, xo)
        row_specs = [
            pl.BlockSpec((1, 2, wph, Cin_p), lambda n, i: (n, i, 0, 0)),
            pl.BlockSpec((1, 2, wph, Cin_p), lambda n, i: (n, i + 1, 0, 0)),
            pl.BlockSpec((1, 2, wph, Cin_p), lambda n, i: (n, i, 0, 0)),
            pl.BlockSpec((1, 2, wph, Cin_p), lambda n, i: (n, i + 1, 0, 0)),
        ]
    else:
        wp = xp.shape[2]
        row_args = (xp, xp, xp, xp)
        row_specs = [
            pl.BlockSpec((1, 1, wp, Cin_p), lambda n, i, k=k: (n, i + k, 0, 0))
            for k in range(KW)
        ]

    in_specs = row_specs + [
        pl.BlockSpec((KW * KW, Cin_p, Cout), lambda n, i: (0, 0, 0)),
        pl.BlockSpec((1, Cout), lambda n, i: (0, 0)),
    ]
    out_shape = [jax.ShapeDtypeStruct((N, Ho, Wo, Cout), out_dtype)]
    out_specs = [pl.BlockSpec((1, 1, Wo, Cout), lambda n, i: (n, i, 0, 0))]
    if collect_stats:
        out_shape.append(jax.ShapeDtypeStruct((N, 2, Cout), jnp.float32))
        out_specs.append(pl.BlockSpec((1, 2, Cout), lambda n, i: (n, 0, 0)))

    kernel = _make_conv_kernel(stride=stride, w_out=Wo, c_out=Cout,
                               fuse_leaky=fuse_leaky, collect_stats=collect_stats)
    # Stats accumulate over the output-row axis -> arbitrary; batch axis stays
    # parallel (stats block is per batch element) so megacore can still split.
    sem = ("parallel", "arbitrary") if collect_stats else ("parallel", "parallel")

    outs = pl.pallas_call(
        kernel,
        out_shape=tuple(out_shape),
        grid=(N, Ho),
        in_specs=in_specs,
        out_specs=tuple(out_specs),
        compiler_params=pltpu.CompilerParams(dimension_semantics=sem),
    )(*row_args, w3, b2)

    if not isinstance(outs, (tuple, list)):
        outs = (outs,)
    if collect_stats:
        return outs[0], outs[1]
    return outs[0], None


def batchnorm_leaky(y, stats_per_image, gamma, beta, out_dtype=jnp.bfloat16):
    """y: (N,Ho,Wo,C) f32 conv output; stats_per_image: (N,2,C) [sum, sumsq]."""
    N, Ho, Wo, C = y.shape
    st = jnp.sum(stats_per_image, axis=0)                 # (2, C) f32 (tiny)
    g = gamma.reshape(1, C).astype(jnp.float32)
    bt = beta.reshape(1, C).astype(jnp.float32)
    inv_count = 1.0 / float(N * Ho * Wo)

    return pl.pallas_call(
        functools.partial(_bn_apply_kernel, inv_count=inv_count),
        out_shape=jax.ShapeDtypeStruct((N, Ho, Wo, C), out_dtype),
        grid=(N, Ho),
        in_specs=[
            pl.BlockSpec((1, 1, Wo, C), lambda n, i: (n, i, 0, 0)),
            pl.BlockSpec((2, C), lambda n, i: (0, 0)),
            pl.BlockSpec((1, C), lambda n, i: (0, 0)),
            pl.BlockSpec((1, C), lambda n, i: (0, 0)),
        ],
        out_specs=pl.BlockSpec((1, 1, Wo, C), lambda n, i: (n, i, 0, 0)),
        compiler_params=pltpu.CompilerParams(
            dimension_semantics=("parallel", "parallel")),
    )(y, st, g, bt)


# ------------------------------------------------------------------
# Model: parameters + forward
# ------------------------------------------------------------------
def build_params(key, input_nc, ndf=8, n_layers=3):
    """Deterministic synthetic parameters; norm_layer = BatchNorm2d => use_bias=False
    for the inner convs (matches the PyTorch constructor logic)."""
    cfgs = [dict(cin=input_nc, cout=ndf, stride=2, bias=True, bn=False, act=True)]
    nf_mult = 1
    for n in range(1, n_layers):
        nf_prev, nf_mult = nf_mult, min(2 ** n, 8)
        cfgs.append(dict(cin=ndf * nf_prev, cout=ndf * nf_mult, stride=2,
                         bias=False, bn=True, act=True))
    nf_prev, nf_mult = nf_mult, min(2 ** n_layers, 8)
    cfgs.append(dict(cin=ndf * nf_prev, cout=ndf * nf_mult, stride=1,
                     bias=False, bn=True, act=True))
    cfgs.append(dict(cin=ndf * nf_mult, cout=1, stride=1, bias=True, bn=False, act=False))

    params = []
    for c in cfgs:
        key, kw_, kb_ = jax.random.split(key, 3)
        w = jax.random.normal(kw_, (KW, KW, c["cin"], c["cout"]), jnp.float32) * 0.02
        if c["bias"]:
            b = jax.random.normal(kb_, (c["cout"],), jnp.float32) * 0.02
        else:
            b = jnp.zeros((c["cout"],), jnp.float32)
        p = dict(w=w, b=b, stride=c["stride"], bn=c["bn"], act=c["act"])
        if c["bn"]:
            p["gamma"] = jnp.ones((c["cout"],), jnp.float32)   # torch BN default init
            p["beta"] = jnp.zeros((c["cout"],), jnp.float32)
        params.append(p)
    return params


def nlayer_discriminator_forward(params, x_nchw):
    # Input is NCHW (PyTorch convention); compute in NHWC bf16; output NCHW f32.
    x = jnp.transpose(x_nchw, (0, 2, 3, 1)).astype(jnp.bfloat16)
    for idx, p in enumerate(params):
        last = idx == len(params) - 1
        if p["bn"]:
            # Conv (stats fused) -> BN(batch stats) + LeakyReLU (tiled pass).
            y, stats = conv4x4(x, p["w"], p["b"], stride=p["stride"],
                               fuse_leaky=False, collect_stats=True,
                               out_dtype=jnp.float32)
            x = batchnorm_leaky(y, stats, p["gamma"], p["beta"],
                                out_dtype=jnp.bfloat16)
        else:
            y, _ = conv4x4(x, p["w"], p["b"], stride=p["stride"],
                           fuse_leaky=p["act"], collect_stats=False,
                           out_dtype=jnp.float32 if last else jnp.bfloat16)
            x = y
    return jnp.transpose(x, (0, 3, 1, 2)).astype(jnp.float32)


# ------------------------------------------------------------------
# Pure-JAX reference (correctness check)
# ------------------------------------------------------------------
def reference_forward(params, x_nchw):
    x = jnp.transpose(x_nchw, (0, 2, 3, 1)).astype(jnp.float32)
    for p in params:
        y = jax.lax.conv_general_dilated(
            x, p["w"], window_strides=(p["stride"],) * 2,
            padding=((PADW, PADW), (PADW, PADW)),
            dimension_numbers=("NHWC", "HWIO", "NHWC"),
            precision=jax.lax.Precision.HIGHEST) + p["b"]
        if p["bn"]:
            mean = jnp.mean(y, axis=(0, 1, 2), keepdims=True)
            var = jnp.var(y, axis=(0, 1, 2), keepdims=True)
            y = (y - mean) / jnp.sqrt(var + BN_EPS) * p["gamma"] + p["beta"]
        if p["act"]:
            y = jnp.where(y >= 0.0, y, LEAKY_SLOPE * y)
        x = y
    return jnp.transpose(x, (0, 3, 1, 2))


if __name__ == "__main__":
    key = jax.random.PRNGKey(0)
    kx, kp = jax.random.split(key)

    # Spatial 32 is the smallest size keeping all 5 convs valid:
    # 32 -> 16 -> 8 -> 4 -> 3 -> 2 with the default n_layers=3 topology.
    x = jax.random.normal(kx, (2, 3, 32, 32), jnp.float32)
    params = build_params(kp, input_nc=3, ndf=8, n_layers=3)

    fwd = jax.jit(lambda inp: nlayer_discriminator_forward(params, inp))
    out = jax.block_until_ready(fwd(x))

    ref = reference_forward(params, x)
    assert out.shape == ref.shape == (2, 1, 2, 2), (out.shape, ref.shape)
    # Tolerance accounts for bf16 MXU inputs through 5 conv layers.
    np.testing.assert_allclose(np.asarray(out), np.asarray(ref),
                               rtol=3e-2, atol=3e-2)

    print("KERNEL_OK")
</pallas_src>

<mosaic_0001>
module attributes {stable_mosaic.version = 11 : i64} {
  func.func @kernel(%arg0: i32, %arg1: i32, %arg2: memref<1x2x17x8xbf16, #tpu.memory_space<vmem>>, %arg3: memref<1x2x17x8xbf16, #tpu.memory_space<vmem>>, %arg4: memref<1x2x17x8xbf16, #tpu.memory_space<vmem>>, %arg5: memref<1x2x17x8xbf16, #tpu.memory_space<vmem>>, %arg6: memref<16x8x8xbf16, #tpu.memory_space<vmem>>, %arg7: memref<1x8xf32, #tpu.memory_space<vmem>>, %arg8: memref<1x1x16x8xbf16, #tpu.memory_space<vmem>>) attributes {dimension_semantics = [#tpu.dimension_semantics<parallel>, #tpu.dimension_semantics<parallel>], iteration_bounds = array<i64: 2, 16>, scalar_prefetch = 0 : i64, scratch_operands = 0 : i64, tpu.core_type = #tpu.core_type<tc>, window_params = [{transform_indices = @transform_0, window_bounds = array<i64: 1, 2, 17, 8>}, {transform_indices = @transform_1, window_bounds = array<i64: 1, 2, 17, 8>}, {transform_indices = @transform_2, window_bounds = array<i64: 1, 2, 17, 8>}, {transform_indices = @transform_3, window_bounds = array<i64: 1, 2, 17, 8>}, {pipeline_mode = #tpu.pipeline_mode<synchronous>, transform_indices = @transform_4, window_bounds = array<i64: 16, 8, 8>}, {pipeline_mode = #tpu.pipeline_mode<synchronous>, transform_indices = @transform_5, window_bounds = array<i64: 1, 8>}, {transform_indices = @transform_6, window_bounds = array<i64: 1, 1, 16, 8>}]} {
    %c0 = arith.constant 0 : index
    %c0_0 = arith.constant 0 : index
    %c0_1 = arith.constant 0 : index
    %c0_2 = arith.constant 0 : index
    %0 = vector.load %arg2[%c0, %c0_0, %c0_1, %c0_2] : memref<1x2x17x8xbf16, #tpu.memory_space<vmem>>, vector<1x1x17x8xbf16>
    %1 = vector.shape_cast %0 : vector<1x1x17x8xbf16> to vector<17x8xbf16>
    %c0_3 = arith.constant 0 : index
    %c1 = arith.constant 1 : index
    %c0_4 = arith.constant 0 : index
    %c0_5 = arith.constant 0 : index
    %2 = vector.load %arg2[%c0_3, %c1, %c0_4, %c0_5] : memref<1x2x17x8xbf16, #tpu.memory_space<vmem>>, vector<1x1x17x8xbf16>
    %3 = vector.shape_cast %2 : vector<1x1x17x8xbf16> to vector<17x8xbf16>
    %c0_6 = arith.constant 0 : index
    %c0_7 = arith.constant 0 : index
    %c0_8 = arith.constant 0 : index
    %c0_9 = arith.constant 0 : index
    %4 = vector.load %arg3[%c0_6, %c0_7, %c0_8, %c0_9] : memref<1x2x17x8xbf16, #tpu.memory_space<vmem>>, vector<1x1x17x8xbf16>
    %5 = vector.shape_cast %4 : vector<1x1x17x8xbf16> to vector<17x8xbf16>
    %c0_10 = arith.constant 0 : index
    %c1_11 = arith.constant 1 : index
    %c0_12 = arith.constant 0 : index
    %c0_13 = arith.constant 0 : index
    %6 = vector.load %arg3[%c0_10, %c1_11, %c0_12, %c0_13] : memref<1x2x17x8xbf16, #tpu.memory_space<vmem>>, vector<1x1x17x8xbf16>
    %7 = vector.shape_cast %6 : vector<1x1x17x8xbf16> to vector<17x8xbf16>
    %c0_14 = arith.constant 0 : index
    %c0_15 = arith.constant 0 : index
    %c0_16 = arith.constant 0 : index
    %c0_17 = arith.constant 0 : index
    %8 = vector.load %arg4[%c0_14, %c0_15, %c0_16, %c0_17] : memref<1x2x17x8xbf16, #tpu.memory_space<vmem>>, vector<1x1x17x8xbf16>
    %9 = vector.shape_cast %8 : vector<1x1x17x8xbf16> to vector<17x8xbf16>
    %c0_18 = arith.constant 0 : index
    %c1_19 = arith.constant 1 : index
    %c0_20 = arith.constant 0 : index
    %c0_21 = arith.constant 0 : index
    %10 = vector.load %arg4[%c0_18, %c1_19, %c0_20, %c0_21] : memref<1x2x17x8xbf16, #tpu.memory_space<vmem>>, vector<1x1x17x8xbf16>
    %11 = vector.shape_cast %10 : vector<1x1x17x8xbf16> to vector<17x8xbf16>
    %c0_22 = arith.constant 0 : index
    %c0_23 = arith.constant 0 : index
    %c0_24 = arith.constant 0 : index
    %c0_25 = arith.constant 0 : index
    %12 = vector.load %arg5[%c0_22, %c0_23, %c0_24, %c0_25] : memref<1x2x17x8xbf16, #tpu.memory_space<vmem>>, vector<1x1x17x8xbf16>
    %13 = vector.shape_cast %12 : vector<1x1x17x8xbf16> to vector<17x8xbf16>
    %c0_26 = arith.constant 0 : index
    %c1_27 = arith.constant 1 : index
    %c0_28 = arith.constant 0 : index
    %c0_29 = arith.constant 0 : index
    %14 = vector.load %arg5[%c0_26, %c1_27, %c0_28, %c0_29] : memref<1x2x17x8xbf16, #tpu.memory_space<vmem>>, vector<1x1x17x8xbf16>
    %15 = vector.shape_cast %14 : vector<1x1x17x8xbf16> to vector<17x8xbf16>
    %cst = arith.constant 0.000000e+00 : f32
    %16 = vector.broadcast %cst : f32 to vector<16x8xf32>
    %17 = vector.extract_strided_slice %1 {offsets = [0, 0], sizes = [16, 8], strides = [1, 1]} : vector<17x8xbf16> to vector<16x8xbf16>
    %c0_30 = arith.constant 0 : index
    %c0_31 = arith.constant 0 : index
    %c0_32 = arith.constant 0 : index
    %18 = vector.load %arg6[%c0_30, %c0_31, %c0_32] : memref<16x8x8xbf16, #tpu.memory_space<vmem>>, vector<1x8x8xbf16>
    %19 = vector.shape_cast %18 : vector<1x8x8xbf16> to vector<8x8xbf16>
    %cst_33 = arith.constant dense<0.000000e+00> : vector<16x8xf32>
    %20 = tpu.matmul %17, %19, %cst_33 {dimension_numbers = #tpu.dot_dimension_numbers<[1], [0], [0], [1], [0, 0, 1, 1], [], []>} : vector<16x8xbf16>, vector<8x8xbf16>, vector<16x8xf32> -> vector<16x8xf32>
    %21 = arith.addf %16, %20 : vector<16x8xf32>
    %22 = vector.extract_strided_slice %9 {offsets = [0, 0], sizes = [16, 8], strides = [1, 1]} : vector<17x8xbf16> to vector<16x8xbf16>
    %c1_34 = arith.constant 1 : index
    %c0_35 = arith.constant 0 : index
    %c0_36 = arith.constant 0 : index
    %23 = vector.load %arg6[%c1_34, %c0_35, %c0_36] : memref<16x8x8xbf16, #tpu.memory_space<vmem>>, vector<1x8x8xbf16>
    %24 = vector.shape_cast %23 : vector<1x8x8xbf16> to vector<8x8xbf16>
    %cst_37 = arith.constant dense<0.000000e+00> : vector<16x8xf32>
    %25 = tpu.matmul %22, %24, %cst_37 {dimension_numbers = #tpu.dot_dimension_numbers<[1], [0], [0], [1], [0, 0, 1, 1], [], []>} : vector<16x8xbf16>, vector<8x8xbf16>, vector<16x8xf32> -> vector<16x8xf32>
    %26 = arith.addf %21, %25 : vector<16x8xf32>
    %27 = vector.extract_strided_slice %1 {offsets = [1, 0], sizes = [16, 8], strides = [1, 1]} : vector<17x8xbf16> to vector<16x8xbf16>
    %c2 = arith.constant 2 : index
    %c0_38 = arith.constant 0 : index
    %c0_39 = arith.constant 0 : index
    %28 = vector.load %arg6[%c2, %c0_38, %c0_39] : memref<16x8x8xbf16, #tpu.memory_space<vmem>>, vector<1x8x8xbf16>
    %29 = vector.shape_cast %28 : vector<1x8x8xbf16> to vector<8x8xbf16>
    %cst_40 = arith.constant dense<0.000000e+00> : vector<16x8xf32>
    %30 = tpu.matmul %27, %29, %cst_40 {dimension_numbers = #tpu.dot_dimension_numbers<[1], [0], [0], [1], [0, 0, 1, 1], [], []>} : vector<16x8xbf16>, vector<8x8xbf16>, vector<16x8xf32> -> vector<16x8xf32>
    %31 = arith.addf %26, %30 : vector<16x8xf32>
    %32 = vector.extract_strided_slice %9 {offsets = [1, 0], sizes = [16, 8], strides = [1, 1]} : vector<17x8xbf16> to vector<16x8xbf16>
    %c3 = arith.constant 3 : index
    %c0_41 = arith.constant 0 : index
    %c0_42 = arith.constant 0 : index
    %33 = vector.load %arg6[%c3, %c0_41, %c0_42] : memref<16x8x8xbf16, #tpu.memory_space<vmem>>, vector<1x8x8xbf16>
    %34 = vector.shape_cast %33 : vector<1x8x8xbf16> to vector<8x8xbf16>
    %cst_43 = arith.constant dense<0.000000e+00> : vector<16x8xf32>
    %35 = tpu.matmul %32, %34, %cst_43 {dimension_numbers = #tpu.dot_dimension_numbers<[1], [0], [0], [1], [0, 0, 1, 1], [], []>} : vector<16x8xbf16>, vector<8x8xbf16>, vector<16x8xf32> -> vector<16x8xf32>
    %36 = arith.addf %31, %35 : vector<16x8xf32>
    %37 = vector.extract_strided_slice %3 {offsets = [0, 0], sizes = [16, 8], strides = [1, 1]} : vector<17x8xbf16> to vector<16x8xbf16>
    %c4 = arith.constant 4 : index
    %c0_44 = arith.constant 0 : index
    %c0_45 = arith.constant 0 : index
    %38 = vector.load %arg6[%c4, %c0_44, %c0_45] : memref<16x8x8xbf16, #tpu.memory_space<vmem>>, vector<1x8x8xbf16>
    %39 = vector.shape_cast %38 : vector<1x8x8xbf16> to vector<8x8xbf16>
    %cst_46 = arith.constant dense<0.000000e+00> : vector<16x8xf32>
    %40 = tpu.matmul %37, %39, %cst_46 {dimension_numbers = #tpu.dot_dimension_numbers<[1], [0], [0], [1], [0, 0, 1, 1], [], []>} : vector<16x8xbf16>, vector<8x8xbf16>, vector<16x8xf32> -> vector<16x8xf32>
    %41 = arith.addf %36, %40 : vector<16x8xf32>
    %42 = vector.extract_strided_slice %11 {offsets = [0, 0], sizes = [16, 8], strides = [1, 1]} : vector<17x8xbf16> to vector<16x8xbf16>
    %c5 = arith.constant 5 : index
    %c0_47 = arith.constant 0 : index
    %c0_48 = arith.constant 0 : index
    %43 = vector.load %arg6[%c5, %c0_47, %c0_48] : memref<16x8x8xbf16, #tpu.memory_space<vmem>>, vector<1x8x8xbf16>
    %44 = vector.shape_cast %43 : vector<1x8x8xbf16> to vector<8x8xbf16>
    %cst_49 = arith.constant dense<0.000000e+00> : vector<16x8xf32>
    %45 = tpu.matmul %42, %44, %cst_49 {dimension_numbers = #tpu.dot_dimension_numbers<[1], [0], [0], [1], [0, 0, 1, 1], [], []>} : vector<16x8xbf16>, vector<8x8xbf16>, vector<16x8xf32> -> vector<16x8xf32>
    %46 = arith.addf %41, %45 : vector<16x8xf32>
    %47 = vector.extract_strided_slice %3 {offsets = [1, 0], sizes = [16, 8], strides = [1, 1]} : vector<17x8xbf16> to vector<16x8xbf16>
    %c6 = arith.constant 6 : index
    %c0_50 = arith.constant 0 : index
    %c0_51 = arith.constant 0 : index
    %48 = vector.load %arg6[%c6, %c0_50, %c0_51] : memref<16x8x8xbf16, #tpu.memory_space<vmem>>, vector<1x8x8xbf16>
    %49 = vector.shape_cast %48 : vector<1x8x8xbf16> to vector<8x8xbf16>
    %cst_52 = arith.constant dense<0.000000e+00> : vector<16x8xf32>
    %50 = tpu.matmul %47, %49, %cst_52 {dimension_numbers = #tpu.dot_dimension_numbers<[1], [0], [0], [1], [0, 0, 1, 1], [], []>} : vector<16x8xbf16>, vector<8x8xbf16>, vector<16x8xf32> -> vector<16x8xf32>
    %51 = arith.addf %46, %50 : vector<16x8xf32>
    %52 = vector.extract_strided_slice %11 {offsets = [1, 0], sizes = [16, 8], strides = [1, 1]} : vector<17x8xbf16> to vector<16x8xbf16>
    %c7 = arith.constant 7 : index
    %c0_53 = arith.constant 0 : index
    %c0_54 = arith.constant 0 : index
    %53 = vector.load %arg6[%c7, %c0_53, %c0_54] : memref<16x8x8xbf16, #tpu.memory_space<vmem>>, vector<1x8x8xbf16>
    %54 = vector.shape_cast %53 : vector<1x8x8xbf16> to vector<8x8xbf16>
    %cst_55 = arith.constant dense<0.000000e+00> : vector<16x8xf32>
    %55 = tpu.matmul %52, %54, %cst_55 {dimension_numbers = #tpu.dot_dimension_numbers<[1], [0], [0], [1], [0, 0, 1, 1], [], []>} : vector<16x8xbf16>, vector<8x8xbf16>, vector<16x8xf32> -> vector<16x8xf32>
    %56 = arith.addf %51, %55 : vector<16x8xf32>
    %57 = vector.extract_strided_slice %5 {offsets = [0, 0], sizes = [16, 8], strides = [1, 1]} : vector<17x8xbf16> to vector<16x8xbf16>
    %c8 = arith.constant 8 : index
    %c0_56 = arith.constant 0 : index
    %c0_57 = arith.constant 0 : index
    %58 = vector.load %arg6[%c8, %c0_56, %c0_57] : memref<16x8x8xbf16, #tpu.memory_space<vmem>>, vector<1x8x8xbf16>
    %59 = vector.shape_cast %58 : vector<1x8x8xbf16> to vector<8x8xbf16>
    %cst_58 = arith.constant dense<0.000000e+00> : vector<16x8xf32>
    %60 = tpu.matmul %57, %59, %cst_58 {dimension_numbers = #tpu.dot_dimension_numbers<[1], [0], [0], [1], [0, 0, 1, 1], [], []>} : vector<16x8xbf16>, vector<8x8xbf16>, vector<16x8xf32> -> vector<16x8xf32>
    %61 = arith.addf %56, %60 : vector<16x8xf32>
    %62 = vector.extract_strided_slice %13 {offsets = [0, 0], sizes = [16, 8], strides = [1, 1]} : vector<17x8xbf16> to vector<16x8xbf16>
    %c9 = arith.constant 9 : index
    %c0_59 = arith.constant 0 : index
    %c0_60 = arith.constant 0 : index
    %63 = vector.load %arg6[%c9, %c0_59, %c0_60] : memref<16x8x8xbf16, #tpu.memory_space<vmem>>, vector<1x8x8xbf16>
    %64 = vector.shape_cast %63 : vector<1x8x8xbf16> to vector<8x8xbf16>
    %cst_61 = arith.constant dense<0.000000e+00> : vector<16x8xf32>
    %65 = tpu.matmul %62, %64, %cst_61 {dimension_numbers = #tpu.dot_dimension_numbers<[1], [0], [0], [1], [0, 0, 1, 1], [], []>} : vector<16x8xbf16>, vector<8x8xbf16>, vector<16x8xf32> -> vector<16x8xf32>
    %66 = arith.addf %61, %65 : vector<16x8xf32>
    %67 = vector.extract_strided_slice %5 {offsets = [1, 0], sizes = [16, 8], strides = [1, 1]} : vector<17x8xbf16> to vector<16x8xbf16>
    %c10 = arith.constant 10 : index
    %c0_62 = arith.constant 0 : index
    %c0_63 = arith.constant 0 : index
    %68 = vector.load %arg6[%c10, %c0_62, %c0_63] : memref<16x8x8xbf16, #tpu.memory_space<vmem>>, vector<1x8x8xbf16>
    %69 = vector.shape_cast %68 : vector<1x8x8xbf16> to vector<8x8xbf16>
    %cst_64 = arith.constant dense<0.000000e+00> : vector<16x8xf32>
    %70 = tpu.matmul %67, %69, %cst_64 {dimension_numbers = #tpu.dot_dimension_numbers<[1], [0], [0], [1], [0, 0, 1, 1], [], []>} : vector<16x8xbf16>, vector<8x8xbf16>, vector<16x8xf32> -> vector<16x8xf32>
    %71 = arith.addf %66, %70 : vector<16x8xf32>
    %72 = vector.extract_strided_slice %13 {offsets = [1, 0], sizes = [16, 8], strides = [1, 1]} : vector<17x8xbf16> to vector<16x8xbf16>
    %c11 = arith.constant 11 : index
    %c0_65 = arith.constant 0 : index
    %c0_66 = arith.constant 0 : index
    %73 = vector.load %arg6[%c11, %c0_65, %c0_66] : memref<16x8x8xbf16, #tpu.memory_space<vmem>>, vector<1x8x8xbf16>
    %74 = vector.shape_cast %73 : vector<1x8x8xbf16> to vector<8x8xbf16>
    %cst_67 = arith.constant dense<0.000000e+00> : vector<16x8xf32>
    %75 = tpu.matmul %72, %74, %cst_67 {dimension_numbers = #tpu.dot_dimension_numbers<[1], [0], [0], [1], [0, 0, 1, 1], [], []>} : vector<16x8xbf16>, vector<8x8xbf16>, vector<16x8xf32> -> vector<16x8xf32>
    %76 = arith.addf %71, %75 : vector<16x8xf32>
    %77 = vector.extract_strided_slice %7 {offsets = [0, 0], sizes = [16, 8], strides = [1, 1]} : vector<17x8xbf16> to vector<16x8xbf16>
    %c12 = arith.constant 12 : index
    %c0_68 = arith.constant 0 : index
    %c0_69 = arith.constant 0 : index
    %78 = vector.load %arg6[%c12, %c0_68, %c0_69] : memref<16x8x8xbf16, #tpu.memory_space<vmem>>, vector<1x8x8xbf16>
    %79 = vector.shape_cast %78 : vector<1x8x8xbf16> to vector<8x8xbf16>
    %cst_70 = arith.constant dense<0.000000e+00> : vector<16x8xf32>
    %80 = tpu.matmul %77, %79, %cst_70 {dimension_numbers = #tpu.dot_dimension_numbers<[1], [0], [0], [1], [0, 0, 1, 1], [], []>} : vector<16x8xbf16>, vector<8x8xbf16>, vector<16x8xf32> -> vector<16x8xf32>
    %81 = arith.addf %76, %80 : vector<16x8xf32>
    %82 = vector.extract_strided_slice %15 {offsets = [0, 0], sizes = [16, 8], strides = [1, 1]} : vector<17x8xbf16> to vector<16x8xbf16>
    %c13 = arith.constant 13 : index
    %c0_71 = arith.constant 0 : index
    %c0_72 = arith.constant 0 : index
    %83 = vector.load %arg6[%c13, %c0_71, %c0_72] : memref<16x8x8xbf16, #tpu.memory_space<vmem>>, vector<1x8x8xbf16>
    %84 = vector.shape_cast %83 : vector<1x8x8xbf16> to vector<8x8xbf16>
    %cst_73 = arith.constant dense<0.000000e+00> : vector<16x8xf32>
    %85 = tpu.matmul %82, %84, %cst_73 {dimension_numbers = #tpu.dot_dimension_numbers<[1], [0], [0], [1], [0, 0, 1, 1], [], []>} : vector<16x8xbf16>, vector<8x8xbf16>, vector<16x8xf32> -> vector<16x8xf32>
    %86 = arith.addf %81, %85 : vector<16x8xf32>
    %87 = vector.extract_strided_slice %7 {offsets = [1, 0], sizes = [16, 8], strides = [1, 1]} : vector<17x8xbf16> to vector<16x8xbf16>
    %c14 = arith.constant 14 : index
    %c0_74 = arith.constant 0 : index
    %c0_75 = arith.constant 0 : index
    %88 = vector.load %arg6[%c14, %c0_74, %c0_75] : memref<16x8x8xbf16, #tpu.memory_space<vmem>>, vector<1x8x8xbf16>
    %89 = vector.shape_cast %88 : vector<1x8x8xbf16> to vector<8x8xbf16>
    %cst_76 = arith.constant dense<0.000000e+00> : vector<16x8xf32>
    %90 = tpu.matmul %87, %89, %cst_76 {dimension_numbers = #tpu.dot_dimension_numbers<[1], [0], [0], [1], [0, 0, 1, 1], [], []>} : vector<16x8xbf16>, vector<8x8xbf16>, vector<16x8xf32> -> vector<16x8xf32>
    %91 = arith.addf %86, %90 : vector<16x8xf32>
    %92 = vector.extract_strided_slice %15 {offsets = [1, 0], sizes = [16, 8], strides = [1, 1]} : vector<17x8xbf16> to vector<16x8xbf16>
    %c15 = arith.constant 15 : index
    %c0_77 = arith.constant 0 : index
    %c0_78 = arith.constant 0 : index
    %93 = vector.load %arg6[%c15, %c0_77, %c0_78] : memref<16x8x8xbf16, #tpu.memory_space<vmem>>, vector<1x8x8xbf16>
    %94 = vector.shape_cast %93 : vector<1x8x8xbf16> to vector<8x8xbf16>
    %cst_79 = arith.constant dense<0.000000e+00> : vector<16x8xf32>
    %95 = tpu.matmul %92, %94, %cst_79 {dimension_numbers = #tpu.dot_dimension_numbers<[1], [0], [0], [1], [0, 0, 1, 1], [], []>} : vector<16x8xbf16>, vector<8x8xbf16>, vector<16x8xf32> -> vector<16x8xf32>
    %96 = arith.addf %91, %95 : vector<16x8xf32>
    %c0_80 = arith.constant 0 : index
    %c0_81 = arith.constant 0 : index
    %97 = vector.load %arg7[%c0_80, %c0_81] : memref<1x8xf32, #tpu.memory_space<vmem>>, vector<1x8xf32>
    %98 = vector.broadcast %97 : vector<1x8xf32> to vector<16x8xf32>
    %99 = arith.addf %96, %98 : vector<16x8xf32>
    %cst_82 = arith.constant 0.000000e+00 : f32
    %100 = vector.broadcast %cst_82 : f32 to vector<16x8xf32>
    %101 = arith.cmpf oge, %99, %100 : vector<16x8xf32>
    %cst_83 = arith.constant 2.000000e-01 : f32
    %102 = vector.broadcast %cst_83 : f32 to vector<16x8xf32>
    %103 = arith.mulf %102, %99 : vector<16x8xf32>
    %104 = arith.select %101, %99, %103 : vector<16x8xi1>, vector<16x8xf32>
    %105 = arith.truncf %104 : vector<16x8xf32> to vector<16x8xbf16>
    %c0_84 = arith.constant 0 : index
    %c0_85 = arith.constant 0 : index
    %c0_86 = arith.constant 0 : index
    %c0_87 = arith.constant 0 : index
    %106 = vector.load %arg8[%c0_84, %c0_85, %c0_86, %c0_87] : memref<1x1x16x8xbf16, #tpu.memory_space<vmem>>, vector<1x1x16x8xbf16>
    %107 = vector.shape_cast %106 : vector<1x1x16x8xbf16> to vector<16x8xbf16>
    %108 = vector.shape_cast %105 : vector<16x8xbf16> to vector<1x1x16x8xbf16>
    tpu.vector_store %arg8[%c0_84, %c0_85, %c0_86, %c0_87], %108 {strides = array<i32>} : memref<1x1x16x8xbf16, #tpu.memory_space<vmem>>, vector<1x1x16x8xbf16>,
    return
  }
  func.func @transform_0(%arg0: i32, %arg1: i32) -> (i32, i32, i32, i32) {
    %c0_i32 = arith.constant 0 : i32
    %c0_i32_0 = arith.constant 0 : i32
    %c0_i32_1 = arith.constant 0 : i32
    return %arg0, %arg1, %c0_i32, %c0_i32_0 : i32, i32, i32, i32
  }
  func.func @transform_1(%arg0: i32, %arg1: i32) -> (i32, i32, i32, i32) {
    %c1_i32 = arith.constant 1 : i32
    %0 = arith.addi %arg1, %c1_i32 : i32
    %c0_i32 = arith.constant 0 : i32
    %c0_i32_0 = arith.constant 0 : i32
    %c0_i32_1 = arith.constant 0 : i32
    return %arg0, %0, %c0_i32, %c0_i32_0 : i32, i32, i32, i32
  }
  func.func @transform_2(%arg0: i32, %arg1: i32) -> (i32, i32, i32, i32) {
    %c0_i32 = arith.constant 0 : i32
    %c0_i32_0 = arith.constant 0 : i32
    %c0_i32_1 = arith.constant 0 : i32
    return %arg0, %arg1, %c0_i32, %c0_i32_0 : i32, i32, i32, i32
  }
  func.func @transform_3(%arg0: i32, %arg1: i32) -> (i32, i32, i32, i32) {
    %c1_i32 = arith.constant 1 : i32
    %0 = arith.addi %arg1, %c1_i32 : i32
    %c0_i32 = arith.constant 0 : i32
    %c0_i32_0 = arith.constant 0 : i32
    %c0_i32_1 = arith.constant 0 : i32
    return %arg0, %0, %c0_i32, %c0_i32_0 : i32, i32, i32, i32
  }
  func.func @transform_4(%arg0: i32, %arg1: i32) -> (i32, i32, i32) {
    %c0_i32 = arith.constant 0 : i32
    %c0_i32_0 = arith.constant 0 : i32
    %c0_i32_1 = arith.constant 0 : i32
    %c0_i32_2 = arith.constant 0 : i32
    return %c0_i32, %c0_i32_0, %c0_i32_1 : i32, i32, i32
  }
  func.func @transform_5(%arg0: i32, %arg1: i32) -> (i32, i32) {
    %c0_i32 = arith.constant 0 : i32
    %c0_i32_0 = arith.constant 0 : i32
    %c0_i32_1 = arith.constant 0 : i32
    return %c0_i32, %c0_i32_0 : i32, i32
  }
  func.func @transform_6(%arg0: i32, %arg1: i32) -> (i32, i32, i32, i32) {
    %c0_i32 = arith.constant 0 : i32
    %c0_i32_0 = arith.constant 0 : i32
    %c0_i32_1 = arith.constant 0 : i32
    return %arg0, %arg1, %c0_i32, %c0_i32_0 : i32, i32, i32, i32
  }
}

module attributes {stable_mosaic.version = 11 : i64} {
  func.func @kernel(%arg0: i32, %arg1: i32, %arg2: memref<1x2x9x8xbf16, #tpu.memory_space<vmem>>, %arg3: memref<1x2x9x8xbf16, #tpu.memory_space<vmem>>, %arg4: memref<1x2x9x8xbf16, #tpu.memory_space<vmem>>, %arg5: memref<1x2x9x8xbf16, #tpu.memory_space<vmem>>, %arg6: memref<16x8x16xbf16, #tpu.memory_space<vmem>>, %arg7: memref<1x16xf32, #tpu.memory_space<vmem>>, %arg8: memref<1x1x8x16xf32, #tpu.memory_space<vmem>>, %arg9: memref<1x2x16xf32, #tpu.memory_space<vmem>>) attributes {dimension_semantics = [#tpu.dimension_semantics<parallel>, #tpu.dimension_semantics<arbitrary>], iteration_bounds = array<i64: 2, 8>, scalar_prefetch = 0 : i64, scratch_operands = 0 : i64, tpu.core_type = #tpu.core_type<tc>, window_params = [{transform_indices = @transform_0, window_bounds = array<i64: 1, 2, 9, 8>}, {transform_indices = @transform_1, window_bounds = array<i64: 1, 2, 9, 8>}, {transform_indices = @transform_2, window_bounds = array<i64: 1, 2, 9, 8>}, {transform_indices = @transform_3, window_bounds = array<i64: 1, 2, 9, 8>}, {pipeline_mode = #tpu.pipeline_mode<synchronous>, transform_indices = @transform_4, window_bounds = array<i64: 16, 8, 16>}, {pipeline_mode = #tpu.pipeline_mode<synchronous>, transform_indices = @transform_5, window_bounds = array<i64: 1, 16>}, {transform_indices = @transform_6, window_bounds = array<i64: 1, 1, 8, 16>}, {transform_indices = @transform_7, window_bounds = array<i64: 1, 2, 16>}]} {
    %c0 = arith.constant 0 : index
    %c0_0 = arith.constant 0 : index
    %c0_1 = arith.constant 0 : index
    %c0_2 = arith.constant 0 : index
    %0 = vector.load %arg2[%c0, %c0_0, %c0_1, %c0_2] : memref<1x2x9x8xbf16, #tpu.memory_space<vmem>>, vector<1x1x9x8xbf16>
    %1 = vector.shape_cast %0 : vector<1x1x9x8xbf16> to vector<9x8xbf16>
    %c0_3 = arith.constant 0 : index
    %c1 = arith.constant 1 : index
    %c0_4 = arith.constant 0 : index
    %c0_5 = arith.constant 0 : index
    %2 = vector.load %arg2[%c0_3, %c1, %c0_4, %c0_5] : memref<1x2x9x8xbf16, #tpu.memory_space<vmem>>, vector<1x1x9x8xbf16>
    %3 = vector.shape_cast %2 : vector<1x1x9x8xbf16> to vector<9x8xbf16>
    %c0_6 = arith.constant 0 : index
    %c0_7 = arith.constant 0 : index
    %c0_8 = arith.constant 0 : index
    %c0_9 = arith.constant 0 : index
    %4 = vector.load %arg3[%c0_6, %c0_7, %c0_8, %c0_9] : memref<1x2x9x8xbf16, #tpu.memory_space<vmem>>, vector<1x1x9x8xbf16>
    %5 = vector.shape_cast %4 : vector<1x1x9x8xbf16> to vector<9x8xbf16>
    %c0_10 = arith.constant 0 : index
    %c1_11 = arith.constant 1 : index
    %c0_12 = arith.constant 0 : index
    %c0_13 = arith.constant 0 : index
    %6 = vector.load %arg3[%c0_10, %c1_11, %c0_12, %c0_13] : memref<1x2x9x8xbf16, #tpu.memory_space<vmem>>, vector<1x1x9x8xbf16>
    %7 = vector.shape_cast %6 : vector<1x1x9x8xbf16> to vector<9x8xbf16>
    %c0_14 = arith.constant 0 : index
    %c0_15 = arith.constant 0 : index
    %c0_16 = arith.constant 0 : index
    %c0_17 = arith.constant 0 : index
    %8 = vector.load %arg4[%c0_14, %c0_15, %c0_16, %c0_17] : memref<1x2x9x8xbf16, #tpu.memory_space<vmem>>, vector<1x1x9x8xbf16>
    %9 = vector.shape_cast %8 : vector<1x1x9x8xbf16> to vector<9x8xbf16>
    %c0_18 = arith.constant 0 : index
    %c1_19 = arith.constant 1 : index
    %c0_20 = arith.constant 0 : index
    %c0_21 = arith.constant 0 : index
    %10 = vector.load %arg4[%c0_18, %c1_19, %c0_20, %c0_21] : memref<1x2x9x8xbf16, #tpu.memory_space<vmem>>, vector<1x1x9x8xbf16>
    %11 = vector.shape_cast %10 : vector<1x1x9x8xbf16> to vector<9x8xbf16>
    %c0_22 = arith.constant 0 : index
    %c0_23 = arith.constant 0 : index
    %c0_24 = arith.constant 0 : index
    %c0_25 = arith.constant 0 : index
    %12 = vector.load %arg5[%c0_22, %c0_23, %c0_24, %c0_25] : memref<1x2x9x8xbf16, #tpu.memory_space<vmem>>, vector<1x1x9x8xbf16>
    %13 = vector.shape_cast %12 : vector<1x1x9x8xbf16> to vector<9x8xbf16>
    %c0_26 = arith.constant 0 : index
    %c1_27 = arith.constant 1 : index
    %c0_28 = arith.constant 0 : index
    %c0_29 = arith.constant 0 : index
    %14 = vector.load %arg5[%c0_26, %c1_27, %c0_28, %c0_29] : memref<1x2x9x8xbf16, #tpu.memory_space<vmem>>, vector<1x1x9x8xbf16>
    %15 = vector.shape_cast %14 : vector<1x1x9x8xbf16> to vector<9x8xbf16>
    %cst = arith.constant 0.000000e+00 : f32
    %16 = vector.broadcast %cst : f32 to vector<8x16xf32>
    %17 = vector.extract_strided_slice %1 {offsets = [0, 0], sizes = [8, 8], strides = [1, 1]} : vector<9x8xbf16> to vector<8x8xbf16>
    %c0_30 = arith.constant 0 : index
    %c0_31 = arith.constant 0 : index
    %c0_32 = arith.constant 0 : index
    %18 = vector.load %arg6[%c0_30, %c0_31, %c0_32] : memref<16x8x16xbf16, #tpu.memory_space<vmem>>, vector<1x8x16xbf16>
    %19 = vector.shape_cast %18 : vector<1x8x16xbf16> to vector<8x16xbf16>
    %cst_33 = arith.constant dense<0.000000e+00> : vector<8x16xf32>
    %20 = tpu.matmul %17, %19, %cst_33 {dimension_numbers = #tpu.dot_dimension_numbers<[1], [0], [0], [1], [0, 0, 1, 1], [], []>} : vector<8x8xbf16>, vector<8x16xbf16>, vector<8x16xf32> -> vector<8x16xf32>
    %21 = arith.addf %16, %20 : vector<8x16xf32>
    %22 = vector.extract_strided_slice %9 {offsets = [0, 0], sizes = [8, 8], strides = [1, 1]} : vector<9x8xbf16> to vector<8x8xbf16>
    %c1_34 = arith.constant 1 : index
    %c0_35 = arith.constant 0 : index
    %c0_36 = arith.constant 0 : index
    %23 = vector.load %arg6[%c1_34, %c0_35, %c0_36] : memref<16x8x16xbf16, #tpu.memory_space<vmem>>, vector<1x8x16xbf16>
    %24 = vector.shape_cast %23 : vector<1x8x16xbf16> to vector<8x16xbf16>
    %cst_37 = arith.constant dense<0.000000e+00> : vector<8x16xf32>
    %25 = tpu.matmul %22, %24, %cst_37 {dimension_numbers = #tpu.dot_dimension_numbers<[1], [0], [0], [1], [0, 0, 1, 1], [], []>} : vector<8x8xbf16>, vector<8x16xbf16>, vector<8x16xf32> -> vector<8x16xf32>
    %26 = arith.addf %21, %25 : vector<8x16xf32>
    %27 = vector.extract_strided_slice %1 {offsets = [1, 0], sizes = [8, 8], strides = [1, 1]} : vector<9x8xbf16> to vector<8x8xbf16>
    %c2 = arith.constant 2 : index
    %c0_38 = arith.constant 0 : index
    %c0_39 = arith.constant 0 : index
    %28 = vector.load %arg6[%c2, %c0_38, %c0_39] : memref<16x8x16xbf16, #tpu.memory_space<vmem>>, vector<1x8x16xbf16>
    %29 = vector.shape_cast %28 : vector<1x8x16xbf16> to vector<8x16xbf16>
    %cst_40 = arith.constant dense<0.000000e+00> : vector<8x16xf32>
    %30 = tpu.matmul %27, %29, %cst_40 {dimension_numbers = #tpu.dot_dimension_numbers<[1], [0], [0], [1], [0, 0, 1, 1], [], []>} : vector<8x8xbf16>, vector<8x16xbf16>, vector<8x16xf32> -> vector<8x16xf32>
    %31 = arith.addf %26, %30 : vector<8x16xf32>
    %32 = vector.extract_strided_slice %9 {offsets = [1, 0], sizes = [8, 8], strides = [1, 1]} : vector<9x8xbf16> to vector<8x8xbf16>
    %c3 = arith.constant 3 : index
    %c0_41 = arith.constant 0 : index
    %c0_42 = arith.constant 0 : index
    %33 = vector.load %arg6[%c3, %c0_41, %c0_42] : memref<16x8x16xbf16, #tpu.memory_space<vmem>>, vector<1x8x16xbf16>
    %34 = vector.shape_cast %33 : vector<1x8x16xbf16> to vector<8x16xbf16>
    %cst_43 = arith.constant dense<0.000000e+00> : vector<8x16xf32>
    %35 = tpu.matmul %32, %34, %cst_43 {dimension_numbers = #tpu.dot_dimension_numbers<[1], [0], [0], [1], [0, 0, 1, 1], [], []>} : vector<8x8xbf16>, vector<8x16xbf16>, vector<8x16xf32> -> vector<8x16xf32>
    %36 = arith.addf %31, %35 : vector<8x16xf32>
    %37 = vector.extract_strided_slice %3 {offsets = [0, 0], sizes = [8, 8], strides = [1, 1]} : vector<9x8xbf16> to vector<8x8xbf16>
    %c4 = arith.constant 4 : index
    %c0_44 = arith.constant 0 : index
    %c0_45 = arith.constant 0 : index
    %38 = vector.load %arg6[%c4, %c0_44, %c0_45] : memref<16x8x16xbf16, #tpu.memory_space<vmem>>, vector<1x8x16xbf16>
    %39 = vector.shape_cast %38 : vector<1x8x16xbf16> to vector<8x16xbf16>
    %cst_46 = arith.constant dense<0.000000e+00> : vector<8x16xf32>
    %40 = tpu.matmul %37, %39, %cst_46 {dimension_numbers = #tpu.dot_dimension_numbers<[1], [0], [0], [1], [0, 0, 1, 1], [], []>} : vector<8x8xbf16>, vector<8x16xbf16>, vector<8x16xf32> -> vector<8x16xf32>
    %41 = arith.addf %36, %40 : vector<8x16xf32>
    %42 = vector.extract_strided_slice %11 {offsets = [0, 0], sizes = [8, 8], strides = [1, 1]} : vector<9x8xbf16> to vector<8x8xbf16>
    %c5 = arith.constant 5 : index
    %c0_47 = arith.constant 0 : index
    %c0_48 = arith.constant 0 : index
    %43 = vector.load %arg6[%c5, %c0_47, %c0_48] : memref<16x8x16xbf16, #tpu.memory_space<vmem>>, vector<1x8x16xbf16>
    %44 = vector.shape_cast %43 : vector<1x8x16xbf16> to vector<8x16xbf16>
    %cst_49 = arith.constant dense<0.000000e+00> : vector<8x16xf32>
    %45 = tpu.matmul %42, %44, %cst_49 {dimension_numbers = #tpu.dot_dimension_numbers<[1], [0], [0], [1], [0, 0, 1, 1], [], []>} : vector<8x8xbf16>, vector<8x16xbf16>, vector<8x16xf32> -> vector<8x16xf32>
    %46 = arith.addf %41, %45 : vector<8x16xf32>
    %47 = vector.extract_strided_slice %3 {offsets = [1, 0], sizes = [8, 8], strides = [1, 1]} : vector<9x8xbf16> to vector<8x8xbf16>
    %c6 = arith.constant 6 : index
    %c0_50 = arith.constant 0 : index
    %c0_51 = arith.constant 0 : index
    %48 = vector.load %arg6[%c6, %c0_50, %c0_51] : memref<16x8x16xbf16, #tpu.memory_space<vmem>>, vector<1x8x16xbf16>
    %49 = vector.shape_cast %48 : vector<1x8x16xbf16> to vector<8x16xbf16>
    %cst_52 = arith.constant dense<0.000000e+00> : vector<8x16xf32>
    %50 = tpu.matmul %47, %49, %cst_52 {dimension_numbers = #tpu.dot_dimension_numbers<[1], [0], [0], [1], [0, 0, 1, 1], [], []>} : vector<8x8xbf16>, vector<8x16xbf16>, vector<8x16xf32> -> vector<8x16xf32>
    %51 = arith.addf %46, %50 : vector<8x16xf32>
    %52 = vector.extract_strided_slice %11 {offsets = [1, 0], sizes = [8, 8], strides = [1, 1]} : vector<9x8xbf16> to vector<8x8xbf16>
    %c7 = arith.constant 7 : index
    %c0_53 = arith.constant 0 : index
    %c0_54 = arith.constant 0 : index
    %53 = vector.load %arg6[%c7, %c0_53, %c0_54] : memref<16x8x16xbf16, #tpu.memory_space<vmem>>, vector<1x8x16xbf16>
    %54 = vector.shape_cast %53 : vector<1x8x16xbf16> to vector<8x16xbf16>
    %cst_55 = arith.constant dense<0.000000e+00> : vector<8x16xf32>
    %55 = tpu.matmul %52, %54, %cst_55 {dimension_numbers = #tpu.dot_dimension_numbers<[1], [0], [0], [1], [0, 0, 1, 1], [], []>} : vector<8x8xbf16>, vector<8x16xbf16>, vector<8x16xf32> -> vector<8x16xf32>
    %56 = arith.addf %51, %55 : vector<8x16xf32>
    %57 = vector.extract_strided_slice %5 {offsets = [0, 0], sizes = [8, 8], strides = [1, 1]} : vector<9x8xbf16> to vector<8x8xbf16>
    %c8 = arith.constant 8 : index
    %c0_56 = arith.constant 0 : index
    %c0_57 = arith.constant 0 : index
    %58 = vector.load %arg6[%c8, %c0_56, %c0_57] : memref<16x8x16xbf16, #tpu.memory_space<vmem>>, vector<1x8x16xbf16>
    %59 = vector.shape_cast %58 : vector<1x8x16xbf16> to vector<8x16xbf16>
    %cst_58 = arith.constant dense<0.000000e+00> : vector<8x16xf32>
    %60 = tpu.matmul %57, %59, %cst_58 {dimension_numbers = #tpu.dot_dimension_numbers<[1], [0], [0], [1], [0, 0, 1, 1], [], []>} : vector<8x8xbf16>, vector<8x16xbf16>, vector<8x16xf32> -> vector<8x16xf32>
    %61 = arith.addf %56, %60 : vector<8x16xf32>
    %62 = vector.extract_strided_slice %13 {offsets = [0, 0], sizes = [8, 8], strides = [1, 1]} : vector<9x8xbf16> to vector<8x8xbf16>
    %c9 = arith.constant 9 : index
    %c0_59 = arith.constant 0 : index
    %c0_60 = arith.constant 0 : index
    %63 = vector.load %arg6[%c9, %c0_59, %c0_60] : memref<16x8x16xbf16, #tpu.memory_space<vmem>>, vector<1x8x16xbf16>
    %64 = vector.shape_cast %63 : vector<1x8x16xbf16> to vector<8x16xbf16>
    %cst_61 = arith.constant dense<0.000000e+00> : vector<8x16xf32>
    %65 = tpu.matmul %62, %64, %cst_61 {dimension_numbers = #tpu.dot_dimension_numbers<[1], [0], [0], [1], [0, 0, 1, 1], [], []>} : vector<8x8xbf16>, vector<8x16xbf16>, vector<8x16xf32> -> vector<8x16xf32>
    %66 = arith.addf %61, %65 : vector<8x16xf32>
    %67 = vector.extract_strided_slice %5 {offsets = [1, 0], sizes = [8, 8], strides = [1, 1]} : vector<9x8xbf16> to vector<8x8xbf16>
    %c10 = arith.constant 10 : index
    %c0_62 = arith.constant 0 : index
    %c0_63 = arith.constant 0 : index
    %68 = vector.load %arg6[%c10, %c0_62, %c0_63] : memref<16x8x16xbf16, #tpu.memory_space<vmem>>, vector<1x8x16xbf16>
    %69 = vector.shape_cast %68 : vector<1x8x16xbf16> to vector<8x16xbf16>
    %cst_64 = arith.constant dense<0.000000e+00> : vector<8x16xf32>
    %70 = tpu.matmul %67, %69, %cst_64 {dimension_numbers = #tpu.dot_dimension_numbers<[1], [0], [0], [1], [0, 0, 1, 1], [], []>} : vector<8x8xbf16>, vector<8x16xbf16>, vector<8x16xf32> -> vector<8x16xf32>
    %71 = arith.addf %66, %70 : vector<8x16xf32>
    %72 = vector.extract_strided_slice %13 {offsets = [1, 0], sizes = [8, 8], strides = [1, 1]} : vector<9x8xbf16> to vector<8x8xbf16>
    %c11 = arith.constant 11 : index
    %c0_65 = arith.constant 0 : index
    %c0_66 = arith.constant 0 : index
    %73 = vector.load %arg6[%c11, %c0_65, %c0_66] : memref<16x8x16xbf16, #tpu.memory_space<vmem>>, vector<1x8x16xbf16>
    %74 = vector.shape_cast %73 : vector<1x8x16xbf16> to vector<8x16xbf16>
    %cst_67 = arith.constant dense<0.000000e+00> : vector<8x16xf32>
    %75 = tpu.matmul %72, %74, %cst_67 {dimension_numbers = #tpu.dot_dimension_numbers<[1], [0], [0], [1], [0, 0, 1, 1], [], []>} : vector<8x8xbf16>, vector<8x16xbf16>, vector<8x16xf32> -> vector<8x16xf32>
    %76 = arith.addf %71, %75 : vector<8x16xf32>
    %77 = vector.extract_strided_slice %7 {offsets = [0, 0], sizes = [8, 8], strides = [1, 1]} : vector<9x8xbf16> to vector<8x8xbf16>
    %c12 = arith.constant 12 : index
    %c0_68 = arith.constant 0 : index
    %c0_69 = arith.constant 0 : index
    %78 = vector.load %arg6[%c12, %c0_68, %c0_69] : memref<16x8x16xbf16, #tpu.memory_space<vmem>>, vector<1x8x16xbf16>
    %79 = vector.shape_cast %78 : vector<1x8x16xbf16> to vector<8x16xbf16>
    %cst_70 = arith.constant dense<0.000000e+00> : vector<8x16xf32>
    %80 = tpu.matmul %77, %79, %cst_70 {dimension_numbers = #tpu.dot_dimension_numbers<[1], [0], [0], [1], [0, 0, 1, 1], [], []>} : vector<8x8xbf16>, vector<8x16xbf16>, vector<8x16xf32> -> vector<8x16xf32>
    %81 = arith.addf %76, %80 : vector<8x16xf32>
    %82 = vector.extract_strided_slice %15 {offsets = [0, 0], sizes = [8, 8], strides = [1, 1]} : vector<9x8xbf16> to vector<8x8xbf16>
    %c13 = arith.constant 13 : index
    %c0_71 = arith.constant 0 : index
    %c0_72 = arith.constant 0 : index
    %83 = vector.load %arg6[%c13, %c0_71, %c0_72] : memref<16x8x16xbf16, #tpu.memory_space<vmem>>, vector<1x8x16xbf16>
    %84 = vector.shape_cast %83 : vector<1x8x16xbf16> to vector<8x16xbf16>
    %cst_73 = arith.constant dense<0.000000e+00> : vector<8x16xf32>
    %85 = tpu.matmul %82, %84, %cst_73 {dimension_numbers = #tpu.dot_dimension_numbers<[1], [0], [0], [1], [0, 0, 1, 1], [], []>} : vector<8x8xbf16>, vector<8x16xbf16>, vector<8x16xf32> -> vector<8x16xf32>
    %86 = arith.addf %81, %85 : vector<8x16xf32>
    %87 = vector.extract_strided_slice %7 {offsets = [1, 0], sizes = [8, 8], strides = [1, 1]} : vector<9x8xbf16> to vector<8x8xbf16>
    %c14 = arith.constant 14 : index
    %c0_74 = arith.constant 0 : index
    %c0_75 = arith.constant 0 : index
    %88 = vector.load %arg6[%c14, %c0_74, %c0_75] : memref<16x8x16xbf16, #tpu.memory_space<vmem>>, vector<1x8x16xbf16>
    %89 = vector.shape_cast %88 : vector<1x8x16xbf16> to vector<8x16xbf16>
    %cst_76 = arith.constant dense<0.000000e+00> : vector<8x16xf32>
    %90 = tpu.matmul %87, %89, %cst_76 {dimension_numbers = #tpu.dot_dimension_numbers<[1], [0], [0], [1], [0, 0, 1, 1], [], []>} : vector<8x8xbf16>, vector<8x16xbf16>, vector<8x16xf32> -> vector<8x16xf32>
    %91 = arith.addf %86, %90 : vector<8x16xf32>
    %92 = vector.extract_strided_slice %15 {offsets = [1, 0], sizes = [8, 8], strides = [1, 1]} : vector<9x8xbf16> to vector<8x8xbf16>
    %c15 = arith.constant 15 : index
    %c0_77 = arith.constant 0 : index
    %c0_78 = arith.constant 0 : index
    %93 = vector.load %arg6[%c15, %c0_77, %c0_78] : memref<16x8x16xbf16, #tpu.memory_space<vmem>>, vector<1x8x16xbf16>
    %94 = vector.shape_cast %93 : vector<1x8x16xbf16> to vector<8x16xbf16>
    %cst_79 = arith.constant dense<0.000000e+00> : vector<8x16xf32>
    %95 = tpu.matmul %92, %94, %cst_79 {dimension_numbers = #tpu.dot_dimension_numbers<[1], [0], [0], [1], [0, 0, 1, 1], [], []>} : vector<8x8xbf16>, vector<8x16xbf16>, vector<8x16xf32> -> vector<8x16xf32>
    %96 = arith.addf %91, %95 : vector<8x16xf32>
    %c0_80 = arith.constant 0 : index
    %c0_81 = arith.constant 0 : index
    %97 = vector.load %arg7[%c0_80, %c0_81] : memref<1x16xf32, #tpu.memory_space<vmem>>, vector<1x16xf32>
    %98 = vector.broadcast %97 : vector<1x16xf32> to vector<8x16xf32>
    %99 = arith.addf %96, %98 : vector<8x16xf32>
    %c0_i32 = arith.constant 0 : i32
    %100 = arith.cmpi eq, %arg1, %c0_i32 : i32
    %101 = arith.extui %100 : i1 to i32
    %c0_i32_82 = arith.constant 0 : i32
    %102 = arith.cmpi ne, %101, %c0_i32_82 : i32
    scf.if %102 {
      %cst_101 = arith.constant 0.000000e+00 : f32
      %123 = vector.broadcast %cst_101 : f32 to vector<1x2x16xf32>
      %c0_102 = arith.constant 0 : index
      %c0_103 = arith.constant 0 : index
      %c0_104 = arith.constant 0 : index
      %124 = vector.load %arg9[%c0_102, %c0_103, %c0_104] : memref<1x2x16xf32, #tpu.memory_space<vmem>>, vector<1x2x16xf32>
      tpu.vector_store %arg9[%c0_102, %c0_103, %c0_104], %123 {strides = array<i32>} : memref<1x2x16xf32, #tpu.memory_space<vmem>>, vector<1x2x16xf32>,
    } else {
    }
    %c0_83 = arith.constant 0 : index
    %c0_84 = arith.constant 0 : index
    %c0_85 = arith.constant 0 : index
    %103 = vector.load %arg9[%c0_83, %c0_84, %c0_85] : memref<1x2x16xf32, #tpu.memory_space<vmem>>, vector<1x1x16xf32>
    %104 = vector.shape_cast %103 : vector<1x1x16xf32> to vector<1x16xf32>
    %cst_86 = arith.constant dense<0.000000e+00> : vector<16xf32>
    %105 = vector.multi_reduction <add>, %99, %cst_86 [0] : vector<8x16xf32> to vector<16xf32>
    %106 = vector.shape_cast %105 : vector<16xf32> to vector<1x16xf32>
    %107 = arith.addf %104, %106 : vector<1x16xf32>
    %c0_87 = arith.constant 0 : index
    %c0_88 = arith.constant 0 : index
    %c0_89 = arith.constant 0 : index
    %108 = vector.load %arg9[%c0_87, %c0_88, %c0_89] : memref<1x2x16xf32, #tpu.memory_space<vmem>>, vector<1x1x16xf32>
    %109 = vector.shape_cast %108 : vector<1x1x16xf32> to vector<1x16xf32>
    %110 = vector.shape_cast %107 : vector<1x16xf32> to vector<1x1x16xf32>
    tpu.vector_store %arg9[%c0_87, %c0_88, %c0_89], %110 {strides = array<i32>} : memref<1x2x16xf32, #tpu.memory_space<vmem>>, vector<1x1x16xf32>,
    %c0_90 = arith.constant 0 : index
    %c1_91 = arith.constant 1 : index
    %c0_92 = arith.constant 0 : index
    %111 = vector.load %arg9[%c0_90, %c1_91, %c0_92] : memref<1x2x16xf32, #tpu.memory_space<vmem>>, vector<1x1x16xf32>
    %112 = vector.shape_cast %111 : vector<1x1x16xf32> to vector<1x16xf32>
    %113 = arith.mulf %99, %99 : vector<8x16xf32>
    %cst_93 = arith.constant dense<0.000000e+00> : vector<16xf32>
    %114 = vector.multi_reduction <add>, %113, %cst_93 [0] : vector<8x16xf32> to vector<16xf32>
    %115 = vector.shape_cast %114 : vector<16xf32> to vector<1x16xf32>
    %116 = arith.addf %112, %115 : vector<1x16xf32>
    %c0_94 = arith.constant 0 : index
    %c1_95 = arith.constant 1 : index
    %c0_96 = arith.constant 0 : index
    %117 = vector.load %arg9[%c0_94, %c1_95, %c0_96] : memref<1x2x16xf32, #tpu.memory_space<vmem>>, vector<1x1x16xf32>
    %118 = vector.shape_cast %117 : vector<1x1x16xf32> to vector<1x16xf32>
    %119 = vector.shape_cast %116 : vector<1x16xf32> to vector<1x1x16xf32>
    tpu.vector_store %arg9[%c0_94, %c1_95, %c0_96], %119 {strides = array<i32>} : memref<1x2x16xf32, #tpu.memory_space<vmem>>, vector<1x1x16xf32>,
    %c0_97 = arith.constant 0 : index
    %c0_98 = arith.constant 0 : index
    %c0_99 = arith.constant 0 : index
    %c0_100 = arith.constant 0 : index
    %120 = vector.load %arg8[%c0_97, %c0_98, %c0_99, %c0_100] : memref<1x1x8x16xf32, #tpu.memory_space<vmem>>, vector<1x1x8x16xf32>
    %121 = vector.shape_cast %120 : vector<1x1x8x16xf32> to vector<8x16xf32>
    %122 = vector.shape_cast %99 : vector<8x16xf32> to vector<1x1x8x16xf32>
    tpu.vector_store %arg8[%c0_97, %c0_98, %c0_99, %c0_100], %122 {strides = array<i32>} : memref<1x1x8x16xf32, #tpu.memory_space<vmem>>, vector<1x1x8x16xf32>,
    return
  }
  func.func @transform_0(%arg0: i32, %arg1: i32) -> (i32, i32, i32, i32) {
    %c0_i32 = arith.constant 0 : i32
    %c0_i32_0 = arith.constant 0 : i32
    %c0_i32_1 = arith.constant 0 : i32
    return %arg0, %arg1, %c0_i32, %c0_i32_0 : i32, i32, i32, i32
  }
  func.func @transform_1(%arg0: i32, %arg1: i32) -> (i32, i32, i32, i32) {
    %c1_i32 = arith.constant 1 : i32
    %0 = arith.addi %arg1, %c1_i32 : i32
    %c0_i32 = arith.constant 0 : i32
    %c0_i32_0 = arith.constant 0 : i32
    %c0_i32_1 = arith.constant 0 : i32
    return %arg0, %0, %c0_i32, %c0_i32_0 : i32, i32, i32, i32
  }
  func.func @transform_2(%arg0: i32, %arg1: i32) -> (i32, i32, i32, i32) {
    %c0_i32 = arith.constant 0 : i32
    %c0_i32_0 = arith.constant 0 : i32
    %c0_i32_1 = arith.constant 0 : i32
    return %arg0, %arg1, %c0_i32, %c0_i32_0 : i32, i32, i32, i32
  }
  func.func @transform_3(%arg0: i32, %arg1: i32) -> (i32, i32, i32, i32) {
    %c1_i32 = arith.constant 1 : i32
    %0 = arith.addi %arg1, %c1_i32 : i32
    %c0_i32 = arith.constant 0 : i32
    %c0_i32_0 = arith.constant 0 : i32
    %c0_i32_1 = arith.constant 0 : i32
    return %arg0, %0, %c0_i32, %c0_i32_0 : i32, i32, i32, i32
  }
  func.func @transform_4(%arg0: i32, %arg1: i32) -> (i32, i32, i32) {
    %c0_i32 = arith.constant 0 : i32
    %c0_i32_0 = arith.constant 0 : i32
    %c0_i32_1 = arith.constant 0 : i32
    %c0_i32_2 = arith.constant 0 : i32
    return %c0_i32, %c0_i32_0, %c0_i32_1 : i32, i32, i32
  }
  func.func @transform_5(%arg0: i32, %arg1: i32) -> (i32, i32) {
    %c0_i32 = arith.constant 0 : i32
    %c0_i32_0 = arith.constant 0 : i32
    %c0_i32_1 = arith.constant 0 : i32
    return %c0_i32, %c0_i32_0 : i32, i32
  }
  func.func @transform_6(%arg0: i32, %arg1: i32) -> (i32, i32, i32, i32) {
    %c0_i32 = arith.constant 0 : i32
    %c0_i32_0 = arith.constant 0 : i32
    %c0_i32_1 = arith.constant 0 : i32
    return %arg0, %arg1, %c0_i32, %c0_i32_0 : i32, i32, i32, i32
  }
  func.func @transform_7(%arg0: i32, %arg1: i32) -> (i32, i32, i32) {
    %c0_i32 = arith.constant 0 : i32
    %c0_i32_0 = arith.constant 0 : i32
    %c0_i32_1 = arith.constant 0 : i32
    return %arg0, %c0_i32, %c0_i32_0 : i32, i32, i32
  }
}

module attributes {stable_mosaic.version = 11 : i64} {
  func.func @_bn_apply_kernel(%arg0: i32, %arg1: i32, %arg2: memref<1x1x8x16xf32, #tpu.memory_space<vmem>>, %arg3: memref<2x16xf32, #tpu.memory_space<vmem>>, %arg4: memref<1x16xf32, #tpu.memory_space<vmem>>, %arg5: memref<1x16xf32, #tpu.memory_space<vmem>>, %arg6: memref<1x1x8x16xbf16, #tpu.memory_space<vmem>>) attributes {dimension_semantics = [#tpu.dimension_semantics<parallel>, #tpu.dimension_semantics<parallel>], iteration_bounds = array<i64: 2, 8>, scalar_prefetch = 0 : i64, scratch_operands = 0 : i64, tpu.core_type = #tpu.core_type<tc>, window_params = [{transform_indices = @transform_0, window_bounds = array<i64: 1, 1, 8, 16>}, {pipeline_mode = #tpu.pipeline_mode<synchronous>, transform_indices = @transform_1, window_bounds = array<i64: 2, 16>}, {pipeline_mode = #tpu.pipeline_mode<synchronous>, transform_indices = @transform_2, window_bounds = array<i64: 1, 16>}, {pipeline_mode = #tpu.pipeline_mode<synchronous>, transform_indices = @transform_3, window_bounds = array<i64: 1, 16>}, {transform_indices = @transform_4, window_bounds = array<i64: 1, 1, 8, 16>}]} {
    %c0 = arith.constant 0 : index
    %c0_0 = arith.constant 0 : index
    %c0_1 = arith.constant 0 : index
    %c0_2 = arith.constant 0 : index
    %0 = vector.load %arg2[%c0, %c0_0, %c0_1, %c0_2] : memref<1x1x8x16xf32, #tpu.memory_space<vmem>>, vector<1x1x8x16xf32>
    %1 = vector.shape_cast %0 : vector<1x1x8x16xf32> to vector<8x16xf32>
    %c0_3 = arith.constant 0 : index
    %c0_4 = arith.constant 0 : index
    %2 = vector.load %arg3[%c0_3, %c0_4] : memref<2x16xf32, #tpu.memory_space<vmem>>, vector<1x16xf32>
    %cst = arith.constant 7.812500e-03 : f32
    %3 = vector.broadcast %cst : f32 to vector<1x16xf32>
    %4 = arith.mulf %2, %3 : vector<1x16xf32>
    %c1 = arith.constant 1 : index
    %c0_5 = arith.constant 0 : index
    %5 = vector.load %arg3[%c1, %c0_5] : memref<2x16xf32, #tpu.memory_space<vmem>>, vector<1x16xf32>
    %cst_6 = arith.constant 7.812500e-03 : f32
    %6 = vector.broadcast %cst_6 : f32 to vector<1x16xf32>
    %7 = arith.mulf %5, %6 : vector<1x16xf32>
    %8 = arith.mulf %4, %4 : vector<1x16xf32>
    %9 = arith.subf %7, %8 : vector<1x16xf32>
    %10 = vector.broadcast %4 : vector<1x16xf32> to vector<8x16xf32>
    %11 = arith.subf %1, %10 : vector<8x16xf32>
    %cst_7 = arith.constant 9.99999974E-6 : f32
    %12 = vector.broadcast %cst_7 : f32 to vector<1x16xf32>
    %13 = arith.addf %9, %12 : vector<1x16xf32>
    %14 = math.rsqrt %13 : vector<1x16xf32>
    %15 = vector.broadcast %14 : vector<1x16xf32> to vector<8x16xf32>
    %16 = arith.mulf %11, %15 : vector<8x16xf32>
    %c0_8 = arith.constant 0 : index
    %c0_9 = arith.constant 0 : index
    %17 = vector.load %arg4[%c0_8, %c0_9] : memref<1x16xf32, #tpu.memory_space<vmem>>, vector<1x16xf32>
    %18 = vector.broadcast %17 : vector<1x16xf32> to vector<8x16xf32>
    %19 = arith.mulf %16, %18 : vector<8x16xf32>
    %c0_10 = arith.constant 0 : index
    %c0_11 = arith.constant 0 : index
    %20 = vector.load %arg5[%c0_10, %c0_11] : memref<1x16xf32, #tpu.memory_space<vmem>>, vector<1x16xf32>
    %21 = vector.broadcast %20 : vector<1x16xf32> to vector<8x16xf32>
    %22 = arith.addf %19, %21 : vector<8x16xf32>
    %cst_12 = arith.constant 0.000000e+00 : f32
    %23 = vector.broadcast %cst_12 : f32 to vector<8x16xf32>
    %24 = arith.cmpf oge, %22, %23 : vector<8x16xf32>
    %cst_13 = arith.constant 2.000000e-01 : f32
    %25 = vector.broadcast %cst_13 : f32 to vector<8x16xf32>
    %26 = arith.mulf %25, %22 : vector<8x16xf32>
    %27 = arith.select %24, %22, %26 : vector<8x16xi1>, vector<8x16xf32>
    %28 = arith.truncf %27 : vector<8x16xf32> to vector<8x16xbf16>
    %c0_14 = arith.constant 0 : index
    %c0_15 = arith.constant 0 : index
    %c0_16 = arith.constant 0 : index
    %c0_17 = arith.constant 0 : index
    %29 = vector.load %arg6[%c0_14, %c0_15, %c0_16, %c0_17] : memref<1x1x8x16xbf16, #tpu.memory_space<vmem>>, vector<1x1x8x16xbf16>
    %30 = vector.shape_cast %29 : vector<1x1x8x16xbf16> to vector<8x16xbf16>
    %31 = vector.shape_cast %28 : vector<8x16xbf16> to vector<1x1x8x16xbf16>
    tpu.vector_store %arg6[%c0_14, %c0_15, %c0_16, %c0_17], %31 {strides = array<i32>} : memref<1x1x8x16xbf16, #tpu.memory_space<vmem>>, vector<1x1x8x16xbf16>,
    return
  }
  func.func @transform_0(%arg0: i32, %arg1: i32) -> (i32, i32, i32, i32) {
    %c0_i32 = arith.constant 0 : i32
    %c0_i32_0 = arith.constant 0 : i32
    %c0_i32_1 = arith.constant 0 : i32
    return %arg0, %arg1, %c0_i32, %c0_i32_0 : i32, i32, i32, i32
  }
  func.func @transform_1(%arg0: i32, %arg1: i32) -> (i32, i32) {
    %c0_i32 = arith.constant 0 : i32
    %c0_i32_0 = arith.constant 0 : i32
    %c0_i32_1 = arith.constant 0 : i32
    return %c0_i32, %c0_i32_0 : i32, i32
  }
  func.func @transform_2(%arg0: i32, %arg1: i32) -> (i32, i32) {
    %c0_i32 = arith.constant 0 : i32
    %c0_i32_0 = arith.constant 0 : i32
    %c0_i32_1 = arith.constant 0 : i32
    return %c0_i32, %c0_i32_0 : i32, i32
  }
  func.func @transform_3(%arg0: i32, %arg1: i32) -> (i32, i32) {
    %c0_i32 = arith.constant 0 : i32
    %c0_i32_0 = arith.constant 0 : i32
    %c0_i32_1 = arith.constant 0 : i32
    return %c0_i32, %c0_i32_0 : i32, i32
  }
  func.func @transform_4(%arg0: i32, %arg1: i32) -> (i32, i32, i32, i32) {
    %c0_i32 = arith.constant 0 : i32
    %c0_i32_0 = arith.constant 0 : i32
    %c0_i32_1 = arith.constant 0 : i32
    return %arg0, %arg1, %c0_i32, %c0_i32_0 : i32, i32, i32, i32
  }
}

module attributes {stable_mosaic.version = 11 : i64} {
  func.func @_bn_apply_kernel(%arg0: i32, %arg1: i32, %arg2: memref<1x1x4x32xf32, #tpu.memory_space<vmem>>, %arg3: memref<2x32xf32, #tpu.memory_space<vmem>>, %arg4: memref<1x32xf32, #tpu.memory_space<vmem>>, %arg5: memref<1x32xf32, #tpu.memory_space<vmem>>, %arg6: memref<1x1x4x32xbf16, #tpu.memory_space<vmem>>) attributes {dimension_semantics = [#tpu.dimension_semantics<parallel>, #tpu.dimension_semantics<parallel>], iteration_bounds = array<i64: 2, 4>, scalar_prefetch = 0 : i64, scratch_operands = 0 : i64, tpu.core_type = #tpu.core_type<tc>, window_params = [{transform_indices = @transform_0, window_bounds = array<i64: 1, 1, 4, 32>}, {pipeline_mode = #tpu.pipeline_mode<synchronous>, transform_indices = @transform_1, window_bounds = array<i64: 2, 32>}, {pipeline_mode = #tpu.pipeline_mode<synchronous>, transform_indices = @transform_2, window_bounds = array<i64: 1, 32>}, {pipeline_mode = #tpu.pipeline_mode<synchronous>, transform_indices = @transform_3, window_bounds = array<i64: 1, 32>}, {transform_indices = @transform_4, window_bounds = array<i64: 1, 1, 4, 32>}]} {
    %c0 = arith.constant 0 : index
    %c0_0 = arith.constant 0 : index
    %c0_1 = arith.constant 0 : index
    %c0_2 = arith.constant 0 : index
    %0 = vector.load %arg2[%c0, %c0_0, %c0_1, %c0_2] : memref<1x1x4x32xf32, #tpu.memory_space<vmem>>, vector<1x1x4x32xf32>
    %1 = vector.shape_cast %0 : vector<1x1x4x32xf32> to vector<4x32xf32>
    %c0_3 = arith.constant 0 : index
    %c0_4 = arith.constant 0 : index
    %2 = vector.load %arg3[%c0_3, %c0_4] : memref<2x32xf32, #tpu.memory_space<vmem>>, vector<1x32xf32>
    %cst = arith.constant 3.125000e-02 : f32
    %3 = vector.broadcast %cst : f32 to vector<1x32xf32>
    %4 = arith.mulf %2, %3 : vector<1x32xf32>
    %c1 = arith.constant 1 : index
    %c0_5 = arith.constant 0 : index
    %5 = vector.load %arg3[%c1, %c0_5] : memref<2x32xf32, #tpu.memory_space<vmem>>, vector<1x32xf32>
    %cst_6 = arith.constant 3.125000e-02 : f32
    %6 = vector.broadcast %cst_6 : f32 to vector<1x32xf32>
    %7 = arith.mulf %5, %6 : vector<1x32xf32>
    %8 = arith.mulf %4, %4 : vector<1x32xf32>
    %9 = arith.subf %7, %8 : vector<1x32xf32>
    %10 = vector.broadcast %4 : vector<1x32xf32> to vector<4x32xf32>
    %11 = arith.subf %1, %10 : vector<4x32xf32>
    %cst_7 = arith.constant 9.99999974E-6 : f32
    %12 = vector.broadcast %cst_7 : f32 to vector<1x32xf32>
    %13 = arith.addf %9, %12 : vector<1x32xf32>
    %14 = math.rsqrt %13 : vector<1x32xf32>
    %15 = vector.broadcast %14 : vector<1x32xf32> to vector<4x32xf32>
    %16 = arith.mulf %11, %15 : vector<4x32xf32>
    %c0_8 = arith.constant 0 : index
    %c0_9 = arith.constant 0 : index
    %17 = vector.load %arg4[%c0_8, %c0_9] : memref<1x32xf32, #tpu.memory_space<vmem>>, vector<1x32xf32>
    %18 = vector.broadcast %17 : vector<1x32xf32> to vector<4x32xf32>
    %19 = arith.mulf %16, %18 : vector<4x32xf32>
    %c0_10 = arith.constant 0 : index
    %c0_11 = arith.constant 0 : index
    %20 = vector.load %arg5[%c0_10, %c0_11] : memref<1x32xf32, #tpu.memory_space<vmem>>, vector<1x32xf32>
    %21 = vector.broadcast %20 : vector<1x32xf32> to vector<4x32xf32>
    %22 = arith.addf %19, %21 : vector<4x32xf32>
    %cst_12 = arith.constant 0.000000e+00 : f32
    %23 = vector.broadcast %cst_12 : f32 to vector<4x32xf32>
    %24 = arith.cmpf oge, %22, %23 : vector<4x32xf32>
    %cst_13 = arith.constant 2.000000e-01 : f32
    %25 = vector.broadcast %cst_13 : f32 to vector<4x32xf32>
    %26 = arith.mulf %25, %22 : vector<4x32xf32>
    %27 = arith.select %24, %22, %26 : vector<4x32xi1>, vector<4x32xf32>
    %28 = arith.truncf %27 : vector<4x32xf32> to vector<4x32xbf16>
    %c0_14 = arith.constant 0 : index
    %c0_15 = arith.constant 0 : index
    %c0_16 = arith.constant 0 : index
    %c0_17 = arith.constant 0 : index
    %29 = vector.load %arg6[%c0_14, %c0_15, %c0_16, %c0_17] : memref<1x1x4x32xbf16, #tpu.memory_space<vmem>>, vector<1x1x4x32xbf16>
    %30 = vector.shape_cast %29 : vector<1x1x4x32xbf16> to vector<4x32xbf16>
    %31 = vector.shape_cast %28 : vector<4x32xbf16> to vector<1x1x4x32xbf16>
    tpu.vector_store %arg6[%c0_14, %c0_15, %c0_16, %c0_17], %31 {strides = array<i32>} : memref<1x1x4x32xbf16, #tpu.memory_space<vmem>>, vector<1x1x4x32xbf16>,
    return
  }
  func.func @transform_0(%arg0: i32, %arg1: i32) -> (i32, i32, i32, i32) {
    %c0_i32 = arith.constant 0 : i32
    %c0_i32_0 = arith.constant 0 : i32
    %c0_i32_1 = arith.constant 0 : i32
    return %arg0, %arg1, %c0_i32, %c0_i32_0 : i32, i32, i32, i32
  }
  func.func @transform_1(%arg0: i32, %arg1: i32) -> (i32, i32) {
    %c0_i32 = arith.constant 0 : i32
    %c0_i32_0 = arith.constant 0 : i32
    %c0_i32_1 = arith.constant 0 : i32
    return %c0_i32, %c0_i32_0 : i32, i32
  }
  func.func @transform_2(%arg0: i32, %arg1: i32) -> (i32, i32) {
    %c0_i32 = arith.constant 0 : i32
    %c0_i32_0 = arith.constant 0 : i32
    %c0_i32_1 = arith.constant 0 : i32
    return %c0_i32, %c0_i32_0 : i32, i32
  }
  func.func @transform_3(%arg0: i32, %arg1: i32) -> (i32, i32) {
    %c0_i32 = arith.constant 0 : i32
    %c0_i32_0 = arith.constant 0 : i32
    %c0_i32_1 = arith.constant 0 : i32
    return %c0_i32, %c0_i32_0 : i32, i32
  }
  func.func @transform_4(%arg0: i32, %arg1: i32) -> (i32, i32, i32, i32) {
    %c0_i32 = arith.constant 0 : i32
    %c0_i32_0 = arith.constant 0 : i32
    %c0_i32_1 = arith.constant 0 : i32
    return %arg0, %arg1, %c0_i32, %c0_i32_0 : i32, i32, i32, i32
  }
}

module attributes {stable_mosaic.version = 11 : i64} {
  func.func @kernel(%arg0: i32, %arg1: i32, %arg2: memref<1x2x5x16xbf16, #tpu.memory_space<vmem>>, %arg3: memref<1x2x5x16xbf16, #tpu.memory_space<vmem>>, %arg4: memref<1x2x5x16xbf16, #tpu.memory_space<vmem>>, %arg5: memref<1x2x5x16xbf16, #tpu.memory_space<vmem>>, %arg6: memref<16x16x32xbf16, #tpu.memory_space<vmem>>, %arg7: memref<1x32xf32, #tpu.memory_space<vmem>>, %arg8: memref<1x1x4x32xf32, #tpu.memory_space<vmem>>, %arg9: memref<1x2x32xf32, #tpu.memory_space<vmem>>) attributes {dimension_semantics = [#tpu.dimension_semantics<parallel>, #tpu.dimension_semantics<arbitrary>], iteration_bounds = array<i64: 2, 4>, scalar_prefetch = 0 : i64, scratch_operands = 0 : i64, tpu.core_type = #tpu.core_type<tc>, window_params = [{transform_indices = @transform_0, window_bounds = array<i64: 1, 2, 5, 16>}, {transform_indices = @transform_1, window_bounds = array<i64: 1, 2, 5, 16>}, {transform_indices = @transform_2, window_bounds = array<i64: 1, 2, 5, 16>}, {transform_indices = @transform_3, window_bounds = array<i64: 1, 2, 5, 16>}, {pipeline_mode = #tpu.pipeline_mode<synchronous>, transform_indices = @transform_4, window_bounds = array<i64: 16, 16, 32>}, {pipeline_mode = #tpu.pipeline_mode<synchronous>, transform_indices = @transform_5, window_bounds = array<i64: 1, 32>}, {transform_indices = @transform_6, window_bounds = array<i64: 1, 1, 4, 32>}, {transform_indices = @transform_7, window_bounds = array<i64: 1, 2, 32>}]} {
    %c0 = arith.constant 0 : index
    %c0_0 = arith.constant 0 : index
    %c0_1 = arith.constant 0 : index
    %c0_2 = arith.constant 0 : index
    %0 = vector.load %arg2[%c0, %c0_0, %c0_1, %c0_2] : memref<1x2x5x16xbf16, #tpu.memory_space<vmem>>, vector<1x1x5x16xbf16>
    %1 = vector.shape_cast %0 : vector<1x1x5x16xbf16> to vector<5x16xbf16>
    %c0_3 = arith.constant 0 : index
    %c1 = arith.constant 1 : index
    %c0_4 = arith.constant 0 : index
    %c0_5 = arith.constant 0 : index
    %2 = vector.load %arg2[%c0_3, %c1, %c0_4, %c0_5] : memref<1x2x5x16xbf16, #tpu.memory_space<vmem>>, vector<1x1x5x16xbf16>
    %3 = vector.shape_cast %2 : vector<1x1x5x16xbf16> to vector<5x16xbf16>
    %c0_6 = arith.constant 0 : index
    %c0_7 = arith.constant 0 : index
    %c0_8 = arith.constant 0 : index
    %c0_9 = arith.constant 0 : index
    %4 = vector.load %arg3[%c0_6, %c0_7, %c0_8, %c0_9] : memref<1x2x5x16xbf16, #tpu.memory_space<vmem>>, vector<1x1x5x16xbf16>
    %5 = vector.shape_cast %4 : vector<1x1x5x16xbf16> to vector<5x16xbf16>
    %c0_10 = arith.constant 0 : index
    %c1_11 = arith.constant 1 : index
    %c0_12 = arith.constant 0 : index
    %c0_13 = arith.constant 0 : index
    %6 = vector.load %arg3[%c0_10, %c1_11, %c0_12, %c0_13] : memref<1x2x5x16xbf16, #tpu.memory_space<vmem>>, vector<1x1x5x16xbf16>
    %7 = vector.shape_cast %6 : vector<1x1x5x16xbf16> to vector<5x16xbf16>
    %c0_14 = arith.constant 0 : index
    %c0_15 = arith.constant 0 : index
    %c0_16 = arith.constant 0 : index
    %c0_17 = arith.constant 0 : index
    %8 = vector.load %arg4[%c0_14, %c0_15, %c0_16, %c0_17] : memref<1x2x5x16xbf16, #tpu.memory_space<vmem>>, vector<1x1x5x16xbf16>
    %9 = vector.shape_cast %8 : vector<1x1x5x16xbf16> to vector<5x16xbf16>
    %c0_18 = arith.constant 0 : index
    %c1_19 = arith.constant 1 : index
    %c0_20 = arith.constant 0 : index
    %c0_21 = arith.constant 0 : index
    %10 = vector.load %arg4[%c0_18, %c1_19, %c0_20, %c0_21] : memref<1x2x5x16xbf16, #tpu.memory_space<vmem>>, vector<1x1x5x16xbf16>
    %11 = vector.shape_cast %10 : vector<1x1x5x16xbf16> to vector<5x16xbf16>
    %c0_22 = arith.constant 0 : index
    %c0_23 = arith.constant 0 : index
    %c0_24 = arith.constant 0 : index
    %c0_25 = arith.constant 0 : index
    %12 = vector.load %arg5[%c0_22, %c0_23, %c0_24, %c0_25] : memref<1x2x5x16xbf16, #tpu.memory_space<vmem>>, vector<1x1x5x16xbf16>
    %13 = vector.shape_cast %12 : vector<1x1x5x16xbf16> to vector<5x16xbf16>
    %c0_26 = arith.constant 0 : index
    %c1_27 = arith.constant 1 : index
    %c0_28 = arith.constant 0 : index
    %c0_29 = arith.constant 0 : index
    %14 = vector.load %arg5[%c0_26, %c1_27, %c0_28, %c0_29] : memref<1x2x5x16xbf16, #tpu.memory_space<vmem>>, vector<1x1x5x16xbf16>
    %15 = vector.shape_cast %14 : vector<1x1x5x16xbf16> to vector<5x16xbf16>
    %cst = arith.constant 0.000000e+00 : f32
    %16 = vector.broadcast %cst : f32 to vector<4x32xf32>
    %17 = vector.extract_strided_slice %1 {offsets = [0, 0], sizes = [4, 16], strides = [1, 1]} : vector<5x16xbf16> to vector<4x16xbf16>
    %c0_30 = arith.constant 0 : index
    %c0_31 = arith.constant 0 : index
    %c0_32 = arith.constant 0 : index
    %18 = vector.load %arg6[%c0_30, %c0_31, %c0_32] : memref<16x16x32xbf16, #tpu.memory_space<vmem>>, vector<1x16x32xbf16>
    %19 = vector.shape_cast %18 : vector<1x16x32xbf16> to vector<16x32xbf16>
    %cst_33 = arith.constant dense<0.000000e+00> : vector<4x32xf32>
    %20 = tpu.matmul %17, %19, %cst_33 {dimension_numbers = #tpu.dot_dimension_numbers<[1], [0], [0], [1], [0, 0, 1, 1], [], []>} : vector<4x16xbf16>, vector<16x32xbf16>, vector<4x32xf32> -> vector<4x32xf32>
    %21 = arith.addf %16, %20 : vector<4x32xf32>
    %22 = vector.extract_strided_slice %9 {offsets = [0, 0], sizes = [4, 16], strides = [1, 1]} : vector<5x16xbf16> to vector<4x16xbf16>
    %c1_34 = arith.constant 1 : index
    %c0_35 = arith.constant 0 : index
    %c0_36 = arith.constant 0 : index
    %23 = vector.load %arg6[%c1_34, %c0_35, %c0_36] : memref<16x16x32xbf16, #tpu.memory_space<vmem>>, vector<1x16x32xbf16>
    %24 = vector.shape_cast %23 : vector<1x16x32xbf16> to vector<16x32xbf16>
    %cst_37 = arith.constant dense<0.000000e+00> : vector<4x32xf32>
    %25 = tpu.matmul %22, %24, %cst_37 {dimension_numbers = #tpu.dot_dimension_numbers<[1], [0], [0], [1], [0, 0, 1, 1], [], []>} : vector<4x16xbf16>, vector<16x32xbf16>, vector<4x32xf32> -> vector<4x32xf32>
    %26 = arith.addf %21, %25 : vector<4x32xf32>
    %27 = vector.extract_strided_slice %1 {offsets = [1, 0], sizes = [4, 16], strides = [1, 1]} : vector<5x16xbf16> to vector<4x16xbf16>
    %c2 = arith.constant 2 : index
    %c0_38 = arith.constant 0 : index
    %c0_39 = arith.constant 0 : index
    %28 = vector.load %arg6[%c2, %c0_38, %c0_39] : memref<16x16x32xbf16, #tpu.memory_space<vmem>>, vector<1x16x32xbf16>
    %29 = vector.shape_cast %28 : vector<1x16x32xbf16> to vector<16x32xbf16>
    %cst_40 = arith.constant dense<0.000000e+00> : vector<4x32xf32>
    %30 = tpu.matmul %27, %29, %cst_40 {dimension_numbers = #tpu.dot_dimension_numbers<[1], [0], [0], [1], [0, 0, 1, 1], [], []>} : vector<4x16xbf16>, vector<16x32xbf16>, vector<4x32xf32> -> vector<4x32xf32>
    %31 = arith.addf %26, %30 : vector<4x32xf32>
    %32 = vector.extract_strided_slice %9 {offsets = [1, 0], sizes = [4, 16], strides = [1, 1]} : vector<5x16xbf16> to vector<4x16xbf16>
    %c3 = arith.constant 3 : index
    %c0_41 = arith.constant 0 : index
    %c0_42 = arith.constant 0 : index
    %33 = vector.load %arg6[%c3, %c0_41, %c0_42] : memref<16x16x32xbf16, #tpu.memory_space<vmem>>, vector<1x16x32xbf16>
    %34 = vector.shape_cast %33 : vector<1x16x32xbf16> to vector<16x32xbf16>
    %cst_43 = arith.constant dense<0.000000e+00> : vector<4x32xf32>
    %35 = tpu.matmul %32, %34, %cst_43 {dimension_numbers = #tpu.dot_dimension_numbers<[1], [0], [0], [1], [0, 0, 1, 1], [], []>} : vector<4x16xbf16>, vector<16x32xbf16>, vector<4x32xf32> -> vector<4x32xf32>
    %36 = arith.addf %31, %35 : vector<4x32xf32>
    %37 = vector.extract_strided_slice %3 {offsets = [0, 0], sizes = [4, 16], strides = [1, 1]} : vector<5x16xbf16> to vector<4x16xbf16>
    %c4 = arith.constant 4 : index
    %c0_44 = arith.constant 0 : index
    %c0_45 = arith.constant 0 : index
    %38 = vector.load %arg6[%c4, %c0_44, %c0_45] : memref<16x16x32xbf16, #tpu.memory_space<vmem>>, vector<1x16x32xbf16>
    %39 = vector.shape_cast %38 : vector<1x16x32xbf16> to vector<16x32xbf16>
    %cst_46 = arith.constant dense<0.000000e+00> : vector<4x32xf32>
    %40 = tpu.matmul %37, %39, %cst_46 {dimension_numbers = #tpu.dot_dimension_numbers<[1], [0], [0], [1], [0, 0, 1, 1], [], []>} : vector<4x16xbf16>, vector<16x32xbf16>, vector<4x32xf32> -> vector<4x32xf32>
    %41 = arith.addf %36, %40 : vector<4x32xf32>
    %42 = vector.extract_strided_slice %11 {offsets = [0, 0], sizes = [4, 16], strides = [1, 1]} : vector<5x16xbf16> to vector<4x16xbf16>
    %c5 = arith.constant 5 : index
    %c0_47 = arith.constant 0 : index
    %c0_48 = arith.constant 0 : index
    %43 = vector.load %arg6[%c5, %c0_47, %c0_48] : memref<16x16x32xbf16, #tpu.memory_space<vmem>>, vector<1x16x32xbf16>
    %44 = vector.shape_cast %43 : vector<1x16x32xbf16> to vector<16x32xbf16>
    %cst_49 = arith.constant dense<0.000000e+00> : vector<4x32xf32>
    %45 = tpu.matmul %42, %44, %cst_49 {dimension_numbers = #tpu.dot_dimension_numbers<[1], [0], [0], [1], [0, 0, 1, 1], [], []>} : vector<4x16xbf16>, vector<16x32xbf16>, vector<4x32xf32> -> vector<4x32xf32>
    %46 = arith.addf %41, %45 : vector<4x32xf32>
    %47 = vector.extract_strided_slice %3 {offsets = [1, 0], sizes = [4, 16], strides = [1, 1]} : vector<5x16xbf16> to vector<4x16xbf16>
    %c6 = arith.constant 6 : index
    %c0_50 = arith.constant 0 : index
    %c0_51 = arith.constant 0 : index
    %48 = vector.load %arg6[%c6, %c0_50, %c0_51] : memref<16x16x32xbf16, #tpu.memory_space<vmem>>, vector<1x16x32xbf16>
    %49 = vector.shape_cast %48 : vector<1x16x32xbf16> to vector<16x32xbf16>
    %cst_52 = arith.constant dense<0.000000e+00> : vector<4x32xf32>
    %50 = tpu.matmul %47, %49, %cst_52 {dimension_numbers = #tpu.dot_dimension_numbers<[1], [0], [0], [1], [0, 0, 1, 1], [], []>} : vector<4x16xbf16>, vector<16x32xbf16>, vector<4x32xf32> -> vector<4x32xf32>
    %51 = arith.addf %46, %50 : vector<4x32xf32>
    %52 = vector.extract_strided_slice %11 {offsets = [1, 0], sizes = [4, 16], strides = [1, 1]} : vector<5x16xbf16> to vector<4x16xbf16>
    %c7 = arith.constant 7 : index
    %c0_53 = arith.constant 0 : index
    %c0_54 = arith.constant 0 : index
    %53 = vector.load %arg6[%c7, %c0_53, %c0_54] : memref<16x16x32xbf16, #tpu.memory_space<vmem>>, vector<1x16x32xbf16>
    %54 = vector.shape_cast %53 : vector<1x16x32xbf16> to vector<16x32xbf16>
    %cst_55 = arith.constant dense<0.000000e+00> : vector<4x32xf32>
    %55 = tpu.matmul %52, %54, %cst_55 {dimension_numbers = #tpu.dot_dimension_numbers<[1], [0], [0], [1], [0, 0, 1, 1], [], []>} : vector<4x16xbf16>, vector<16x32xbf16>, vector<4x32xf32> -> vector<4x32xf32>
    %56 = arith.addf %51, %55 : vector<4x32xf32>
    %57 = vector.extract_strided_slice %5 {offsets = [0, 0], sizes = [4, 16], strides = [1, 1]} : vector<5x16xbf16> to vector<4x16xbf16>
    %c8 = arith.constant 8 : index
    %c0_56 = arith.constant 0 : index
    %c0_57 = arith.constant 0 : index
    %58 = vector.load %arg6[%c8, %c0_56, %c0_57] : memref<16x16x32xbf16, #tpu.memory_space<vmem>>, vector<1x16x32xbf16>
    %59 = vector.shape_cast %58 : vector<1x16x32xbf16> to vector<16x32xbf16>
    %cst_58 = arith.constant dense<0.000000e+00> : vector<4x32xf32>
    %60 = tpu.matmul %57, %59, %cst_58 {dimension_numbers = #tpu.dot_dimension_numbers<[1], [0], [0], [1], [0, 0, 1, 1], [], []>} : vector<4x16xbf16>, vector<16x32xbf16>, vector<4x32xf32> -> vector<4x32xf32>
    %61 = arith.addf %56, %60 : vector<4x32xf32>
    %62 = vector.extract_strided_slice %13 {offsets = [0, 0], sizes = [4, 16], strides = [1, 1]} : vector<5x16xbf16> to vector<4x16xbf16>
    %c9 = arith.constant 9 : index
    %c0_59 = arith.constant 0 : index
    %c0_60 = arith.constant 0 : index
    %63 = vector.load %arg6[%c9, %c0_59, %c0_60] : memref<16x16x32xbf16, #tpu.memory_space<vmem>>, vector<1x16x32xbf16>
    %64 = vector.shape_cast %63 : vector<1x16x32xbf16> to vector<16x32xbf16>
    %cst_61 = arith.constant dense<0.000000e+00> : vector<4x32xf32>
    %65 = tpu.matmul %62, %64, %cst_61 {dimension_numbers = #tpu.dot_dimension_numbers<[1], [0], [0], [1], [0, 0, 1, 1], [], []>} : vector<4x16xbf16>, vector<16x32xbf16>, vector<4x32xf32> -> vector<4x32xf32>
    %66 = arith.addf %61, %65 : vector<4x32xf32>
    %67 = vector.extract_strided_slice %5 {offsets = [1, 0], sizes = [4, 16], strides = [1, 1]} : vector<5x16xbf16> to vector<4x16xbf16>
    %c10 = arith.constant 10 : index
    %c0_62 = arith.constant 0 : index
    %c0_63 = arith.constant 0 : index
    %68 = vector.load %arg6[%c10, %c0_62, %c0_63] : memref<16x16x32xbf16, #tpu.memory_space<vmem>>, vector<1x16x32xbf16>
    %69 = vector.shape_cast %68 : vector<1x16x32xbf16> to vector<16x32xbf16>
    %cst_64 = arith.constant dense<0.000000e+00> : vector<4x32xf32>
    %70 = tpu.matmul %67, %69, %cst_64 {dimension_numbers = #tpu.dot_dimension_numbers<[1], [0], [0], [1], [0, 0, 1, 1], [], []>} : vector<4x16xbf16>, vector<16x32xbf16>, vector<4x32xf32> -> vector<4x32xf32>
    %71 = arith.addf %66, %70 : vector<4x32xf32>
    %72 = vector.extract_strided_slice %13 {offsets = [1, 0], sizes = [4, 16], strides = [1, 1]} : vector<5x16xbf16> to vector<4x16xbf16>
    %c11 = arith.constant 11 : index
    %c0_65 = arith.constant 0 : index
    %c0_66 = arith.constant 0 : index
    %73 = vector.load %arg6[%c11, %c0_65, %c0_66] : memref<16x16x32xbf16, #tpu.memory_space<vmem>>, vector<1x16x32xbf16>
    %74 = vector.shape_cast %73 : vector<1x16x32xbf16> to vector<16x32xbf16>
    %cst_67 = arith.constant dense<0.000000e+00> : vector<4x32xf32>
    %75 = tpu.matmul %72, %74, %cst_67 {dimension_numbers = #tpu.dot_dimension_numbers<[1], [0], [0], [1], [0, 0, 1, 1], [], []>} : vector<4x16xbf16>, vector<16x32xbf16>, vector<4x32xf32> -> vector<4x32xf32>
    %76 = arith.addf %71, %75 : vector<4x32xf32>
    %77 = vector.extract_strided_slice %7 {offsets = [0, 0], sizes = [4, 16], strides = [1, 1]} : vector<5x16xbf16> to vector<4x16xbf16>
    %c12 = arith.constant 12 : index
    %c0_68 = arith.constant 0 : index
    %c0_69 = arith.constant 0 : index
    %78 = vector.load %arg6[%c12, %c0_68, %c0_69] : memref<16x16x32xbf16, #tpu.memory_space<vmem>>, vector<1x16x32xbf16>
    %79 = vector.shape_cast %78 : vector<1x16x32xbf16> to vector<16x32xbf16>
    %cst_70 = arith.constant dense<0.000000e+00> : vector<4x32xf32>
    %80 = tpu.matmul %77, %79, %cst_70 {dimension_numbers = #tpu.dot_dimension_numbers<[1], [0], [0], [1], [0, 0, 1, 1], [], []>} : vector<4x16xbf16>, vector<16x32xbf16>, vector<4x32xf32> -> vector<4x32xf32>
    %81 = arith.addf %76, %80 : vector<4x32xf32>
    %82 = vector.extract_strided_slice %15 {offsets = [0, 0], sizes = [4, 16], strides = [1, 1]} : vector<5x16xbf16> to vector<4x16xbf16>
    %c13 = arith.constant 13 : index
    %c0_71 = arith.constant 0 : index
    %c0_72 = arith.constant 0 : index
    %83 = vector.load %arg6[%c13, %c0_71, %c0_72] : memref<16x16x32xbf16, #tpu.memory_space<vmem>>, vector<1x16x32xbf16>
    %84 = vector.shape_cast %83 : vector<1x16x32xbf16> to vector<16x32xbf16>
    %cst_73 = arith.constant dense<0.000000e+00> : vector<4x32xf32>
    %85 = tpu.matmul %82, %84, %cst_73 {dimension_numbers = #tpu.dot_dimension_numbers<[1], [0], [0], [1], [0, 0, 1, 1], [], []>} : vector<4x16xbf16>, vector<16x32xbf16>, vector<4x32xf32> -> vector<4x32xf32>
    %86 = arith.addf %81, %85 : vector<4x32xf32>
    %87 = vector.extract_strided_slice %7 {offsets = [1, 0], sizes = [4, 16], strides = [1, 1]} : vector<5x16xbf16> to vector<4x16xbf16>
    %c14 = arith.constant 14 : index
    %c0_74 = arith.constant 0 : index
    %c0_75 = arith.constant 0 : index
    %88 = vector.load %arg6[%c14, %c0_74, %c0_75] : memref<16x16x32xbf16, #tpu.memory_space<vmem>>, vector<1x16x32xbf16>
    %89 = vector.shape_cast %88 : vector<1x16x32xbf16> to vector<16x32xbf16>
    %cst_76 = arith.constant dense<0.000000e+00> : vector<4x32xf32>
    %90 = tpu.matmul %87, %89, %cst_76 {dimension_numbers = #tpu.dot_dimension_numbers<[1], [0], [0], [1], [0, 0, 1, 1], [], []>} : vector<4x16xbf16>, vector<16x32xbf16>, vector<4x32xf32> -> vector<4x32xf32>
    %91 = arith.addf %86, %90 : vector<4x32xf32>
    %92 = vector.extract_strided_slice %15 {offsets = [1, 0], sizes = [4, 16], strides = [1, 1]} : vector<5x16xbf16> to vector<4x16xbf16>
    %c15 = arith.constant 15 : index
    %c0_77 = arith.constant 0 : index
    %c0_78 = arith.constant 0 : index
    %93 = vector.load %arg6[%c15, %c0_77, %c0_78] : memref<16x16x32xbf16, #tpu.memory_space<vmem>>, vector<1x16x32xbf16>
    %94 = vector.shape_cast %93 : vector<1x16x32xbf16> to vector<16x32xbf16>
    %cst_79 = arith.constant dense<0.000000e+00> : vector<4x32xf32>
    %95 = tpu.matmul %92, %94, %cst_79 {dimension_numbers = #tpu.dot_dimension_numbers<[1], [0], [0], [1], [0, 0, 1, 1], [], []>} : vector<4x16xbf16>, vector<16x32xbf16>, vector<4x32xf32> -> vector<4x32xf32>
    %96 = arith.addf %91, %95 : vector<4x32xf32>
    %c0_80 = arith.constant 0 : index
    %c0_81 = arith.constant 0 : index
    %97 = vector.load %arg7[%c0_80, %c0_81] : memref<1x32xf32, #tpu.memory_space<vmem>>, vector<1x32xf32>
    %98 = vector.broadcast %97 : vector<1x32xf32> to vector<4x32xf32>
    %99 = arith.addf %96, %98 : vector<4x32xf32>
    %c0_i32 = arith.constant 0 : i32
    %100 = arith.cmpi eq, %arg1, %c0_i32 : i32
    %101 = arith.extui %100 : i1 to i32
    %c0_i32_82 = arith.constant 0 : i32
    %102 = arith.cmpi ne, %101, %c0_i32_82 : i32
    scf.if %102 {
      %cst_101 = arith.constant 0.000000e+00 : f32
      %123 = vector.broadcast %cst_101 : f32 to vector<1x2x32xf32>
      %c0_102 = arith.constant 0 : index
      %c0_103 = arith.constant 0 : index
      %c0_104 = arith.constant 0 : index
      %124 = vector.load %arg9[%c0_102, %c0_103, %c0_104] : memref<1x2x32xf32, #tpu.memory_space<vmem>>, vector<1x2x32xf32>
      tpu.vector_store %arg9[%c0_102, %c0_103, %c0_104], %123 {strides = array<i32>} : memref<1x2x32xf32, #tpu.memory_space<vmem>>, vector<1x2x32xf32>,
    } else {
    }
    %c0_83 = arith.constant 0 : index
    %c0_84 = arith.constant 0 : index
    %c0_85 = arith.constant 0 : index
    %103 = vector.load %arg9[%c0_83, %c0_84, %c0_85] : memref<1x2x32xf32, #tpu.memory_space<vmem>>, vector<1x1x32xf32>
    %104 = vector.shape_cast %103 : vector<1x1x32xf32> to vector<1x32xf32>
    %cst_86 = arith.constant dense<0.000000e+00> : vector<32xf32>
    %105 = vector.multi_reduction <add>, %99, %cst_86 [0] : vector<4x32xf32> to vector<32xf32>
    %106 = vector.shape_cast %105 : vector<32xf32> to vector<1x32xf32>
    %107 = arith.addf %104, %106 : vector<1x32xf32>
    %c0_87 = arith.constant 0 : index
    %c0_88 = arith.constant 0 : index
    %c0_89 = arith.constant 0 : index
    %108 = vector.load %arg9[%c0_87, %c0_88, %c0_89] : memref<1x2x32xf32, #tpu.memory_space<vmem>>, vector<1x1x32xf32>
    %109 = vector.shape_cast %108 : vector<1x1x32xf32> to vector<1x32xf32>
    %110 = vector.shape_cast %107 : vector<1x32xf32> to vector<1x1x32xf32>
    tpu.vector_store %arg9[%c0_87, %c0_88, %c0_89], %110 {strides = array<i32>} : memref<1x2x32xf32, #tpu.memory_space<vmem>>, vector<1x1x32xf32>,
    %c0_90 = arith.constant 0 : index
    %c1_91 = arith.constant 1 : index
    %c0_92 = arith.constant 0 : index
    %111 = vector.load %arg9[%c0_90, %c1_91, %c0_92] : memref<1x2x32xf32, #tpu.memory_space<vmem>>, vector<1x1x32xf32>
    %112 = vector.shape_cast %111 : vector<1x1x32xf32> to vector<1x32xf32>
    %113 = arith.mulf %99, %99 : vector<4x32xf32>
    %cst_93 = arith.constant dense<0.000000e+00> : vector<32xf32>
    %114 = vector.multi_reduction <add>, %113, %cst_93 [0] : vector<4x32xf32> to vector<32xf32>
    %115 = vector.shape_cast %114 : vector<32xf32> to vector<1x32xf32>
    %116 = arith.addf %112, %115 : vector<1x32xf32>
    %c0_94 = arith.constant 0 : index
    %c1_95 = arith.constant 1 : index
    %c0_96 = arith.constant 0 : index
    %117 = vector.load %arg9[%c0_94, %c1_95, %c0_96] : memref<1x2x32xf32, #tpu.memory_space<vmem>>, vector<1x1x32xf32>
    %118 = vector.shape_cast %117 : vector<1x1x32xf32> to vector<1x32xf32>
    %119 = vector.shape_cast %116 : vector<1x32xf32> to vector<1x1x32xf32>
    tpu.vector_store %arg9[%c0_94, %c1_95, %c0_96], %119 {strides = array<i32>} : memref<1x2x32xf32, #tpu.memory_space<vmem>>, vector<1x1x32xf32>,
    %c0_97 = arith.constant 0 : index
    %c0_98 = arith.constant 0 : index
    %c0_99 = arith.constant 0 : index
    %c0_100 = arith.constant 0 : index
    %120 = vector.load %arg8[%c0_97, %c0_98, %c0_99, %c0_100] : memref<1x1x4x32xf32, #tpu.memory_space<vmem>>, vector<1x1x4x32xf32>
    %121 = vector.shape_cast %120 : vector<1x1x4x32xf32> to vector<4x32xf32>
    %122 = vector.shape_cast %99 : vector<4x32xf32> to vector<1x1x4x32xf32>
    tpu.vector_store %arg8[%c0_97, %c0_98, %c0_99, %c0_100], %122 {strides = array<i32>} : memref<1x1x4x32xf32, #tpu.memory_space<vmem>>, vector<1x1x4x32xf32>,
    return
  }
  func.func @transform_0(%arg0: i32, %arg1: i32) -> (i32, i32, i32, i32) {
    %c0_i32 = arith.constant 0 : i32
    %c0_i32_0 = arith.constant 0 : i32
    %c0_i32_1 = arith.constant 0 : i32
    return %arg0, %arg1, %c0_i32, %c0_i32_0 : i32, i32, i32, i32
  }
  func.func @transform_1(%arg0: i32, %arg1: i32) -> (i32, i32, i32, i32) {
    %c1_i32 = arith.constant 1 : i32
    %0 = arith.addi %arg1, %c1_i32 : i32
    %c0_i32 = arith.constant 0 : i32
    %c0_i32_0 = arith.constant 0 : i32
    %c0_i32_1 = arith.constant 0 : i32
    return %arg0, %0, %c0_i32, %c0_i32_0 : i32, i32, i32, i32
  }
  func.func @transform_2(%arg0: i32, %arg1: i32) -> (i32, i32, i32, i32) {
    %c0_i32 = arith.constant 0 : i32
    %c0_i32_0 = arith.constant 0 : i32
    %c0_i32_1 = arith.constant 0 : i32
    return %arg0, %arg1, %c0_i32, %c0_i32_0 : i32, i32, i32, i32
  }
  func.func @transform_3(%arg0: i32, %arg1: i32) -> (i32, i32, i32, i32) {
    %c1_i32 = arith.constant 1 : i32
    %0 = arith.addi %arg1, %c1_i32 : i32
    %c0_i32 = arith.constant 0 : i32
    %c0_i32_0 = arith.constant 0 : i32
    %c0_i32_1 = arith.constant 0 : i32
    return %arg0, %0, %c0_i32, %c0_i32_0 : i32, i32, i32, i32
  }
  func.func @transform_4(%arg0: i32, %arg1: i32) -> (i32, i32, i32) {
    %c0_i32 = arith.constant 0 : i32
    %c0_i32_0 = arith.constant 0 : i32
    %c0_i32_1 = arith.constant 0 : i32
    %c0_i32_2 = arith.constant 0 : i32
    return %c0_i32, %c0_i32_0, %c0_i32_1 : i32, i32, i32
  }
  func.func @transform_5(%arg0: i32, %arg1: i32) -> (i32, i32) {
    %c0_i32 = arith.constant 0 : i32
    %c0_i32_0 = arith.constant 0 : i32
    %c0_i32_1 = arith.constant 0 : i32
    return %c0_i32, %c0_i32_0 : i32, i32
  }
  func.func @transform_6(%arg0: i32, %arg1: i32) -> (i32, i32, i32, i32) {
    %c0_i32 = arith.constant 0 : i32
    %c0_i32_0 = arith.constant 0 : i32
    %c0_i32_1 = arith.constant 0 : i32
    return %arg0, %arg1, %c0_i32, %c0_i32_0 : i32, i32, i32, i32
  }
  func.func @transform_7(%arg0: i32, %arg1: i32) -> (i32, i32, i32) {
    %c0_i32 = arith.constant 0 : i32
    %c0_i32_0 = arith.constant 0 : i32
    %c0_i32_1 = arith.constant 0 : i32
    return %arg0, %c0_i32, %c0_i32_0 : i32, i32, i32
  }
}

module attributes {stable_mosaic.version = 11 : i64} {
  func.func @kernel(%arg0: i32, %arg1: i32, %arg2: memref<1x1x6x32xbf16, #tpu.memory_space<vmem>>, %arg3: memref<1x1x6x32xbf16, #tpu.memory_space<vmem>>, %arg4: memref<1x1x6x32xbf16, #tpu.memory_space<vmem>>, %arg5: memref<1x1x6x32xbf16, #tpu.memory_space<vmem>>, %arg6: memref<16x32x64xbf16, #tpu.memory_space<vmem>>, %arg7: memref<1x64xf32, #tpu.memory_space<vmem>>, %arg8: memref<1x1x3x64xf32, #tpu.memory_space<vmem>>, %arg9: memref<1x2x64xf32, #tpu.memory_space<vmem>>) attributes {dimension_semantics = [#tpu.dimension_semantics<parallel>, #tpu.dimension_semantics<arbitrary>], iteration_bounds = array<i64: 2, 3>, scalar_prefetch = 0 : i64, scratch_operands = 0 : i64, tpu.core_type = #tpu.core_type<tc>, window_params = [{transform_indices = @transform_0, window_bounds = array<i64: 1, 1, 6, 32>}, {transform_indices = @transform_1, window_bounds = array<i64: 1, 1, 6, 32>}, {transform_indices = @transform_2, window_bounds = array<i64: 1, 1, 6, 32>}, {transform_indices = @transform_3, window_bounds = array<i64: 1, 1, 6, 32>}, {pipeline_mode = #tpu.pipeline_mode<synchronous>, transform_indices = @transform_4, window_bounds = array<i64: 16, 32, 64>}, {pipeline_mode = #tpu.pipeline_mode<synchronous>, transform_indices = @transform_5, window_bounds = array<i64: 1, 64>}, {transform_indices = @transform_6, window_bounds = array<i64: 1, 1, 3, 64>}, {transform_indices = @transform_7, window_bounds = array<i64: 1, 2, 64>}]} {
    %c0 = arith.constant 0 : index
    %c0_0 = arith.constant 0 : index
    %c0_1 = arith.constant 0 : index
    %c0_2 = arith.constant 0 : index
    %0 = vector.load %arg2[%c0, %c0_0, %c0_1, %c0_2] : memref<1x1x6x32xbf16, #tpu.memory_space<vmem>>, vector<1x1x6x32xbf16>
    %1 = vector.shape_cast %0 : vector<1x1x6x32xbf16> to vector<6x32xbf16>
    %c0_3 = arith.constant 0 : index
    %c0_4 = arith.constant 0 : index
    %c0_5 = arith.constant 0 : index
    %c0_6 = arith.constant 0 : index
    %2 = vector.load %arg3[%c0_3, %c0_4, %c0_5, %c0_6] : memref<1x1x6x32xbf16, #tpu.memory_space<vmem>>, vector<1x1x6x32xbf16>
    %3 = vector.shape_cast %2 : vector<1x1x6x32xbf16> to vector<6x32xbf16>
    %c0_7 = arith.constant 0 : index
    %c0_8 = arith.constant 0 : index
    %c0_9 = arith.constant 0 : index
    %c0_10 = arith.constant 0 : index
    %4 = vector.load %arg4[%c0_7, %c0_8, %c0_9, %c0_10] : memref<1x1x6x32xbf16, #tpu.memory_space<vmem>>, vector<1x1x6x32xbf16>
    %5 = vector.shape_cast %4 : vector<1x1x6x32xbf16> to vector<6x32xbf16>
    %c0_11 = arith.constant 0 : index
    %c0_12 = arith.constant 0 : index
    %c0_13 = arith.constant 0 : index
    %c0_14 = arith.constant 0 : index
    %6 = vector.load %arg5[%c0_11, %c0_12, %c0_13, %c0_14] : memref<1x1x6x32xbf16, #tpu.memory_space<vmem>>, vector<1x1x6x32xbf16>
    %7 = vector.shape_cast %6 : vector<1x1x6x32xbf16> to vector<6x32xbf16>
    %cst = arith.constant 0.000000e+00 : f32
    %8 = vector.broadcast %cst : f32 to vector<3x64xf32>
    %9 = vector.extract_strided_slice %1 {offsets = [0, 0], sizes = [3, 32], strides = [1, 1]} : vector<6x32xbf16> to vector<3x32xbf16>
    %c0_15 = arith.constant 0 : index
    %c0_16 = arith.constant 0 : index
    %c0_17 = arith.constant 0 : index
    %10 = vector.load %arg6[%c0_15, %c0_16, %c0_17] : memref<16x32x64xbf16, #tpu.memory_space<vmem>>, vector<1x32x64xbf16>
    %11 = vector.shape_cast %10 : vector<1x32x64xbf16> to vector<32x64xbf16>
    %cst_18 = arith.constant dense<0.000000e+00> : vector<3x64xf32>
    %12 = tpu.matmul %9, %11, %cst_18 {dimension_numbers = #tpu.dot_dimension_numbers<[1], [0], [0], [1], [0, 0, 1, 1], [], []>} : vector<3x32xbf16>, vector<32x64xbf16>, vector<3x64xf32> -> vector<3x64xf32>
    %13 = arith.addf %8, %12 : vector<3x64xf32>
    %14 = vector.extract_strided_slice %1 {offsets = [1, 0], sizes = [3, 32], strides = [1, 1]} : vector<6x32xbf16> to vector<3x32xbf16>
    %c1 = arith.constant 1 : index
    %c0_19 = arith.constant 0 : index
    %c0_20 = arith.constant 0 : index
    %15 = vector.load %arg6[%c1, %c0_19, %c0_20] : memref<16x32x64xbf16, #tpu.memory_space<vmem>>, vector<1x32x64xbf16>
    %16 = vector.shape_cast %15 : vector<1x32x64xbf16> to vector<32x64xbf16>
    %cst_21 = arith.constant dense<0.000000e+00> : vector<3x64xf32>
    %17 = tpu.matmul %14, %16, %cst_21 {dimension_numbers = #tpu.dot_dimension_numbers<[1], [0], [0], [1], [0, 0, 1, 1], [], []>} : vector<3x32xbf16>, vector<32x64xbf16>, vector<3x64xf32> -> vector<3x64xf32>
    %18 = arith.addf %13, %17 : vector<3x64xf32>
    %19 = vector.extract_strided_slice %1 {offsets = [2, 0], sizes = [3, 32], strides = [1, 1]} : vector<6x32xbf16> to vector<3x32xbf16>
    %c2 = arith.constant 2 : index
    %c0_22 = arith.constant 0 : index
    %c0_23 = arith.constant 0 : index
    %20 = vector.load %arg6[%c2, %c0_22, %c0_23] : memref<16x32x64xbf16, #tpu.memory_space<vmem>>, vector<1x32x64xbf16>
    %21 = vector.shape_cast %20 : vector<1x32x64xbf16> to vector<32x64xbf16>
    %cst_24 = arith.constant dense<0.000000e+00> : vector<3x64xf32>
    %22 = tpu.matmul %19, %21, %cst_24 {dimension_numbers = #tpu.dot_dimension_numbers<[1], [0], [0], [1], [0, 0, 1, 1], [], []>} : vector<3x32xbf16>, vector<32x64xbf16>, vector<3x64xf32> -> vector<3x64xf32>
    %23 = arith.addf %18, %22 : vector<3x64xf32>
    %24 = vector.extract_strided_slice %1 {offsets = [3, 0], sizes = [3, 32], strides = [1, 1]} : vector<6x32xbf16> to vector<3x32xbf16>
    %c3 = arith.constant 3 : index
    %c0_25 = arith.constant 0 : index
    %c0_26 = arith.constant 0 : index
    %25 = vector.load %arg6[%c3, %c0_25, %c0_26] : memref<16x32x64xbf16, #tpu.memory_space<vmem>>, vector<1x32x64xbf16>
    %26 = vector.shape_cast %25 : vector<1x32x64xbf16> to vector<32x64xbf16>
    %cst_27 = arith.constant dense<0.000000e+00> : vector<3x64xf32>
    %27 = tpu.matmul %24, %26, %cst_27 {dimension_numbers = #tpu.dot_dimension_numbers<[1], [0], [0], [1], [0, 0, 1, 1], [], []>} : vector<3x32xbf16>, vector<32x64xbf16>, vector<3x64xf32> -> vector<3x64xf32>
    %28 = arith.addf %23, %27 : vector<3x64xf32>
    %29 = vector.extract_strided_slice %3 {offsets = [0, 0], sizes = [3, 32], strides = [1, 1]} : vector<6x32xbf16> to vector<3x32xbf16>
    %c4 = arith.constant 4 : index
    %c0_28 = arith.constant 0 : index
    %c0_29 = arith.constant 0 : index
    %30 = vector.load %arg6[%c4, %c0_28, %c0_29] : memref<16x32x64xbf16, #tpu.memory_space<vmem>>, vector<1x32x64xbf16>
    %31 = vector.shape_cast %30 : vector<1x32x64xbf16> to vector<32x64xbf16>
    %cst_30 = arith.constant dense<0.000000e+00> : vector<3x64xf32>
    %32 = tpu.matmul %29, %31, %cst_30 {dimension_numbers = #tpu.dot_dimension_numbers<[1], [0], [0], [1], [0, 0, 1, 1], [], []>} : vector<3x32xbf16>, vector<32x64xbf16>, vector<3x64xf32> -> vector<3x64xf32>
    %33 = arith.addf %28, %32 : vector<3x64xf32>
    %34 = vector.extract_strided_slice %3 {offsets = [1, 0], sizes = [3, 32], strides = [1, 1]} : vector<6x32xbf16> to vector<3x32xbf16>
    %c5 = arith.constant 5 : index
    %c0_31 = arith.constant 0 : index
    %c0_32 = arith.constant 0 : index
    %35 = vector.load %arg6[%c5, %c0_31, %c0_32] : memref<16x32x64xbf16, #tpu.memory_space<vmem>>, vector<1x32x64xbf16>
    %36 = vector.shape_cast %35 : vector<1x32x64xbf16> to vector<32x64xbf16>
    %cst_33 = arith.constant dense<0.000000e+00> : vector<3x64xf32>
    %37 = tpu.matmul %34, %36, %cst_33 {dimension_numbers = #tpu.dot_dimension_numbers<[1], [0], [0], [1], [0, 0, 1, 1], [], []>} : vector<3x32xbf16>, vector<32x64xbf16>, vector<3x64xf32> -> vector<3x64xf32>
    %38 = arith.addf %33, %37 : vector<3x64xf32>
    %39 = vector.extract_strided_slice %3 {offsets = [2, 0], sizes = [3, 32], strides = [1, 1]} : vector<6x32xbf16> to vector<3x32xbf16>
    %c6 = arith.constant 6 : index
    %c0_34 = arith.constant 0 : index
    %c0_35 = arith.constant 0 : index
    %40 = vector.load %arg6[%c6, %c0_34, %c0_35] : memref<16x32x64xbf16, #tpu.memory_space<vmem>>, vector<1x32x64xbf16>
    %41 = vector.shape_cast %40 : vector<1x32x64xbf16> to vector<32x64xbf16>
    %cst_36 = arith.constant dense<0.000000e+00> : vector<3x64xf32>
    %42 = tpu.matmul %39, %41, %cst_36 {dimension_numbers = #tpu.dot_dimension_numbers<[1], [0], [0], [1], [0, 0, 1, 1], [], []>} : vector<3x32xbf16>, vector<32x64xbf16>, vector<3x64xf32> -> vector<3x64xf32>
    %43 = arith.addf %38, %42 : vector<3x64xf32>
    %44 = vector.extract_strided_slice %3 {offsets = [3, 0], sizes = [3, 32], strides = [1, 1]} : vector<6x32xbf16> to vector<3x32xbf16>
    %c7 = arith.constant 7 : index
    %c0_37 = arith.constant 0 : index
    %c0_38 = arith.constant 0 : index
    %45 = vector.load %arg6[%c7, %c0_37, %c0_38] : memref<16x32x64xbf16, #tpu.memory_space<vmem>>, vector<1x32x64xbf16>
    %46 = vector.shape_cast %45 : vector<1x32x64xbf16> to vector<32x64xbf16>
    %cst_39 = arith.constant dense<0.000000e+00> : vector<3x64xf32>
    %47 = tpu.matmul %44, %46, %cst_39 {dimension_numbers = #tpu.dot_dimension_numbers<[1], [0], [0], [1], [0, 0, 1, 1], [], []>} : vector<3x32xbf16>, vector<32x64xbf16>, vector<3x64xf32> -> vector<3x64xf32>
    %48 = arith.addf %43, %47 : vector<3x64xf32>
    %49 = vector.extract_strided_slice %5 {offsets = [0, 0], sizes = [3, 32], strides = [1, 1]} : vector<6x32xbf16> to vector<3x32xbf16>
    %c8 = arith.constant 8 : index
    %c0_40 = arith.constant 0 : index
    %c0_41 = arith.constant 0 : index
    %50 = vector.load %arg6[%c8, %c0_40, %c0_41] : memref<16x32x64xbf16, #tpu.memory_space<vmem>>, vector<1x32x64xbf16>
    %51 = vector.shape_cast %50 : vector<1x32x64xbf16> to vector<32x64xbf16>
    %cst_42 = arith.constant dense<0.000000e+00> : vector<3x64xf32>
    %52 = tpu.matmul %49, %51, %cst_42 {dimension_numbers = #tpu.dot_dimension_numbers<[1], [0], [0], [1], [0, 0, 1, 1], [], []>} : vector<3x32xbf16>, vector<32x64xbf16>, vector<3x64xf32> -> vector<3x64xf32>
    %53 = arith.addf %48, %52 : vector<3x64xf32>
    %54 = vector.extract_strided_slice %5 {offsets = [1, 0], sizes = [3, 32], strides = [1, 1]} : vector<6x32xbf16> to vector<3x32xbf16>
    %c9 = arith.constant 9 : index
    %c0_43 = arith.constant 0 : index
    %c0_44 = arith.constant 0 : index
    %55 = vector.load %arg6[%c9, %c0_43, %c0_44] : memref<16x32x64xbf16, #tpu.memory_space<vmem>>, vector<1x32x64xbf16>
    %56 = vector.shape_cast %55 : vector<1x32x64xbf16> to vector<32x64xbf16>
    %cst_45 = arith.constant dense<0.000000e+00> : vector<3x64xf32>
    %57 = tpu.matmul %54, %56, %cst_45 {dimension_numbers = #tpu.dot_dimension_numbers<[1], [0], [0], [1], [0, 0, 1, 1], [], []>} : vector<3x32xbf16>, vector<32x64xbf16>, vector<3x64xf32> -> vector<3x64xf32>
    %58 = arith.addf %53, %57 : vector<3x64xf32>
    %59 = vector.extract_strided_slice %5 {offsets = [2, 0], sizes = [3, 32], strides = [1, 1]} : vector<6x32xbf16> to vector<3x32xbf16>
    %c10 = arith.constant 10 : index
    %c0_46 = arith.constant 0 : index
    %c0_47 = arith.constant 0 : index
    %60 = vector.load %arg6[%c10, %c0_46, %c0_47] : memref<16x32x64xbf16, #tpu.memory_space<vmem>>, vector<1x32x64xbf16>
    %61 = vector.shape_cast %60 : vector<1x32x64xbf16> to vector<32x64xbf16>
    %cst_48 = arith.constant dense<0.000000e+00> : vector<3x64xf32>
    %62 = tpu.matmul %59, %61, %cst_48 {dimension_numbers = #tpu.dot_dimension_numbers<[1], [0], [0], [1], [0, 0, 1, 1], [], []>} : vector<3x32xbf16>, vector<32x64xbf16>, vector<3x64xf32> -> vector<3x64xf32>
    %63 = arith.addf %58, %62 : vector<3x64xf32>
    %64 = vector.extract_strided_slice %5 {offsets = [3, 0], sizes = [3, 32], strides = [1, 1]} : vector<6x32xbf16> to vector<3x32xbf16>
    %c11 = arith.constant 11 : index
    %c0_49 = arith.constant 0 : index
    %c0_50 = arith.constant 0 : index
    %65 = vector.load %arg6[%c11, %c0_49, %c0_50] : memref<16x32x64xbf16, #tpu.memory_space<vmem>>, vector<1x32x64xbf16>
    %66 = vector.shape_cast %65 : vector<1x32x64xbf16> to vector<32x64xbf16>
    %cst_51 = arith.constant dense<0.000000e+00> : vector<3x64xf32>
    %67 = tpu.matmul %64, %66, %cst_51 {dimension_numbers = #tpu.dot_dimension_numbers<[1], [0], [0], [1], [0, 0, 1, 1], [], []>} : vector<3x32xbf16>, vector<32x64xbf16>, vector<3x64xf32> -> vector<3x64xf32>
    %68 = arith.addf %63, %67 : vector<3x64xf32>
    %69 = vector.extract_strided_slice %7 {offsets = [0, 0], sizes = [3, 32], strides = [1, 1]} : vector<6x32xbf16> to vector<3x32xbf16>
    %c12 = arith.constant 12 : index
    %c0_52 = arith.constant 0 : index
    %c0_53 = arith.constant 0 : index
    %70 = vector.load %arg6[%c12, %c0_52, %c0_53] : memref<16x32x64xbf16, #tpu.memory_space<vmem>>, vector<1x32x64xbf16>
    %71 = vector.shape_cast %70 : vector<1x32x64xbf16> to vector<32x64xbf16>
    %cst_54 = arith.constant dense<0.000000e+00> : vector<3x64xf32>
    %72 = tpu.matmul %69, %71, %cst_54 {dimension_numbers = #tpu.dot_dimension_numbers<[1], [0], [0], [1], [0, 0, 1, 1], [], []>} : vector<3x32xbf16>, vector<32x64xbf16>, vector<3x64xf32> -> vector<3x64xf32>
    %73 = arith.addf %68, %72 : vector<3x64xf32>
    %74 = vector.extract_strided_slice %7 {offsets = [1, 0], sizes = [3, 32], strides = [1, 1]} : vector<6x32xbf16> to vector<3x32xbf16>
    %c13 = arith.constant 13 : index
    %c0_55 = arith.constant 0 : index
    %c0_56 = arith.constant 0 : index
    %75 = vector.load %arg6[%c13, %c0_55, %c0_56] : memref<16x32x64xbf16, #tpu.memory_space<vmem>>, vector<1x32x64xbf16>
    %76 = vector.shape_cast %75 : vector<1x32x64xbf16> to vector<32x64xbf16>
    %cst_57 = arith.constant dense<0.000000e+00> : vector<3x64xf32>
    %77 = tpu.matmul %74, %76, %cst_57 {dimension_numbers = #tpu.dot_dimension_numbers<[1], [0], [0], [1], [0, 0, 1, 1], [], []>} : vector<3x32xbf16>, vector<32x64xbf16>, vector<3x64xf32> -> vector<3x64xf32>
    %78 = arith.addf %73, %77 : vector<3x64xf32>
    %79 = vector.extract_strided_slice %7 {offsets = [2, 0], sizes = [3, 32], strides = [1, 1]} : vector<6x32xbf16> to vector<3x32xbf16>
    %c14 = arith.constant 14 : index
    %c0_58 = arith.constant 0 : index
    %c0_59 = arith.constant 0 : index
    %80 = vector.load %arg6[%c14, %c0_58, %c0_59] : memref<16x32x64xbf16, #tpu.memory_space<vmem>>, vector<1x32x64xbf16>
    %81 = vector.shape_cast %80 : vector<1x32x64xbf16> to vector<32x64xbf16>
    %cst_60 = arith.constant dense<0.000000e+00> : vector<3x64xf32>
    %82 = tpu.matmul %79, %81, %cst_60 {dimension_numbers = #tpu.dot_dimension_numbers<[1], [0], [0], [1], [0, 0, 1, 1], [], []>} : vector<3x32xbf16>, vector<32x64xbf16>, vector<3x64xf32> -> vector<3x64xf32>
    %83 = arith.addf %78, %82 : vector<3x64xf32>
    %84 = vector.extract_strided_slice %7 {offsets = [3, 0], sizes = [3, 32], strides = [1, 1]} : vector<6x32xbf16> to vector<3x32xbf16>
    %c15 = arith.constant 15 : index
    %c0_61 = arith.constant 0 : index
    %c0_62 = arith.constant 0 : index
    %85 = vector.load %arg6[%c15, %c0_61, %c0_62] : memref<16x32x64xbf16, #tpu.memory_space<vmem>>, vector<1x32x64xbf16>
    %86 = vector.shape_cast %85 : vector<1x32x64xbf16> to vector<32x64xbf16>
    %cst_63 = arith.constant dense<0.000000e+00> : vector<3x64xf32>
    %87 = tpu.matmul %84, %86, %cst_63 {dimension_numbers = #tpu.dot_dimension_numbers<[1], [0], [0], [1], [0, 0, 1, 1], [], []>} : vector<3x32xbf16>, vector<32x64xbf16>, vector<3x64xf32> -> vector<3x64xf32>
    %88 = arith.addf %83, %87 : vector<3x64xf32>
    %c0_64 = arith.constant 0 : index
    %c0_65 = arith.constant 0 : index
    %89 = vector.load %arg7[%c0_64, %c0_65] : memref<1x64xf32, #tpu.memory_space<vmem>>, vector<1x64xf32>
    %90 = vector.broadcast %89 : vector<1x64xf32> to vector<3x64xf32>
    %91 = arith.addf %88, %90 : vector<3x64xf32>
    %c0_i32 = arith.constant 0 : i32
    %92 = arith.cmpi eq, %arg1, %c0_i32 : i32
    %93 = arith.extui %92 : i1 to i32
    %c0_i32_66 = arith.constant 0 : i32
    %94 = arith.cmpi ne, %93, %c0_i32_66 : i32
    scf.if %94 {
      %cst_85 = arith.constant 0.000000e+00 : f32
      %115 = vector.broadcast %cst_85 : f32 to vector<1x2x64xf32>
      %c0_86 = arith.constant 0 : index
      %c0_87 = arith.constant 0 : index
      %c0_88 = arith.constant 0 : index
      %116 = vector.load %arg9[%c0_86, %c0_87, %c0_88] : memref<1x2x64xf32, #tpu.memory_space<vmem>>, vector<1x2x64xf32>
      tpu.vector_store %arg9[%c0_86, %c0_87, %c0_88], %115 {strides = array<i32>} : memref<1x2x64xf32, #tpu.memory_space<vmem>>, vector<1x2x64xf32>,
    } else {
    }
    %c0_67 = arith.constant 0 : index
    %c0_68 = arith.constant 0 : index
    %c0_69 = arith.constant 0 : index
    %95 = vector.load %arg9[%c0_67, %c0_68, %c0_69] : memref<1x2x64xf32, #tpu.memory_space<vmem>>, vector<1x1x64xf32>
    %96 = vector.shape_cast %95 : vector<1x1x64xf32> to vector<1x64xf32>
    %cst_70 = arith.constant dense<0.000000e+00> : vector<64xf32>
    %97 = vector.multi_reduction <add>, %91, %cst_70 [0] : vector<3x64xf32> to vector<64xf32>
    %98 = vector.shape_cast %97 : vector<64xf32> to vector<1x64xf32>
    %99 = arith.addf %96, %98 : vector<1x64xf32>
    %c0_71 = arith.constant 0 : index
    %c0_72 = arith.constant 0 : index
    %c0_73 = arith.constant 0 : index
    %100 = vector.load %arg9[%c0_71, %c0_72, %c0_73] : memref<1x2x64xf32, #tpu.memory_space<vmem>>, vector<1x1x64xf32>
    %101 = vector.shape_cast %100 : vector<1x1x64xf32> to vector<1x64xf32>
    %102 = vector.shape_cast %99 : vector<1x64xf32> to vector<1x1x64xf32>
    tpu.vector_store %arg9[%c0_71, %c0_72, %c0_73], %102 {strides = array<i32>} : memref<1x2x64xf32, #tpu.memory_space<vmem>>, vector<1x1x64xf32>,
    %c0_74 = arith.constant 0 : index
    %c1_75 = arith.constant 1 : index
    %c0_76 = arith.constant 0 : index
    %103 = vector.load %arg9[%c0_74, %c1_75, %c0_76] : memref<1x2x64xf32, #tpu.memory_space<vmem>>, vector<1x1x64xf32>
    %104 = vector.shape_cast %103 : vector<1x1x64xf32> to vector<1x64xf32>
    %105 = arith.mulf %91, %91 : vector<3x64xf32>
    %cst_77 = arith.constant dense<0.000000e+00> : vector<64xf32>
    %106 = vector.multi_reduction <add>, %105, %cst_77 [0] : vector<3x64xf32> to vector<64xf32>
    %107 = vector.shape_cast %106 : vector<64xf32> to vector<1x64xf32>
    %108 = arith.addf %104, %107 : vector<1x64xf32>
    %c0_78 = arith.constant 0 : index
    %c1_79 = arith.constant 1 : index
    %c0_80 = arith.constant 0 : index
    %109 = vector.load %arg9[%c0_78, %c1_79, %c0_80] : memref<1x2x64xf32, #tpu.memory_space<vmem>>, vector<1x1x64xf32>
    %110 = vector.shape_cast %109 : vector<1x1x64xf32> to vector<1x64xf32>
    %111 = vector.shape_cast %108 : vector<1x64xf32> to vector<1x1x64xf32>
    tpu.vector_store %arg9[%c0_78, %c1_79, %c0_80], %111 {strides = array<i32>} : memref<1x2x64xf32, #tpu.memory_space<vmem>>, vector<1x1x64xf32>,
    %c0_81 = arith.constant 0 : index
    %c0_82 = arith.constant 0 : index
    %c0_83 = arith.constant 0 : index
    %c0_84 = arith.constant 0 : index
    %112 = vector.load %arg8[%c0_81, %c0_82, %c0_83, %c0_84] : memref<1x1x3x64xf32, #tpu.memory_space<vmem>>, vector<1x1x3x64xf32>
    %113 = vector.shape_cast %112 : vector<1x1x3x64xf32> to vector<3x64xf32>
    %114 = vector.shape_cast %91 : vector<3x64xf32> to vector<1x1x3x64xf32>
    tpu.vector_store %arg8[%c0_81, %c0_82, %c0_83, %c0_84], %114 {strides = array<i32>} : memref<1x1x3x64xf32, #tpu.memory_space<vmem>>, vector<1x1x3x64xf32>,
    return
  }
  func.func @transform_0(%arg0: i32, %arg1: i32) -> (i32, i32, i32, i32) {
    %c0_i32 = arith.constant 0 : i32
    %0 = arith.addi %arg1, %c0_i32 : i32
    %c0_i32_0 = arith.constant 0 : i32
    %c0_i32_1 = arith.constant 0 : i32
    %c0_i32_2 = arith.constant 0 : i32
    return %arg0, %0, %c0_i32_0, %c0_i32_1 : i32, i32, i32, i32
  }
  func.func @transform_1(%arg0: i32, %arg1: i32) -> (i32, i32, i32, i32) {
    %c1_i32 = arith.constant 1 : i32
    %0 = arith.addi %arg1, %c1_i32 : i32
    %c0_i32 = arith.constant 0 : i32
    %c0_i32_0 = arith.constant 0 : i32
    %c0_i32_1 = arith.constant 0 : i32
    return %arg0, %0, %c0_i32, %c0_i32_0 : i32, i32, i32, i32
  }
  func.func @transform_2(%arg0: i32, %arg1: i32) -> (i32, i32, i32, i32) {
    %c2_i32 = arith.constant 2 : i32
    %0 = arith.addi %arg1, %c2_i32 : i32
    %c0_i32 = arith.constant 0 : i32
    %c0_i32_0 = arith.constant 0 : i32
    %c0_i32_1 = arith.constant 0 : i32
    return %arg0, %0, %c0_i32, %c0_i32_0 : i32, i32, i32, i32
  }
  func.func @transform_3(%arg0: i32, %arg1: i32) -> (i32, i32, i32, i32) {
    %c3_i32 = arith.constant 3 : i32
    %0 = arith.addi %arg1, %c3_i32 : i32
    %c0_i32 = arith.constant 0 : i32
    %c0_i32_0 = arith.constant 0 : i32
    %c0_i32_1 = arith.constant 0 : i32
    return %arg0, %0, %c0_i32, %c0_i32_0 : i32, i32, i32, i32
  }
  func.func @transform_4(%arg0: i32, %arg1: i32) -> (i32, i32, i32) {
    %c0_i32 = arith.constant 0 : i32
    %c0_i32_0 = arith.constant 0 : i32
    %c0_i32_1 = arith.constant 0 : i32
    %c0_i32_2 = arith.constant 0 : i32
    return %c0_i32, %c0_i32_0, %c0_i32_1 : i32, i32, i32
  }
  func.func @transform_5(%arg0: i32, %arg1: i32) -> (i32, i32) {
    %c0_i32 = arith.constant 0 : i32
    %c0_i32_0 = arith.constant 0 : i32
    %c0_i32_1 = arith.constant 0 : i32
    return %c0_i32, %c0_i32_0 : i32, i32
  }
  func.func @transform_6(%arg0: i32, %arg1: i32) -> (i32, i32, i32, i32) {
    %c0_i32 = arith.constant 0 : i32
    %c0_i32_0 = arith.constant 0 : i32
    %c0_i32_1 = arith.constant 0 : i32
    return %arg0, %arg1, %c0_i32, %c0_i32_0 : i32, i32, i32, i32
  }
  func.func @transform_7(%arg0: i32, %arg1: i32) -> (i32, i32, i32) {
    %c0_i32 = arith.constant 0 : i32
    %c0_i32_0 = arith.constant 0 : i32
    %c0_i32_1 = arith.constant 0 : i32
    return %arg0, %c0_i32, %c0_i32_0 : i32, i32, i32
  }
}

module attributes {stable_mosaic.version = 11 : i64} {
  func.func @_bn_apply_kernel(%arg0: i32, %arg1: i32, %arg2: memref<1x1x3x64xf32, #tpu.memory_space<vmem>>, %arg3: memref<2x64xf32, #tpu.memory_space<vmem>>, %arg4: memref<1x64xf32, #tpu.memory_space<vmem>>, %arg5: memref<1x64xf32, #tpu.memory_space<vmem>>, %arg6: memref<1x1x3x64xbf16, #tpu.memory_space<vmem>>) attributes {dimension_semantics = [#tpu.dimension_semantics<parallel>, #tpu.dimension_semantics<parallel>], iteration_bounds = array<i64: 2, 3>, scalar_prefetch = 0 : i64, scratch_operands = 0 : i64, tpu.core_type = #tpu.core_type<tc>, window_params = [{transform_indices = @transform_0, window_bounds = array<i64: 1, 1, 3, 64>}, {pipeline_mode = #tpu.pipeline_mode<synchronous>, transform_indices = @transform_1, window_bounds = array<i64: 2, 64>}, {pipeline_mode = #tpu.pipeline_mode<synchronous>, transform_indices = @transform_2, window_bounds = array<i64: 1, 64>}, {pipeline_mode = #tpu.pipeline_mode<synchronous>, transform_indices = @transform_3, window_bounds = array<i64: 1, 64>}, {transform_indices = @transform_4, window_bounds = array<i64: 1, 1, 3, 64>}]} {
    %c0 = arith.constant 0 : index
    %c0_0 = arith.constant 0 : index
    %c0_1 = arith.constant 0 : index
    %c0_2 = arith.constant 0 : index
    %0 = vector.load %arg2[%c0, %c0_0, %c0_1, %c0_2] : memref<1x1x3x64xf32, #tpu.memory_space<vmem>>, vector<1x1x3x64xf32>
    %1 = vector.shape_cast %0 : vector<1x1x3x64xf32> to vector<3x64xf32>
    %c0_3 = arith.constant 0 : index
    %c0_4 = arith.constant 0 : index
    %2 = vector.load %arg3[%c0_3, %c0_4] : memref<2x64xf32, #tpu.memory_space<vmem>>, vector<1x64xf32>
    %cst = arith.constant 0.055555556 : f32
    %3 = vector.broadcast %cst : f32 to vector<1x64xf32>
    %4 = arith.mulf %2, %3 : vector<1x64xf32>
    %c1 = arith.constant 1 : index
    %c0_5 = arith.constant 0 : index
    %5 = vector.load %arg3[%c1, %c0_5] : memref<2x64xf32, #tpu.memory_space<vmem>>, vector<1x64xf32>
    %cst_6 = arith.constant 0.055555556 : f32
    %6 = vector.broadcast %cst_6 : f32 to vector<1x64xf32>
    %7 = arith.mulf %5, %6 : vector<1x64xf32>
    %8 = arith.mulf %4, %4 : vector<1x64xf32>
    %9 = arith.subf %7, %8 : vector<1x64xf32>
    %10 = vector.broadcast %4 : vector<1x64xf32> to vector<3x64xf32>
    %11 = arith.subf %1, %10 : vector<3x64xf32>
    %cst_7 = arith.constant 9.99999974E-6 : f32
    %12 = vector.broadcast %cst_7 : f32 to vector<1x64xf32>
    %13 = arith.addf %9, %12 : vector<1x64xf32>
    %14 = math.rsqrt %13 : vector<1x64xf32>
    %15 = vector.broadcast %14 : vector<1x64xf32> to vector<3x64xf32>
    %16 = arith.mulf %11, %15 : vector<3x64xf32>
    %c0_8 = arith.constant 0 : index
    %c0_9 = arith.constant 0 : index
    %17 = vector.load %arg4[%c0_8, %c0_9] : memref<1x64xf32, #tpu.memory_space<vmem>>, vector<1x64xf32>
    %18 = vector.broadcast %17 : vector<1x64xf32> to vector<3x64xf32>
    %19 = arith.mulf %16, %18 : vector<3x64xf32>
    %c0_10 = arith.constant 0 : index
    %c0_11 = arith.constant 0 : index
    %20 = vector.load %arg5[%c0_10, %c0_11] : memref<1x64xf32, #tpu.memory_space<vmem>>, vector<1x64xf32>
    %21 = vector.broadcast %20 : vector<1x64xf32> to vector<3x64xf32>
    %22 = arith.addf %19, %21 : vector<3x64xf32>
    %cst_12 = arith.constant 0.000000e+00 : f32
    %23 = vector.broadcast %cst_12 : f32 to vector<3x64xf32>
    %24 = arith.cmpf oge, %22, %23 : vector<3x64xf32>
    %cst_13 = arith.constant 2.000000e-01 : f32
    %25 = vector.broadcast %cst_13 : f32 to vector<3x64xf32>
    %26 = arith.mulf %25, %22 : vector<3x64xf32>
    %27 = arith.select %24, %22, %26 : vector<3x64xi1>, vector<3x64xf32>
    %28 = arith.truncf %27 : vector<3x64xf32> to vector<3x64xbf16>
    %c0_14 = arith.constant 0 : index
    %c0_15 = arith.constant 0 : index
    %c0_16 = arith.constant 0 : index
    %c0_17 = arith.constant 0 : index
    %29 = vector.load %arg6[%c0_14, %c0_15, %c0_16, %c0_17] : memref<1x1x3x64xbf16, #tpu.memory_space<vmem>>, vector<1x1x3x64xbf16>
    %30 = vector.shape_cast %29 : vector<1x1x3x64xbf16> to vector<3x64xbf16>
    %31 = vector.shape_cast %28 : vector<3x64xbf16> to vector<1x1x3x64xbf16>
    tpu.vector_store %arg6[%c0_14, %c0_15, %c0_16, %c0_17], %31 {strides = array<i32>} : memref<1x1x3x64xbf16, #tpu.memory_space<vmem>>, vector<1x1x3x64xbf16>,
    return
  }
  func.func @transform_0(%arg0: i32, %arg1: i32) -> (i32, i32, i32, i32) {
    %c0_i32 = arith.constant 0 : i32
    %c0_i32_0 = arith.constant 0 : i32
    %c0_i32_1 = arith.constant 0 : i32
    return %arg0, %arg1, %c0_i32, %c0_i32_0 : i32, i32, i32, i32
  }
  func.func @transform_1(%arg0: i32, %arg1: i32) -> (i32, i32) {
    %c0_i32 = arith.constant 0 : i32
    %c0_i32_0 = arith.constant 0 : i32
    %c0_i32_1 = arith.constant 0 : i32
    return %c0_i32, %c0_i32_0 : i32, i32
  }
  func.func @transform_2(%arg0: i32, %arg1: i32) -> (i32, i32) {
    %c0_i32 = arith.constant 0 : i32
    %c0_i32_0 = arith.constant 0 : i32
    %c0_i32_1 = arith.constant 0 : i32
    return %c0_i32, %c0_i32_0 : i32, i32
  }
  func.func @transform_3(%arg0: i32, %arg1: i32) -> (i32, i32) {
    %c0_i32 = arith.constant 0 : i32
    %c0_i32_0 = arith.constant 0 : i32
    %c0_i32_1 = arith.constant 0 : i32
    return %c0_i32, %c0_i32_0 : i32, i32
  }
  func.func @transform_4(%arg0: i32, %arg1: i32) -> (i32, i32, i32, i32) {
    %c0_i32 = arith.constant 0 : i32
    %c0_i32_0 = arith.constant 0 : i32
    %c0_i32_1 = arith.constant 0 : i32
    return %arg0, %arg1, %c0_i32, %c0_i32_0 : i32, i32, i32, i32
  }
}

module attributes {stable_mosaic.version = 11 : i64} {
  func.func @kernel(%arg0: i32, %arg1: i32, %arg2: memref<1x1x5x64xbf16, #tpu.memory_space<vmem>>, %arg3: memref<1x1x5x64xbf16, #tpu.memory_space<vmem>>, %arg4: memref<1x1x5x64xbf16, #tpu.memory_space<vmem>>, %arg5: memref<1x1x5x64xbf16, #tpu.memory_space<vmem>>, %arg6: memref<16x64x1xbf16, #tpu.memory_space<vmem>>, %arg7: memref<1x1xf32, #tpu.memory_space<vmem>>, %arg8: memref<1x1x2x1xf32, #tpu.memory_space<vmem>>) attributes {dimension_semantics = [#tpu.dimension_semantics<parallel>, #tpu.dimension_semantics<parallel>], iteration_bounds = array<i64: 2, 2>, scalar_prefetch = 0 : i64, scratch_operands = 0 : i64, tpu.core_type = #tpu.core_type<tc>, window_params = [{transform_indices = @transform_0, window_bounds = array<i64: 1, 1, 5, 64>}, {transform_indices = @transform_1, window_bounds = array<i64: 1, 1, 5, 64>}, {transform_indices = @transform_2, window_bounds = array<i64: 1, 1, 5, 64>}, {transform_indices = @transform_3, window_bounds = array<i64: 1, 1, 5, 64>}, {pipeline_mode = #tpu.pipeline_mode<synchronous>, transform_indices = @transform_4, window_bounds = array<i64: 16, 64, 1>}, {pipeline_mode = #tpu.pipeline_mode<synchronous>, transform_indices = @transform_5, window_bounds = array<i64: 1, 1>}, {transform_indices = @transform_6, window_bounds = array<i64: 1, 1, 2, 1>}]} {
    %c0 = arith.constant 0 : index
    %c0_0 = arith.constant 0 : index
    %c0_1 = arith.constant 0 : index
    %c0_2 = arith.constant 0 : index
    %0 = vector.load %arg2[%c0, %c0_0, %c0_1, %c0_2] : memref<1x1x5x64xbf16, #tpu.memory_space<vmem>>, vector<1x1x5x64xbf16>
    %1 = vector.shape_cast %0 : vector<1x1x5x64xbf16> to vector<5x64xbf16>
    %c0_3 = arith.constant 0 : index
    %c0_4 = arith.constant 0 : index
    %c0_5 = arith.constant 0 : index
    %c0_6 = arith.constant 0 : index
    %2 = vector.load %arg3[%c0_3, %c0_4, %c0_5, %c0_6] : memref<1x1x5x64xbf16, #tpu.memory_space<vmem>>, vector<1x1x5x64xbf16>
    %3 = vector.shape_cast %2 : vector<1x1x5x64xbf16> to vector<5x64xbf16>
    %c0_7 = arith.constant 0 : index
    %c0_8 = arith.constant 0 : index
    %c0_9 = arith.constant 0 : index
    %c0_10 = arith.constant 0 : index
    %4 = vector.load %arg4[%c0_7, %c0_8, %c0_9, %c0_10] : memref<1x1x5x64xbf16, #tpu.memory_space<vmem>>, vector<1x1x5x64xbf16>
    %5 = vector.shape_cast %4 : vector<1x1x5x64xbf16> to vector<5x64xbf16>
    %c0_11 = arith.constant 0 : index
    %c0_12 = arith.constant 0 : index
    %c0_13 = arith.constant 0 : index
    %c0_14 = arith.constant 0 : index
    %6 = vector.load %arg5[%c0_11, %c0_12, %c0_13, %c0_14] : memref<1x1x5x64xbf16, #tpu.memory_space<vmem>>, vector<1x1x5x64xbf16>
    %7 = vector.shape_cast %6 : vector<1x1x5x64xbf16> to vector<5x64xbf16>
    %cst = arith.constant 0.000000e+00 : f32
    %8 = vector.broadcast %cst : f32 to vector<2x1xf32>
    %9 = vector.extract_strided_slice %1 {offsets = [0, 0], sizes = [2, 64], strides = [1, 1]} : vector<5x64xbf16> to vector<2x64xbf16>
    %c0_15 = arith.constant 0 : index
    %c0_16 = arith.constant 0 : index
    %c0_17 = arith.constant 0 : index
    %10 = vector.load %arg6[%c0_15, %c0_16, %c0_17] : memref<16x64x1xbf16, #tpu.memory_space<vmem>>, vector<1x64x1xbf16>
    %11 = vector.shape_cast %10 : vector<1x64x1xbf16> to vector<64x1xbf16>
    %cst_18 = arith.constant dense<0.000000e+00> : vector<2x1xf32>
    %12 = tpu.matmul %9, %11, %cst_18 {dimension_numbers = #tpu.dot_dimension_numbers<[1], [0], [0], [1], [0, 0, 1, 1], [], []>} : vector<2x64xbf16>, vector<64x1xbf16>, vector<2x1xf32> -> vector<2x1xf32>
    %13 = arith.addf %8, %12 : vector<2x1xf32>
    %14 = vector.extract_strided_slice %1 {offsets = [1, 0], sizes = [2, 64], strides = [1, 1]} : vector<5x64xbf16> to vector<2x64xbf16>
    %c1 = arith.constant 1 : index
    %c0_19 = arith.constant 0 : index
    %c0_20 = arith.constant 0 : index
    %15 = vector.load %arg6[%c1, %c0_19, %c0_20] : memref<16x64x1xbf16, #tpu.memory_space<vmem>>, vector<1x64x1xbf16>
    %16 = vector.shape_cast %15 : vector<1x64x1xbf16> to vector<64x1xbf16>
    %cst_21 = arith.constant dense<0.000000e+00> : vector<2x1xf32>
    %17 = tpu.matmul %14, %16, %cst_21 {dimension_numbers = #tpu.dot_dimension_numbers<[1], [0], [0], [1], [0, 0, 1, 1], [], []>} : vector<2x64xbf16>, vector<64x1xbf16>, vector<2x1xf32> -> vector<2x1xf32>
    %18 = arith.addf %13, %17 : vector<2x1xf32>
    %19 = vector.extract_strided_slice %1 {offsets = [2, 0], sizes = [2, 64], strides = [1, 1]} : vector<5x64xbf16> to vector<2x64xbf16>
    %c2 = arith.constant 2 : index
    %c0_22 = arith.constant 0 : index
    %c0_23 = arith.constant 0 : index
    %20 = vector.load %arg6[%c2, %c0_22, %c0_23] : memref<16x64x1xbf16, #tpu.memory_space<vmem>>, vector<1x64x1xbf16>
    %21 = vector.shape_cast %20 : vector<1x64x1xbf16> to vector<64x1xbf16>
    %cst_24 = arith.constant dense<0.000000e+00> : vector<2x1xf32>
    %22 = tpu.matmul %19, %21, %cst_24 {dimension_numbers = #tpu.dot_dimension_numbers<[1], [0], [0], [1], [0, 0, 1, 1], [], []>} : vector<2x64xbf16>, vector<64x1xbf16>, vector<2x1xf32> -> vector<2x1xf32>
    %23 = arith.addf %18, %22 : vector<2x1xf32>
    %24 = vector.extract_strided_slice %1 {offsets = [3, 0], sizes = [2, 64], strides = [1, 1]} : vector<5x64xbf16> to vector<2x64xbf16>
    %c3 = arith.constant 3 : index
    %c0_25 = arith.constant 0 : index
    %c0_26 = arith.constant 0 : index
    %25 = vector.load %arg6[%c3, %c0_25, %c0_26] : memref<16x64x1xbf16, #tpu.memory_space<vmem>>, vector<1x64x1xbf16>
    %26 = vector.shape_cast %25 : vector<1x64x1xbf16> to vector<64x1xbf16>
    %cst_27 = arith.constant dense<0.000000e+00> : vector<2x1xf32>
    %27 = tpu.matmul %24, %26, %cst_27 {dimension_numbers = #tpu.dot_dimension_numbers<[1], [0], [0], [1], [0, 0, 1, 1], [], []>} : vector<2x64xbf16>, vector<64x1xbf16>, vector<2x1xf32> -> vector<2x1xf32>
    %28 = arith.addf %23, %27 : vector<2x1xf32>
    %29 = vector.extract_strided_slice %3 {offsets = [0, 0], sizes = [2, 64], strides = [1, 1]} : vector<5x64xbf16> to vector<2x64xbf16>
    %c4 = arith.constant 4 : index
    %c0_28 = arith.constant 0 : index
    %c0_29 = arith.constant 0 : index
    %30 = vector.load %arg6[%c4, %c0_28, %c0_29] : memref<16x64x1xbf16, #tpu.memory_space<vmem>>, vector<1x64x1xbf16>
    %31 = vector.shape_cast %30 : vector<1x64x1xbf16> to vector<64x1xbf16>
    %cst_30 = arith.constant dense<0.000000e+00> : vector<2x1xf32>
    %32 = tpu.matmul %29, %31, %cst_30 {dimension_numbers = #tpu.dot_dimension_numbers<[1], [0], [0], [1], [0, 0, 1, 1], [], []>} : vector<2x64xbf16>, vector<64x1xbf16>, vector<2x1xf32> -> vector<2x1xf32>
    %33 = arith.addf %28, %32 : vector<2x1xf32>
    %34 = vector.extract_strided_slice %3 {offsets = [1, 0], sizes = [2, 64], strides = [1, 1]} : vector<5x64xbf16> to vector<2x64xbf16>
    %c5 = arith.constant 5 : index
    %c0_31 = arith.constant 0 : index
    %c0_32 = arith.constant 0 : index
    %35 = vector.load %arg6[%c5, %c0_31, %c0_32] : memref<16x64x1xbf16, #tpu.memory_space<vmem>>, vector<1x64x1xbf16>
    %36 = vector.shape_cast %35 : vector<1x64x1xbf16> to vector<64x1xbf16>
    %cst_33 = arith.constant dense<0.000000e+00> : vector<2x1xf32>
    %37 = tpu.matmul %34, %36, %cst_33 {dimension_numbers = #tpu.dot_dimension_numbers<[1], [0], [0], [1], [0, 0, 1, 1], [], []>} : vector<2x64xbf16>, vector<64x1xbf16>, vector<2x1xf32> -> vector<2x1xf32>
    %38 = arith.addf %33, %37 : vector<2x1xf32>
    %39 = vector.extract_strided_slice %3 {offsets = [2, 0], sizes = [2, 64], strides = [1, 1]} : vector<5x64xbf16> to vector<2x64xbf16>
    %c6 = arith.constant 6 : index
    %c0_34 = arith.constant 0 : index
    %c0_35 = arith.constant 0 : index
    %40 = vector.load %arg6[%c6, %c0_34, %c0_35] : memref<16x64x1xbf16, #tpu.memory_space<vmem>>, vector<1x64x1xbf16>
    %41 = vector.shape_cast %40 : vector<1x64x1xbf16> to vector<64x1xbf16>
    %cst_36 = arith.constant dense<0.000000e+00> : vector<2x1xf32>
    %42 = tpu.matmul %39, %41, %cst_36 {dimension_numbers = #tpu.dot_dimension_numbers<[1], [0], [0], [1], [0, 0, 1, 1], [], []>} : vector<2x64xbf16>, vector<64x1xbf16>, vector<2x1xf32> -> vector<2x1xf32>
    %43 = arith.addf %38, %42 : vector<2x1xf32>
    %44 = vector.extract_strided_slice %3 {offsets = [3, 0], sizes = [2, 64], strides = [1, 1]} : vector<5x64xbf16> to vector<2x64xbf16>
    %c7 = arith.constant 7 : index
    %c0_37 = arith.constant 0 : index
    %c0_38 = arith.constant 0 : index
    %45 = vector.load %arg6[%c7, %c0_37, %c0_38] : memref<16x64x1xbf16, #tpu.memory_space<vmem>>, vector<1x64x1xbf16>
    %46 = vector.shape_cast %45 : vector<1x64x1xbf16> to vector<64x1xbf16>
    %cst_39 = arith.constant dense<0.000000e+00> : vector<2x1xf32>
    %47 = tpu.matmul %44, %46, %cst_39 {dimension_numbers = #tpu.dot_dimension_numbers<[1], [0], [0], [1], [0, 0, 1, 1], [], []>} : vector<2x64xbf16>, vector<64x1xbf16>, vector<2x1xf32> -> vector<2x1xf32>
    %48 = arith.addf %43, %47 : vector<2x1xf32>
    %49 = vector.extract_strided_slice %5 {offsets = [0, 0], sizes = [2, 64], strides = [1, 1]} : vector<5x64xbf16> to vector<2x64xbf16>
    %c8 = arith.constant 8 : index
    %c0_40 = arith.constant 0 : index
    %c0_41 = arith.constant 0 : index
    %50 = vector.load %arg6[%c8, %c0_40, %c0_41] : memref<16x64x1xbf16, #tpu.memory_space<vmem>>, vector<1x64x1xbf16>
    %51 = vector.shape_cast %50 : vector<1x64x1xbf16> to vector<64x1xbf16>
    %cst_42 = arith.constant dense<0.000000e+00> : vector<2x1xf32>
    %52 = tpu.matmul %49, %51, %cst_42 {dimension_numbers = #tpu.dot_dimension_numbers<[1], [0], [0], [1], [0, 0, 1, 1], [], []>} : vector<2x64xbf16>, vector<64x1xbf16>, vector<2x1xf32> -> vector<2x1xf32>
    %53 = arith.addf %48, %52 : vector<2x1xf32>
    %54 = vector.extract_strided_slice %5 {offsets = [1, 0], sizes = [2, 64], strides = [1, 1]} : vector<5x64xbf16> to vector<2x64xbf16>
    %c9 = arith.constant 9 : index
    %c0_43 = arith.constant 0 : index
    %c0_44 = arith.constant 0 : index
    %55 = vector.load %arg6[%c9, %c0_43, %c0_44] : memref<16x64x1xbf16, #tpu.memory_space<vmem>>, vector<1x64x1xbf16>
    %56 = vector.shape_cast %55 : vector<1x64x1xbf16> to vector<64x1xbf16>
    %cst_45 = arith.constant dense<0.000000e+00> : vector<2x1xf32>
    %57 = tpu.matmul %54, %56, %cst_45 {dimension_numbers = #tpu.dot_dimension_numbers<[1], [0], [0], [1], [0, 0, 1, 1], [], []>} : vector<2x64xbf16>, vector<64x1xbf16>, vector<2x1xf32> -> vector<2x1xf32>
    %58 = arith.addf %53, %57 : vector<2x1xf32>
    %59 = vector.extract_strided_slice %5 {offsets = [2, 0], sizes = [2, 64], strides = [1, 1]} : vector<5x64xbf16> to vector<2x64xbf16>
    %c10 = arith.constant 10 : index
    %c0_46 = arith.constant 0 : index
    %c0_47 = arith.constant 0 : index
    %60 = vector.load %arg6[%c10, %c0_46, %c0_47] : memref<16x64x1xbf16, #tpu.memory_space<vmem>>, vector<1x64x1xbf16>
    %61 = vector.shape_cast %60 : vector<1x64x1xbf16> to vector<64x1xbf16>
    %cst_48 = arith.constant dense<0.000000e+00> : vector<2x1xf32>
    %62 = tpu.matmul %59, %61, %cst_48 {dimension_numbers = #tpu.dot_dimension_numbers<[1], [0], [0], [1], [0, 0, 1, 1], [], []>} : vector<2x64xbf16>, vector<64x1xbf16>, vector<2x1xf32> -> vector<2x1xf32>
    %63 = arith.addf %58, %62 : vector<2x1xf32>
    %64 = vector.extract_strided_slice %5 {offsets = [3, 0], sizes = [2, 64], strides = [1, 1]} : vector<5x64xbf16> to vector<2x64xbf16>
    %c11 = arith.constant 11 : index
    %c0_49 = arith.constant 0 : index
    %c0_50 = arith.constant 0 : index
    %65 = vector.load %arg6[%c11, %c0_49, %c0_50] : memref<16x64x1xbf16, #tpu.memory_space<vmem>>, vector<1x64x1xbf16>
    %66 = vector.shape_cast %65 : vector<1x64x1xbf16> to vector<64x1xbf16>
    %cst_51 = arith.constant dense<0.000000e+00> : vector<2x1xf32>
    %67 = tpu.matmul %64, %66, %cst_51 {dimension_numbers = #tpu.dot_dimension_numbers<[1], [0], [0], [1], [0, 0, 1, 1], [], []>} : vector<2x64xbf16>, vector<64x1xbf16>, vector<2x1xf32> -> vector<2x1xf32>
    %68 = arith.addf %63, %67 : vector<2x1xf32>
    %69 = vector.extract_strided_slice %7 {offsets = [0, 0], sizes = [2, 64], strides = [1, 1]} : vector<5x64xbf16> to vector<2x64xbf16>
    %c12 = arith.constant 12 : index
    %c0_52 = arith.constant 0 : index
    %c0_53 = arith.constant 0 : index
    %70 = vector.load %arg6[%c12, %c0_52, %c0_53] : memref<16x64x1xbf16, #tpu.memory_space<vmem>>, vector<1x64x1xbf16>
    %71 = vector.shape_cast %70 : vector<1x64x1xbf16> to vector<64x1xbf16>
    %cst_54 = arith.constant dense<0.000000e+00> : vector<2x1xf32>
    %72 = tpu.matmul %69, %71, %cst_54 {dimension_numbers = #tpu.dot_dimension_numbers<[1], [0], [0], [1], [0, 0, 1, 1], [], []>} : vector<2x64xbf16>, vector<64x1xbf16>, vector<2x1xf32> -> vector<2x1xf32>
    %73 = arith.addf %68, %72 : vector<2x1xf32>
    %74 = vector.extract_strided_slice %7 {offsets = [1, 0], sizes = [2, 64], strides = [1, 1]} : vector<5x64xbf16> to vector<2x64xbf16>
    %c13 = arith.constant 13 : index
    %c0_55 = arith.constant 0 : index
    %c0_56 = arith.constant 0 : index
    %75 = vector.load %arg6[%c13, %c0_55, %c0_56] : memref<16x64x1xbf16, #tpu.memory_space<vmem>>, vector<1x64x1xbf16>
    %76 = vector.shape_cast %75 : vector<1x64x1xbf16> to vector<64x1xbf16>
    %cst_57 = arith.constant dense<0.000000e+00> : vector<2x1xf32>
    %77 = tpu.matmul %74, %76, %cst_57 {dimension_numbers = #tpu.dot_dimension_numbers<[1], [0], [0], [1], [0, 0, 1, 1], [], []>} : vector<2x64xbf16>, vector<64x1xbf16>, vector<2x1xf32> -> vector<2x1xf32>
    %78 = arith.addf %73, %77 : vector<2x1xf32>
    %79 = vector.extract_strided_slice %7 {offsets = [2, 0], sizes = [2, 64], strides = [1, 1]} : vector<5x64xbf16> to vector<2x64xbf16>
    %c14 = arith.constant 14 : index
    %c0_58 = arith.constant 0 : index
    %c0_59 = arith.constant 0 : index
    %80 = vector.load %arg6[%c14, %c0_58, %c0_59] : memref<16x64x1xbf16, #tpu.memory_space<vmem>>, vector<1x64x1xbf16>
    %81 = vector.shape_cast %80 : vector<1x64x1xbf16> to vector<64x1xbf16>
    %cst_60 = arith.constant dense<0.000000e+00> : vector<2x1xf32>
    %82 = tpu.matmul %79, %81, %cst_60 {dimension_numbers = #tpu.dot_dimension_numbers<[1], [0], [0], [1], [0, 0, 1, 1], [], []>} : vector<2x64xbf16>, vector<64x1xbf16>, vector<2x1xf32> -> vector<2x1xf32>
    %83 = arith.addf %78, %82 : vector<2x1xf32>
    %84 = vector.extract_strided_slice %7 {offsets = [3, 0], sizes = [2, 64], strides = [1, 1]} : vector<5x64xbf16> to vector<2x64xbf16>
    %c15 = arith.constant 15 : index
    %c0_61 = arith.constant 0 : index
    %c0_62 = arith.constant 0 : index
    %85 = vector.load %arg6[%c15, %c0_61, %c0_62] : memref<16x64x1xbf16, #tpu.memory_space<vmem>>, vector<1x64x1xbf16>
    %86 = vector.shape_cast %85 : vector<1x64x1xbf16> to vector<64x1xbf16>
    %cst_63 = arith.constant dense<0.000000e+00> : vector<2x1xf32>
    %87 = tpu.matmul %84, %86, %cst_63 {dimension_numbers = #tpu.dot_dimension_numbers<[1], [0], [0], [1], [0, 0, 1, 1], [], []>} : vector<2x64xbf16>, vector<64x1xbf16>, vector<2x1xf32> -> vector<2x1xf32>
    %88 = arith.addf %83, %87 : vector<2x1xf32>
    %c0_64 = arith.constant 0 : index
    %c0_65 = arith.constant 0 : index
    %89 = vector.load %arg7[%c0_64, %c0_65] : memref<1x1xf32, #tpu.memory_space<vmem>>, vector<1x1xf32>
    %90 = vector.broadcast %89 : vector<1x1xf32> to vector<2x1xf32>
    %91 = arith.addf %88, %90 : vector<2x1xf32>
    %c0_66 = arith.constant 0 : index
    %c0_67 = arith.constant 0 : index
    %c0_68 = arith.constant 0 : index
    %c0_69 = arith.constant 0 : index
    %92 = vector.load %arg8[%c0_66, %c0_67, %c0_68, %c0_69] : memref<1x1x2x1xf32, #tpu.memory_space<vmem>>, vector<1x1x2x1xf32>
    %93 = vector.shape_cast %92 : vector<1x1x2x1xf32> to vector<2x1xf32>
    %94 = vector.shape_cast %91 : vector<2x1xf32> to vector<1x1x2x1xf32>
    tpu.vector_store %arg8[%c0_66, %c0_67, %c0_68, %c0_69], %94 {strides = array<i32>} : memref<1x1x2x1xf32, #tpu.memory_space<vmem>>, vector<1x1x2x1xf32>,
    return
  }
  func.func @transform_0(%arg0: i32, %arg1: i32) -> (i32, i32, i32, i32) {
    %c0_i32 = arith.constant 0 : i32
    %0 = arith.addi %arg1, %c0_i32 : i32
    %c0_i32_0 = arith.constant 0 : i32
    %c0_i32_1 = arith.constant 0 : i32
    %c0_i32_2 = arith.constant 0 : i32
    return %arg0, %0, %c0_i32_0, %c0_i32_1 : i32, i32, i32, i32
  }
  func.func @transform_1(%arg0: i32, %arg1: i32) -> (i32, i32, i32, i32) {
    %c1_i32 = arith.constant 1 : i32
    %0 = arith.addi %arg1, %c1_i32 : i32
    %c0_i32 = arith.constant 0 : i32
    %c0_i32_0 = arith.constant 0 : i32
    %c0_i32_1 = arith.constant 0 : i32
    return %arg0, %0, %c0_i32, %c0_i32_0 : i32, i32, i32, i32
  }
  func.func @transform_2(%arg0: i32, %arg1: i32) -> (i32, i32, i32, i32) {
    %c2_i32 = arith.constant 2 : i32
    %0 = arith.addi %arg1, %c2_i32 : i32
    %c0_i32 = arith.constant 0 : i32
    %c0_i32_0 = arith.constant 0 : i32
    %c0_i32_1 = arith.constant 0 : i32
    return %arg0, %0, %c0_i32, %c0_i32_0 : i32, i32, i32, i32
  }
  func.func @transform_3(%arg0: i32, %arg1: i32) -> (i32, i32, i32, i32) {
    %c3_i32 = arith.constant 3 : i32
    %0 = arith.addi %arg1, %c3_i32 : i32
    %c0_i32 = arith.constant 0 : i32
    %c0_i32_0 = arith.constant 0 : i32
    %c0_i32_1 = arith.constant 0 : i32
    return %arg0, %0, %c0_i32, %c0_i32_0 : i32, i32, i32, i32
  }
  func.func @transform_4(%arg0: i32, %arg1: i32) -> (i32, i32, i32) {
    %c0_i32 = arith.constant 0 : i32
    %c0_i32_0 = arith.constant 0 : i32
    %c0_i32_1 = arith.constant 0 : i32
    %c0_i32_2 = arith.constant 0 : i32
    return %c0_i32, %c0_i32_0, %c0_i32_1 : i32, i32, i32
  }
  func.func @transform_5(%arg0: i32, %arg1: i32) -> (i32, i32) {
    %c0_i32 = arith.constant 0 : i32
    %c0_i32_0 = arith.constant 0 : i32
    %c0_i32_1 = arith.constant 0 : i32
    return %c0_i32, %c0_i32_0 : i32, i32
  }
  func.func @transform_6(%arg0: i32, %arg1: i32) -> (i32, i32, i32, i32) {
    %c0_i32 = arith.constant 0 : i32
    %c0_i32_0 = arith.constant 0 : i32
    %c0_i32_1 = arith.constant 0 : i32
    return %arg0, %arg1, %c0_i32, %c0_i32_0 : i32, i32, i32, i32
  }
}

</mosaic_0001>

<llo_original>
// kernel: _lambda_.8
$region0: #{_lambda_.8}
  #allocation0 [shape = 'u32[]', space=smem, size = 0x4, offset = 0x4, fixed_abs, tag = 'smem constant byte address 0x4 - core index']
  #allocation1 [shape = 'u32[144,128]{1,0:T(1,128)}', space=vmem, size = 0x12000, scoped, tag = 'internal scratch']
  %s0 = inlined_call_operand.vmem [shape: bf16[2,34,17,8], index: 0, kind: input, shape index: {}, may-alias: {0,1}]
  %s1 = inlined_call_operand.vmem [shape: bf16[2,34,17,8], index: 1, kind: input, shape index: {}, may-alias: {0,1}]
  %s2 = inlined_call_operand.vmem [shape: bf16[2,34,17,8], index: 2, kind: input, shape index: {}, may-alias: {2,3}]
  %s3 = inlined_call_operand.vmem [shape: bf16[2,34,17,8], index: 3, kind: input, shape index: {}, may-alias: {2,3}]
  %s4 = inlined_call_operand.vmem [shape: bf16[16,8,8], index: 4, kind: input, shape index: {}]
  %s5 = inlined_call_operand.vmem [shape: f32[1,8], index: 5, kind: input, shape index: {}]
  %s6 = inlined_call_operand.vmem [shape: bf16[2,16,16,8], index: 6, kind: output, shape index: {}]
  %s7 = sld [smem:[#allocation0]]
  $region57: #{_lambda_.8} parent=0
    _
  %s9 = ssub.s32 1, %s7
  %s10 = scalar_select 0, %s9, %s7
  loop: start=0, step=1, limit=34
  $region2: #{_lambda_.8} parent=0 // loop_pre_header
    _
  $region3: #{_lambda_.8} parent=0 // loop_header
    %s12 = sphi 0, %s16
    %p13 = scmp.ge.s32.totalorder %s12, 34
    %s19 = sphi 0, %s31
    %s20 = sphi 0, %s27
    %s21 = sphi 0, %s19
    %s22 = sphi 0, %s20
    %s23 = sphi 0, %s21
    %s24 = sphi 0, %s22
    %s36 = sphi 0, %s38
    %s39 = sphi 0, %s36
    %s40 = sphi 0, %s39
    %s56 = sphi 0, %s40
    %s66 = sphi 0, %s68
    %s69 = sphi 0, %s66
    %s70 = sphi 0, %s69
    %s86 = sphi 0, %s70
    %s94 = sphi 0, %s96
    %s97 = sphi 0, %s94
    %s98 = sphi 0, %s97
    %s114 = sphi 0, %s98
    %s124 = sphi 0, %s126
    %s127 = sphi 0, %s124
    %s128 = sphi 0, %s127
    %s144 = sphi 0, %s128
    %s148 = sphi 0, %s148
    %s150 = sphi 0, %s148
    %s151 = sphi 0, %s150
    %s165 = sphi 0, %s151
    %s169 = sphi 0, %s169
    %s171 = sphi 0, %s169
    %s172 = sphi 0, %s171
    %s186 = sphi 0, %s172
    %s194 = sphi 0, %s196
    %s197 = sphi 0, %s194
    %s198 = sphi 0, %s197
    %s214 = sphi 0, %s198
  $region4: #{_lambda_.8} parent=0 // loop_header_branch
    %15 = sbr.rel (%p13) target = $region8
  $region5: #{_lambda_.8} parent=0 // loop_body
    %s17 = ssub.s32 %s12, 1
    %s18 = ssub.s32 %s12, 2
    %s25 = sadd.s32 1, %s20
    %p26 = scmp.ge.s32.totalorder %s25, 16
    %s27 = scalar_select %p26, 0, %s25
    %s28 = sadd.s32 1, %s19
    %s29 = scalar_select %p26, %s28, %s19
    %p30 = scmp.ge.s32.totalorder %s29, 2
    %s31 = scalar_select %p30, 0, %s29
    %s32 = ssub.s32 %s19, %s31
    %s33 = ssub.s32 %s20, %s27
    %s34 = sor.u32 %s32, %s33
    %p35 = scmp.eq.s32.totalorder %s34, 0
    %s37 = sadd.s32 %s36, 1
    %s38 = scalar_select %p35, %s36, %s37
    %p41 = pneg %p35
    %p42 = scmp.eq.s32.totalorder %s12, 31
    %p43 = por %p41, %p42
    %p44 = scmp.ne.s32.totalorder %s36, %s39
    %p45 = scmp.eq.s32.totalorder %s12, 0
    %p46 = por %p44, %p45
    %p47 = scmp.ne.s32.totalorder %s36, %s39
    %p48 = scmp.eq.s32.totalorder %s17, 31
    %p49 = por %p47, %p48
    %p50 = scmp.ne.s32.totalorder %s39, %s40
    %p51 = scmp.eq.s32.totalorder %s17, 0
    %p52 = por %p50, %p51
    %p53 = scmp.ne.s32.totalorder %s39, %s40
    %p54 = scmp.eq.s32.totalorder %s18, 31
    %p55 = por %p53, %p54
    %p57 = scmp.ne.s32.totalorder %s40, %s56
    %p58 = scmp.eq.s32.totalorder %s18, 0
    %p59 = por %p57, %p58
    %s60 = sadd.s32 %s20, 1
    %s61 = sadd.s32 %s27, 1
    %s62 = ssub.s32 %s19, %s31
    %s63 = ssub.s32 %s60, %s61
    %s64 = sor.u32 %s62, %s63
    %p65 = scmp.eq.s32.totalorder %s64, 0
    %s67 = sadd.s32 %s66, 1
    %s68 = scalar_select %p65, %s66, %s67
    %p71 = pneg %p65
    %p72 = scmp.eq.s32.totalorder %s12, 31
    %p73 = por %p71, %p72
    %p74 = scmp.ne.s32.totalorder %s66, %s69
    %p75 = scmp.eq.s32.totalorder %s12, 0
    %p76 = por %p74, %p75
    %p77 = scmp.ne.s32.totalorder %s66, %s69
    %p78 = scmp.eq.s32.totalorder %s17, 31
    %p79 = por %p77, %p78
    %p80 = scmp.ne.s32.totalorder %s69, %s70
    %p81 = scmp.eq.s32.totalorder %s17, 0
    %p82 = por %p80, %p81
    %p83 = scmp.ne.s32.totalorder %s69, %s70
    %p84 = scmp.eq.s32.totalorder %s18, 31
    %p85 = por %p83, %p84
    %p87 = scmp.ne.s32.totalorder %s70, %s86
    %p88 = scmp.eq.s32.totalorder %s18, 0
    %p89 = por %p87, %p88
    %s90 = ssub.s32 %s19, %s31
    %s91 = ssub.s32 %s20, %s27
    %s92 = sor.u32 %s90, %s91
    %p93 = scmp.eq.s32.totalorder %s92, 0
    %s95 = sadd.s32 %s94, 1
    %s96 = scalar_select %p93, %s94, %s95
    %p99 = pneg %p93
    %p100 = scmp.eq.s32.totalorder %s12, 31
    %p101 = por %p99, %p100
    %p102 = scmp.ne.s32.totalorder %s94, %s97
    %p103 = scmp.eq.s32.totalorder %s12, 0
    %p104 = por %p102, %p103
    %p105 = scmp.ne.s32.totalorder %s94, %s97
    %p106 = scmp.eq.s32.totalorder %s17, 31
    %p107 = por %p105, %p106
    %p108 = scmp.ne.s32.totalorder %s97, %s98
    %p109 = scmp.eq.s32.totalorder %s17, 0
    %p110 = por %p108, %p109
    %p111 = scmp.ne.s32.totalorder %s97, %s98
    %p112 = scmp.eq.s32.totalorder %s18, 31
    %p113 = por %p111, %p112
    %p115 = scmp.ne.s32.totalorder %s98, %s114
    %p116 = scmp.eq.s32.totalorder %s18, 0
    %p117 = por %p115, %p116
    %s118 = sadd.s32 %s20, 1
    %s119 = sadd.s32 %s27, 1
    %s120 = ssub.s32 %s19, %s31
    %s121 = ssub.s32 %s118, %s119
    %s122 = sor.u32 %s120, %s121
    %p123 = scmp.eq.s32.totalorder %s122, 0
    %s125 = sadd.s32 %s124, 1
    %s126 = scalar_select %p123, %s124, %s125
    %p129 = pneg %p123
    %p130 = scmp.eq.s32.totalorder %s12, 31
    %p131 = por %p129, %p130
    %p132 = scmp.ne.s32.totalorder %s124, %s127
    %p133 = scmp.eq.s32.totalorder %s12, 0
    %p134 = por %p132, %p133
    %p135 = scmp.ne.s32.totalorder %s124, %s127
    %p136 = scmp.eq.s32.totalorder %s17, 31
    %p137 = por %p135, %p136
    %p138 = scmp.ne.s32.totalorder %s127, %s128
    %p139 = scmp.eq.s32.totalorder %s17, 0
    %p140 = por %p138, %p139
    %p141 = scmp.ne.s32.totalorder %s127, %s128
    %p142 = scmp.eq.s32.totalorder %s18, 31
    %p143 = por %p141, %p142
    %p145 = scmp.ne.s32.totalorder %s128, %s144
    %p146 = scmp.eq.s32.totalorder %s18, 0
    %p147 = por %p145, %p146
    %s149 = sadd.s32 %s148, 1
    %p152 = scmp.eq.s32.totalorder %s12, 31
    %p153 = scmp.ne.s32.totalorder %s148, %s150
    %p154 = scmp.eq.s32.totalorder %s12, 0
    %p155 = por %p153, %p154
    %p156 = scmp.ne.s32.totalorder %s148, %s150
    %p157 = scmp.eq.s32.totalorder %s17, 31
    %p158 = por %p156, %p157
    %p159 = scmp.ne.s32.totalorder %s150, %s151
    %p160 = scmp.eq.s32.totalorder %s17, 0
    %p161 = por %p159, %p160
    %p162 = scmp.ne.s32.totalorder %s150, %s151
    %p163 = scmp.eq.s32.totalorder %s18, 31
    %p164 = por %p162, %p163
    %p166 = scmp.ne.s32.totalorder %s151, %s165
    %p167 = scmp.eq.s32.totalorder %s18, 0
    %p168 = por %p166, %p167
    %s170 = sadd.s32 %s169, 1
    %p173 = scmp.eq.s32.totalorder %s12, 31
    %p174 = scmp.ne.s32.totalorder %s169, %s171
    %p175 = scmp.eq.s32.totalorder %s12, 0
    %p176 = por %p174, %p175
    %p177 = scmp.ne.s32.totalorder %s169, %s171
    %p178 = scmp.eq.s32.totalorder %s17, 31
    %p179 = por %p177, %p178
    %p180 = scmp.ne.s32.totalorder %s171, %s172
    %p181 = scmp.eq.s32.totalorder %s17, 0
    %p182 = por %p180, %p181
    %p183 = scmp.ne.s32.totalorder %s171, %s172
    %p184 = scmp.eq.s32.totalorder %s18, 31
    %p185 = por %p183, %p184
    %p187 = scmp.ne.s32.totalorder %s172, %s186
    %p188 = scmp.eq.s32.totalorder %s18, 0
    %p189 = por %p187, %p188
    %s190 = ssub.s32 %s19, %s31
    %s191 = ssub.s32 %s20, %s27
    %s192 = sor.u32 %s190, %s191
    %p193 = scmp.eq.s32.totalorder %s192, 0
    %s195 = sadd.s32 %s194, 1
    %s196 = scalar_select %p193, %s194, %s195
    %p199 = pneg %p193
    %p200 = scmp.eq.s32.totalorder %s12, 31
    %p201 = por %p199, %p200
    %p202 = scmp.ne.s32.totalorder %s194, %s197
    %p203 = scmp.eq.s32.totalorder %s12, 0
    %p204 = por %p202, %p203
    %p205 = scmp.ne.s32.totalorder %s194, %s197
    %p206 = scmp.eq.s32.totalorder %s17, 31
    %p207 = por %p205, %p206
    %p208 = scmp.ne.s32.totalorder %s197, %s198
    %p209 = scmp.eq.s32.totalorder %s17, 0
    %p210 = por %p208, %p209
    %p211 = scmp.ne.s32.totalorder %s197, %s198
    %p212 = scmp.eq.s32.totalorder %s18, 31
    %p213 = por %p211, %p212
    %p215 = scmp.ne.s32.totalorder %s198, %s214
    %p216 = scmp.eq.s32.totalorder %s18, 0
    %p217 = por %p215, %p216
    %p218 = scmp.le.s32.totalorder 1, %s12
    %p219 = scmp.lt.s32.totalorder %s12, 33
    %p220 = pnand %p218, %p219
    %p221 = pneg %p220
    // Predicated region
    $region9: #{_lambda_.8} parent=5 // pred_check
      _
    $region10: #{_lambda_.8} parent=5 // pred_check_branch
      %223 = sbr.rel (%p220) target = $region12
    $region11: #{_lambda_.8} parent=5 // pred_region
      %s224 = ssub.s32 %s12, 1
      // Predicated region
      $region13: #{_lambda_.8} parent=11 // pred_check
        %p225 = pneg %p161
      $region14: #{_lambda_.8} parent=11 // pred_check_branch
        %227 = sbr.rel (%p225) target = $region16
      $region15: #{_lambda_.8} parent=11 // pred_region
        _
      $region16: #{_lambda_.8} parent=11 // pred_fallthru
        _
      // Predicated region
      $region17: #{_lambda_.8} parent=11 // pred_check
        %p228 = pneg %p182
      $region18: #{_lambda_.8} parent=11 // pred_check_branch
        %230 = sbr.rel (%p228) target = $region20
      $region19: #{_lambda_.8} parent=11 // pred_region
        _
      $region20: #{_lambda_.8} parent=11 // pred_fallthru
        _
    $region12: #{_lambda_.8} parent=5 // pred_fallthru
      _
    %p231 = scmp.lt.s32.totalorder %s12, 32
    // Predicated region
    $region21: #{_lambda_.8} parent=5 // pred_check
      %p232 = pneg %p231
    $region22: #{_lambda_.8} parent=5 // pred_check_branch
      %234 = sbr.rel (%p232) target = $region24
    $region23: #{_lambda_.8} parent=5 // pred_region
      // Predicated region
      $region25: #{_lambda_.8} parent=23 // pred_check
        %p235 = pneg %p46
      $region26: #{_lambda_.8} parent=23 // pred_check_branch
        %237 = sbr.rel (%p235) target = $region28
      $region27: #{_lambda_.8} parent=23 // pred_region
        %s238 = smul.u32 2, %s20
        %p239 = scmp.lt.s32.totalorder %s19, 1
        %s240 = scalar_select %p239, %s19, 1
        %p241 = scmp.lt.s32.totalorder %s238, 33
        %s242 = scalar_select %p241, %s238, 33
        %s243 = smul.addr %s242, 3
        %s244 = smul.addr %s240, 102
        %s245 = sadd.s32 %s243, %s244
        %s246 = smul.addr %s245, 4
        %s247 = scalar_lea.vmem %s0, %s246
        %s248 = smul.u32 2, %s20
      $region28: #{_lambda_.8} parent=23 // pred_fallthru
        _
      // Predicated region
      $region29: #{_lambda_.8} parent=23 // pred_check
        %p249 = pneg %p76
      $region30: #{_lambda_.8} parent=23 // pred_check_branch
        %251 = sbr.rel (%p249) target = $region32
      $region31: #{_lambda_.8} parent=23 // pred_region
        %s252 = sadd.s32 %s20, 1
        %s253 = smul.u32 2, %s252
        %p254 = scmp.lt.s32.totalorder %s19, 1
        %s255 = scalar_select %p254, %s19, 1
        %p256 = scmp.lt.s32.totalorder %s253, 33
        %s257 = scalar_select %p256, %s253, 33
        %s258 = smul.addr %s257, 3
        %s259 = smul.addr %s255, 102
        %s260 = sadd.s32 %s258, %s259
        %s261 = smul.addr %s260, 4
        %s262 = scalar_lea.vmem %s1, %s261
        %s263 = sadd.s32 %s20, 1
        %s264 = smul.u32 2, %s263
      $region32: #{_lambda_.8} parent=23 // pred_fallthru
        _
      // Predicated region
      $region33: #{_lambda_.8} parent=23 // pred_check
        %p265 = pneg %p104
      $region34: #{_lambda_.8} parent=23 // pred_check_branch
        %267 = sbr.rel (%p265) target = $region36
      $region35: #{_lambda_.8} parent=23 // pred_region
        %s268 = smul.u32 2, %s20
        %p269 = scmp.lt.s32.totalorder %s19, 1
        %s270 = scalar_select %p269, %s19, 1
        %p271 = scmp.lt.s32.totalorder %s268, 33
        %s272 = scalar_select %p271, %s268, 33
        %s273 = smul.addr %s272, 3
        %s274 = smul.addr %s270, 102
        %s275 = sadd.s32 %s273, %s274
        %s276 = smul.addr %s275, 4
        %s277 = scalar_lea.vmem %s2, %s276
        %s278 = smul.u32 2, %s20
      $region36: #{_lambda_.8} parent=23 // pred_fallthru
        _
      // Predicated region
      $region37: #{_lambda_.8} parent=23 // pred_check
        %p279 = pneg %p134
      $region38: #{_lambda_.8} parent=23 // pred_check_branch
        %281 = sbr.rel (%p279) target = $region40
      $region39: #{_lambda_.8} parent=23 // pred_region
        %s282 = sadd.s32 %s20, 1
        %s283 = smul.u32 2, %s282
        %p284 = scmp.lt.s32.totalorder %s19, 1
        %s285 = scalar_select %p284, %s19, 1
        %p286 = scmp.lt.s32.totalorder %s283, 33
        %s287 = scalar_select %p286, %s283, 33
        %s288 = smul.addr %s287, 3
        %s289 = smul.addr %s285, 102
        %s290 = sadd.s32 %s288, %s289
        %s291 = smul.addr %s290, 4
        %s292 = scalar_lea.vmem %s3, %s291
        %s293 = sadd.s32 %s20, 1
        %s294 = smul.u32 2, %s293
      $region40: #{_lambda_.8} parent=23 // pred_fallthru
        _
    $region24: #{_lambda_.8} parent=5 // pred_fallthru
      _
    %p295 = scmp.le.s32.totalorder 1, %s12
    %p296 = scmp.lt.s32.totalorder %s12, 33
    %p297 = pnand %p295, %p296
    %p298 = pneg %p297
    // Predicated region
    $region41: #{_lambda_.8} parent=5 // pred_check
      _
    $region42: #{_lambda_.8} parent=5 // pred_check_branch
      %300 = sbr.rel (%p297) target = $region44
    $region43: #{_lambda_.8} parent=5 // pred_region
      %s301 = ssub.s32 %s12, 1
      %s302 = smul.u32 2, %s22
      %p303 = scmp.lt.s32.totalorder %s21, 1
      %s304 = scalar_select %p303, %s21, 1
      %p305 = scmp.lt.s32.totalorder %s302, 33
      %s306 = scalar_select %p305, %s302, 33
      %s307 = smul.addr %s306, 3
      %s308 = smul.addr %s304, 102
      %s309 = sadd.s32 %s307, %s308
      %s310 = smul.addr %s309, 4
      %s311 = scalar_lea.vmem %s0, %s310
      %p312 = pneg %p52
      %p313 = pneg %p49
      %s314 = sadd.s32 %s22, 1
      %s315 = smul.u32 2, %s314
      %p316 = scmp.lt.s32.totalorder %s21, 1
      %s317 = scalar_select %p316, %s21, 1
      %p318 = scmp.lt.s32.totalorder %s315, 33
      %s319 = scalar_select %p318, %s315, 33
      %s320 = smul.addr %s319, 3
      %s321 = smul.addr %s317, 102
      %s322 = sadd.s32 %s320, %s321
      %s323 = smul.addr %s322, 4
      %s324 = scalar_lea.vmem %s1, %s323
      %p325 = pneg %p82
      %p326 = pneg %p79
      %s327 = smul.u32 2, %s22
      %p328 = scmp.lt.s32.totalorder %s21, 1
      %s329 = scalar_select %p328, %s21, 1
      %p330 = scmp.lt.s32.totalorder %s327, 33
      %s331 = scalar_select %p330, %s327, 33
      %s332 = smul.addr %s331, 3
      %s333 = smul.addr %s329, 102
      %s334 = sadd.s32 %s332, %s333
      %s335 = smul.addr %s334, 4
      %s336 = scalar_lea.vmem %s2, %s335
      %p337 = pneg %p110
      %p338 = pneg %p107
      %s339 = sadd.s32 %s22, 1
      %s340 = smul.u32 2, %s339
      %p341 = scmp.lt.s32.totalorder %s21, 1
      %s342 = scalar_select %p341, %s21, 1
      %p343 = scmp.lt.s32.totalorder %s340, 33
      %s344 = scalar_select %p343, %s340, 33
      %s345 = smul.addr %s344, 3
      %s346 = smul.addr %s342, 102
      %s347 = sadd.s32 %s345, %s346
      %s348 = smul.addr %s347, 4
      %s349 = scalar_lea.vmem %s3, %s348
      %p350 = pneg %p140
      %p351 = pneg %p137
      %p352 = pneg %p161
      %p353 = pneg %p158
      %p354 = pneg %p182
      %p355 = pneg %p179
      %p356 = pneg %p210
      %p357 = pneg %p207
      %p358 = scmp.lt.s32.totalorder %s21, 1
      %s359 = scalar_select %p358, %s21, 1
      %p360 = scmp.lt.s32.totalorder %s22, 15
      %s361 = scalar_select %p360, %s22, 15
      %s362 = smul.addr %s361, 2
      %s363 = smul.addr %s359, 32
      %s364 = sadd.s32 %s362, %s363
      %s365 = smul.addr %s364, 4
      %s366 = scalar_lea.vmem %s6, %s365
      %s367 = smul.u32 2, %s22
      %p368 = scmp.lt.s32.totalorder %s21, 1
      %s369 = scalar_select %p368, %s21, 1
      %p370 = scmp.lt.s32.totalorder %s367, 33
      %s371 = scalar_select %p370, %s367, 33
      %s372 = smul.addr %s371, 3
      %s373 = smul.addr %s369, 102
      %s374 = sadd.s32 %s372, %s373
      %s375 = smul.addr %s374, 4
      %s376 = scalar_lea.vmem %s0, %s375
      %s377 = smul.u32 2, %s22
      %s378 = sadd.s32 %s22, 1
      %s379 = smul.u32 2, %s378
      %p380 = scmp.lt.s32.totalorder %s21, 1
      %s381 = scalar_select %p380, %s21, 1
      %p382 = scmp.lt.s32.totalorder %s379, 33
      %s383 = scalar_select %p382, %s379, 33
      %s384 = smul.addr %s383, 3
      %s385 = smul.addr %s381, 102
      %s386 = sadd.s32 %s384, %s385
      %s387 = smul.addr %s386, 4
      %s388 = scalar_lea.vmem %s1, %s387
      %s389 = sadd.s32 %s22, 1
      %s390 = smul.u32 2, %s389
      %s391 = smul.u32 2, %s22
      %p392 = scmp.lt.s32.totalorder %s21, 1
      %s393 = scalar_select %p392, %s21, 1
      %p394 = scmp.lt.s32.totalorder %s391, 33
      %s395 = scalar_select %p394, %s391, 33
      %s396 = smul.addr %s395, 3
      %s397 = smul.addr %s393, 102
      %s398 = sadd.s32 %s396, %s397
      %s399 = smul.addr %s398, 4
      %s400 = scalar_lea.vmem %s2, %s399
      %s401 = smul.u32 2, %s22
      %s402 = sadd.s32 %s22, 1
      %s403 = smul.u32 2, %s402
      %p404 = scmp.lt.s32.totalorder %s21, 1
      %s405 = scalar_select %p404, %s21, 1
      %p406 = scmp.lt.s32.totalorder %s403, 33
      %s407 = scalar_select %p406, %s403, 33
      %s408 = smul.addr %s407, 3
      %s409 = smul.addr %s405, 102
      %s410 = sadd.s32 %s408, %s409
      %s411 = smul.addr %s410, 4
      %s412 = scalar_lea.vmem %s3, %s411
      %s413 = sadd.s32 %s22, 1
      %s414 = smul.u32 2, %s413
      %p415 = scmp.lt.s32.totalorder %s21, 1
      %s416 = scalar_select %p415, %s21, 1
      %p417 = scmp.lt.s32.totalorder %s22, 15
      %s418 = scalar_select %p417, %s22, 15
      %s419 = smul.addr %s418, 2
      %s420 = smul.addr %s416, 32
      %s421 = sadd.s32 %s419, %s420
      %s422 = smul.addr %s421, 4
      %s423 = scalar_lea.vmem %s6, %s422
      %v425 = vld [vmem:[%s376] sm:$0xf]
      %v426 = vld [vmem:[%s376 + $0x4] sm:$0xf]
      %v427 = vld [vmem:[%s376 + $0x8] sm:$0x1]
      %s428 = scalar_lea.vmem %s376, 12
      %v429 = vld [vmem:[%s428] sm:$0xf]
      %v430 = vld [vmem:[%s428 + $0x4] sm:$0xf]
      %v431 = vld [vmem:[%s428 + $0x8] sm:$0x1]
      %v432 = vld [vmem:[%s388] sm:$0xf]
      %v433 = vld [vmem:[%s388 + $0x4] sm:$0xf]
      %v434 = vld [vmem:[%s388 + $0x8] sm:$0x1]
      %s435 = scalar_lea.vmem %s388, 12
      %v436 = vld [vmem:[%s435] sm:$0xf]
      %v437 = vld [vmem:[%s435 + $0x4] sm:$0xf]
      %v438 = vld [vmem:[%s435 + $0x8] sm:$0x1]
      %v439 = vld [vmem:[%s400] sm:$0xf]
      %v440 = vld [vmem:[%s400 + $0x4] sm:$0xf]
      %v441 = vld [vmem:[%s400 + $0x8] sm:$0x1]
      %s442 = scalar_lea.vmem %s400, 12
      %v443 = vld [vmem:[%s442] sm:$0xf]
      %v444 = vld [vmem:[%s442 + $0x4] sm:$0xf]
      %v445 = vld [vmem:[%s442 + $0x8] sm:$0x1]
      %v446 = vld [vmem:[%s412] sm:$0xf]
      %v447 = vld [vmem:[%s412 + $0x4] sm:$0xf]
      %v448 = vld [vmem:[%s412 + $0x8] sm:$0x1]
      %s449 = scalar_lea.vmem %s412, 12
      %v450 = vld [vmem:[%s449] sm:$0xf]
      %v451 = vld [vmem:[%s449 + $0x4] sm:$0xf]
      %v452 = vld [vmem:[%s449 + $0x8] sm:$0x1]
      %v453 = vld [vmem:[%s4] sm:$0xf]
      %s454 = scalar_lea.vmem %s4, 4
      %v455 = vld [vmem:[%s454] sm:$0xf]
      %v458 = vunpack.c.l.b16 %v439
      %v459 = vunpack.c.l.b16 %v440
      %v460 = vpack.c.b16 %v459, %v458
      %vm461 = vcmask 64512
      %v463 = vsel %vm461, %v460, 0
      %vm465 = vcmask 1043456
      %v467 = vsel %vm465, %v455, 0
      %469 = vmatprep.subr.bf16.mxu0 0
      %470 = vmatpush1.bf16.msra.mxu0 %v467
      %471 = vmatprep.subr.bf16.mxu0 0
      %472 = vmatpush1.bf16.msra.mxu0 0
      %473 = vmatprep.subr.bf16.mxu0 0
      %474 = vmatpush1.bf16.msra.mxu0 0
      %475 = vmatprep.subr.bf16.mxu0 0
      %476 = vmatpush1.bf16.msra.mxu0 0
      %477 = vmatprep.subr.bf16.mxu0 0
      %478 = vmatpush1.bf16.msra.mxu0 0
      %479 = vmatprep.subr.bf16.mxu0 0
      %480 = vmatpush1.bf16.msra.mxu0 0
      %481 = vmatprep.subr.bf16.mxu0 0
      %482 = vmatpush1.bf16.msra.mxu0 0
      %483 = vmatprep.subr.bf16.mxu0 0
      %484 = vmatpush1.bf16.msra.mxu0 0
      %485 = vmatprep.subr.bf16.mxu0 0
      %486 = vmatpush1.bf16.msra.mxu0 0
      %487 = vmatprep.subr.bf16.mxu0 0
      %488 = vmatpush1.bf16.msra.mxu0 0
      %489 = vmatprep.subr.bf16.mxu0 0
      %490 = vmatpush1.bf16.msra.mxu0 0
      %491 = vmatprep.subr.bf16.mxu0 0
      %492 = vmatpush1.bf16.msra.mxu0 0
      %493 = vmatprep.subr.bf16.mxu0 0
      %494 = vmatpush1.bf16.msra.mxu0 0
      %495 = vmatprep.subr.bf16.mxu0 0
      %496 = vmatpush1.bf16.msra.mxu0 0
      %497 = vmatprep.subr.bf16.mxu0 0
      %498 = vmatpush1.bf16.msra.mxu0 0
      %499 = vmatprep.subr.bf16.mxu0 0
      %500 = vmatpush1.bf16.msra.mxu0 0
      %501 = vmatprep.mubr.bf16.mxu0 0
      %502 = vmatmul.mubr.bf16.gmra.mrb[0].mxu0 %v463
      %v503 = vpop.f32.mrb[0].mxu0
      %v504 = vadd.f32 0.0, %v503
      %v505 = vpop.f32.mrb[0].mxu0
      %v506 = vpop.f32.mrb[0].mxu0
      %v507 = vadd.f32 0.0, %v506
      %v508 = vpop.f32.mrb[0].mxu0
      %509 = vdwg.mxu0
      %v512 = vunpack.c.l.b16 %v425
      %v513 = vunpack.c.l.b16 %v426
      %v514 = vpack.c.b16 %v513, %v512
      %v516 = vsel %vm461, %v514, 0
      %v519 = vsel %vm465, %v453, 0
      %521 = vmatprep.subr.bf16.mxu0 0
      %522 = vmatpush1.bf16.msra.mxu0 %v519
      %523 = vmatprep.subr.bf16.mxu0 0
      %524 = vmatpush1.bf16.msra.mxu0 0
      %525 = vmatprep.subr.bf16.mxu0 0
      %526 = vmatpush1.bf16.msra.mxu0 0
      %527 = vmatprep.subr.bf16.mxu0 0
      %528 = vmatpush1.bf16.msra.mxu0 0
      %529 = vmatprep.subr.bf16.mxu0 0
      %530 = vmatpush1.bf16.msra.mxu0 0
      %531 = vmatprep.subr.bf16.mxu0 0
      %532 = vmatpush1.bf16.msra.mxu0 0
      %533 = vmatprep.subr.bf16.mxu0 0
      %534 = vmatpush1.bf16.msra.mxu0 0
      %535 = vmatprep.subr.bf16.mxu0 0
      %536 = vmatpush1.bf16.msra.mxu0 0
      %537 = vmatprep.subr.bf16.mxu0 0
      %538 = vmatpush1.bf16.msra.mxu0 0
      %539 = vmatprep.subr.bf16.mxu0 0
      %540 = vmatpush1.bf16.msra.mxu0 0
      %541 = vmatprep.subr.bf16.mxu0 0
      %542 = vmatpush1.bf16.msra.mxu0 0
      %543 = vmatprep.subr.bf16.mxu0 0
      %544 = vmatpush1.bf16.msra.mxu0 0
      %545 = vmatprep.subr.bf16.mxu0 0
      %546 = vmatpush1.bf16.msra.mxu0 0
      %547 = vmatprep.subr.bf16.mxu0 0
      %548 = vmatpush1.bf16.msra.mxu0 0
      %549 = vmatprep.subr.bf16.mxu0 0
      %550 = vmatpush1.bf16.msra.mxu0 0
      %551 = vmatprep.subr.bf16.mxu0 0
      %552 = vmatpush1.bf16.msra.mxu0 0
      %553 = vmatprep.mubr.bf16.mxu0 0
      %554 = vmatmul.mubr.bf16.gmra.mrb[0].mxu0 %v516
      %v555 = vpop.f32.mrb[0].mxu0
      %v556 = vadd.f32 %v504, %v555
      %v557 = vpop.f32.mrb[0].mxu0
      %v558 = vpop.f32.mrb[0].mxu0
      %v559 = vadd.f32 %v507, %v558
      %v560 = vpop.f32.mrb[0].mxu0
      %561 = vdwg.mxu0
      %s562 = scalar_lea.vmem %s4, 8
      %v563 = vld [vmem:[%s562] sm:$0xf]
      %v565 = vunpack.c.l.b16 %v427
      %v566 = vpack.c.b16 %v565, %v565
      %vm567 = vsmask.f32 7424
      %v568 = vshrl.u32 %v514, 16
      %v570 = vshll.u32 %v514, 16
      %v572 = vrot.slane %v570, 1
      %v573 = vor.u32 %v568, %v572
      %v575 = vshll.u32 %v566, 16
      %v577 = vrot.slane %v575, 1
      %v578 = vsel %vm567, %v573, %v577
      %v580 = vsel %vm461, %v578, 0
      %v583 = vsel %vm465, %v563, 0
      %585 = vmatprep.subr.bf16.mxu0 0
      %586 = vmatpush1.bf16.msra.mxu0 %v583
      %587 = vmatprep.subr.bf16.mxu0 0
      %588 = vmatpush1.bf16.msra.mxu0 0
      %589 = vmatprep.subr.bf16.mxu0 0
      %590 = vmatpush1.bf16.msra.mxu0 0
      %591 = vmatprep.subr.bf16.mxu0 0
      %592 = vmatpush1.bf16.msra.mxu0 0
      %593 = vmatprep.subr.bf16.mxu0 0
      %594 = vmatpush1.bf16.msra.mxu0 0
      %595 = vmatprep.subr.bf16.mxu0 0
      %596 = vmatpush1.bf16.msra.mxu0 0
      %597 = vmatprep.subr.bf16.mxu0 0
      %598 = vmatpush1.bf16.msra.mxu0 0
      %599 = vmatprep.subr.bf16.mxu0 0
      %600 = vmatpush1.bf16.msra.mxu0 0
      %601 = vmatprep.subr.bf16.mxu0 0
      %602 = vmatpush1.bf16.msra.mxu0 0
      %603 = vmatprep.subr.bf16.mxu0 0
      %604 = vmatpush1.bf16.msra.mxu0 0
      %605 = vmatprep.subr.bf16.mxu0 0
      %606 = vmatpush1.bf16.msra.mxu0 0
      %607 = vmatprep.subr.bf16.mxu0 0
      %608 = vmatpush1.bf16.msra.mxu0 0
      %609 = vmatprep.subr.bf16.mxu0 0
      %610 = vmatpush1.bf16.msra.mxu0 0
      %611 = vmatprep.subr.bf16.mxu0 0
      %612 = vmatpush1.bf16.msra.mxu0 0
      %613 = vmatprep.subr.bf16.mxu0 0
      %614 = vmatpush1.bf16.msra.mxu0 0
      %615 = vmatprep.subr.bf16.mxu0 0
      %616 = vmatpush1.bf16.msra.mxu0 0
      %617 = vmatprep.mubr.bf16.mxu0 0
      %618 = vmatmul.mubr.bf16.gmra.mrb[0].mxu0 %v580
      %v619 = vpop.f32.mrb[0].mxu0
      %v620 = vadd.f32 0.0, %v619
      %v621 = vpop.f32.mrb[0].mxu0
      %v622 = vpop.f32.mrb[0].mxu0
      %v623 = vadd.f32 0.0, %v622
      %v624 = vpop.f32.mrb[0].mxu0
      %625 = vdwg.mxu0
      %v626 = vadd.f32 %v556, %v620
      %v627 = vadd.f32 %v559, %v623
      %s628 = scalar_lea.vmem %s4, 12
      %v629 = vld [vmem:[%s628] sm:$0xf]
      %v631 = vunpack.c.l.b16 %v441
      %v632 = vpack.c.b16 %v631, %v631
      %v633 = vshrl.u32 %v460, 16
      %v635 = vshll.u32 %v460, 16
      %v637 = vrot.slane %v635, 1
      %v638 = vor.u32 %v633, %v637
      %v640 = vshll.u32 %v632, 16
      %v642 = vrot.slane %v640, 1
      %v643 = vsel %vm567, %v638, %v642
      %v645 = vsel %vm461, %v643, 0
      %v648 = vsel %vm465, %v629, 0
      %650 = vmatprep.subr.bf16.mxu0 0
      %651 = vmatpush1.bf16.msra.mxu0 %v648
      %652 = vmatprep.subr.bf16.mxu0 0
      %653 = vmatpush1.bf16.msra.mxu0 0
      %654 = vmatprep.subr.bf16.mxu0 0
      %655 = vmatpush1.bf16.msra.mxu0 0
      %656 = vmatprep.subr.bf16.mxu0 0
      %657 = vmatpush1.bf16.msra.mxu0 0
      %658 = vmatprep.subr.bf16.mxu0 0
      %659 = vmatpush1.bf16.msra.mxu0 0
      %660 = vmatprep.subr.bf16.mxu0 0
      %661 = vmatpush1.bf16.msra.mxu0 0
      %662 = vmatprep.subr.bf16.mxu0 0
      %663 = vmatpush1.bf16.msra.mxu0 0
      %664 = vmatprep.subr.bf16.mxu0 0
      %665 = vmatpush1.bf16.msra.mxu0 0
      %666 = vmatprep.subr.bf16.mxu0 0
      %667 = vmatpush1.bf16.msra.mxu0 0
      %668 = vmatprep.subr.bf16.mxu0 0
      %669 = vmatpush1.bf16.msra.mxu0 0
      %670 = vmatprep.subr.bf16.mxu0 0
      %671 = vmatpush1.bf16.msra.mxu0 0
      %672 = vmatprep.subr.bf16.mxu0 0
      %673 = vmatpush1.bf16.msra.mxu0 0
      %674 = vmatprep.subr.bf16.mxu0 0
      %675 = vmatpush1.bf16.msra.mxu0 0
      %676 = vmatprep.subr.bf16.mxu0 0
      %677 = vmatpush1.bf16.msra.mxu0 0
      %678 = vmatprep.subr.bf16.mxu0 0
      %679 = vmatpush1.bf16.msra.mxu0 0
      %680 = vmatprep.subr.bf16.mxu0 0
      %681 = vmatpush1.bf16.msra.mxu0 0
      %682 = vmatprep.mubr.bf16.mxu0 0
      %683 = vmatmul.mubr.bf16.gmra.mrb[0].mxu0 %v645
      %v684 = vpop.f32.mrb[0].mxu0
      %v685 = vadd.f32 0.0, %v684
      %v686 = vpop.f32.mrb[0].mxu0
      %v687 = vpop.f32.mrb[0].mxu0
      %v688 = vadd.f32 0.0, %v687
      %v689 = vpop.f32.mrb[0].mxu0
      %690 = vdwg.mxu0
      %v691 = vadd.f32 %v626, %v685
      %v692 = vadd.f32 %v627, %v688
      %s693 = scalar_lea.vmem %s4, 16
      %v694 = vld [vmem:[%s693] sm:$0xf]
      %v697 = vunpack.c.l.b16 %v429
      %v698 = vunpack.c.l.b16 %v430
      %v699 = vpack.c.b16 %v698, %v697
      %v701 = vsel %vm461, %v699, 0
      %v704 = vsel %vm465, %v694, 0
      %706 = vmatprep.subr.bf16.mxu0 0
      %707 = vmatpush1.bf16.msra.mxu0 %v704
      %708 = vmatprep.subr.bf16.mxu0 0
      %709 = vmatpush1.bf16.msra.mxu0 0
      %710 = vmatprep.subr.bf16.mxu0 0
      %711 = vmatpush1.bf16.msra.mxu0 0
      %712 = vmatprep.subr.bf16.mxu0 0
      %713 = vmatpush1.bf16.msra.mxu0 0
      %714 = vmatprep.subr.bf16.mxu0 0
      %715 = vmatpush1.bf16.msra.mxu0 0
      %716 = vmatprep.subr.bf16.mxu0 0
      %717 = vmatpush1.bf16.msra.mxu0 0
      %718 = vmatprep.subr.bf16.mxu0 0
      %719 = vmatpush1.bf16.msra.mxu0 0
      %720 = vmatprep.subr.bf16.mxu0 0
      %721 = vmatpush1.bf16.msra.mxu0 0
      %722 = vmatprep.subr.bf16.mxu0 0
      %723 = vmatpush1.bf16.msra.mxu0 0
      %724 = vmatprep.subr.bf16.mxu0 0
      %725 = vmatpush1.bf16.msra.mxu0 0
      %726 = vmatprep.subr.bf16.mxu0 0
      %727 = vmatpush1.bf16.msra.mxu0 0
      %728 = vmatprep.subr.bf16.mxu0 0
      %729 = vmatpush1.bf16.msra.mxu0 0
      %730 = vmatprep.subr.bf16.mxu0 0
      %731 = vmatpush1.bf16.msra.mxu0 0
      %732 = vmatprep.subr.bf16.mxu0 0
      %733 = vmatpush1.bf16.msra.mxu0 0
      %734 = vmatprep.subr.bf16.mxu0 0
      %735 = vmatpush1.bf16.msra.mxu0 0
      %736 = vmatprep.subr.bf16.mxu0 0
      %737 = vmatpush1.bf16.msra.mxu0 0
      %738 = vmatprep.mubr.bf16.mxu0 0
      %739 = vmatmul.mubr.bf16.gmra.mrb[0].mxu0 %v701
      %v740 = vpop.f32.mrb[0].mxu0
      %v741 = vadd.f32 0.0, %v740
      %v742 = vpop.f32.mrb[0].mxu0
      %v743 = vpop.f32.mrb[0].mxu0
      %v744 = vadd.f32 0.0, %v743
      %v745 = vpop.f32.mrb[0].mxu0
      %746 = vdwg.mxu0
      %v747 = vadd.f32 %v691, %v741
      %v748 = vadd.f32 %v692, %v744
      %s749 = scalar_lea.vmem %s4, 20
      %v750 = vld [vmem:[%s749] sm:$0xf]
      %v753 = vunpack.c.l.b16 %v443
      %v754 = vunpack.c.l.b16 %v444
      %v755 = vpack.c.b16 %v754, %v753
      %v757 = vsel %vm461, %v755, 0
      %v760 = vsel %vm465, %v750, 0
      %762 = vmatprep.subr.bf16.mxu0 0
      %763 = vmatpush1.bf16.msra.mxu0 %v760
      %764 = vmatprep.subr.bf16.mxu0 0
      %765 = vmatpush1.bf16.msra.mxu0 0
      %766 = vmatprep.subr.bf16.mxu0 0
      %767 = vmatpush1.bf16.msra.mxu0 0
      %768 = vmatprep.subr.bf16.mxu0 0
      %769 = vmatpush1.bf16.msra.mxu0 0
      %770 = vmatprep.subr.bf16.mxu0 0
      %771 = vmatpush1.bf16.msra.mxu0 0
      %772 = vmatprep.subr.bf16.mxu0 0
      %773 = vmatpush1.bf16.msra.mxu0 0
      %774 = vmatprep.subr.bf16.mxu0 0
      %775 = vmatpush1.bf16.msra.mxu0 0
      %776 = vmatprep.subr.bf16.mxu0 0
      %777 = vmatpush1.bf16.msra.mxu0 0
      %778 = vmatprep.subr.bf16.mxu0 0
      %779 = vmatpush1.bf16.msra.mxu0 0
      %780 = vmatprep.subr.bf16.mxu0 0
      %781 = vmatpush1.bf16.msra.mxu0 0
      %782 = vmatprep.subr.bf16.mxu0 0
      %783 = vmatpush1.bf16.msra.mxu0 0
      %784 = vmatprep.subr.bf16.mxu0 0
      %785 = vmatpush1.bf16.msra.mxu0 0
      %786 = vmatprep.subr.bf16.mxu0 0
      %787 = vmatpush1.bf16.msra.mxu0 0
      %788 = vmatprep.subr.bf16.mxu0 0
      %789 = vmatpush1.bf16.msra.mxu0 0
      %790 = vmatprep.subr.bf16.mxu0 0
      %791 = vmatpush1.bf16.msra.mxu0 0
      %792 = vmatprep.subr.bf16.mxu0 0
      %793 = vmatpush1.bf16.msra.mxu0 0
      %794 = vmatprep.mubr.bf16.mxu0 0
      %795 = vmatmul.mubr.bf16.gmra.mrb[0].mxu0 %v757
      %v796 = vpop.f32.mrb[0].mxu0
      %v797 = vadd.f32 0.0, %v796
      %v798 = vpop.f32.mrb[0].mxu0
      %v799 = vpop.f32.mrb[0].mxu0
      %v800 = vadd.f32 0.0, %v799
      %v801 = vpop.f32.mrb[0].mxu0
      %802 = vdwg.mxu0
      %v803 = vadd.f32 %v747, %v797
      %v804 = vadd.f32 %v748, %v800
      %s805 = scalar_lea.vmem %s4, 24
      %v806 = vld [vmem:[%s805] sm:$0xf]
      %v808 = vunpack.c.l.b16 %v431
      %v809 = vpack.c.b16 %v808, %v808
      %v810 = vshrl.u32 %v699, 16
      %v812 = vshll.u32 %v699, 16
      %v814 = vrot.slane %v812, 1
      %v815 = vor.u32 %v810, %v814
      %v817 = vshll.u32 %v809, 16
      %v819 = vrot.slane %v817, 1
      %v820 = vsel %vm567, %v815, %v819
      %v822 = vsel %vm461, %v820, 0
      %v825 = vsel %vm465, %v806, 0
      %827 = vmatprep.subr.bf16.mxu0 0
      %828 = vmatpush1.bf16.msra.mxu0 %v825
      %829 = vmatprep.subr.bf16.mxu0 0
      %830 = vmatpush1.bf16.msra.mxu0 0
      %831 = vmatprep.subr.bf16.mxu0 0
      %832 = vmatpush1.bf16.msra.mxu0 0
      %833 = vmatprep.subr.bf16.mxu0 0
      %834 = vmatpush1.bf16.msra.mxu0 0
      %835 = vmatprep.subr.bf16.mxu0 0
      %836 = vmatpush1.bf16.msra.mxu0 0
      %837 = vmatprep.subr.bf16.mxu0 0
      %838 = vmatpush1.bf16.msra.mxu0 0
      %839 = vmatprep.subr.bf16.mxu0 0
      %840 = vmatpush1.bf16.msra.mxu0 0
      %841 = vmatprep.subr.bf16.mxu0 0
      %842 = vmatpush1.bf16.msra.mxu0 0
      %843 = vmatprep.subr.bf16.mxu0 0
      %844 = vmatpush1.bf16.msra.mxu0 0
      %845 = vmatprep.subr.bf16.mxu0 0
      %846 = vmatpush1.bf16.msra.mxu0 0
      %847 = vmatprep.subr.bf16.mxu0 0
      %848 = vmatpush1.bf16.msra.mxu0 0
      %849 = vmatprep.subr.bf16.mxu0 0
      %850 = vmatpush1.bf16.msra.mxu0 0
      %851 = vmatprep.subr.bf16.mxu0 0
      %852 = vmatpush1.bf16.msra.mxu0 0
      %853 = vmatprep.subr.bf16.mxu0 0
      %854 = vmatpush1.bf16.msra.mxu0 0
      %855 = vmatprep.subr.bf16.mxu0 0
      %856 = vmatpush1.bf16.msra.mxu0 0
      %857 = vmatprep.subr.bf16.mxu0 0
      %858 = vmatpush1.bf16.msra.mxu0 0
      %859 = vmatprep.mubr.bf16.mxu0 0
      %860 = vmatmul.mubr.bf16.gmra.mrb[0].mxu0 %v822
      %v861 = vpop.f32.mrb[0].mxu0
      %v862 = vadd.f32 0.0, %v861
      %v863 = vpop.f32.mrb[0].mxu0
      %v864 = vpop.f32.mrb[0].mxu0
      %v865 = vadd.f32 0.0, %v864
      %v866 = vpop.f32.mrb[0].mxu0
      %867 = vdwg.mxu0
      %v868 = vadd.f32 %v803, %v862
      %v869 = vadd.f32 %v804, %v865
      %s870 = scalar_lea.vmem %s4, 28
      %v871 = vld [vmem:[%s870] sm:$0xf]
      %v873 = vunpack.c.l.b16 %v445
      %v874 = vpack.c.b16 %v873, %v873
      %v875 = vshrl.u32 %v755, 16
      %v877 = vshll.u32 %v755, 16
      %v879 = vrot.slane %v877, 1
      %v880 = vor.u32 %v875, %v879
      %v882 = vshll.u32 %v874, 16
      %v884 = vrot.slane %v882, 1
      %v885 = vsel %vm567, %v880, %v884
      %v887 = vsel %vm461, %v885, 0
      %v890 = vsel %vm465, %v871, 0
      %892 = vmatprep.subr.bf16.mxu0 0
      %893 = vmatpush1.bf16.msra.mxu0 %v890
      %894 = vmatprep.subr.bf16.mxu0 0
      %895 = vmatpush1.bf16.msra.mxu0 0
      %896 = vmatprep.subr.bf16.mxu0 0
      %897 = vmatpush1.bf16.msra.mxu0 0
      %898 = vmatprep.subr.bf16.mxu0 0
      %899 = vmatpush1.bf16.msra.mxu0 0
      %900 = vmatprep.subr.bf16.mxu0 0
      %901 = vmatpush1.bf16.msra.mxu0 0
      %902 = vmatprep.subr.bf16.mxu0 0
      %903 = vmatpush1.bf16.msra.mxu0 0
      %904 = vmatprep.subr.bf16.mxu0 0
      %905 = vmatpush1.bf16.msra.mxu0 0
      %906 = vmatprep.subr.bf16.mxu0 0
      %907 = vmatpush1.bf16.msra.mxu0 0
      %908 = vmatprep.subr.bf16.mxu0 0
      %909 = vmatpush1.bf16.msra.mxu0 0
      %910 = vmatprep.subr.bf16.mxu0 0
      %911 = vmatpush1.bf16.msra.mxu0 0
      %912 = vmatprep.subr.bf16.mxu0 0
      %913 = vmatpush1.bf16.msra.mxu0 0
      %914 = vmatprep.subr.bf16.mxu0 0
      %915 = vmatpush1.bf16.msra.mxu0 0
      %916 = vmatprep.subr.bf16.mxu0 0
      %917 = vmatpush1.bf16.msra.mxu0 0
      %918 = vmatprep.subr.bf16.mxu0 0
      %919 = vmatpush1.bf16.msra.mxu0 0
      %920 = vmatprep.subr.bf16.mxu0 0
      %921 = vmatpush1.bf16.msra.mxu0 0
      %922 = vmatprep.subr.bf16.mxu0 0
      %923 = vmatpush1.bf16.msra.mxu0 0
      %924 = vmatprep.mubr.bf16.mxu0 0
      %925 = vmatmul.mubr.bf16.gmra.mrb[0].mxu0 %v887
      %v926 = vpop.f32.mrb[0].mxu0
      %v927 = vadd.f32 0.0, %v926
      %v928 = vpop.f32.mrb[0].mxu0
      %v929 = vpop.f32.mrb[0].mxu0
      %v930 = vadd.f32 0.0, %v929
      %v931 = vpop.f32.mrb[0].mxu0
      %932 = vdwg.mxu0
      %v933 = vadd.f32 %v868, %v927
      %v934 = vadd.f32 %v869, %v930
      %s935 = scalar_lea.vmem %s4, 32
      %v936 = vld [vmem:[%s935] sm:$0xf]
      %v939 = vunpack.c.l.b16 %v432
      %v940 = vunpack.c.l.b16 %v433
      %v941 = vpack.c.b16 %v940, %v939
      %v943 = vsel %vm461, %v941, 0
      %v946 = vsel %vm465, %v936, 0
      %948 = vmatprep.subr.bf16.mxu0 0
      %949 = vmatpush1.bf16.msra.mxu0 %v946
      %950 = vmatprep.subr.bf16.mxu0 0
      %951 = vmatpush1.bf16.msra.mxu0 0
      %952 = vmatprep.subr.bf16.mxu0 0
      %953 = vmatpush1.bf16.msra.mxu0 0
      %954 = vmatprep.subr.bf16.mxu0 0
      %955 = vmatpush1.bf16.msra.mxu0 0
      %956 = vmatprep.subr.bf16.mxu0 0
      %957 = vmatpush1.bf16.msra.mxu0 0
      %958 = vmatprep.subr.bf16.mxu0 0
      %959 = vmatpush1.bf16.msra.mxu0 0
      %960 = vmatprep.subr.bf16.mxu0 0
      %961 = vmatpush1.bf16.msra.mxu0 0
      %962 = vmatprep.subr.bf16.mxu0 0
      %963 = vmatpush1.bf16.msra.mxu0 0
      %964 = vmatprep.subr.bf16.mxu0 0
      %965 = vmatpush1.bf16.msra.mxu0 0
      %966 = vmatprep.subr.bf16.mxu0 0
      %967 = vmatpush1.bf16.msra.mxu0 0
      %968 = vmatprep.subr.bf16.mxu0 0
      %969 = vmatpush1.bf16.msra.mxu0 0
      %970 = vmatprep.subr.bf16.mxu0 0
      %971 = vmatpush1.bf16.msra.mxu0 0
      %972 = vmatprep.subr.bf16.mxu0 0
      %973 = vmatpush1.bf16.msra.mxu0 0
      %974 = vmatprep.subr.bf16.mxu0 0
      %975 = vmatpush1.bf16.msra.mxu0 0
      %976 = vmatprep.subr.bf16.mxu0 0
      %977 = vmatpush1.bf16.msra.mxu0 0
      %978 = vmatprep.subr.bf16.mxu0 0
      %979 = vmatpush1.bf16.msra.mxu0 0
      %980 = vmatprep.mubr.bf16.mxu0 0
      %981 = vmatmul.mubr.bf16.gmra.mrb[0].mxu0 %v943
      %v982 = vpop.f32.mrb[0].mxu0
      %v983 = vadd.f32 0.0, %v982
      %v984 = vpop.f32.mrb[0].mxu0
      %v985 = vpop.f32.mrb[0].mxu0
      %v986 = vadd.f32 0.0, %v985
      %v987 = vpop.f32.mrb[0].mxu0
      %988 = vdwg.mxu0
      %v989 = vadd.f32 %v933, %v983
      %v990 = vadd.f32 %v934, %v986
      %s991 = scalar_lea.vmem %s4, 36
      %v992 = vld [vmem:[%s991] sm:$0xf]
      %v995 = vunpack.c.l.b16 %v446
      %v996 = vunpack.c.l.b16 %v447
      %v997 = vpack.c.b16 %v996, %v995
      %v999 = vsel %vm461, %v997, 0
      %v1002 = vsel %vm465, %v992, 0
      %1004 = vmatprep.subr.bf16.mxu0 0
      %1005 = vmatpush1.bf16.msra.mxu0 %v1002
      %1006 = vmatprep.subr.bf16.mxu0 0
      %1007 = vmatpush1.bf16.msra.mxu0 0
      %1008 = vmatprep.subr.bf16.mxu0 0
      %1009 = vmatpush1.bf16.msra.mxu0 0
      %1010 = vmatprep.subr.bf16.mxu0 0
      %1011 = vmatpush1.bf16.msra.mxu0 0
      %1012 = vmatprep.subr.bf16.mxu0 0
      %1013 = vmatpush1.bf16.msra.mxu0 0
      %1014 = vmatprep.subr.bf16.mxu0 0
      %1015 = vmatpush1.bf16.msra.mxu0 0
      %1016 = vmatprep.subr.bf16.mxu0 0
      %1017 = vmatpush1.bf16.msra.mxu0 0
      %1018 = vmatprep.subr.bf16.mxu0 0
      %1019 = vmatpush1.bf16.msra.mxu0 0
      %1020 = vmatprep.subr.bf16.mxu0 0
      %1021 = vmatpush1.bf16.msra.mxu0 0
      %1022 = vmatprep.subr.bf16.mxu0 0
      %1023 = vmatpush1.bf16.msra.mxu0 0
      %1024 = vmatprep.subr.bf16.mxu0 0
      %1025 = vmatpush1.bf16.msra.mxu0 0
      %1026 = vmatprep.subr.bf16.mxu0 0
      %1027 = vmatpush1.bf16.msra.mxu0 0
      %1028 = vmatprep.subr.bf16.mxu0 0
      %1029 = vmatpush1.bf16.msra.mxu0 0
      %1030 = vmatprep.subr.bf16.mxu0 0
      %1031 = vmatpush1.bf16.msra.mxu0 0
      %1032 = vmatprep.subr.bf16.mxu0 0
      %1033 = vmatpush1.bf16.msra.mxu0 0
      %1034 = vmatprep.subr.bf16.mxu0 0
      %1035 = vmatpush1.bf16.msra.mxu0 0
      %1036 = vmatprep.mubr.bf16.mxu0 0
      %1037 = vmatmul.mubr.bf16.gmra.mrb[0].mxu0 %v999
      %v1038 = vpop.f32.mrb[0].mxu0
      %v1039 = vadd.f32 0.0, %v1038
      %v1040 = vpop.f32.mrb[0].mxu0
      %v1041 = vpop.f32.mrb[0].mxu0
      %v1042 = vadd.f32 0.0, %v1041
      %v1043 = vpop.f32.mrb[0].mxu0
      %1044 = vdwg.mxu0
      %v1045 = vadd.f32 %v989, %v1039
      %v1046 = vadd.f32 %v990, %v1042
      %s1047 = scalar_lea.vmem %s4, 40
      %v1048 = vld [vmem:[%s1047] sm:$0xf]
      %v1050 = vunpack.c.l.b16 %v434
      %v1051 = vpack.c.b16 %v1050, %v1050
      %v1052 = vshrl.u32 %v941, 16
      %v1054 = vshll.u32 %v941, 16
      %v1056 = vrot.slane %v1054, 1
      %v1057 = vor.u32 %v1052, %v1056
      %v1059 = vshll.u32 %v1051, 16
      %v1061 = vrot.slane %v1059, 1
      %v1062 = vsel %vm567, %v1057, %v1061
      %v1064 = vsel %vm461, %v1062, 0
      %v1067 = vsel %vm465, %v1048, 0
      %1069 = vmatprep.subr.bf16.mxu0 0
      %1070 = vmatpush1.bf16.msra.mxu0 %v1067
      %1071 = vmatprep.subr.bf16.mxu0 0
      %1072 = vmatpush1.bf16.msra.mxu0 0
      %1073 = vmatprep.subr.bf16.mxu0 0
      %1074 = vmatpush1.bf16.msra.mxu0 0
      %1075 = vmatprep.subr.bf16.mxu0 0
      %1076 = vmatpush1.bf16.msra.mxu0 0
      %1077 = vmatprep.subr.bf16.mxu0 0
      %1078 = vmatpush1.bf16.msra.mxu0 0
      %1079 = vmatprep.subr.bf16.mxu0 0
      %1080 = vmatpush1.bf16.msra.mxu0 0
      %1081 = vmatprep.subr.bf16.mxu0 0
      %1082 = vmatpush1.bf16.msra.mxu0 0
      %1083 = vmatprep.subr.bf16.mxu0 0
      %1084 = vmatpush1.bf16.msra.mxu0 0
      %1085 = vmatprep.subr.bf16.mxu0 0
      %1086 = vmatpush1.bf16.msra.mxu0 0
      %1087 = vmatprep.subr.bf16.mxu0 0
      %1088 = vmatpush1.bf16.msra.mxu0 0
      %1089 = vmatprep.subr.bf16.mxu0 0
      %1090 = vmatpush1.bf16.msra.mxu0 0
      %1091 = vmatprep.subr.bf16.mxu0 0
      %1092 = vmatpush1.bf16.msra.mxu0 0
      %1093 = vmatprep.subr.bf16.mxu0 0
      %1094 = vmatpush1.bf16.msra.mxu0 0
      %1095 = vmatprep.subr.bf16.mxu0 0
      %1096 = vmatpush1.bf16.msra.mxu0 0
      %1097 = vmatprep.subr.bf16.mxu0 0
      %1098 = vmatpush1.bf16.msra.mxu0 0
      %1099 = vmatprep.subr.bf16.mxu0 0
      %1100 = vmatpush1.bf16.msra.mxu0 0
      %1101 = vmatprep.mubr.bf16.mxu0 0
      %1102 = vmatmul.mubr.bf16.gmra.mrb[0].mxu0 %v1064
      %v1103 = vpop.f32.mrb[0].mxu0
      %v1104 = vadd.f32 0.0, %v1103
      %v1105 = vpop.f32.mrb[0].mxu0
      %v1106 = vpop.f32.mrb[0].mxu0
      %v1107 = vadd.f32 0.0, %v1106
      %v1108 = vpop.f32.mrb[0].mxu0
      %1109 = vdwg.mxu0
      %v1110 = vadd.f32 %v1045, %v1104
      %v1111 = vadd.f32 %v1046, %v1107
      %s1112 = scalar_lea.vmem %s4, 44
      %v1113 = vld [vmem:[%s1112] sm:$0xf]
      %v1115 = vunpack.c.l.b16 %v448
      %v1116 = vpack.c.b16 %v1115, %v1115
      %v1117 = vshrl.u32 %v997, 16
      %v1119 = vshll.u32 %v997, 16
      %v1121 = vrot.slane %v1119, 1
      %v1122 = vor.u32 %v1117, %v1121
      %v1124 = vshll.u32 %v1116, 16
      %v1126 = vrot.slane %v1124, 1
      %v1127 = vsel %vm567, %v1122, %v1126
      %v1129 = vsel %vm461, %v1127, 0
      %v1132 = vsel %vm465, %v1113, 0
      %1134 = vmatprep.subr.bf16.mxu0 0
      %1135 = vmatpush1.bf16.msra.mxu0 %v1132
      %1136 = vmatprep.subr.bf16.mxu0 0
      %1137 = vmatpush1.bf16.msra.mxu0 0
      %1138 = vmatprep.subr.bf16.mxu0 0
      %1139 = vmatpush1.bf16.msra.mxu0 0
      %1140 = vmatprep.subr.bf16.mxu0 0
      %1141 = vmatpush1.bf16.msra.mxu0 0
      %1142 = vmatprep.subr.bf16.mxu0 0
      %1143 = vmatpush1.bf16.msra.mxu0 0
      %1144 = vmatprep.subr.bf16.mxu0 0
      %1145 = vmatpush1.bf16.msra.mxu0 0
      %1146 = vmatprep.subr.bf16.mxu0 0
      %1147 = vmatpush1.bf16.msra.mxu0 0
      %1148 = vmatprep.subr.bf16.mxu0 0
      %1149 = vmatpush1.bf16.msra.mxu0 0
      %1150 = vmatprep.subr.bf16.mxu0 0
      %1151 = vmatpush1.bf16.msra.mxu0 0
      %1152 = vmatprep.subr.bf16.mxu0 0
      %1153 = vmatpush1.bf16.msra.mxu0 0
      %1154 = vmatprep.subr.bf16.mxu0 0
      %1155 = vmatpush1.bf16.msra.mxu0 0
      %1156 = vmatprep.subr.bf16.mxu0 0
      %1157 = vmatpush1.bf16.msra.mxu0 0
      %1158 = vmatprep.subr.bf16.mxu0 0
      %1159 = vmatpush1.bf16.msra.mxu0 0
      %1160 = vmatprep.subr.bf16.mxu0 0
      %1161 = vmatpush1.bf16.msra.mxu0 0
      %1162 = vmatprep.subr.bf16.mxu0 0
      %1163 = vmatpush1.bf16.msra.mxu0 0
      %1164 = vmatprep.subr.bf16.mxu0 0
      %1165 = vmatpush1.bf16.msra.mxu0 0
      %1166 = vmatprep.mubr.bf16.mxu0 0
      %1167 = vmatmul.mubr.bf16.gmra.mrb[0].mxu0 %v1129
      %v1168 = vpop.f32.mrb[0].mxu0
      %v1169 = vadd.f32 0.0, %v1168
      %v1170 = vpop.f32.mrb[0].mxu0
      %v1171 = vpop.f32.mrb[0].mxu0
      %v1172 = vadd.f32 0.0, %v1171
      %v1173 = vpop.f32.mrb[0].mxu0
      %1174 = vdwg.mxu0
      %v1175 = vadd.f32 %v1110, %v1169
      %v1176 = vadd.f32 %v1111, %v1172
      %s1177 = scalar_lea.vmem %s4, 48
      %v1178 = vld [vmem:[%s1177] sm:$0xf]
      %v1181 = vunpack.c.l.b16 %v436
      %v1182 = vunpack.c.l.b16 %v437
      %v1183 = vpack.c.b16 %v1182, %v1181
      %v1185 = vsel %vm461, %v1183, 0
      %v1188 = vsel %vm465, %v1178, 0
      %1190 = vmatprep.subr.bf16.mxu0 0
      %1191 = vmatpush1.bf16.msra.mxu0 %v1188
      %1192 = vmatprep.subr.bf16.mxu0 0
      %1193 = vmatpush1.bf16.msra.mxu0 0
      %1194 = vmatprep.subr.bf16.mxu0 0
      %1195 = vmatpush1.bf16.msra.mxu0 0
      %1196 = vmatprep.subr.bf16.mxu0 0
      %1197 = vmatpush1.bf16.msra.mxu0 0
      %1198 = vmatprep.subr.bf16.mxu0 0
      %1199 = vmatpush1.bf16.msra.mxu0 0
      %1200 = vmatprep.subr.bf16.mxu0 0
      %1201 = vmatpush1.bf16.msra.mxu0 0
      %1202 = vmatprep.subr.bf16.mxu0 0
      %1203 = vmatpush1.bf16.msra.mxu0 0
      %1204 = vmatprep.subr.bf16.mxu0 0
      %1205 = vmatpush1.bf16.msra.mxu0 0
      %1206 = vmatprep.subr.bf16.mxu0 0
      %1207 = vmatpush1.bf16.msra.mxu0 0
      %1208 = vmatprep.subr.bf16.mxu0 0
      %1209 = vmatpush1.bf16.msra.mxu0 0
      %1210 = vmatprep.subr.bf16.mxu0 0
      %1211 = vmatpush1.bf16.msra.mxu0 0
      %1212 = vmatprep.subr.bf16.mxu0 0
      %1213 = vmatpush1.bf16.msra.mxu0 0
      %1214 = vmatprep.subr.bf16.mxu0 0
      %1215 = vmatpush1.bf16.msra.mxu0 0
      %1216 = vmatprep.subr.bf16.mxu0 0
      %1217 = vmatpush1.bf16.msra.mxu0 0
      %1218 = vmatprep.subr.bf16.mxu0 0
      %1219 = vmatpush1.bf16.msra.mxu0 0
      %1220 = vmatprep.subr.bf16.mxu0 0
      %1221 = vmatpush1.bf16.msra.mxu0 0
      %1222 = vmatprep.mubr.bf16.mxu0 0
      %1223 = vmatmul.mubr.bf16.gmra.mrb[0].mxu0 %v1185
      %v1224 = vpop.f32.mrb[0].mxu0
      %v1225 = vadd.f32 0.0, %v1224
      %v1226 = vpop.f32.mrb[0].mxu0
      %v1227 = vpop.f32.mrb[0].mxu0
      %v1228 = vadd.f32 0.0, %v1227
      %v1229 = vpop.f32.mrb[0].mxu0
      %1230 = vdwg.mxu0
      %v1231 = vadd.f32 %v1175, %v1225
      %v1232 = vadd.f32 %v1176, %v1228
      %s1233 = scalar_lea.vmem %s4, 52
      %v1234 = vld [vmem:[%s1233] sm:$0xf]
      %v1237 = vunpack.c.l.b16 %v450
      %v1238 = vunpack.c.l.b16 %v451
      %v1239 = vpack.c.b16 %v1238, %v1237
      %v1241 = vsel %vm461, %v1239, 0
      %v1244 = vsel %vm465, %v1234, 0
      %1246 = vmatprep.subr.bf16.mxu0 0
      %1247 = vmatpush1.bf16.msra.mxu0 %v1244
      %1248 = vmatprep.subr.bf16.mxu0 0
      %1249 = vmatpush1.bf16.msra.mxu0 0
      %1250 = vmatprep.subr.bf16.mxu0 0
      %1251 = vmatpush1.bf16.msra.mxu0 0
      %1252 = vmatprep.subr.bf16.mxu0 0
      %1253 = vmatpush1.bf16.msra.mxu0 0
      %1254 = vmatprep.subr.bf16.mxu0 0
      %1255 = vmatpush1.bf16.msra.mxu0 0
      %1256 = vmatprep.subr.bf16.mxu0 0
      %1257 = vmatpush1.bf16.msra.mxu0 0
      %1258 = vmatprep.subr.bf16.mxu0 0
      %1259 = vmatpush1.bf16.msra.mxu0 0
      %1260 = vmatprep.subr.bf16.mxu0 0
      %1261 = vmatpush1.bf16.msra.mxu0 0
      %1262 = vmatprep.subr.bf16.mxu0 0
      %1263 = vmatpush1.bf16.msra.mxu0 0
      %1264 = vmatprep.subr.bf16.mxu0 0
      %1265 = vmatpush1.bf16.msra.mxu0 0
      %1266 = vmatprep.subr.bf16.mxu0 0
      %1267 = vmatpush1.bf16.msra.mxu0 0
      %1268 = vmatprep.subr.bf16.mxu0 0
      %1269 = vmatpush1.bf16.msra.mxu0 0
      %1270 = vmatprep.subr.bf16.mxu0 0
      %1271 = vmatpush1.bf16.msra.mxu0 0
      %1272 = vmatprep.subr.bf16.mxu0 0
      %1273 = vmatpush1.bf16.msra.mxu0 0
      %1274 = vmatprep.subr.bf16.mxu0 0
      %1275 = vmatpush1.bf16.msra.mxu0 0
      %1276 = vmatprep.subr.bf16.mxu0 0
      %1277 = vmatpush1.bf16.msra.mxu0 0
      %1278 = vmatprep.mubr.bf16.mxu0 0
      %1279 = vmatmul.mubr.bf16.gmra.mrb[0].mxu0 %v1241
      %v1280 = vpop.f32.mrb[0].mxu0
      %v1281 = vadd.f32 0.0, %v1280
      %v1282 = vpop.f32.mrb[0].mxu0
      %v1283 = vpop.f32.mrb[0].mxu0
      %v1284 = vadd.f32 0.0, %v1283
      %v1285 = vpop.f32.mrb[0].mxu0
      %1286 = vdwg.mxu0
      %v1287 = vadd.f32 %v1231, %v1281
      %v1288 = vadd.f32 %v1232, %v1284
      %s1289 = scalar_lea.vmem %s4, 56
      %v1290 = vld [vmem:[%s1289] sm:$0xf]
      %v1292 = vunpack.c.l.b16 %v438
      %v1293 = vpack.c.b16 %v1292, %v1292
      %v1294 = vshrl.u32 %v1183, 16
      %v1296 = vshll.u32 %v1183, 16
      %v1298 = vrot.slane %v1296, 1
      %v1299 = vor.u32 %v1294, %v1298
      %v1301 = vshll.u32 %v1293, 16
      %v1303 = vrot.slane %v1301, 1
      %v1304 = vsel %vm567, %v1299, %v1303
      %v1306 = vsel %vm461, %v1304, 0
      %v1309 = vsel %vm465, %v1290, 0
      %1311 = vmatprep.subr.bf16.mxu0 0
      %1312 = vmatpush1.bf16.msra.mxu0 %v1309
      %1313 = vmatprep.subr.bf16.mxu0 0
      %1314 = vmatpush1.bf16.msra.mxu0 0
      %1315 = vmatprep.subr.bf16.mxu0 0
      %1316 = vmatpush1.bf16.msra.mxu0 0
      %1317 = vmatprep.subr.bf16.mxu0 0
      %1318 = vmatpush1.bf16.msra.mxu0 0
      %1319 = vmatprep.subr.bf16.mxu0 0
      %1320 = vmatpush1.bf16.msra.mxu0 0
      %1321 = vmatprep.subr.bf16.mxu0 0
      %1322 = vmatpush1.bf16.msra.mxu0 0
      %1323 = vmatprep.subr.bf16.mxu0 0
      %1324 = vmatpush1.bf16.msra.mxu0 0
      %1325 = vmatprep.subr.bf16.mxu0 0
      %1326 = vmatpush1.bf16.msra.mxu0 0
      %1327 = vmatprep.subr.bf16.mxu0 0
      %1328 = vmatpush1.bf16.msra.mxu0 0
      %1329 = vmatprep.subr.bf16.mxu0 0
      %1330 = vmatpush1.bf16.msra.mxu0 0
      %1331 = vmatprep.subr.bf16.mxu0 0
      %1332 = vmatpush1.bf16.msra.mxu0 0
      %1333 = vmatprep.subr.bf16.mxu0 0
      %1334 = vmatpush1.bf16.msra.mxu0 0
      %1335 = vmatprep.subr.bf16.mxu0 0
      %1336 = vmatpush1.bf16.msra.mxu0 0
      %1337 = vmatprep.subr.bf16.mxu0 0
      %1338 = vmatpush1.bf16.msra.mxu0 0
      %1339 = vmatprep.subr.bf16.mxu0 0
      %1340 = vmatpush1.bf16.msra.mxu0 0
      %1341 = vmatprep.subr.bf16.mxu0 0
      %1342 = vmatpush1.bf16.msra.mxu0 0
      %1343 = vmatprep.mubr.bf16.mxu0 0
      %1344 = vmatmul.mubr.bf16.gmra.mrb[0].mxu0 %v1306
      %v1345 = vpop.f32.mrb[0].mxu0
      %v1346 = vadd.f32 0.0, %v1345
      %v1347 = vpop.f32.mrb[0].mxu0
      %v1348 = vpop.f32.mrb[0].mxu0
      %v1349 = vadd.f32 0.0, %v1348
      %v1350 = vpop.f32.mrb[0].mxu0
      %1351 = vdwg.mxu0
      %v1352 = vadd.f32 %v1287, %v1346
      %v1353 = vadd.f32 %v1288, %v1349
      %s1354 = scalar_lea.vmem %s4, 60
      %v1355 = vld [vmem:[%s1354] sm:$0xf]
      %v1357 = vunpack.c.l.b16 %v452
      %v1358 = vpack.c.b16 %v1357, %v1357
      %v1359 = vshrl.u32 %v1239, 16
      %v1361 = vshll.u32 %v1239, 16
      %v1363 = vrot.slane %v1361, 1
      %v1364 = vor.u32 %v1359, %v1363
      %v1366 = vshll.u32 %v1358, 16
      %v1368 = vrot.slane %v1366, 1
      %v1369 = vsel %vm567, %v1364, %v1368
      %v1371 = vsel %vm461, %v1369, 0
      %v1374 = vsel %vm465, %v1355, 0
      %1376 = vmatprep.subr.bf16.mxu0 0
      %1377 = vmatpush1.bf16.msra.mxu0 %v1374
      %1378 = vmatprep.subr.bf16.mxu0 0
      %1379 = vmatpush1.bf16.msra.mxu0 0
      %1380 = vmatprep.subr.bf16.mxu0 0
      %1381 = vmatpush1.bf16.msra.mxu0 0
      %1382 = vmatprep.subr.bf16.mxu0 0
      %1383 = vmatpush1.bf16.msra.mxu0 0
      %1384 = vmatprep.subr.bf16.mxu0 0
      %1385 = vmatpush1.bf16.msra.mxu0 0
      %1386 = vmatprep.subr.bf16.mxu0 0
      %1387 = vmatpush1.bf16.msra.mxu0 0
      %1388 = vmatprep.subr.bf16.mxu0 0
      %1389 = vmatpush1.bf16.msra.mxu0 0
      %1390 = vmatprep.subr.bf16.mxu0 0
      %1391 = vmatpush1.bf16.msra.mxu0 0
      %1392 = vmatprep.subr.bf16.mxu0 0
      %1393 = vmatpush1.bf16.msra.mxu0 0
      %1394 = vmatprep.subr.bf16.mxu0 0
      %1395 = vmatpush1.bf16.msra.mxu0 0
      %1396 = vmatprep.subr.bf16.mxu0 0
      %1397 = vmatpush1.bf16.msra.mxu0 0
      %1398 = vmatprep.subr.bf16.mxu0 0
      %1399 = vmatpush1.bf16.msra.mxu0 0
      %1400 = vmatprep.subr.bf16.mxu0 0
      %1401 = vmatpush1.bf16.msra.mxu0 0
      %1402 = vmatprep.subr.bf16.mxu0 0
      %1403 = vmatpush1.bf16.msra.mxu0 0
      %1404 = vmatprep.subr.bf16.mxu0 0
      %1405 = vmatpush1.bf16.msra.mxu0 0
      %1406 = vmatprep.subr.bf16.mxu0 0
      %1407 = vmatpush1.bf16.msra.mxu0 0
      %1408 = vmatprep.mubr.bf16.mxu0 0
      %1409 = vmatmul.mubr.bf16.gmra.mrb[0].mxu0 %v1371
      %v1410 = vpop.f32.mrb[0].mxu0
      %v1411 = vadd.f32 0.0, %v1410
      %v1412 = vpop.f32.mrb[0].mxu0
      %v1413 = vpop.f32.mrb[0].mxu0
      %v1414 = vadd.f32 0.0, %v1413
      %v1415 = vpop.f32.mrb[0].mxu0
      %1416 = vdwg.mxu0
      %v1417 = vadd.f32 %v1352, %v1411
      %v1418 = vadd.f32 %v1353, %v1414
      %v1419 = vld [vmem:[%s5] sm:$0x1]
      %v1421 = vlaneseq
      %v1422 = vshrl.u32 %v1421, 7
      %v1423 = vsub.s32 0, %v1422
      %v1424 = vrot.slane %v1419, %v1423
      %v1426 = vadd.f32 %v1417, %v1424
      %v1427 = vadd.f32 %v1418, %v1424
      %vm1428 = vcmp.ge.f32.partialorder %v1426, 0.0
      %vm1429 = vcmp.ge.f32.partialorder %v1427, 0.0
      %v1430 = vmul.f32 %v1426, 0.2
      %v1431 = vmul.f32 %v1427, 0.2
      %v1432 = vsel %vm1428, %v1426, %v1430
      %v1433 = vsel %vm1429, %v1427, %v1431
      %v1434 = vpack.c.bf16 %v1433, %v1432
      %v1436 = vunpack.c.l.b16 %v1434
      %v1437 = vunpack.c.h.b16 %v1434
      %v1438 = vpack.c.b16 %v1436, %v1436
      %v1439 = vpack.c.b16 %v1437, %v1437
      %vm1442 = vcmask 60416
      %1443 = vst.msk [vmem:[%s423] sm:$0xf] %vm1442, %v1438
      %1444 = vst.msk [vmem:[%s423 + $0x4] sm:$0xf] %vm1442, %v1439
      %p1445 = scmp.lt.s32.totalorder %s21, 1
      %s1446 = scalar_select %p1445, %s21, 1
      %p1447 = scmp.lt.s32.totalorder %s22, 15
      %s1448 = scalar_select %p1447, %s22, 15
      %s1449 = smul.addr %s1448, 2
      %s1450 = smul.addr %s1446, 32
      %s1451 = sadd.s32 %s1449, %s1450
      %s1452 = smul.addr %s1451, 4
      %s1453 = scalar_lea.vmem %s6, %s1452
      // Predicated region
      $region45: #{_lambda_.8} parent=43 // pred_check
        %p1454 = pneg %p207
      $region46: #{_lambda_.8} parent=43 // pred_check_branch
        %1456 = sbr.rel (%p1454) target = $region48
      $region47: #{_lambda_.8} parent=43 // pred_region
        _
      $region48: #{_lambda_.8} parent=43 // pred_fallthru
        _
    $region44: #{_lambda_.8} parent=5 // pred_fallthru
      _
    %p1457 = scmp.le.s32.totalorder 2, %s12
    // Predicated region
    $region49: #{_lambda_.8} parent=5 // pred_check
      %p1458 = pneg %p1457
    $region50: #{_lambda_.8} parent=5 // pred_check_branch
      %1460 = sbr.rel (%p1458) target = $region52
    $region51: #{_lambda_.8} parent=5 // pred_region
      %s1461 = ssub.s32 %s12, 2
      // Predicated region
      $region53: #{_lambda_.8} parent=51 // pred_check
        %p1462 = pneg %p213
      $region54: #{_lambda_.8} parent=51 // pred_check_branch
        %1464 = sbr.rel (%p1462) target = $region56
      $region55: #{_lambda_.8} parent=51 // pred_region
        %p1465 = scmp.lt.s32.totalorder %s23, 1
        %s1466 = scalar_select %p1465, %s23, 1
        %p1467 = scmp.lt.s32.totalorder %s24, 15
        %s1468 = scalar_select %p1467, %s24, 15
        %s1469 = smul.addr %s1468, 2
        %s1470 = smul.addr %s1466, 32
        %s1471 = sadd.s32 %s1469, %s1470
        %s1472 = smul.addr %s1471, 4
        %s1473 = scalar_lea.vmem %s6, %s1472
      $region56: #{_lambda_.8} parent=51 // pred_fallthru
        _
    $region52: #{_lambda_.8} parent=5 // pred_fallthru
      _
  $region6: #{_lambda_.8} parent=0 // loop_footer
    %s16 = sadd.s32 1, %s12
  $region7: #{_lambda_.8} parent=0 // loop_footer_branch
    %11 = sbr.rel target = $region3
  $region8: #{_lambda_.8} parent=0 // loop_exit
    _

// kernel: _lambda_.10
$region0: #{_lambda_.10}
  #allocation0 [shape = 'u32[]', space=smem, size = 0x4, offset = 0x4, fixed_abs, tag = 'smem constant byte address 0x4 - core index']
  #allocation1 [shape = 'u32[144,128]{1,0:T(1,128)}', space=vmem, size = 0x12000, scoped, tag = 'internal scratch']
  %s0 = inlined_call_operand.vmem [shape: f32[2,8,8,16], index: 0, kind: input, shape index: {}]
  %s1 = inlined_call_operand.vmem [shape: f32[2,16], index: 1, kind: input, shape index: {}]
  %s2 = inlined_call_operand.vmem [shape: f32[1,16], index: 2, kind: input, shape index: {}]
  %s3 = inlined_call_operand.vmem [shape: f32[1,16], index: 3, kind: input, shape index: {}]
  %s4 = inlined_call_operand.vmem [shape: bf16[2,8,8,16], index: 4, kind: output, shape index: {}]
  %s5 = sld [smem:[#allocation0]]
  $region49: #{_lambda_.10} parent=0
    _
  %s7 = ssub.s32 1, %s5
  %s8 = scalar_select 0, %s7, %s5
  loop: start=0, step=1, limit=18
  $region2: #{_lambda_.10} parent=0 // loop_pre_header
    _
  $region3: #{_lambda_.10} parent=0 // loop_header
    %s10 = sphi 0, %s14
    %p11 = scmp.ge.s32.totalorder %s10, 18
    %s17 = sphi 0, %s29
    %s18 = sphi 0, %s25
    %s19 = sphi 0, %s17
    %s20 = sphi 0, %s18
    %s21 = sphi 0, %s19
    %s22 = sphi 0, %s20
    %s34 = sphi 0, %s36
    %s37 = sphi 0, %s34
    %s38 = sphi 0, %s37
    %s54 = sphi 0, %s38
    %s58 = sphi 0, %s58
    %s60 = sphi 0, %s58
    %s61 = sphi 0, %s60
    %s75 = sphi 0, %s61
    %s79 = sphi 0, %s79
    %s81 = sphi 0, %s79
    %s82 = sphi 0, %s81
    %s96 = sphi 0, %s82
    %s100 = sphi 0, %s100
    %s102 = sphi 0, %s100
    %s103 = sphi 0, %s102
    %s117 = sphi 0, %s103
    %s125 = sphi 0, %s127
    %s128 = sphi 0, %s125
    %s129 = sphi 0, %s128
    %s145 = sphi 0, %s129
  $region4: #{_lambda_.10} parent=0 // loop_header_branch
    %13 = sbr.rel (%p11) target = $region8
  $region5: #{_lambda_.10} parent=0 // loop_body
    %s15 = ssub.s32 %s10, 1
    %s16 = ssub.s32 %s10, 2
    %s23 = sadd.s32 1, %s18
    %p24 = scmp.ge.s32.totalorder %s23, 8
    %s25 = scalar_select %p24, 0, %s23
    %s26 = sadd.s32 1, %s17
    %s27 = scalar_select %p24, %s26, %s17
    %p28 = scmp.ge.s32.totalorder %s27, 2
    %s29 = scalar_select %p28, 0, %s27
    %s30 = ssub.s32 %s17, %s29
    %s31 = ssub.s32 %s18, %s25
    %s32 = sor.u32 %s30, %s31
    %p33 = scmp.eq.s32.totalorder %s32, 0
    %s35 = sadd.s32 %s34, 1
    %s36 = scalar_select %p33, %s34, %s35
    %p39 = pneg %p33
    %p40 = scmp.eq.s32.totalorder %s10, 15
    %p41 = por %p39, %p40
    %p42 = scmp.ne.s32.totalorder %s34, %s37
    %p43 = scmp.eq.s32.totalorder %s10, 0
    %p44 = por %p42, %p43
    %p45 = scmp.ne.s32.totalorder %s34, %s37
    %p46 = scmp.eq.s32.totalorder %s15, 15
    %p47 = por %p45, %p46
    %p48 = scmp.ne.s32.totalorder %s37, %s38
    %p49 = scmp.eq.s32.totalorder %s15, 0
    %p50 = por %p48, %p49
    %p51 = scmp.ne.s32.totalorder %s37, %s38
    %p52 = scmp.eq.s32.totalorder %s16, 15
    %p53 = por %p51, %p52
    %p55 = scmp.ne.s32.totalorder %s38, %s54
    %p56 = scmp.eq.s32.totalorder %s16, 0
    %p57 = por %p55, %p56
    %s59 = sadd.s32 %s58, 1
    %p62 = scmp.eq.s32.totalorder %s10, 15
    %p63 = scmp.ne.s32.totalorder %s58, %s60
    %p64 = scmp.eq.s32.totalorder %s10, 0
    %p65 = por %p63, %p64
    %p66 = scmp.ne.s32.totalorder %s58, %s60
    %p67 = scmp.eq.s32.totalorder %s15, 15
    %p68 = por %p66, %p67
    %p69 = scmp.ne.s32.totalorder %s60, %s61
    %p70 = scmp.eq.s32.totalorder %s15, 0
    %p71 = por %p69, %p70
    %p72 = scmp.ne.s32.totalorder %s60, %s61
    %p73 = scmp.eq.s32.totalorder %s16, 15
    %p74 = por %p72, %p73
    %p76 = scmp.ne.s32.totalorder %s61, %s75
    %p77 = scmp.eq.s32.totalorder %s16, 0
    %p78 = por %p76, %p77
    %s80 = sadd.s32 %s79, 1
    %p83 = scmp.eq.s32.totalorder %s10, 15
    %p84 = scmp.ne.s32.totalorder %s79, %s81
    %p85 = scmp.eq.s32.totalorder %s10, 0
    %p86 = por %p84, %p85
    %p87 = scmp.ne.s32.totalorder %s79, %s81
    %p88 = scmp.eq.s32.totalorder %s15, 15
    %p89 = por %p87, %p88
    %p90 = scmp.ne.s32.totalorder %s81, %s82
    %p91 = scmp.eq.s32.totalorder %s15, 0
    %p92 = por %p90, %p91
    %p93 = scmp.ne.s32.totalorder %s81, %s82
    %p94 = scmp.eq.s32.totalorder %s16, 15
    %p95 = por %p93, %p94
    %p97 = scmp.ne.s32.totalorder %s82, %s96
    %p98 = scmp.eq.s32.totalorder %s16, 0
    %p99 = por %p97, %p98
    %s101 = sadd.s32 %s100, 1
    %p104 = scmp.eq.s32.totalorder %s10, 15
    %p105 = scmp.ne.s32.totalorder %s100, %s102
    %p106 = scmp.eq.s32.totalorder %s10, 0
    %p107 = por %p105, %p106
    %p108 = scmp.ne.s32.totalorder %s100, %s102
    %p109 = scmp.eq.s32.totalorder %s15, 15
    %p110 = por %p108, %p109
    %p111 = scmp.ne.s32.totalorder %s102, %s103
    %p112 = scmp.eq.s32.totalorder %s15, 0
    %p113 = por %p111, %p112
    %p114 = scmp.ne.s32.totalorder %s102, %s103
    %p115 = scmp.eq.s32.totalorder %s16, 15
    %p116 = por %p114, %p115
    %p118 = scmp.ne.s32.totalorder %s103, %s117
    %p119 = scmp.eq.s32.totalorder %s16, 0
    %p120 = por %p118, %p119
    %s121 = ssub.s32 %s17, %s29
    %s122 = ssub.s32 %s18, %s25
    %s123 = sor.u32 %s121, %s122
    %p124 = scmp.eq.s32.totalorder %s123, 0
    %s126 = sadd.s32 %s125, 1
    %s127 = scalar_select %p124, %s125, %s126
    %p130 = pneg %p124
    %p131 = scmp.eq.s32.totalorder %s10, 15
    %p132 = por %p130, %p131
    %p133 = scmp.ne.s32.totalorder %s125, %s128
    %p134 = scmp.eq.s32.totalorder %s10, 0
    %p135 = por %p133, %p134
    %p136 = scmp.ne.s32.totalorder %s125, %s128
    %p137 = scmp.eq.s32.totalorder %s15, 15
    %p138 = por %p136, %p137
    %p139 = scmp.ne.s32.totalorder %s128, %s129
    %p140 = scmp.eq.s32.totalorder %s15, 0
    %p141 = por %p139, %p140
    %p142 = scmp.ne.s32.totalorder %s128, %s129
    %p143 = scmp.eq.s32.totalorder %s16, 15
    %p144 = por %p142, %p143
    %p146 = scmp.ne.s32.totalorder %s129, %s145
    %p147 = scmp.eq.s32.totalorder %s16, 0
    %p148 = por %p146, %p147
    %p149 = scmp.le.s32.totalorder 1, %s10
    %p150 = scmp.lt.s32.totalorder %s10, 17
    %p151 = pnand %p149, %p150
    %p152 = pneg %p151
    // Predicated region
    $region9: #{_lambda_.10} parent=5 // pred_check
      _
    $region10: #{_lambda_.10} parent=5 // pred_check_branch
      %154 = sbr.rel (%p151) target = $region12
    $region11: #{_lambda_.10} parent=5 // pred_region
      %s155 = ssub.s32 %s10, 1
      // Predicated region
      $region13: #{_lambda_.10} parent=11 // pred_check
        %p156 = pneg %p71
      $region14: #{_lambda_.10} parent=11 // pred_check_branch
        %158 = sbr.rel (%p156) target = $region16
      $region15: #{_lambda_.10} parent=11 // pred_region
        _
      $region16: #{_lambda_.10} parent=11 // pred_fallthru
        _
      // Predicated region
      $region17: #{_lambda_.10} parent=11 // pred_check
        %p159 = pneg %p92
      $region18: #{_lambda_.10} parent=11 // pred_check_branch
        %161 = sbr.rel (%p159) target = $region20
      $region19: #{_lambda_.10} parent=11 // pred_region
        _
      $region20: #{_lambda_.10} parent=11 // pred_fallthru
        _
      // Predicated region
      $region21: #{_lambda_.10} parent=11 // pred_check
        %p162 = pneg %p113
      $region22: #{_lambda_.10} parent=11 // pred_check_branch
        %164 = sbr.rel (%p162) target = $region24
      $region23: #{_lambda_.10} parent=11 // pred_region
        _
      $region24: #{_lambda_.10} parent=11 // pred_fallthru
        _
    $region12: #{_lambda_.10} parent=5 // pred_fallthru
      _
    %p165 = scmp.lt.s32.totalorder %s10, 16
    // Predicated region
    $region25: #{_lambda_.10} parent=5 // pred_check
      %p166 = pneg %p165
    $region26: #{_lambda_.10} parent=5 // pred_check_branch
      %168 = sbr.rel (%p166) target = $region28
    $region27: #{_lambda_.10} parent=5 // pred_region
      // Predicated region
      $region29: #{_lambda_.10} parent=27 // pred_check
        %p169 = pneg %p44
      $region30: #{_lambda_.10} parent=27 // pred_check_branch
        %171 = sbr.rel (%p169) target = $region32
      $region31: #{_lambda_.10} parent=27 // pred_region
        %p172 = scmp.lt.s32.totalorder %s17, 1
        %s173 = scalar_select %p172, %s17, 1
        %p174 = scmp.lt.s32.totalorder %s18, 7
        %s175 = scalar_select %p174, %s18, 7
        %s176 = smul.addr %s173, 8
        %s177 = sadd.s32 %s175, %s176
        %s178 = smul.addr %s177, 8
        %s179 = scalar_lea.vmem %s0, %s178
      $region32: #{_lambda_.10} parent=27 // pred_fallthru
        _
    $region28: #{_lambda_.10} parent=5 // pred_fallthru
      _
    %p180 = scmp.le.s32.totalorder 1, %s10
    %p181 = scmp.lt.s32.totalorder %s10, 17
    %p182 = pnand %p180, %p181
    %p183 = pneg %p182
    // Predicated region
    $region33: #{_lambda_.10} parent=5 // pred_check
      _
    $region34: #{_lambda_.10} parent=5 // pred_check_branch
      %185 = sbr.rel (%p182) target = $region36
    $region35: #{_lambda_.10} parent=5 // pred_region
      %s186 = ssub.s32 %s10, 1
      %p187 = scmp.lt.s32.totalorder %s19, 1
      %s188 = scalar_select %p187, %s19, 1
      %p189 = scmp.lt.s32.totalorder %s20, 7
      %s190 = scalar_select %p189, %s20, 7
      %s191 = smul.addr %s188, 8
      %s192 = sadd.s32 %s190, %s191
      %s193 = smul.addr %s192, 8
      %s194 = scalar_lea.vmem %s0, %s193
      %p195 = pneg %p50
      %p196 = pneg %p47
      %p197 = pneg %p71
      %p198 = pneg %p68
      %p199 = pneg %p92
      %p200 = pneg %p89
      %p201 = pneg %p113
      %p202 = pneg %p110
      %p203 = pneg %p141
      %p204 = pneg %p138
      %p205 = scmp.lt.s32.totalorder %s19, 1
      %s206 = scalar_select %p205, %s19, 1
      %p207 = scmp.lt.s32.totalorder %s20, 7
      %s208 = scalar_select %p207, %s20, 7
      %s209 = smul.addr %s206, 8
      %s210 = sadd.s32 %s208, %s209
      %s211 = smul.addr %s210, 4
      %s212 = scalar_lea.vmem %s4, %s211
      %p213 = scmp.lt.s32.totalorder %s19, 1
      %s214 = scalar_select %p213, %s19, 1
      %p215 = scmp.lt.s32.totalorder %s20, 7
      %s216 = scalar_select %p215, %s20, 7
      %s217 = smul.addr %s214, 8
      %s218 = sadd.s32 %s216, %s217
      %s219 = smul.addr %s218, 8
      %s220 = scalar_lea.vmem %s0, %s219
      %p221 = scmp.lt.s32.totalorder %s19, 1
      %s222 = scalar_select %p221, %s19, 1
      %p223 = scmp.lt.s32.totalorder %s20, 7
      %s224 = scalar_select %p223, %s20, 7
      %s225 = smul.addr %s222, 8
      %s226 = sadd.s32 %s224, %s225
      %s227 = smul.addr %s226, 4
      %s228 = scalar_lea.vmem %s4, %s227
      %v229 = vld [vmem:[%s220] sm:$0xff]
      %v230 = vld [vmem:[%s1] sm:$0x1]
      %v231 = vmul.f32 %v230, 0.0078125
      %v232 = vld [vmem:[%s1 + $0x1] sm:$0x1]
      %v233 = vmul.f32 %v232, 0.0078125
      %v234 = vmul.f32 %v231, %v231
      %v235 = vsub.f32 %v233, %v234
      %v236 = vlaneseq
      %v237 = vshrl.u32 %v236, 7
      %v238 = vsub.s32 0, %v237
      %v239 = vrot.slane %v231, %v238
      %v240 = vsub.f32 %v229, %v239
      %v241 = vadd.f32 %v235, 1e-05
      %v242 = vrsqrt.pop %v241
      %v243 = vlaneseq
      %v244 = vshrl.u32 %v243, 7
      %v245 = vsub.s32 0, %v244
      %v246 = vrot.slane %v242, %v245
      %v247 = vmul.f32 %v240, %v246
      %v248 = vld [vmem:[%s2] sm:$0x1]
      %v250 = vlaneseq
      %v251 = vshrl.u32 %v250, 7
      %v252 = vsub.s32 0, %v251
      %v253 = vrot.slane %v248, %v252
      %v255 = vmul.f32 %v247, %v253
      %v256 = vld [vmem:[%s3] sm:$0x1]
      %v258 = vlaneseq
      %v259 = vshrl.u32 %v258, 7
      %v260 = vsub.s32 0, %v259
      %v261 = vrot.slane %v256, %v260
      %v263 = vadd.f32 %v255, %v261
      %vm264 = vcmp.ge.f32.partialorder %v263, 0.0
      %v265 = vmul.f32 %v263, 0.2
      %v266 = vsel %vm264, %v263, %v265
      %v267 = vpack.c.bf16 %v266, %v266
      %vm268 = vcmask 125952
      %269 = vst.msk [vmem:[%s228] sm:$0xf] %vm268, %v267
      %p270 = scmp.lt.s32.totalorder %s19, 1
      %s271 = scalar_select %p270, %s19, 1
      %p272 = scmp.lt.s32.totalorder %s20, 7
      %s273 = scalar_select %p272, %s20, 7
      %s274 = smul.addr %s271, 8
      %s275 = sadd.s32 %s273, %s274
      %s276 = smul.addr %s275, 4
      %s277 = scalar_lea.vmem %s4, %s276
      // Predicated region
      $region37: #{_lambda_.10} parent=35 // pred_check
        %p278 = pneg %p138
      $region38: #{_lambda_.10} parent=35 // pred_check_branch
        %280 = sbr.rel (%p278) target = $region40
      $region39: #{_lambda_.10} parent=35 // pred_region
        _
      $region40: #{_lambda_.10} parent=35 // pred_fallthru
        _
    $region36: #{_lambda_.10} parent=5 // pred_fallthru
      _
    %p281 = scmp.le.s32.totalorder 2, %s10
    // Predicated region
    $region41: #{_lambda_.10} parent=5 // pred_check
      %p282 = pneg %p281
    $region42: #{_lambda_.10} parent=5 // pred_check_branch
      %284 = sbr.rel (%p282) target = $region44
    $region43: #{_lambda_.10} parent=5 // pred_region
      %s285 = ssub.s32 %s10, 2
      // Predicated region
      $region45: #{_lambda_.10} parent=43 // pred_check
        %p286 = pneg %p144
      $region46: #{_lambda_.10} parent=43 // pred_check_branch
        %288 = sbr.rel (%p286) target = $region48
      $region47: #{_lambda_.10} parent=43 // pred_region
        %p289 = scmp.lt.s32.totalorder %s21, 1
        %s290 = scalar_select %p289, %s21, 1
        %p291 = scmp.lt.s32.totalorder %s22, 7
        %s292 = scalar_select %p291, %s22, 7
        %s293 = smul.addr %s290, 8
        %s294 = sadd.s32 %s292, %s293
        %s295 = smul.addr %s294, 4
        %s296 = scalar_lea.vmem %s4, %s295
      $region48: #{_lambda_.10} parent=43 // pred_fallthru
        _
    $region44: #{_lambda_.10} parent=5 // pred_fallthru
      _
  $region6: #{_lambda_.10} parent=0 // loop_footer
    %s14 = sadd.s32 1, %s10
  $region7: #{_lambda_.10} parent=0 // loop_footer_branch
    %9 = sbr.rel target = $region3
  $region8: #{_lambda_.10} parent=0 // loop_exit
    _

// kernel: _lambda_.9
$region0: #{_lambda_.9}
  #allocation0 [shape = 'u32[]', space=smem, size = 0x4, offset = 0x4, fixed_abs, tag = 'smem constant byte address 0x4 - core index']
  #allocation1 [shape = 'u32[144,128]{1,0:T(1,128)}', space=vmem, size = 0x12000, scoped, tag = 'internal scratch']
  %s0 = inlined_call_operand.vmem [shape: bf16[2,18,9,8], index: 0, kind: input, shape index: {}, may-alias: {0,1}]
  %s1 = inlined_call_operand.vmem [shape: bf16[2,18,9,8], index: 1, kind: input, shape index: {}, may-alias: {0,1}]
  %s2 = inlined_call_operand.vmem [shape: bf16[2,18,9,8], index: 2, kind: input, shape index: {}, may-alias: {2,3}]
  %s3 = inlined_call_operand.vmem [shape: bf16[2,18,9,8], index: 3, kind: input, shape index: {}, may-alias: {2,3}]
  %s4 = inlined_call_operand.vmem [shape: bf16[16,8,16], index: 4, kind: input, shape index: {}]
  %s5 = inlined_call_operand.vmem [shape: f32[1,16], index: 5, kind: input, shape index: {}]
  %s6 = inlined_call_operand.vmem [shape: f32[2,8,8,16], index: 6, kind: output, shape index: {0}]
  %s7 = inlined_call_operand.vmem [shape: f32[2,2,16], index: 7, kind: output, shape index: {1}]
  %8 = xla_tuple %s6, %s7
  %s9 = sld [smem:[#allocation0]]
  $region69: #{_lambda_.9} parent=0
    _
  %s11 = ssub.s32 1, %s9
  %s12 = scalar_select 0, %s11, %s9
  loop: start=0, step=1, limit=18
  $region2: #{_lambda_.9} parent=0 // loop_pre_header
    _
  $region3: #{_lambda_.9} parent=0 // loop_header
    %s14 = sphi 0, %s18
    %p15 = scmp.ge.s32.totalorder %s14, 18
    %s21 = sphi 0, %s33
    %s22 = sphi 0, %s29
    %s23 = sphi 0, %s21
    %s24 = sphi 0, %s22
    %s25 = sphi 0, %s23
    %s26 = sphi 0, %s24
    %s38 = sphi 0, %s40
    %s41 = sphi 0, %s38
    %s42 = sphi 0, %s41
    %s58 = sphi 0, %s42
    %s68 = sphi 0, %s70
    %s71 = sphi 0, %s68
    %s72 = sphi 0, %s71
    %s88 = sphi 0, %s72
    %s96 = sphi 0, %s98
    %s99 = sphi 0, %s96
    %s100 = sphi 0, %s99
    %s116 = sphi 0, %s100
    %s126 = sphi 0, %s128
    %s129 = sphi 0, %s126
    %s130 = sphi 0, %s129
    %s146 = sphi 0, %s130
    %s150 = sphi 0, %s150
    %s152 = sphi 0, %s150
    %s153 = sphi 0, %s152
    %s167 = sphi 0, %s153
    %s171 = sphi 0, %s171
    %s173 = sphi 0, %s171
    %s174 = sphi 0, %s173
    %s188 = sphi 0, %s174
    %s196 = sphi 0, %s198
    %s199 = sphi 0, %s196
    %s200 = sphi 0, %s199
    %s216 = sphi 0, %s200
    %s222 = sphi 0, %s224
    %s225 = sphi 0, %s222
    %s226 = sphi 0, %s225
    %s242 = sphi 0, %s226
  $region4: #{_lambda_.9} parent=0 // loop_header_branch
    %17 = sbr.rel (%p15) target = $region8
  $region5: #{_lambda_.9} parent=0 // loop_body
    %s19 = ssub.s32 %s14, 1
    %s20 = ssub.s32 %s14, 2
    %s27 = sadd.s32 1, %s22
    %p28 = scmp.ge.s32.totalorder %s27, 8
    %s29 = scalar_select %p28, 0, %s27
    %s30 = sadd.s32 1, %s21
    %s31 = scalar_select %p28, %s30, %s21
    %p32 = scmp.ge.s32.totalorder %s31, 2
    %s33 = scalar_select %p32, 0, %s31
    %s34 = ssub.s32 %s21, %s33
    %s35 = ssub.s32 %s22, %s29
    %s36 = sor.u32 %s34, %s35
    %p37 = scmp.eq.s32.totalorder %s36, 0
    %s39 = sadd.s32 %s38, 1
    %s40 = scalar_select %p37, %s38, %s39
    %p43 = pneg %p37
    %p44 = scmp.eq.s32.totalorder %s14, 15
    %p45 = por %p43, %p44
    %p46 = scmp.ne.s32.totalorder %s38, %s41
    %p47 = scmp.eq.s32.totalorder %s14, 0
    %p48 = por %p46, %p47
    %p49 = scmp.ne.s32.totalorder %s38, %s41
    %p50 = scmp.eq.s32.totalorder %s19, 15
    %p51 = por %p49, %p50
    %p52 = scmp.ne.s32.totalorder %s41, %s42
    %p53 = scmp.eq.s32.totalorder %s19, 0
    %p54 = por %p52, %p53
    %p55 = scmp.ne.s32.totalorder %s41, %s42
    %p56 = scmp.eq.s32.totalorder %s20, 15
    %p57 = por %p55, %p56
    %p59 = scmp.ne.s32.totalorder %s42, %s58
    %p60 = scmp.eq.s32.totalorder %s20, 0
    %p61 = por %p59, %p60
    %s62 = sadd.s32 %s22, 1
    %s63 = sadd.s32 %s29, 1
    %s64 = ssub.s32 %s21, %s33
    %s65 = ssub.s32 %s62, %s63
    %s66 = sor.u32 %s64, %s65
    %p67 = scmp.eq.s32.totalorder %s66, 0
    %s69 = sadd.s32 %s68, 1
    %s70 = scalar_select %p67, %s68, %s69
    %p73 = pneg %p67
    %p74 = scmp.eq.s32.totalorder %s14, 15
    %p75 = por %p73, %p74
    %p76 = scmp.ne.s32.totalorder %s68, %s71
    %p77 = scmp.eq.s32.totalorder %s14, 0
    %p78 = por %p76, %p77
    %p79 = scmp.ne.s32.totalorder %s68, %s71
    %p80 = scmp.eq.s32.totalorder %s19, 15
    %p81 = por %p79, %p80
    %p82 = scmp.ne.s32.totalorder %s71, %s72
    %p83 = scmp.eq.s32.totalorder %s19, 0
    %p84 = por %p82, %p83
    %p85 = scmp.ne.s32.totalorder %s71, %s72
    %p86 = scmp.eq.s32.totalorder %s20, 15
    %p87 = por %p85, %p86
    %p89 = scmp.ne.s32.totalorder %s72, %s88
    %p90 = scmp.eq.s32.totalorder %s20, 0
    %p91 = por %p89, %p90
    %s92 = ssub.s32 %s21, %s33
    %s93 = ssub.s32 %s22, %s29
    %s94 = sor.u32 %s92, %s93
    %p95 = scmp.eq.s32.totalorder %s94, 0
    %s97 = sadd.s32 %s96, 1
    %s98 = scalar_select %p95, %s96, %s97
    %p101 = pneg %p95
    %p102 = scmp.eq.s32.totalorder %s14, 15
    %p103 = por %p101, %p102
    %p104 = scmp.ne.s32.totalorder %s96, %s99
    %p105 = scmp.eq.s32.totalorder %s14, 0
    %p106 = por %p104, %p105
    %p107 = scmp.ne.s32.totalorder %s96, %s99
    %p108 = scmp.eq.s32.totalorder %s19, 15
    %p109 = por %p107, %p108
    %p110 = scmp.ne.s32.totalorder %s99, %s100
    %p111 = scmp.eq.s32.totalorder %s19, 0
    %p112 = por %p110, %p111
    %p113 = scmp.ne.s32.totalorder %s99, %s100
    %p114 = scmp.eq.s32.totalorder %s20, 15
    %p115 = por %p113, %p114
    %p117 = scmp.ne.s32.totalorder %s100, %s116
    %p118 = scmp.eq.s32.totalorder %s20, 0
    %p119 = por %p117, %p118
    %s120 = sadd.s32 %s22, 1
    %s121 = sadd.s32 %s29, 1
    %s122 = ssub.s32 %s21, %s33
    %s123 = ssub.s32 %s120, %s121
    %s124 = sor.u32 %s122, %s123
    %p125 = scmp.eq.s32.totalorder %s124, 0
    %s127 = sadd.s32 %s126, 1
    %s128 = scalar_select %p125, %s126, %s127
    %p131 = pneg %p125
    %p132 = scmp.eq.s32.totalorder %s14, 15
    %p133 = por %p131, %p132
    %p134 = scmp.ne.s32.totalorder %s126, %s129
    %p135 = scmp.eq.s32.totalorder %s14, 0
    %p136 = por %p134, %p135
    %p137 = scmp.ne.s32.totalorder %s126, %s129
    %p138 = scmp.eq.s32.totalorder %s19, 15
    %p139 = por %p137, %p138
    %p140 = scmp.ne.s32.totalorder %s129, %s130
    %p141 = scmp.eq.s32.totalorder %s19, 0
    %p142 = por %p140, %p141
    %p143 = scmp.ne.s32.totalorder %s129, %s130
    %p144 = scmp.eq.s32.totalorder %s20, 15
    %p145 = por %p143, %p144
    %p147 = scmp.ne.s32.totalorder %s130, %s146
    %p148 = scmp.eq.s32.totalorder %s20, 0
    %p149 = por %p147, %p148
    %s151 = sadd.s32 %s150, 1
    %p154 = scmp.eq.s32.totalorder %s14, 15
    %p155 = scmp.ne.s32.totalorder %s150, %s152
    %p156 = scmp.eq.s32.totalorder %s14, 0
    %p157 = por %p155, %p156
    %p158 = scmp.ne.s32.totalorder %s150, %s152
    %p159 = scmp.eq.s32.totalorder %s19, 15
    %p160 = por %p158, %p159
    %p161 = scmp.ne.s32.totalorder %s152, %s153
    %p162 = scmp.eq.s32.totalorder %s19, 0
    %p163 = por %p161, %p162
    %p164 = scmp.ne.s32.totalorder %s152, %s153
    %p165 = scmp.eq.s32.totalorder %s20, 15
    %p166 = por %p164, %p165
    %p168 = scmp.ne.s32.totalorder %s153, %s167
    %p169 = scmp.eq.s32.totalorder %s20, 0
    %p170 = por %p168, %p169
    %s172 = sadd.s32 %s171, 1
    %p175 = scmp.eq.s32.totalorder %s14, 15
    %p176 = scmp.ne.s32.totalorder %s171, %s173
    %p177 = scmp.eq.s32.totalorder %s14, 0
    %p178 = por %p176, %p177
    %p179 = scmp.ne.s32.totalorder %s171, %s173
    %p180 = scmp.eq.s32.totalorder %s19, 15
    %p181 = por %p179, %p180
    %p182 = scmp.ne.s32.totalorder %s173, %s174
    %p183 = scmp.eq.s32.totalorder %s19, 0
    %p184 = por %p182, %p183
    %p185 = scmp.ne.s32.totalorder %s173, %s174
    %p186 = scmp.eq.s32.totalorder %s20, 15
    %p187 = por %p185, %p186
    %p189 = scmp.ne.s32.totalorder %s174, %s188
    %p190 = scmp.eq.s32.totalorder %s20, 0
    %p191 = por %p189, %p190
    %s192 = ssub.s32 %s21, %s33
    %s193 = ssub.s32 %s22, %s29
    %s194 = sor.u32 %s192, %s193
    %p195 = scmp.eq.s32.totalorder %s194, 0
    %s197 = sadd.s32 %s196, 1
    %s198 = scalar_select %p195, %s196, %s197
    %p201 = pneg %p195
    %p202 = scmp.eq.s32.totalorder %s14, 15
    %p203 = por %p201, %p202
    %p204 = scmp.ne.s32.totalorder %s196, %s199
    %p205 = scmp.eq.s32.totalorder %s14, 0
    %p206 = por %p204, %p205
    %p207 = scmp.ne.s32.totalorder %s196, %s199
    %p208 = scmp.eq.s32.totalorder %s19, 15
    %p209 = por %p207, %p208
    %p210 = scmp.ne.s32.totalorder %s199, %s200
    %p211 = scmp.eq.s32.totalorder %s19, 0
    %p212 = por %p210, %p211
    %p213 = scmp.ne.s32.totalorder %s199, %s200
    %p214 = scmp.eq.s32.totalorder %s20, 15
    %p215 = por %p213, %p214
    %p217 = scmp.ne.s32.totalorder %s200, %s216
    %p218 = scmp.eq.s32.totalorder %s20, 0
    %p219 = por %p217, %p218
    %s220 = ssub.s32 %s21, %s33
    %p221 = scmp.eq.s32.totalorder %s220, 0
    %s223 = sadd.s32 %s222, 1
    %s224 = scalar_select %p221, %s222, %s223
    %p227 = pneg %p221
    %p228 = scmp.eq.s32.totalorder %s14, 15
    %p229 = por %p227, %p228
    %p230 = scmp.ne.s32.totalorder %s222, %s225
    %p231 = scmp.eq.s32.totalorder %s14, 0
    %p232 = por %p230, %p231
    %p233 = scmp.ne.s32.totalorder %s222, %s225
    %p234 = scmp.eq.s32.totalorder %s19, 15
    %p235 = por %p233, %p234
    %p236 = scmp.ne.s32.totalorder %s225, %s226
    %p237 = scmp.eq.s32.totalorder %s19, 0
    %p238 = por %p236, %p237
    %p239 = scmp.ne.s32.totalorder %s225, %s226
    %p240 = scmp.eq.s32.totalorder %s20, 15
    %p241 = por %p239, %p240
    %p243 = scmp.ne.s32.totalorder %s226, %s242
    %p244 = scmp.eq.s32.totalorder %s20, 0
    %p245 = por %p243, %p244
    %p246 = scmp.le.s32.totalorder 1, %s14
    %p247 = scmp.lt.s32.totalorder %s14, 17
    %p248 = pnand %p246, %p247
    %p249 = pneg %p248
    // Predicated region
    $region9: #{_lambda_.9} parent=5 // pred_check
      _
    $region10: #{_lambda_.9} parent=5 // pred_check_branch
      %251 = sbr.rel (%p248) target = $region12
    $region11: #{_lambda_.9} parent=5 // pred_region
      %s252 = ssub.s32 %s14, 1
      // Predicated region
      $region13: #{_lambda_.9} parent=11 // pred_check
        %p253 = pneg %p163
      $region14: #{_lambda_.9} parent=11 // pred_check_branch
        %255 = sbr.rel (%p253) target = $region16
      $region15: #{_lambda_.9} parent=11 // pred_region
        _
      $region16: #{_lambda_.9} parent=11 // pred_fallthru
        _
      // Predicated region
      $region17: #{_lambda_.9} parent=11 // pred_check
        %p256 = pneg %p184
      $region18: #{_lambda_.9} parent=11 // pred_check_branch
        %258 = sbr.rel (%p256) target = $region20
      $region19: #{_lambda_.9} parent=11 // pred_region
        _
      $region20: #{_lambda_.9} parent=11 // pred_fallthru
        _
    $region12: #{_lambda_.9} parent=5 // pred_fallthru
      _
    %p259 = scmp.lt.s32.totalorder %s14, 16
    // Predicated region
    $region21: #{_lambda_.9} parent=5 // pred_check
      %p260 = pneg %p259
    $region22: #{_lambda_.9} parent=5 // pred_check_branch
      %262 = sbr.rel (%p260) target = $region24
    $region23: #{_lambda_.9} parent=5 // pred_region
      // Predicated region
      $region25: #{_lambda_.9} parent=23 // pred_check
        %p263 = pneg %p48
      $region26: #{_lambda_.9} parent=23 // pred_check_branch
        %265 = sbr.rel (%p263) target = $region28
      $region27: #{_lambda_.9} parent=23 // pred_region
        %s266 = smul.u32 2, %s22
        %p267 = scmp.lt.s32.totalorder %s21, 1
        %s268 = scalar_select %p267, %s21, 1
        %p269 = scmp.lt.s32.totalorder %s266, 17
        %s270 = scalar_select %p269, %s266, 17
        %s271 = smul.addr %s270, 2
        %s272 = smul.addr %s268, 36
        %s273 = sadd.s32 %s271, %s272
        %s274 = smul.addr %s273, 4
        %s275 = scalar_lea.vmem %s0, %s274
        %s276 = smul.u32 2, %s22
      $region28: #{_lambda_.9} parent=23 // pred_fallthru
        _
      // Predicated region
      $region29: #{_lambda_.9} parent=23 // pred_check
        %p277 = pneg %p78
      $region30: #{_lambda_.9} parent=23 // pred_check_branch
        %279 = sbr.rel (%p277) target = $region32
      $region31: #{_lambda_.9} parent=23 // pred_region
        %s280 = sadd.s32 %s22, 1
        %s281 = smul.u32 2, %s280
        %p282 = scmp.lt.s32.totalorder %s21, 1
        %s283 = scalar_select %p282, %s21, 1
        %p284 = scmp.lt.s32.totalorder %s281, 17
        %s285 = scalar_select %p284, %s281, 17
        %s286 = smul.addr %s285, 2
        %s287 = smul.addr %s283, 36
        %s288 = sadd.s32 %s286, %s287
        %s289 = smul.addr %s288, 4
        %s290 = scalar_lea.vmem %s1, %s289
        %s291 = sadd.s32 %s22, 1
        %s292 = smul.u32 2, %s291
      $region32: #{_lambda_.9} parent=23 // pred_fallthru
        _
      // Predicated region
      $region33: #{_lambda_.9} parent=23 // pred_check
        %p293 = pneg %p106
      $region34: #{_lambda_.9} parent=23 // pred_check_branch
        %295 = sbr.rel (%p293) target = $region36
      $region35: #{_lambda_.9} parent=23 // pred_region
        %s296 = smul.u32 2, %s22
        %p297 = scmp.lt.s32.totalorder %s21, 1
        %s298 = scalar_select %p297, %s21, 1
        %p299 = scmp.lt.s32.totalorder %s296, 17
        %s300 = scalar_select %p299, %s296, 17
        %s301 = smul.addr %s300, 2
        %s302 = smul.addr %s298, 36
        %s303 = sadd.s32 %s301, %s302
        %s304 = smul.addr %s303, 4
        %s305 = scalar_lea.vmem %s2, %s304
        %s306 = smul.u32 2, %s22
      $region36: #{_lambda_.9} parent=23 // pred_fallthru
        _
      // Predicated region
      $region37: #{_lambda_.9} parent=23 // pred_check
        %p307 = pneg %p136
      $region38: #{_lambda_.9} parent=23 // pred_check_branch
        %309 = sbr.rel (%p307) target = $region40
      $region39: #{_lambda_.9} parent=23 // pred_region
        %s310 = sadd.s32 %s22, 1
        %s311 = smul.u32 2, %s310
        %p312 = scmp.lt.s32.totalorder %s21, 1
        %s313 = scalar_select %p312, %s21, 1
        %p314 = scmp.lt.s32.totalorder %s311, 17
        %s315 = scalar_select %p314, %s311, 17
        %s316 = smul.addr %s315, 2
        %s317 = smul.addr %s313, 36
        %s318 = sadd.s32 %s316, %s317
        %s319 = smul.addr %s318, 4
        %s320 = scalar_lea.vmem %s3, %s319
        %s321 = sadd.s32 %s22, 1
        %s322 = smul.u32 2, %s321
      $region40: #{_lambda_.9} parent=23 // pred_fallthru
        _
    $region24: #{_lambda_.9} parent=5 // pred_fallthru
      _
    %p323 = scmp.le.s32.totalorder 1, %s14
    %p324 = scmp.lt.s32.totalorder %s14, 17
    %p325 = pnand %p323, %p324
    %p326 = pneg %p325
    // Predicated region
    $region41: #{_lambda_.9} parent=5 // pred_check
      _
    $region42: #{_lambda_.9} parent=5 // pred_check_branch
      %328 = sbr.rel (%p325) target = $region44
    $region43: #{_lambda_.9} parent=5 // pred_region
      %s329 = ssub.s32 %s14, 1
      %s330 = smul.u32 2, %s24
      %p331 = scmp.lt.s32.totalorder %s23, 1
      %s332 = scalar_select %p331, %s23, 1
      %p333 = scmp.lt.s32.totalorder %s330, 17
      %s334 = scalar_select %p333, %s330, 17
      %s335 = smul.addr %s334, 2
      %s336 = smul.addr %s332, 36
      %s337 = sadd.s32 %s335, %s336
      %s338 = smul.addr %s337, 4
      %s339 = scalar_lea.vmem %s0, %s338
      %p340 = pneg %p54
      %p341 = pneg %p51
      %s342 = sadd.s32 %s24, 1
      %s343 = smul.u32 2, %s342
      %p344 = scmp.lt.s32.totalorder %s23, 1
      %s345 = scalar_select %p344, %s23, 1
      %p346 = scmp.lt.s32.totalorder %s343, 17
      %s347 = scalar_select %p346, %s343, 17
      %s348 = smul.addr %s347, 2
      %s349 = smul.addr %s345, 36
      %s350 = sadd.s32 %s348, %s349
      %s351 = smul.addr %s350, 4
      %s352 = scalar_lea.vmem %s1, %s351
      %p353 = pneg %p84
      %p354 = pneg %p81
      %s355 = smul.u32 2, %s24
      %p356 = scmp.lt.s32.totalorder %s23, 1
      %s357 = scalar_select %p356, %s23, 1
      %p358 = scmp.lt.s32.totalorder %s355, 17
      %s359 = scalar_select %p358, %s355, 17
      %s360 = smul.addr %s359, 2
      %s361 = smul.addr %s357, 36
      %s362 = sadd.s32 %s360, %s361
      %s363 = smul.addr %s362, 4
      %s364 = scalar_lea.vmem %s2, %s363
      %p365 = pneg %p112
      %p366 = pneg %p109
      %s367 = sadd.s32 %s24, 1
      %s368 = smul.u32 2, %s367
      %p369 = scmp.lt.s32.totalorder %s23, 1
      %s370 = scalar_select %p369, %s23, 1
      %p371 = scmp.lt.s32.totalorder %s368, 17
      %s372 = scalar_select %p371, %s368, 17
      %s373 = smul.addr %s372, 2
      %s374 = smul.addr %s370, 36
      %s375 = sadd.s32 %s373, %s374
      %s376 = smul.addr %s375, 4
      %s377 = scalar_lea.vmem %s3, %s376
      %p378 = pneg %p142
      %p379 = pneg %p139
      %p380 = pneg %p163
      %p381 = pneg %p160
      %p382 = pneg %p184
      %p383 = pneg %p181
      %p384 = pneg %p212
      %p385 = pneg %p209
      %p386 = scmp.lt.s32.totalorder %s23, 1
      %s387 = scalar_select %p386, %s23, 1
      %p388 = scmp.lt.s32.totalorder %s24, 7
      %s389 = scalar_select %p388, %s24, 7
      %s390 = smul.addr %s387, 8
      %s391 = sadd.s32 %s389, %s390
      %s392 = smul.addr %s391, 8
      %s393 = scalar_lea.vmem %s6, %s392
      %p394 = pneg %p238
      %p395 = pneg %p235
      %p396 = scmp.lt.s32.totalorder %s23, 1
      %s397 = scalar_select %p396, %s23, 1
      %s398 = smul.addr %s397, 2
      %s399 = scalar_lea.vmem %s7, %s398
      %s400 = smul.u32 2, %s24
      %p401 = scmp.lt.s32.totalorder %s23, 1
      %s402 = scalar_select %p401, %s23, 1
      %p403 = scmp.lt.s32.totalorder %s400, 17
      %s404 = scalar_select %p403, %s400, 17
      %s405 = smul.addr %s404, 2
      %s406 = smul.addr %s402, 36
      %s407 = sadd.s32 %s405, %s406
      %s408 = smul.addr %s407, 4
      %s409 = scalar_lea.vmem %s0, %s408
      %s410 = smul.u32 2, %s24
      %s411 = sadd.s32 %s24, 1
      %s412 = smul.u32 2, %s411
      %p413 = scmp.lt.s32.totalorder %s23, 1
      %s414 = scalar_select %p413, %s23, 1
      %p415 = scmp.lt.s32.totalorder %s412, 17
      %s416 = scalar_select %p415, %s412, 17
      %s417 = smul.addr %s416, 2
      %s418 = smul.addr %s414, 36
      %s419 = sadd.s32 %s417, %s418
      %s420 = smul.addr %s419, 4
      %s421 = scalar_lea.vmem %s1, %s420
      %s422 = sadd.s32 %s24, 1
      %s423 = smul.u32 2, %s422
      %s424 = smul.u32 2, %s24
      %p425 = scmp.lt.s32.totalorder %s23, 1
      %s426 = scalar_select %p425, %s23, 1
      %p427 = scmp.lt.s32.totalorder %s424, 17
      %s428 = scalar_select %p427, %s424, 17
      %s429 = smul.addr %s428, 2
      %s430 = smul.addr %s426, 36
      %s431 = sadd.s32 %s429, %s430
      %s432 = smul.addr %s431, 4
      %s433 = scalar_lea.vmem %s2, %s432
      %s434 = smul.u32 2, %s24
      %s435 = sadd.s32 %s24, 1
      %s436 = smul.u32 2, %s435
      %p437 = scmp.lt.s32.totalorder %s23, 1
      %s438 = scalar_select %p437, %s23, 1
      %p439 = scmp.lt.s32.totalorder %s436, 17
      %s440 = scalar_select %p439, %s436, 17
      %s441 = smul.addr %s440, 2
      %s442 = smul.addr %s438, 36
      %s443 = sadd.s32 %s441, %s442
      %s444 = smul.addr %s443, 4
      %s445 = scalar_lea.vmem %s3, %s444
      %s446 = sadd.s32 %s24, 1
      %s447 = smul.u32 2, %s446
      %p448 = scmp.lt.s32.totalorder %s23, 1
      %s449 = scalar_select %p448, %s23, 1
      %p450 = scmp.lt.s32.totalorder %s24, 7
      %s451 = scalar_select %p450, %s24, 7
      %s452 = smul.addr %s449, 8
      %s453 = sadd.s32 %s451, %s452
      %s454 = smul.addr %s453, 8
      %s455 = scalar_lea.vmem %s6, %s454
      %p456 = scmp.lt.s32.totalorder %s23, 1
      %s457 = scalar_select %p456, %s23, 1
      %s458 = smul.addr %s457, 2
      %s459 = scalar_lea.vmem %s7, %s458
      %v461 = vld [vmem:[%s409] sm:$0xf]
      %v462 = vld [vmem:[%s409 + $0x4] sm:$0x1]
      %s463 = scalar_lea.vmem %s409, 8
      %v464 = vld [vmem:[%s463] sm:$0xf]
      %v465 = vld [vmem:[%s463 + $0x4] sm:$0x1]
      %v466 = vld [vmem:[%s421] sm:$0xf]
      %v467 = vld [vmem:[%s421 + $0x4] sm:$0x1]
      %s468 = scalar_lea.vmem %s421, 8
      %v469 = vld [vmem:[%s468] sm:$0xf]
      %v470 = vld [vmem:[%s468 + $0x4] sm:$0x1]
      %v471 = vld [vmem:[%s433] sm:$0xf]
      %v472 = vld [vmem:[%s433 + $0x4] sm:$0x1]
      %s473 = scalar_lea.vmem %s433, 8
      %v474 = vld [vmem:[%s473] sm:$0xf]
      %v475 = vld [vmem:[%s473 + $0x4] sm:$0x1]
      %v476 = vld [vmem:[%s445] sm:$0xf]
      %v477 = vld [vmem:[%s445 + $0x4] sm:$0x1]
      %s478 = scalar_lea.vmem %s445, 8
      %v479 = vld [vmem:[%s478] sm:$0xf]
      %v480 = vld [vmem:[%s478 + $0x4] sm:$0x1]
      %v481 = vld [vmem:[%s4] sm:$0xf]
      %s482 = scalar_lea.vmem %s4, 4
      %v483 = vld [vmem:[%s482] sm:$0xf]
      %vm484 = vcmask 64512
      %v486 = vsel %vm484, %v471, 0
      %vm488 = vcmask 1043456
      %v490 = vsel %vm488, %v483, 0
      %492 = vmatprep.subr.bf16.mxu0 0
      %493 = vmatpush1.bf16.msra.mxu0 %v490
      %494 = vmatprep.subr.bf16.mxu0 0
      %495 = vmatpush1.bf16.msra.mxu0 0
      %496 = vmatprep.subr.bf16.mxu0 0
      %497 = vmatpush1.bf16.msra.mxu0 0
      %498 = vmatprep.subr.bf16.mxu0 0
      %499 = vmatpush1.bf16.msra.mxu0 0
      %500 = vmatprep.subr.bf16.mxu0 0
      %501 = vmatpush1.bf16.msra.mxu0 0
      %502 = vmatprep.subr.bf16.mxu0 0
      %503 = vmatpush1.bf16.msra.mxu0 0
      %504 = vmatprep.subr.bf16.mxu0 0
      %505 = vmatpush1.bf16.msra.mxu0 0
      %506 = vmatprep.subr.bf16.mxu0 0
      %507 = vmatpush1.bf16.msra.mxu0 0
      %508 = vmatprep.subr.bf16.mxu0 0
      %509 = vmatpush1.bf16.msra.mxu0 0
      %510 = vmatprep.subr.bf16.mxu0 0
      %511 = vmatpush1.bf16.msra.mxu0 0
      %512 = vmatprep.subr.bf16.mxu0 0
      %513 = vmatpush1.bf16.msra.mxu0 0
      %514 = vmatprep.subr.bf16.mxu0 0
      %515 = vmatpush1.bf16.msra.mxu0 0
      %516 = vmatprep.subr.bf16.mxu0 0
      %517 = vmatpush1.bf16.msra.mxu0 0
      %518 = vmatprep.subr.bf16.mxu0 0
      %519 = vmatpush1.bf16.msra.mxu0 0
      %520 = vmatprep.subr.bf16.mxu0 0
      %521 = vmatpush1.bf16.msra.mxu0 0
      %522 = vmatprep.subr.bf16.mxu0 0
      %523 = vmatpush1.bf16.msra.mxu0 0
      %524 = vmatprep.mubr.bf16.mxu0 0
      %525 = vmatmul.mubr.bf16.gmra.mrb[0].mxu0 %v486
      %v526 = vpop.f32.mrb[0].mxu0
      %v527 = vadd.f32 0.0, %v526
      %v528 = vpop.f32.mrb[0].mxu0
      %v529 = vpop.f32.mrb[0].mxu0
      %v530 = vpop.f32.mrb[0].mxu0
      %531 = vdwg.mxu0
      %v533 = vsel %vm484, %v461, 0
      %v536 = vsel %vm488, %v481, 0
      %538 = vmatprep.subr.bf16.mxu0 0
      %539 = vmatpush1.bf16.msra.mxu0 %v536
      %540 = vmatprep.subr.bf16.mxu0 0
      %541 = vmatpush1.bf16.msra.mxu0 0
      %542 = vmatprep.subr.bf16.mxu0 0
      %543 = vmatpush1.bf16.msra.mxu0 0
      %544 = vmatprep.subr.bf16.mxu0 0
      %545 = vmatpush1.bf16.msra.mxu0 0
      %546 = vmatprep.subr.bf16.mxu0 0
      %547 = vmatpush1.bf16.msra.mxu0 0
      %548 = vmatprep.subr.bf16.mxu0 0
      %549 = vmatpush1.bf16.msra.mxu0 0
      %550 = vmatprep.subr.bf16.mxu0 0
      %551 = vmatpush1.bf16.msra.mxu0 0
      %552 = vmatprep.subr.bf16.mxu0 0
      %553 = vmatpush1.bf16.msra.mxu0 0
      %554 = vmatprep.subr.bf16.mxu0 0
      %555 = vmatpush1.bf16.msra.mxu0 0
      %556 = vmatprep.subr.bf16.mxu0 0
      %557 = vmatpush1.bf16.msra.mxu0 0
      %558 = vmatprep.subr.bf16.mxu0 0
      %559 = vmatpush1.bf16.msra.mxu0 0
      %560 = vmatprep.subr.bf16.mxu0 0
      %561 = vmatpush1.bf16.msra.mxu0 0
      %562 = vmatprep.subr.bf16.mxu0 0
      %563 = vmatpush1.bf16.msra.mxu0 0
      %564 = vmatprep.subr.bf16.mxu0 0
      %565 = vmatpush1.bf16.msra.mxu0 0
      %566 = vmatprep.subr.bf16.mxu0 0
      %567 = vmatpush1.bf16.msra.mxu0 0
      %568 = vmatprep.subr.bf16.mxu0 0
      %569 = vmatpush1.bf16.msra.mxu0 0
      %570 = vmatprep.mubr.bf16.mxu0 0
      %571 = vmatmul.mubr.bf16.gmra.mrb[0].mxu0 %v533
      %v572 = vpop.f32.mrb[0].mxu0
      %v573 = vadd.f32 %v527, %v572
      %v574 = vpop.f32.mrb[0].mxu0
      %v575 = vpop.f32.mrb[0].mxu0
      %v576 = vpop.f32.mrb[0].mxu0
      %577 = vdwg.mxu0
      %s578 = scalar_lea.vmem %s4, 8
      %v579 = vld [vmem:[%s578] sm:$0xf]
      %v582 = vunpack.c.l.b16 %v461
      %v583 = vunpack.c.l.b16 %v462
      %v584 = vpack.c.b16 %v583, %v582
      %v586 = vshrl.u32 %v584, 16
      %v588 = vshll.u32 %v584, 16
      %v590 = vrot.slane %v588, 1
      %v591 = vor.u32 %v586, %v590
      %v593 = vsel %vm484, %v591, 0
      %v596 = vsel %vm488, %v579, 0
      %598 = vmatprep.subr.bf16.mxu0 0
      %599 = vmatpush1.bf16.msra.mxu0 %v596
      %600 = vmatprep.subr.bf16.mxu0 0
      %601 = vmatpush1.bf16.msra.mxu0 0
      %602 = vmatprep.subr.bf16.mxu0 0
      %603 = vmatpush1.bf16.msra.mxu0 0
      %604 = vmatprep.subr.bf16.mxu0 0
      %605 = vmatpush1.bf16.msra.mxu0 0
      %606 = vmatprep.subr.bf16.mxu0 0
      %607 = vmatpush1.bf16.msra.mxu0 0
      %608 = vmatprep.subr.bf16.mxu0 0
      %609 = vmatpush1.bf16.msra.mxu0 0
      %610 = vmatprep.subr.bf16.mxu0 0
      %611 = vmatpush1.bf16.msra.mxu0 0
      %612 = vmatprep.subr.bf16.mxu0 0
      %613 = vmatpush1.bf16.msra.mxu0 0
      %614 = vmatprep.subr.bf16.mxu0 0
      %615 = vmatpush1.bf16.msra.mxu0 0
      %616 = vmatprep.subr.bf16.mxu0 0
      %617 = vmatpush1.bf16.msra.mxu0 0
      %618 = vmatprep.subr.bf16.mxu0 0
      %619 = vmatpush1.bf16.msra.mxu0 0
      %620 = vmatprep.subr.bf16.mxu0 0
      %621 = vmatpush1.bf16.msra.mxu0 0
      %622 = vmatprep.subr.bf16.mxu0 0
      %623 = vmatpush1.bf16.msra.mxu0 0
      %624 = vmatprep.subr.bf16.mxu0 0
      %625 = vmatpush1.bf16.msra.mxu0 0
      %626 = vmatprep.subr.bf16.mxu0 0
      %627 = vmatpush1.bf16.msra.mxu0 0
      %628 = vmatprep.subr.bf16.mxu0 0
      %629 = vmatpush1.bf16.msra.mxu0 0
      %630 = vmatprep.mubr.bf16.mxu0 0
      %631 = vmatmul.mubr.bf16.gmra.mrb[0].mxu0 %v593
      %v632 = vpop.f32.mrb[0].mxu0
      %v633 = vadd.f32 0.0, %v632
      %v634 = vpop.f32.mrb[0].mxu0
      %v635 = vpop.f32.mrb[0].mxu0
      %v636 = vpop.f32.mrb[0].mxu0
      %637 = vdwg.mxu0
      %v638 = vadd.f32 %v573, %v633
      %s639 = scalar_lea.vmem %s4, 12
      %v640 = vld [vmem:[%s639] sm:$0xf]
      %v643 = vunpack.c.l.b16 %v471
      %v644 = vunpack.c.l.b16 %v472
      %v645 = vpack.c.b16 %v644, %v643
      %v647 = vshrl.u32 %v645, 16
      %v649 = vshll.u32 %v645, 16
      %v651 = vrot.slane %v649, 1
      %v652 = vor.u32 %v647, %v651
      %v654 = vsel %vm484, %v652, 0
      %v657 = vsel %vm488, %v640, 0
      %659 = vmatprep.subr.bf16.mxu0 0
      %660 = vmatpush1.bf16.msra.mxu0 %v657
      %661 = vmatprep.subr.bf16.mxu0 0
      %662 = vmatpush1.bf16.msra.mxu0 0
      %663 = vmatprep.subr.bf16.mxu0 0
      %664 = vmatpush1.bf16.msra.mxu0 0
      %665 = vmatprep.subr.bf16.mxu0 0
      %666 = vmatpush1.bf16.msra.mxu0 0
      %667 = vmatprep.subr.bf16.mxu0 0
      %668 = vmatpush1.bf16.msra.mxu0 0
      %669 = vmatprep.subr.bf16.mxu0 0
      %670 = vmatpush1.bf16.msra.mxu0 0
      %671 = vmatprep.subr.bf16.mxu0 0
      %672 = vmatpush1.bf16.msra.mxu0 0
      %673 = vmatprep.subr.bf16.mxu0 0
      %674 = vmatpush1.bf16.msra.mxu0 0
      %675 = vmatprep.subr.bf16.mxu0 0
      %676 = vmatpush1.bf16.msra.mxu0 0
      %677 = vmatprep.subr.bf16.mxu0 0
      %678 = vmatpush1.bf16.msra.mxu0 0
      %679 = vmatprep.subr.bf16.mxu0 0
      %680 = vmatpush1.bf16.msra.mxu0 0
      %681 = vmatprep.subr.bf16.mxu0 0
      %682 = vmatpush1.bf16.msra.mxu0 0
      %683 = vmatprep.subr.bf16.mxu0 0
      %684 = vmatpush1.bf16.msra.mxu0 0
      %685 = vmatprep.subr.bf16.mxu0 0
      %686 = vmatpush1.bf16.msra.mxu0 0
      %687 = vmatprep.subr.bf16.mxu0 0
      %688 = vmatpush1.bf16.msra.mxu0 0
      %689 = vmatprep.subr.bf16.mxu0 0
      %690 = vmatpush1.bf16.msra.mxu0 0
      %691 = vmatprep.mubr.bf16.mxu0 0
      %692 = vmatmul.mubr.bf16.gmra.mrb[0].mxu0 %v654
      %v693 = vpop.f32.mrb[0].mxu0
      %v694 = vadd.f32 0.0, %v693
      %v695 = vpop.f32.mrb[0].mxu0
      %v696 = vpop.f32.mrb[0].mxu0
      %v697 = vpop.f32.mrb[0].mxu0
      %698 = vdwg.mxu0
      %v699 = vadd.f32 %v638, %v694
      %s700 = scalar_lea.vmem %s4, 16
      %v701 = vld [vmem:[%s700] sm:$0xf]
      %v703 = vsel %vm484, %v464, 0
      %v706 = vsel %vm488, %v701, 0
      %708 = vmatprep.subr.bf16.mxu0 0
      %709 = vmatpush1.bf16.msra.mxu0 %v706
      %710 = vmatprep.subr.bf16.mxu0 0
      %711 = vmatpush1.bf16.msra.mxu0 0
      %712 = vmatprep.subr.bf16.mxu0 0
      %713 = vmatpush1.bf16.msra.mxu0 0
      %714 = vmatprep.subr.bf16.mxu0 0
      %715 = vmatpush1.bf16.msra.mxu0 0
      %716 = vmatprep.subr.bf16.mxu0 0
      %717 = vmatpush1.bf16.msra.mxu0 0
      %718 = vmatprep.subr.bf16.mxu0 0
      %719 = vmatpush1.bf16.msra.mxu0 0
      %720 = vmatprep.subr.bf16.mxu0 0
      %721 = vmatpush1.bf16.msra.mxu0 0
      %722 = vmatprep.subr.bf16.mxu0 0
      %723 = vmatpush1.bf16.msra.mxu0 0
      %724 = vmatprep.subr.bf16.mxu0 0
      %725 = vmatpush1.bf16.msra.mxu0 0
      %726 = vmatprep.subr.bf16.mxu0 0
      %727 = vmatpush1.bf16.msra.mxu0 0
      %728 = vmatprep.subr.bf16.mxu0 0
      %729 = vmatpush1.bf16.msra.mxu0 0
      %730 = vmatprep.subr.bf16.mxu0 0
      %731 = vmatpush1.bf16.msra.mxu0 0
      %732 = vmatprep.subr.bf16.mxu0 0
      %733 = vmatpush1.bf16.msra.mxu0 0
      %734 = vmatprep.subr.bf16.mxu0 0
      %735 = vmatpush1.bf16.msra.mxu0 0
      %736 = vmatprep.subr.bf16.mxu0 0
      %737 = vmatpush1.bf16.msra.mxu0 0
      %738 = vmatprep.subr.bf16.mxu0 0
      %739 = vmatpush1.bf16.msra.mxu0 0
      %740 = vmatprep.mubr.bf16.mxu0 0
      %741 = vmatmul.mubr.bf16.gmra.mrb[0].mxu0 %v703
      %v742 = vpop.f32.mrb[0].mxu0
      %v743 = vadd.f32 0.0, %v742
      %v744 = vpop.f32.mrb[0].mxu0
      %v745 = vpop.f32.mrb[0].mxu0
      %v746 = vpop.f32.mrb[0].mxu0
      %747 = vdwg.mxu0
      %v748 = vadd.f32 %v699, %v743
      %s749 = scalar_lea.vmem %s4, 20
      %v750 = vld [vmem:[%s749] sm:$0xf]
      %v752 = vsel %vm484, %v474, 0
      %v755 = vsel %vm488, %v750, 0
      %757 = vmatprep.subr.bf16.mxu0 0
      %758 = vmatpush1.bf16.msra.mxu0 %v755
      %759 = vmatprep.subr.bf16.mxu0 0
      %760 = vmatpush1.bf16.msra.mxu0 0
      %761 = vmatprep.subr.bf16.mxu0 0
      %762 = vmatpush1.bf16.msra.mxu0 0
      %763 = vmatprep.subr.bf16.mxu0 0
      %764 = vmatpush1.bf16.msra.mxu0 0
      %765 = vmatprep.subr.bf16.mxu0 0
      %766 = vmatpush1.bf16.msra.mxu0 0
      %767 = vmatprep.subr.bf16.mxu0 0
      %768 = vmatpush1.bf16.msra.mxu0 0
      %769 = vmatprep.subr.bf16.mxu0 0
      %770 = vmatpush1.bf16.msra.mxu0 0
      %771 = vmatprep.subr.bf16.mxu0 0
      %772 = vmatpush1.bf16.msra.mxu0 0
      %773 = vmatprep.subr.bf16.mxu0 0
      %774 = vmatpush1.bf16.msra.mxu0 0
      %775 = vmatprep.subr.bf16.mxu0 0
      %776 = vmatpush1.bf16.msra.mxu0 0
      %777 = vmatprep.subr.bf16.mxu0 0
      %778 = vmatpush1.bf16.msra.mxu0 0
      %779 = vmatprep.subr.bf16.mxu0 0
      %780 = vmatpush1.bf16.msra.mxu0 0
      %781 = vmatprep.subr.bf16.mxu0 0
      %782 = vmatpush1.bf16.msra.mxu0 0
      %783 = vmatprep.subr.bf16.mxu0 0
      %784 = vmatpush1.bf16.msra.mxu0 0
      %785 = vmatprep.subr.bf16.mxu0 0
      %786 = vmatpush1.bf16.msra.mxu0 0
      %787 = vmatprep.subr.bf16.mxu0 0
      %788 = vmatpush1.bf16.msra.mxu0 0
      %789 = vmatprep.mubr.bf16.mxu0 0
      %790 = vmatmul.mubr.bf16.gmra.mrb[0].mxu0 %v752
      %v791 = vpop.f32.mrb[0].mxu0
      %v792 = vadd.f32 0.0, %v791
      %v793 = vpop.f32.mrb[0].mxu0
      %v794 = vpop.f32.mrb[0].mxu0
      %v795 = vpop.f32.mrb[0].mxu0
      %796 = vdwg.mxu0
      %v797 = vadd.f32 %v748, %v792
      %s798 = scalar_lea.vmem %s4, 24
      %v799 = vld [vmem:[%s798] sm:$0xf]
      %v802 = vunpack.c.l.b16 %v464
      %v803 = vunpack.c.l.b16 %v465
      %v804 = vpack.c.b16 %v803, %v802
      %v806 = vshrl.u32 %v804, 16
      %v808 = vshll.u32 %v804, 16
      %v810 = vrot.slane %v808, 1
      %v811 = vor.u32 %v806, %v810
      %v813 = vsel %vm484, %v811, 0
      %v816 = vsel %vm488, %v799, 0
      %818 = vmatprep.subr.bf16.mxu0 0
      %819 = vmatpush1.bf16.msra.mxu0 %v816
      %820 = vmatprep.subr.bf16.mxu0 0
      %821 = vmatpush1.bf16.msra.mxu0 0
      %822 = vmatprep.subr.bf16.mxu0 0
      %823 = vmatpush1.bf16.msra.mxu0 0
      %824 = vmatprep.subr.bf16.mxu0 0
      %825 = vmatpush1.bf16.msra.mxu0 0
      %826 = vmatprep.subr.bf16.mxu0 0
      %827 = vmatpush1.bf16.msra.mxu0 0
      %828 = vmatprep.subr.bf16.mxu0 0
      %829 = vmatpush1.bf16.msra.mxu0 0
      %830 = vmatprep.subr.bf16.mxu0 0
      %831 = vmatpush1.bf16.msra.mxu0 0
      %832 = vmatprep.subr.bf16.mxu0 0
      %833 = vmatpush1.bf16.msra.mxu0 0
      %834 = vmatprep.subr.bf16.mxu0 0
      %835 = vmatpush1.bf16.msra.mxu0 0
      %836 = vmatprep.subr.bf16.mxu0 0
      %837 = vmatpush1.bf16.msra.mxu0 0
      %838 = vmatprep.subr.bf16.mxu0 0
      %839 = vmatpush1.bf16.msra.mxu0 0
      %840 = vmatprep.subr.bf16.mxu0 0
      %841 = vmatpush1.bf16.msra.mxu0 0
      %842 = vmatprep.subr.bf16.mxu0 0
      %843 = vmatpush1.bf16.msra.mxu0 0
      %844 = vmatprep.subr.bf16.mxu0 0
      %845 = vmatpush1.bf16.msra.mxu0 0
      %846 = vmatprep.subr.bf16.mxu0 0
      %847 = vmatpush1.bf16.msra.mxu0 0
      %848 = vmatprep.subr.bf16.mxu0 0
      %849 = vmatpush1.bf16.msra.mxu0 0
      %850 = vmatprep.mubr.bf16.mxu0 0
      %851 = vmatmul.mubr.bf16.gmra.mrb[0].mxu0 %v813
      %v852 = vpop.f32.mrb[0].mxu0
      %v853 = vadd.f32 0.0, %v852
      %v854 = vpop.f32.mrb[0].mxu0
      %v855 = vpop.f32.mrb[0].mxu0
      %v856 = vpop.f32.mrb[0].mxu0
      %857 = vdwg.mxu0
      %v858 = vadd.f32 %v797, %v853
      %s859 = scalar_lea.vmem %s4, 28
      %v860 = vld [vmem:[%s859] sm:$0xf]
      %v863 = vunpack.c.l.b16 %v474
      %v864 = vunpack.c.l.b16 %v475
      %v865 = vpack.c.b16 %v864, %v863
      %v867 = vshrl.u32 %v865, 16
      %v869 = vshll.u32 %v865, 16
      %v871 = vrot.slane %v869, 1
      %v872 = vor.u32 %v867, %v871
      %v874 = vsel %vm484, %v872, 0
      %v877 = vsel %vm488, %v860, 0
      %879 = vmatprep.subr.bf16.mxu0 0
      %880 = vmatpush1.bf16.msra.mxu0 %v877
      %881 = vmatprep.subr.bf16.mxu0 0
      %882 = vmatpush1.bf16.msra.mxu0 0
      %883 = vmatprep.subr.bf16.mxu0 0
      %884 = vmatpush1.bf16.msra.mxu0 0
      %885 = vmatprep.subr.bf16.mxu0 0
      %886 = vmatpush1.bf16.msra.mxu0 0
      %887 = vmatprep.subr.bf16.mxu0 0
      %888 = vmatpush1.bf16.msra.mxu0 0
      %889 = vmatprep.subr.bf16.mxu0 0
      %890 = vmatpush1.bf16.msra.mxu0 0
      %891 = vmatprep.subr.bf16.mxu0 0
      %892 = vmatpush1.bf16.msra.mxu0 0
      %893 = vmatprep.subr.bf16.mxu0 0
      %894 = vmatpush1.bf16.msra.mxu0 0
      %895 = vmatprep.subr.bf16.mxu0 0
      %896 = vmatpush1.bf16.msra.mxu0 0
      %897 = vmatprep.subr.bf16.mxu0 0
      %898 = vmatpush1.bf16.msra.mxu0 0
      %899 = vmatprep.subr.bf16.mxu0 0
      %900 = vmatpush1.bf16.msra.mxu0 0
      %901 = vmatprep.subr.bf16.mxu0 0
      %902 = vmatpush1.bf16.msra.mxu0 0
      %903 = vmatprep.subr.bf16.mxu0 0
      %904 = vmatpush1.bf16.msra.mxu0 0
      %905 = vmatprep.subr.bf16.mxu0 0
      %906 = vmatpush1.bf16.msra.mxu0 0
      %907 = vmatprep.subr.bf16.mxu0 0
      %908 = vmatpush1.bf16.msra.mxu0 0
      %909 = vmatprep.subr.bf16.mxu0 0
      %910 = vmatpush1.bf16.msra.mxu0 0
      %911 = vmatprep.mubr.bf16.mxu0 0
      %912 = vmatmul.mubr.bf16.gmra.mrb[0].mxu0 %v874
      %v913 = vpop.f32.mrb[0].mxu0
      %v914 = vadd.f32 0.0, %v913
      %v915 = vpop.f32.mrb[0].mxu0
      %v916 = vpop.f32.mrb[0].mxu0
      %v917 = vpop.f32.mrb[0].mxu0
      %918 = vdwg.mxu0
      %v919 = vadd.f32 %v858, %v914
      %s920 = scalar_lea.vmem %s4, 32
      %v921 = vld [vmem:[%s920] sm:$0xf]
      %v923 = vsel %vm484, %v466, 0
      %v926 = vsel %vm488, %v921, 0
      %928 = vmatprep.subr.bf16.mxu0 0
      %929 = vmatpush1.bf16.msra.mxu0 %v926
      %930 = vmatprep.subr.bf16.mxu0 0
      %931 = vmatpush1.bf16.msra.mxu0 0
      %932 = vmatprep.subr.bf16.mxu0 0
      %933 = vmatpush1.bf16.msra.mxu0 0
      %934 = vmatprep.subr.bf16.mxu0 0
      %935 = vmatpush1.bf16.msra.mxu0 0
      %936 = vmatprep.subr.bf16.mxu0 0
      %937 = vmatpush1.bf16.msra.mxu0 0
      %938 = vmatprep.subr.bf16.mxu0 0
      %939 = vmatpush1.bf16.msra.mxu0 0
      %940 = vmatprep.subr.bf16.mxu0 0
      %941 = vmatpush1.bf16.msra.mxu0 0
      %942 = vmatprep.subr.bf16.mxu0 0
      %943 = vmatpush1.bf16.msra.mxu0 0
      %944 = vmatprep.subr.bf16.mxu0 0
      %945 = vmatpush1.bf16.msra.mxu0 0
      %946 = vmatprep.subr.bf16.mxu0 0
      %947 = vmatpush1.bf16.msra.mxu0 0
      %948 = vmatprep.subr.bf16.mxu0 0
      %949 = vmatpush1.bf16.msra.mxu0 0
      %950 = vmatprep.subr.bf16.mxu0 0
      %951 = vmatpush1.bf16.msra.mxu0 0
      %952 = vmatprep.subr.bf16.mxu0 0
      %953 = vmatpush1.bf16.msra.mxu0 0
      %954 = vmatprep.subr.bf16.mxu0 0
      %955 = vmatpush1.bf16.msra.mxu0 0
      %956 = vmatprep.subr.bf16.mxu0 0
      %957 = vmatpush1.bf16.msra.mxu0 0
      %958 = vmatprep.subr.bf16.mxu0 0
      %959 = vmatpush1.bf16.msra.mxu0 0
      %960 = vmatprep.mubr.bf16.mxu0 0
      %961 = vmatmul.mubr.bf16.gmra.mrb[0].mxu0 %v923
      %v962 = vpop.f32.mrb[0].mxu0
      %v963 = vadd.f32 0.0, %v962
      %v964 = vpop.f32.mrb[0].mxu0
      %v965 = vpop.f32.mrb[0].mxu0
      %v966 = vpop.f32.mrb[0].mxu0
      %967 = vdwg.mxu0
      %v968 = vadd.f32 %v919, %v963
      %s969 = scalar_lea.vmem %s4, 36
      %v970 = vld [vmem:[%s969] sm:$0xf]
      %v972 = vsel %vm484, %v476, 0
      %v975 = vsel %vm488, %v970, 0
      %977 = vmatprep.subr.bf16.mxu0 0
      %978 = vmatpush1.bf16.msra.mxu0 %v975
      %979 = vmatprep.subr.bf16.mxu0 0
      %980 = vmatpush1.bf16.msra.mxu0 0
      %981 = vmatprep.subr.bf16.mxu0 0
      %982 = vmatpush1.bf16.msra.mxu0 0
      %983 = vmatprep.subr.bf16.mxu0 0
      %984 = vmatpush1.bf16.msra.mxu0 0
      %985 = vmatprep.subr.bf16.mxu0 0
      %986 = vmatpush1.bf16.msra.mxu0 0
      %987 = vmatprep.subr.bf16.mxu0 0
      %988 = vmatpush1.bf16.msra.mxu0 0
      %989 = vmatprep.subr.bf16.mxu0 0
      %990 = vmatpush1.bf16.msra.mxu0 0
      %991 = vmatprep.subr.bf16.mxu0 0
      %992 = vmatpush1.bf16.msra.mxu0 0
      %993 = vmatprep.subr.bf16.mxu0 0
      %994 = vmatpush1.bf16.msra.mxu0 0
      %995 = vmatprep.subr.bf16.mxu0 0
      %996 = vmatpush1.bf16.msra.mxu0 0
      %997 = vmatprep.subr.bf16.mxu0 0
      %998 = vmatpush1.bf16.msra.mxu0 0
      %999 = vmatprep.subr.bf16.mxu0 0
      %1000 = vmatpush1.bf16.msra.mxu0 0
      %1001 = vmatprep.subr.bf16.mxu0 0
      %1002 = vmatpush1.bf16.msra.mxu0 0
      %1003 = vmatprep.subr.bf16.mxu0 0
      %1004 = vmatpush1.bf16.msra.mxu0 0
      %1005 = vmatprep.subr.bf16.mxu0 0
      %1006 = vmatpush1.bf16.msra.mxu0 0
      %1007 = vmatprep.subr.bf16.mxu0 0
      %1008 = vmatpush1.bf16.msra.mxu0 0
      %1009 = vmatprep.mubr.bf16.mxu0 0
      %1010 = vmatmul.mubr.bf16.gmra.mrb[0].mxu0 %v972
      %v1011 = vpop.f32.mrb[0].mxu0
      %v1012 = vadd.f32 0.0, %v1011
      %v1013 = vpop.f32.mrb[0].mxu0
      %v1014 = vpop.f32.mrb[0].mxu0
      %v1015 = vpop.f32.mrb[0].mxu0
      %1016 = vdwg.mxu0
      %v1017 = vadd.f32 %v968, %v1012
      %s1018 = scalar_lea.vmem %s4, 40
      %v1019 = vld [vmem:[%s1018] sm:$0xf]
      %v1022 = vunpack.c.l.b16 %v466
      %v1023 = vunpack.c.l.b16 %v467
      %v1024 = vpack.c.b16 %v1023, %v1022
      %v1026 = vshrl.u32 %v1024, 16
      %v1028 = vshll.u32 %v1024, 16
      %v1030 = vrot.slane %v1028, 1
      %v1031 = vor.u32 %v1026, %v1030
      %v1033 = vsel %vm484, %v1031, 0
      %v1036 = vsel %vm488, %v1019, 0
      %1038 = vmatprep.subr.bf16.mxu0 0
      %1039 = vmatpush1.bf16.msra.mxu0 %v1036
      %1040 = vmatprep.subr.bf16.mxu0 0
      %1041 = vmatpush1.bf16.msra.mxu0 0
      %1042 = vmatprep.subr.bf16.mxu0 0
      %1043 = vmatpush1.bf16.msra.mxu0 0
      %1044 = vmatprep.subr.bf16.mxu0 0
      %1045 = vmatpush1.bf16.msra.mxu0 0
      %1046 = vmatprep.subr.bf16.mxu0 0
      %1047 = vmatpush1.bf16.msra.mxu0 0
      %1048 = vmatprep.subr.bf16.mxu0 0
      %1049 = vmatpush1.bf16.msra.mxu0 0
      %1050 = vmatprep.subr.bf16.mxu0 0
      %1051 = vmatpush1.bf16.msra.mxu0 0
      %1052 = vmatprep.subr.bf16.mxu0 0
      %1053 = vmatpush1.bf16.msra.mxu0 0
      %1054 = vmatprep.subr.bf16.mxu0 0
      %1055 = vmatpush1.bf16.msra.mxu0 0
      %1056 = vmatprep.subr.bf16.mxu0 0
      %1057 = vmatpush1.bf16.msra.mxu0 0
      %1058 = vmatprep.subr.bf16.mxu0 0
      %1059 = vmatpush1.bf16.msra.mxu0 0
      %1060 = vmatprep.subr.bf16.mxu0 0
      %1061 = vmatpush1.bf16.msra.mxu0 0
      %1062 = vmatprep.subr.bf16.mxu0 0
      %1063 = vmatpush1.bf16.msra.mxu0 0
      %1064 = vmatprep.subr.bf16.mxu0 0
      %1065 = vmatpush1.bf16.msra.mxu0 0
      %1066 = vmatprep.subr.bf16.mxu0 0
      %1067 = vmatpush1.bf16.msra.mxu0 0
      %1068 = vmatprep.subr.bf16.mxu0 0
      %1069 = vmatpush1.bf16.msra.mxu0 0
      %1070 = vmatprep.mubr.bf16.mxu0 0
      %1071 = vmatmul.mubr.bf16.gmra.mrb[0].mxu0 %v1033
      %v1072 = vpop.f32.mrb[0].mxu0
      %v1073 = vadd.f32 0.0, %v1072
      %v1074 = vpop.f32.mrb[0].mxu0
      %v1075 = vpop.f32.mrb[0].mxu0
      %v1076 = vpop.f32.mrb[0].mxu0
      %1077 = vdwg.mxu0
      %v1078 = vadd.f32 %v1017, %v1073
      %s1079 = scalar_lea.vmem %s4, 44
      %v1080 = vld [vmem:[%s1079] sm:$0xf]
      %v1083 = vunpack.c.l.b16 %v476
      %v1084 = vunpack.c.l.b16 %v477
      %v1085 = vpack.c.b16 %v1084, %v1083
      %v1087 = vshrl.u32 %v1085, 16
      %v1089 = vshll.u32 %v1085, 16
      %v1091 = vrot.slane %v1089, 1
      %v1092 = vor.u32 %v1087, %v1091
      %v1094 = vsel %vm484, %v1092, 0
      %v1097 = vsel %vm488, %v1080, 0
      %1099 = vmatprep.subr.bf16.mxu0 0
      %1100 = vmatpush1.bf16.msra.mxu0 %v1097
      %1101 = vmatprep.subr.bf16.mxu0 0
      %1102 = vmatpush1.bf16.msra.mxu0 0
      %1103 = vmatprep.subr.bf16.mxu0 0
      %1104 = vmatpush1.bf16.msra.mxu0 0
      %1105 = vmatprep.subr.bf16.mxu0 0
      %1106 = vmatpush1.bf16.msra.mxu0 0
      %1107 = vmatprep.subr.bf16.mxu0 0
      %1108 = vmatpush1.bf16.msra.mxu0 0
      %1109 = vmatprep.subr.bf16.mxu0 0
      %1110 = vmatpush1.bf16.msra.mxu0 0
      %1111 = vmatprep.subr.bf16.mxu0 0
      %1112 = vmatpush1.bf16.msra.mxu0 0
      %1113 = vmatprep.subr.bf16.mxu0 0
      %1114 = vmatpush1.bf16.msra.mxu0 0
      %1115 = vmatprep.subr.bf16.mxu0 0
      %1116 = vmatpush1.bf16.msra.mxu0 0
      %1117 = vmatprep.subr.bf16.mxu0 0
      %1118 = vmatpush1.bf16.msra.mxu0 0
      %1119 = vmatprep.subr.bf16.mxu0 0
      %1120 = vmatpush1.bf16.msra.mxu0 0
      %1121 = vmatprep.subr.bf16.mxu0 0
      %1122 = vmatpush1.bf16.msra.mxu0 0
      %1123 = vmatprep.subr.bf16.mxu0 0
      %1124 = vmatpush1.bf16.msra.mxu0 0
      %1125 = vmatprep.subr.bf16.mxu0 0
      %1126 = vmatpush1.bf16.msra.mxu0 0
      %1127 = vmatprep.subr.bf16.mxu0 0
      %1128 = vmatpush1.bf16.msra.mxu0 0
      %1129 = vmatprep.subr.bf16.mxu0 0
      %1130 = vmatpush1.bf16.msra.mxu0 0
      %1131 = vmatprep.mubr.bf16.mxu0 0
      %1132 = vmatmul.mubr.bf16.gmra.mrb[0].mxu0 %v1094
      %v1133 = vpop.f32.mrb[0].mxu0
      %v1134 = vadd.f32 0.0, %v1133
      %v1135 = vpop.f32.mrb[0].mxu0
      %v1136 = vpop.f32.mrb[0].mxu0
      %v1137 = vpop.f32.mrb[0].mxu0
      %1138 = vdwg.mxu0
      %v1139 = vadd.f32 %v1078, %v1134
      %s1140 = scalar_lea.vmem %s4, 48
      %v1141 = vld [vmem:[%s1140] sm:$0xf]
      %v1143 = vsel %vm484, %v469, 0
      %v1146 = vsel %vm488, %v1141, 0
      %1148 = vmatprep.subr.bf16.mxu0 0
      %1149 = vmatpush1.bf16.msra.mxu0 %v1146
      %1150 = vmatprep.subr.bf16.mxu0 0
      %1151 = vmatpush1.bf16.msra.mxu0 0
      %1152 = vmatprep.subr.bf16.mxu0 0
      %1153 = vmatpush1.bf16.msra.mxu0 0
      %1154 = vmatprep.subr.bf16.mxu0 0
      %1155 = vmatpush1.bf16.msra.mxu0 0
      %1156 = vmatprep.subr.bf16.mxu0 0
      %1157 = vmatpush1.bf16.msra.mxu0 0
      %1158 = vmatprep.subr.bf16.mxu0 0
      %1159 = vmatpush1.bf16.msra.mxu0 0
      %1160 = vmatprep.subr.bf16.mxu0 0
      %1161 = vmatpush1.bf16.msra.mxu0 0
      %1162 = vmatprep.subr.bf16.mxu0 0
      %1163 = vmatpush1.bf16.msra.mxu0 0
      %1164 = vmatprep.subr.bf16.mxu0 0
      %1165 = vmatpush1.bf16.msra.mxu0 0
      %1166 = vmatprep.subr.bf16.mxu0 0
      %1167 = vmatpush1.bf16.msra.mxu0 0
      %1168 = vmatprep.subr.bf16.mxu0 0
      %1169 = vmatpush1.bf16.msra.mxu0 0
      %1170 = vmatprep.subr.bf16.mxu0 0
      %1171 = vmatpush1.bf16.msra.mxu0 0
      %1172 = vmatprep.subr.bf16.mxu0 0
      %1173 = vmatpush1.bf16.msra.mxu0 0
      %1174 = vmatprep.subr.bf16.mxu0 0
      %1175 = vmatpush1.bf16.msra.mxu0 0
      %1176 = vmatprep.subr.bf16.mxu0 0
      %1177 = vmatpush1.bf16.msra.mxu0 0
      %1178 = vmatprep.subr.bf16.mxu0 0
      %1179 = vmatpush1.bf16.msra.mxu0 0
      %1180 = vmatprep.mubr.bf16.mxu0 0
      %1181 = vmatmul.mubr.bf16.gmra.mrb[0].mxu0 %v1143
      %v1182 = vpop.f32.mrb[0].mxu0
      %v1183 = vadd.f32 0.0, %v1182
      %v1184 = vpop.f32.mrb[0].mxu0
      %v1185 = vpop.f32.mrb[0].mxu0
      %v1186 = vpop.f32.mrb[0].mxu0
      %1187 = vdwg.mxu0
      %v1188 = vadd.f32 %v1139, %v1183
      %s1189 = scalar_lea.vmem %s4, 52
      %v1190 = vld [vmem:[%s1189] sm:$0xf]
      %v1192 = vsel %vm484, %v479, 0
      %v1195 = vsel %vm488, %v1190, 0
      %1197 = vmatprep.subr.bf16.mxu0 0
      %1198 = vmatpush1.bf16.msra.mxu0 %v1195
      %1199 = vmatprep.subr.bf16.mxu0 0
      %1200 = vmatpush1.bf16.msra.mxu0 0
      %1201 = vmatprep.subr.bf16.mxu0 0
      %1202 = vmatpush1.bf16.msra.mxu0 0
      %1203 = vmatprep.subr.bf16.mxu0 0
      %1204 = vmatpush1.bf16.msra.mxu0 0
      %1205 = vmatprep.subr.bf16.mxu0 0
      %1206 = vmatpush1.bf16.msra.mxu0 0
      %1207 = vmatprep.subr.bf16.mxu0 0
      %1208 = vmatpush1.bf16.msra.mxu0 0
      %1209 = vmatprep.subr.bf16.mxu0 0
      %1210 = vmatpush1.bf16.msra.mxu0 0
      %1211 = vmatprep.subr.bf16.mxu0 0
      %1212 = vmatpush1.bf16.msra.mxu0 0
      %1213 = vmatprep.subr.bf16.mxu0 0
      %1214 = vmatpush1.bf16.msra.mxu0 0
      %1215 = vmatprep.subr.bf16.mxu0 0
      %1216 = vmatpush1.bf16.msra.mxu0 0
      %1217 = vmatprep.subr.bf16.mxu0 0
      %1218 = vmatpush1.bf16.msra.mxu0 0
      %1219 = vmatprep.subr.bf16.mxu0 0
      %1220 = vmatpush1.bf16.msra.mxu0 0
      %1221 = vmatprep.subr.bf16.mxu0 0
      %1222 = vmatpush1.bf16.msra.mxu0 0
      %1223 = vmatprep.subr.bf16.mxu0 0
      %1224 = vmatpush1.bf16.msra.mxu0 0
      %1225 = vmatprep.subr.bf16.mxu0 0
      %1226 = vmatpush1.bf16.msra.mxu0 0
      %1227 = vmatprep.subr.bf16.mxu0 0
      %1228 = vmatpush1.bf16.msra.mxu0 0
      %1229 = vmatprep.mubr.bf16.mxu0 0
      %1230 = vmatmul.mubr.bf16.gmra.mrb[0].mxu0 %v1192
      %v1231 = vpop.f32.mrb[0].mxu0
      %v1232 = vadd.f32 0.0, %v1231
      %v1233 = vpop.f32.mrb[0].mxu0
      %v1234 = vpop.f32.mrb[0].mxu0
      %v1235 = vpop.f32.mrb[0].mxu0
      %1236 = vdwg.mxu0
      %v1237 = vadd.f32 %v1188, %v1232
      %s1238 = scalar_lea.vmem %s4, 56
      %v1239 = vld [vmem:[%s1238] sm:$0xf]
      %v1242 = vunpack.c.l.b16 %v469
      %v1243 = vunpack.c.l.b16 %v470
      %v1244 = vpack.c.b16 %v1243, %v1242
      %v1246 = vshrl.u32 %v1244, 16
      %v1248 = vshll.u32 %v1244, 16
      %v1250 = vrot.slane %v1248, 1
      %v1251 = vor.u32 %v1246, %v1250
      %v1253 = vsel %vm484, %v1251, 0
      %v1256 = vsel %vm488, %v1239, 0
      %1258 = vmatprep.subr.bf16.mxu0 0
      %1259 = vmatpush1.bf16.msra.mxu0 %v1256
      %1260 = vmatprep.subr.bf16.mxu0 0
      %1261 = vmatpush1.bf16.msra.mxu0 0
      %1262 = vmatprep.subr.bf16.mxu0 0
      %1263 = vmatpush1.bf16.msra.mxu0 0
      %1264 = vmatprep.subr.bf16.mxu0 0
      %1265 = vmatpush1.bf16.msra.mxu0 0
      %1266 = vmatprep.subr.bf16.mxu0 0
      %1267 = vmatpush1.bf16.msra.mxu0 0
      %1268 = vmatprep.subr.bf16.mxu0 0
      %1269 = vmatpush1.bf16.msra.mxu0 0
      %1270 = vmatprep.subr.bf16.mxu0 0
      %1271 = vmatpush1.bf16.msra.mxu0 0
      %1272 = vmatprep.subr.bf16.mxu0 0
      %1273 = vmatpush1.bf16.msra.mxu0 0
      %1274 = vmatprep.subr.bf16.mxu0 0
      %1275 = vmatpush1.bf16.msra.mxu0 0
      %1276 = vmatprep.subr.bf16.mxu0 0
      %1277 = vmatpush1.bf16.msra.mxu0 0
      %1278 = vmatprep.subr.bf16.mxu0 0
      %1279 = vmatpush1.bf16.msra.mxu0 0
      %1280 = vmatprep.subr.bf16.mxu0 0
      %1281 = vmatpush1.bf16.msra.mxu0 0
      %1282 = vmatprep.subr.bf16.mxu0 0
      %1283 = vmatpush1.bf16.msra.mxu0 0
      %1284 = vmatprep.subr.bf16.mxu0 0
      %1285 = vmatpush1.bf16.msra.mxu0 0
      %1286 = vmatprep.subr.bf16.mxu0 0
      %1287 = vmatpush1.bf16.msra.mxu0 0
      %1288 = vmatprep.subr.bf16.mxu0 0
      %1289 = vmatpush1.bf16.msra.mxu0 0
      %1290 = vmatprep.mubr.bf16.mxu0 0
      %1291 = vmatmul.mubr.bf16.gmra.mrb[0].mxu0 %v1253
      %v1292 = vpop.f32.mrb[0].mxu0
      %v1293 = vadd.f32 0.0, %v1292
      %v1294 = vpop.f32.mrb[0].mxu0
      %v1295 = vpop.f32.mrb[0].mxu0
      %v1296 = vpop.f32.mrb[0].mxu0
      %1297 = vdwg.mxu0
      %v1298 = vadd.f32 %v1237, %v1293
      %s1299 = scalar_lea.vmem %s4, 60
      %v1300 = vld [vmem:[%s1299] sm:$0xf]
      %v1303 = vunpack.c.l.b16 %v479
      %v1304 = vunpack.c.l.b16 %v480
      %v1305 = vpack.c.b16 %v1304, %v1303
      %v1307 = vshrl.u32 %v1305, 16
      %v1309 = vshll.u32 %v1305, 16
      %v1311 = vrot.slane %v1309, 1
      %v1312 = vor.u32 %v1307, %v1311
      %v1314 = vsel %vm484, %v1312, 0
      %v1317 = vsel %vm488, %v1300, 0
      %1319 = vmatprep.subr.bf16.mxu0 0
      %1320 = vmatpush1.bf16.msra.mxu0 %v1317
      %1321 = vmatprep.subr.bf16.mxu0 0
      %1322 = vmatpush1.bf16.msra.mxu0 0
      %1323 = vmatprep.subr.bf16.mxu0 0
      %1324 = vmatpush1.bf16.msra.mxu0 0
      %1325 = vmatprep.subr.bf16.mxu0 0
      %1326 = vmatpush1.bf16.msra.mxu0 0
      %1327 = vmatprep.subr.bf16.mxu0 0
      %1328 = vmatpush1.bf16.msra.mxu0 0
      %1329 = vmatprep.subr.bf16.mxu0 0
      %1330 = vmatpush1.bf16.msra.mxu0 0
      %1331 = vmatprep.subr.bf16.mxu0 0
      %1332 = vmatpush1.bf16.msra.mxu0 0
      %1333 = vmatprep.subr.bf16.mxu0 0
      %1334 = vmatpush1.bf16.msra.mxu0 0
      %1335 = vmatprep.subr.bf16.mxu0 0
      %1336 = vmatpush1.bf16.msra.mxu0 0
      %1337 = vmatprep.subr.bf16.mxu0 0
      %1338 = vmatpush1.bf16.msra.mxu0 0
      %1339 = vmatprep.subr.bf16.mxu0 0
      %1340 = vmatpush1.bf16.msra.mxu0 0
      %1341 = vmatprep.subr.bf16.mxu0 0
      %1342 = vmatpush1.bf16.msra.mxu0 0
      %1343 = vmatprep.subr.bf16.mxu0 0
      %1344 = vmatpush1.bf16.msra.mxu0 0
      %1345 = vmatprep.subr.bf16.mxu0 0
      %1346 = vmatpush1.bf16.msra.mxu0 0
      %1347 = vmatprep.subr.bf16.mxu0 0
      %1348 = vmatpush1.bf16.msra.mxu0 0
      %1349 = vmatprep.subr.bf16.mxu0 0
      %1350 = vmatpush1.bf16.msra.mxu0 0
      %1351 = vmatprep.mubr.bf16.mxu0 0
      %1352 = vmatmul.mubr.bf16.gmra.mrb[0].mxu0 %v1314
      %v1353 = vpop.f32.mrb[0].mxu0
      %v1354 = vadd.f32 0.0, %v1353
      %v1355 = vpop.f32.mrb[0].mxu0
      %v1356 = vpop.f32.mrb[0].mxu0
      %v1357 = vpop.f32.mrb[0].mxu0
      %1358 = vdwg.mxu0
      %v1359 = vadd.f32 %v1298, %v1354
      %v1360 = vld [vmem:[%s5] sm:$0x1]
      %v1362 = vlaneseq
      %v1363 = vshrl.u32 %v1362, 7
      %v1364 = vsub.s32 0, %v1363
      %v1365 = vrot.slane %v1360, %v1364
      %v1367 = vadd.f32 %v1359, %v1365
      %p1368 = scmp.eq.s32.totalorder %s24, 0
      // Predicated region
      $region45: #{_lambda_.9} parent=43 // pred_check
        %p1369 = pneg %p1368
      $region46: #{_lambda_.9} parent=43 // pred_check_branch
        %1371 = sbr.rel (%p1369) target = $region48
      $region47: #{_lambda_.9} parent=43 // pred_region
        %vm1372 = vcmask 123904
        %1373 = vst.msk [vmem:[%s459] sm:$0x3] %vm1372, 0.0
      $region48: #{_lambda_.9} parent=43 // pred_fallthru
        _
      %v1374 = vld [vmem:[%s459] sm:$0x1]
      %vm1375 = vcmask 130048
      %v1376 = vsel %vm1375, %v1367, 0.0
      %v1377 = vrot.slane %v1376, 4
      %v1378 = vadd.f32 %v1376, %v1377
      %v1379 = vrot.slane %v1378, 2
      %v1380 = vadd.f32 %v1378, %v1379
      %v1381 = vrot.slane %v1380, 1
      %v1382 = vadd.f32 %v1380, %v1381
      %v1383 = vadd.f32 %v1374, %v1382
      %vm1384 = vcmask 122880
      %1385 = vst.msk [vmem:[%s459] sm:$0x1] %vm1384, %v1383
      %v1386 = vld [vmem:[%s459 + $0x1] sm:$0x1]
      %v1387 = vmul.f32 %v1367, %v1367
      %v1388 = vsel %vm1375, %v1387, 0.0
      %v1389 = vrot.slane %v1388, 4
      %v1390 = vadd.f32 %v1388, %v1389
      %v1391 = vrot.slane %v1390, 2
      %v1392 = vadd.f32 %v1390, %v1391
      %v1393 = vrot.slane %v1392, 1
      %v1394 = vadd.f32 %v1392, %v1393
      %v1395 = vadd.f32 %v1386, %v1394
      %1396 = vst.msk [vmem:[%s459 + $0x1] sm:$0x1] %vm1384, %v1395
      %1397 = vst.msk [vmem:[%s455] sm:$0xff] %vm1375, %v1367
      %p1398 = scmp.lt.s32.totalorder %s23, 1
      %s1399 = scalar_select %p1398, %s23, 1
      %p1400 = scmp.lt.s32.totalorder %s24, 7
      %s1401 = scalar_select %p1400, %s24, 7
      %s1402 = smul.addr %s1399, 8
      %s1403 = sadd.s32 %s1401, %s1402
      %s1404 = smul.addr %s1403, 8
      %s1405 = scalar_lea.vmem %s6, %s1404
      %p1406 = scmp.lt.s32.totalorder %s23, 1
      %s1407 = scalar_select %p1406, %s23, 1
      %s1408 = smul.addr %s1407, 2
      %s1409 = scalar_lea.vmem %s7, %s1408
      // Predicated region
      $region49: #{_lambda_.9} parent=43 // pred_check
        %p1410 = pneg %p209
      $region50: #{_lambda_.9} parent=43 // pred_check_branch
        %1412 = sbr.rel (%p1410) target = $region52
      $region51: #{_lambda_.9} parent=43 // pred_region
        _
      $region52: #{_lambda_.9} parent=43 // pred_fallthru
        _
      // Predicated region
      $region53: #{_lambda_.9} parent=43 // pred_check
        %p1413 = pneg %p235
      $region54: #{_lambda_.9} parent=43 // pred_check_branch
        %1415 = sbr.rel (%p1413) target = $region56
      $region55: #{_lambda_.9} parent=43 // pred_region
        _
      $region56: #{_lambda_.9} parent=43 // pred_fallthru
        _
    $region44: #{_lambda_.9} parent=5 // pred_fallthru
      _
    %p1416 = scmp.le.s32.totalorder 2, %s14
    // Predicated region
    $region57: #{_lambda_.9} parent=5 // pred_check
      %p1417 = pneg %p1416
    $region58: #{_lambda_.9} parent=5 // pred_check_branch
      %1419 = sbr.rel (%p1417) target = $region60
    $region59: #{_lambda_.9} parent=5 // pred_region
      %s1420 = ssub.s32 %s14, 2
      // Predicated region
      $region61: #{_lambda_.9} parent=59 // pred_check
        %p1421 = pneg %p215
      $region62: #{_lambda_.9} parent=59 // pred_check_branch
        %1423 = sbr.rel (%p1421) target = $region64
      $region63: #{_lambda_.9} parent=59 // pred_region
        %p1424 = scmp.lt.s32.totalorder %s25, 1
        %s1425 = scalar_select %p1424, %s25, 1
        %p1426 = scmp.lt.s32.totalorder %s26, 7
        %s1427 = scalar_select %p1426, %s26, 7
        %s1428 = smul.addr %s1425, 8
        %s1429 = sadd.s32 %s1427, %s1428
        %s1430 = smul.addr %s1429, 8
        %s1431 = scalar_lea.vmem %s6, %s1430
      $region64: #{_lambda_.9} parent=59 // pred_fallthru
        _
      // Predicated region
      $region65: #{_lambda_.9} parent=59 // pred_check
        %p1432 = pneg %p241
      $region66: #{_lambda_.9} parent=59 // pred_check_branch
        %1434 = sbr.rel (%p1432) target = $region68
      $region67: #{_lambda_.9} parent=59 // pred_region
        %p1435 = scmp.lt.s32.totalorder %s25, 1
        %s1436 = scalar_select %p1435, %s25, 1
        %s1437 = smul.addr %s1436, 2
        %s1438 = scalar_lea.vmem %s7, %s1437
      $region68: #{_lambda_.9} parent=59 // pred_fallthru
        _
    $region60: #{_lambda_.9} parent=5 // pred_fallthru
      _
  $region6: #{_lambda_.9} parent=0 // loop_footer
    %s18 = sadd.s32 1, %s14
  $region7: #{_lambda_.9} parent=0 // loop_footer_branch
    %13 = sbr.rel target = $region3
  $region8: #{_lambda_.9} parent=0 // loop_exit
    _

// kernel: _lambda_.12
$region0: #{_lambda_.12}
  #allocation0 [shape = 'u32[]', space=smem, size = 0x4, offset = 0x4, fixed_abs, tag = 'smem constant byte address 0x4 - core index']
  #allocation1 [shape = 'u32[144,128]{1,0:T(1,128)}', space=vmem, size = 0x12000, scoped, tag = 'internal scratch']
  %s0 = inlined_call_operand.vmem [shape: f32[2,4,4,32], index: 0, kind: input, shape index: {}]
  %s1 = inlined_call_operand.vmem [shape: f32[2,32], index: 1, kind: input, shape index: {}]
  %s2 = inlined_call_operand.vmem [shape: f32[1,32], index: 2, kind: input, shape index: {}]
  %s3 = inlined_call_operand.vmem [shape: f32[1,32], index: 3, kind: input, shape index: {}]
  %s4 = inlined_call_operand.vmem [shape: bf16[2,4,4,32], index: 4, kind: output, shape index: {}]
  %s5 = sld [smem:[#allocation0]]
  $region49: #{_lambda_.12} parent=0
    _
  %s7 = ssub.s32 1, %s5
  %s8 = scalar_select 0, %s7, %s5
  loop: start=0, step=1, limit=10
  $region2: #{_lambda_.12} parent=0 // loop_pre_header
    _
  $region3: #{_lambda_.12} parent=0 // loop_header
    %s10 = sphi 0, %s14
    %p11 = scmp.ge.s32.totalorder %s10, 10
    %s17 = sphi 0, %s29
    %s18 = sphi 0, %s25
    %s19 = sphi 0, %s17
    %s20 = sphi 0, %s18
    %s21 = sphi 0, %s19
    %s22 = sphi 0, %s20
    %s34 = sphi 0, %s36
    %s37 = sphi 0, %s34
    %s38 = sphi 0, %s37
    %s54 = sphi 0, %s38
    %s58 = sphi 0, %s58
    %s60 = sphi 0, %s58
    %s61 = sphi 0, %s60
    %s75 = sphi 0, %s61
    %s79 = sphi 0, %s79
    %s81 = sphi 0, %s79
    %s82 = sphi 0, %s81
    %s96 = sphi 0, %s82
    %s100 = sphi 0, %s100
    %s102 = sphi 0, %s100
    %s103 = sphi 0, %s102
    %s117 = sphi 0, %s103
    %s125 = sphi 0, %s127
    %s128 = sphi 0, %s125
    %s129 = sphi 0, %s128
    %s145 = sphi 0, %s129
  $region4: #{_lambda_.12} parent=0 // loop_header_branch
    %13 = sbr.rel (%p11) target = $region8
  $region5: #{_lambda_.12} parent=0 // loop_body
    %s15 = ssub.s32 %s10, 1
    %s16 = ssub.s32 %s10, 2
    %s23 = sadd.s32 1, %s18
    %p24 = scmp.ge.s32.totalorder %s23, 4
    %s25 = scalar_select %p24, 0, %s23
    %s26 = sadd.s32 1, %s17
    %s27 = scalar_select %p24, %s26, %s17
    %p28 = scmp.ge.s32.totalorder %s27, 2
    %s29 = scalar_select %p28, 0, %s27
    %s30 = ssub.s32 %s17, %s29
    %s31 = ssub.s32 %s18, %s25
    %s32 = sor.u32 %s30, %s31
    %p33 = scmp.eq.s32.totalorder %s32, 0
    %s35 = sadd.s32 %s34, 1
    %s36 = scalar_select %p33, %s34, %s35
    %p39 = pneg %p33
    %p40 = scmp.eq.s32.totalorder %s10, 7
    %p41 = por %p39, %p40
    %p42 = scmp.ne.s32.totalorder %s34, %s37
    %p43 = scmp.eq.s32.totalorder %s10, 0
    %p44 = por %p42, %p43
    %p45 = scmp.ne.s32.totalorder %s34, %s37
    %p46 = scmp.eq.s32.totalorder %s15, 7
    %p47 = por %p45, %p46
    %p48 = scmp.ne.s32.totalorder %s37, %s38
    %p49 = scmp.eq.s32.totalorder %s15, 0
    %p50 = por %p48, %p49
    %p51 = scmp.ne.s32.totalorder %s37, %s38
    %p52 = scmp.eq.s32.totalorder %s16, 7
    %p53 = por %p51, %p52
    %p55 = scmp.ne.s32.totalorder %s38, %s54
    %p56 = scmp.eq.s32.totalorder %s16, 0
    %p57 = por %p55, %p56
    %s59 = sadd.s32 %s58, 1
    %p62 = scmp.eq.s32.totalorder %s10, 7
    %p63 = scmp.ne.s32.totalorder %s58, %s60
    %p64 = scmp.eq.s32.totalorder %s10, 0
    %p65 = por %p63, %p64
    %p66 = scmp.ne.s32.totalorder %s58, %s60
    %p67 = scmp.eq.s32.totalorder %s15, 7
    %p68 = por %p66, %p67
    %p69 = scmp.ne.s32.totalorder %s60, %s61
    %p70 = scmp.eq.s32.totalorder %s15, 0
    %p71 = por %p69, %p70
    %p72 = scmp.ne.s32.totalorder %s60, %s61
    %p73 = scmp.eq.s32.totalorder %s16, 7
    %p74 = por %p72, %p73
    %p76 = scmp.ne.s32.totalorder %s61, %s75
    %p77 = scmp.eq.s32.totalorder %s16, 0
    %p78 = por %p76, %p77
    %s80 = sadd.s32 %s79, 1
    %p83 = scmp.eq.s32.totalorder %s10, 7
    %p84 = scmp.ne.s32.totalorder %s79, %s81
    %p85 = scmp.eq.s32.totalorder %s10, 0
    %p86 = por %p84, %p85
    %p87 = scmp.ne.s32.totalorder %s79, %s81
    %p88 = scmp.eq.s32.totalorder %s15, 7
    %p89 = por %p87, %p88
    %p90 = scmp.ne.s32.totalorder %s81, %s82
    %p91 = scmp.eq.s32.totalorder %s15, 0
    %p92 = por %p90, %p91
    %p93 = scmp.ne.s32.totalorder %s81, %s82
    %p94 = scmp.eq.s32.totalorder %s16, 7
    %p95 = por %p93, %p94
    %p97 = scmp.ne.s32.totalorder %s82, %s96
    %p98 = scmp.eq.s32.totalorder %s16, 0
    %p99 = por %p97, %p98
    %s101 = sadd.s32 %s100, 1
    %p104 = scmp.eq.s32.totalorder %s10, 7
    %p105 = scmp.ne.s32.totalorder %s100, %s102
    %p106 = scmp.eq.s32.totalorder %s10, 0
    %p107 = por %p105, %p106
    %p108 = scmp.ne.s32.totalorder %s100, %s102
    %p109 = scmp.eq.s32.totalorder %s15, 7
    %p110 = por %p108, %p109
    %p111 = scmp.ne.s32.totalorder %s102, %s103
    %p112 = scmp.eq.s32.totalorder %s15, 0
    %p113 = por %p111, %p112
    %p114 = scmp.ne.s32.totalorder %s102, %s103
    %p115 = scmp.eq.s32.totalorder %s16, 7
    %p116 = por %p114, %p115
    %p118 = scmp.ne.s32.totalorder %s103, %s117
    %p119 = scmp.eq.s32.totalorder %s16, 0
    %p120 = por %p118, %p119
    %s121 = ssub.s32 %s17, %s29
    %s122 = ssub.s32 %s18, %s25
    %s123 = sor.u32 %s121, %s122
    %p124 = scmp.eq.s32.totalorder %s123, 0
    %s126 = sadd.s32 %s125, 1
    %s127 = scalar_select %p124, %s125, %s126
    %p130 = pneg %p124
    %p131 = scmp.eq.s32.totalorder %s10, 7
    %p132 = por %p130, %p131
    %p133 = scmp.ne.s32.totalorder %s125, %s128
    %p134 = scmp.eq.s32.totalorder %s10, 0
    %p135 = por %p133, %p134
    %p136 = scmp.ne.s32.totalorder %s125, %s128
    %p137 = scmp.eq.s32.totalorder %s15, 7
    %p138 = por %p136, %p137
    %p139 = scmp.ne.s32.totalorder %s128, %s129
    %p140 = scmp.eq.s32.totalorder %s15, 0
    %p141 = por %p139, %p140
    %p142 = scmp.ne.s32.totalorder %s128, %s129
    %p143 = scmp.eq.s32.totalorder %s16, 7
    %p144 = por %p142, %p143
    %p146 = scmp.ne.s32.totalorder %s129, %s145
    %p147 = scmp.eq.s32.totalorder %s16, 0
    %p148 = por %p146, %p147
    %p149 = scmp.le.s32.totalorder 1, %s10
    %p150 = scmp.lt.s32.totalorder %s10, 9
    %p151 = pnand %p149, %p150
    %p152 = pneg %p151
    // Predicated region
    $region9: #{_lambda_.12} parent=5 // pred_check
      _
    $region10: #{_lambda_.12} parent=5 // pred_check_branch
      %154 = sbr.rel (%p151) target = $region12
    $region11: #{_lambda_.12} parent=5 // pred_region
      %s155 = ssub.s32 %s10, 1
      // Predicated region
      $region13: #{_lambda_.12} parent=11 // pred_check
        %p156 = pneg %p71
      $region14: #{_lambda_.12} parent=11 // pred_check_branch
        %158 = sbr.rel (%p156) target = $region16
      $region15: #{_lambda_.12} parent=11 // pred_region
        _
      $region16: #{_lambda_.12} parent=11 // pred_fallthru
        _
      // Predicated region
      $region17: #{_lambda_.12} parent=11 // pred_check
        %p159 = pneg %p92
      $region18: #{_lambda_.12} parent=11 // pred_check_branch
        %161 = sbr.rel (%p159) target = $region20
      $region19: #{_lambda_.12} parent=11 // pred_region
        _
      $region20: #{_lambda_.12} parent=11 // pred_fallthru
        _
      // Predicated region
      $region21: #{_lambda_.12} parent=11 // pred_check
        %p162 = pneg %p113
      $region22: #{_lambda_.12} parent=11 // pred_check_branch
        %164 = sbr.rel (%p162) target = $region24
      $region23: #{_lambda_.12} parent=11 // pred_region
        _
      $region24: #{_lambda_.12} parent=11 // pred_fallthru
        _
    $region12: #{_lambda_.12} parent=5 // pred_fallthru
      _
    %p165 = scmp.lt.s32.totalorder %s10, 8
    // Predicated region
    $region25: #{_lambda_.12} parent=5 // pred_check
      %p166 = pneg %p165
    $region26: #{_lambda_.12} parent=5 // pred_check_branch
      %168 = sbr.rel (%p166) target = $region28
    $region27: #{_lambda_.12} parent=5 // pred_region
      // Predicated region
      $region29: #{_lambda_.12} parent=27 // pred_check
        %p169 = pneg %p44
      $region30: #{_lambda_.12} parent=27 // pred_check_branch
        %171 = sbr.rel (%p169) target = $region32
      $region31: #{_lambda_.12} parent=27 // pred_region
        %p172 = scmp.lt.s32.totalorder %s17, 1
        %s173 = scalar_select %p172, %s17, 1
        %p174 = scmp.lt.s32.totalorder %s18, 3
        %s175 = scalar_select %p174, %s18, 3
        %s176 = smul.addr %s173, 4
        %s177 = sadd.s32 %s175, %s176
        %s178 = smul.addr %s177, 4
        %s179 = scalar_lea.vmem %s0, %s178
      $region32: #{_lambda_.12} parent=27 // pred_fallthru
        _
    $region28: #{_lambda_.12} parent=5 // pred_fallthru
      _
    %p180 = scmp.le.s32.totalorder 1, %s10
    %p181 = scmp.lt.s32.totalorder %s10, 9
    %p182 = pnand %p180, %p181
    %p183 = pneg %p182
    // Predicated region
    $region33: #{_lambda_.12} parent=5 // pred_check
      _
    $region34: #{_lambda_.12} parent=5 // pred_check_branch
      %185 = sbr.rel (%p182) target = $region36
    $region35: #{_lambda_.12} parent=5 // pred_region
      %s186 = ssub.s32 %s10, 1
      %p187 = scmp.lt.s32.totalorder %s19, 1
      %s188 = scalar_select %p187, %s19, 1
      %p189 = scmp.lt.s32.totalorder %s20, 3
      %s190 = scalar_select %p189, %s20, 3
      %s191 = smul.addr %s188, 4
      %s192 = sadd.s32 %s190, %s191
      %s193 = smul.addr %s192, 4
      %s194 = scalar_lea.vmem %s0, %s193
      %p195 = pneg %p50
      %p196 = pneg %p47
      %p197 = pneg %p71
      %p198 = pneg %p68
      %p199 = pneg %p92
      %p200 = pneg %p89
      %p201 = pneg %p113
      %p202 = pneg %p110
      %p203 = pneg %p141
      %p204 = pneg %p138
      %p205 = scmp.lt.s32.totalorder %s19, 1
      %s206 = scalar_select %p205, %s19, 1
      %p207 = scmp.lt.s32.totalorder %s20, 3
      %s208 = scalar_select %p207, %s20, 3
      %s209 = smul.addr %s206, 4
      %s210 = sadd.s32 %s208, %s209
      %s211 = smul.addr %s210, 2
      %s212 = scalar_lea.vmem %s4, %s211
      %p213 = scmp.lt.s32.totalorder %s19, 1
      %s214 = scalar_select %p213, %s19, 1
      %p215 = scmp.lt.s32.totalorder %s20, 3
      %s216 = scalar_select %p215, %s20, 3
      %s217 = smul.addr %s214, 4
      %s218 = sadd.s32 %s216, %s217
      %s219 = smul.addr %s218, 4
      %s220 = scalar_lea.vmem %s0, %s219
      %p221 = scmp.lt.s32.totalorder %s19, 1
      %s222 = scalar_select %p221, %s19, 1
      %p223 = scmp.lt.s32.totalorder %s20, 3
      %s224 = scalar_select %p223, %s20, 3
      %s225 = smul.addr %s222, 4
      %s226 = sadd.s32 %s224, %s225
      %s227 = smul.addr %s226, 2
      %s228 = scalar_lea.vmem %s4, %s227
      %v229 = vld [vmem:[%s220] sm:$0xf]
      %v230 = vld [vmem:[%s1] sm:$0x1]
      %v231 = vmul.f32 %v230, 0.03125
      %v232 = vld [vmem:[%s1 + $0x1] sm:$0x1]
      %v233 = vmul.f32 %v232, 0.03125
      %v234 = vmul.f32 %v231, %v231
      %v235 = vsub.f32 %v233, %v234
      %v236 = vlaneseq
      %v237 = vshrl.u32 %v236, 7
      %v238 = vsub.s32 0, %v237
      %v239 = vrot.slane %v231, %v238
      %v240 = vsub.f32 %v229, %v239
      %v241 = vadd.f32 %v235, 1e-05
      %v242 = vrsqrt.pop %v241
      %v243 = vlaneseq
      %v244 = vshrl.u32 %v243, 7
      %v245 = vsub.s32 0, %v244
      %v246 = vrot.slane %v242, %v245
      %v247 = vmul.f32 %v240, %v246
      %v248 = vld [vmem:[%s2] sm:$0x1]
      %v250 = vlaneseq
      %v251 = vshrl.u32 %v250, 7
      %v252 = vsub.s32 0, %v251
      %v253 = vrot.slane %v248, %v252
      %v255 = vmul.f32 %v247, %v253
      %v256 = vld [vmem:[%s3] sm:$0x1]
      %v258 = vlaneseq
      %v259 = vshrl.u32 %v258, 7
      %v260 = vsub.s32 0, %v259
      %v261 = vrot.slane %v256, %v260
      %v263 = vadd.f32 %v255, %v261
      %vm264 = vcmp.ge.f32.partialorder %v263, 0.0
      %v265 = vmul.f32 %v263, 0.2
      %v266 = vsel %vm264, %v263, %v265
      %v267 = vpack.c.bf16 %v266, %v266
      %vm268 = vcmask 254976
      %269 = vst.msk [vmem:[%s228] sm:$0x3] %vm268, %v267
      %p270 = scmp.lt.s32.totalorder %s19, 1
      %s271 = scalar_select %p270, %s19, 1
      %p272 = scmp.lt.s32.totalorder %s20, 3
      %s273 = scalar_select %p272, %s20, 3
      %s274 = smul.addr %s271, 4
      %s275 = sadd.s32 %s273, %s274
      %s276 = smul.addr %s275, 2
      %s277 = scalar_lea.vmem %s4, %s276
      // Predicated region
      $region37: #{_lambda_.12} parent=35 // pred_check
        %p278 = pneg %p138
      $region38: #{_lambda_.12} parent=35 // pred_check_branch
        %280 = sbr.rel (%p278) target = $region40
      $region39: #{_lambda_.12} parent=35 // pred_region
        _
      $region40: #{_lambda_.12} parent=35 // pred_fallthru
        _
    $region36: #{_lambda_.12} parent=5 // pred_fallthru
      _
    %p281 = scmp.le.s32.totalorder 2, %s10
    // Predicated region
    $region41: #{_lambda_.12} parent=5 // pred_check
      %p282 = pneg %p281
    $region42: #{_lambda_.12} parent=5 // pred_check_branch
      %284 = sbr.rel (%p282) target = $region44
    $region43: #{_lambda_.12} parent=5 // pred_region
      %s285 = ssub.s32 %s10, 2
      // Predicated region
      $region45: #{_lambda_.12} parent=43 // pred_check
        %p286 = pneg %p144
      $region46: #{_lambda_.12} parent=43 // pred_check_branch
        %288 = sbr.rel (%p286) target = $region48
      $region47: #{_lambda_.12} parent=43 // pred_region
        %p289 = scmp.lt.s32.totalorder %s21, 1
        %s290 = scalar_select %p289, %s21, 1
        %p291 = scmp.lt.s32.totalorder %s22, 3
        %s292 = scalar_select %p291, %s22, 3
        %s293 = smul.addr %s290, 4
        %s294 = sadd.s32 %s292, %s293
        %s295 = smul.addr %s294, 2
        %s296 = scalar_lea.vmem %s4, %s295
      $region48: #{_lambda_.12} parent=43 // pred_fallthru
        _
    $region44: #{_lambda_.12} parent=5 // pred_fallthru
      _
  $region6: #{_lambda_.12} parent=0 // loop_footer
    %s14 = sadd.s32 1, %s10
  $region7: #{_lambda_.12} parent=0 // loop_footer_branch
    %9 = sbr.rel target = $region3
  $region8: #{_lambda_.12} parent=0 // loop_exit
    _

// kernel: _lambda_.14
$region0: #{_lambda_.14}
  #allocation0 [shape = 'u32[]', space=smem, size = 0x4, offset = 0x4, fixed_abs, tag = 'smem constant byte address 0x4 - core index']
  #allocation1 [shape = 'u32[144,128]{1,0:T(1,128)}', space=vmem, size = 0x12000, scoped, tag = 'internal scratch']
  %s0 = inlined_call_operand.vmem [shape: f32[2,3,3,64], index: 0, kind: input, shape index: {}]
  %s1 = inlined_call_operand.vmem [shape: f32[2,64], index: 1, kind: input, shape index: {}]
  %s2 = inlined_call_operand.vmem [shape: f32[1,64], index: 2, kind: input, shape index: {}]
  %s3 = inlined_call_operand.vmem [shape: f32[1,64], index: 3, kind: input, shape index: {}]
  %s4 = inlined_call_operand.vmem [shape: bf16[2,3,3,64], index: 4, kind: output, shape index: {}]
  %s5 = sld [smem:[#allocation0]]
  $region49: #{_lambda_.14} parent=0
    _
  %s7 = ssub.s32 1, %s5
  %s8 = scalar_select 0, %s7, %s5
  loop: start=0, step=1, limit=8
  $region2: #{_lambda_.14} parent=0 // loop_pre_header
    _
  $region3: #{_lambda_.14} parent=0 // loop_header
    %s10 = sphi 0, %s14
    %p11 = scmp.ge.s32.totalorder %s10, 8
    %s17 = sphi 0, %s29
    %s18 = sphi 0, %s25
    %s19 = sphi 0, %s17
    %s20 = sphi 0, %s18
    %s21 = sphi 0, %s19
    %s22 = sphi 0, %s20
    %s34 = sphi 0, %s36
    %s37 = sphi 0, %s34
    %s38 = sphi 0, %s37
    %s54 = sphi 0, %s38
    %s58 = sphi 0, %s58
    %s60 = sphi 0, %s58
    %s61 = sphi 0, %s60
    %s75 = sphi 0, %s61
    %s79 = sphi 0, %s79
    %s81 = sphi 0, %s79
    %s82 = sphi 0, %s81
    %s96 = sphi 0, %s82
    %s100 = sphi 0, %s100
    %s102 = sphi 0, %s100
    %s103 = sphi 0, %s102
    %s117 = sphi 0, %s103
    %s125 = sphi 0, %s127
    %s128 = sphi 0, %s125
    %s129 = sphi 0, %s128
    %s145 = sphi 0, %s129
  $region4: #{_lambda_.14} parent=0 // loop_header_branch
    %13 = sbr.rel (%p11) target = $region8
  $region5: #{_lambda_.14} parent=0 // loop_body
    %s15 = ssub.s32 %s10, 1
    %s16 = ssub.s32 %s10, 2
    %s23 = sadd.s32 1, %s18
    %p24 = scmp.ge.s32.totalorder %s23, 3
    %s25 = scalar_select %p24, 0, %s23
    %s26 = sadd.s32 1, %s17
    %s27 = scalar_select %p24, %s26, %s17
    %p28 = scmp.ge.s32.totalorder %s27, 2
    %s29 = scalar_select %p28, 0, %s27
    %s30 = ssub.s32 %s17, %s29
    %s31 = ssub.s32 %s18, %s25
    %s32 = sor.u32 %s30, %s31
    %p33 = scmp.eq.s32.totalorder %s32, 0
    %s35 = sadd.s32 %s34, 1
    %s36 = scalar_select %p33, %s34, %s35
    %p39 = pneg %p33
    %p40 = scmp.eq.s32.totalorder %s10, 5
    %p41 = por %p39, %p40
    %p42 = scmp.ne.s32.totalorder %s34, %s37
    %p43 = scmp.eq.s32.totalorder %s10, 0
    %p44 = por %p42, %p43
    %p45 = scmp.ne.s32.totalorder %s34, %s37
    %p46 = scmp.eq.s32.totalorder %s15, 5
    %p47 = por %p45, %p46
    %p48 = scmp.ne.s32.totalorder %s37, %s38
    %p49 = scmp.eq.s32.totalorder %s15, 0
    %p50 = por %p48, %p49
    %p51 = scmp.ne.s32.totalorder %s37, %s38
    %p52 = scmp.eq.s32.totalorder %s16, 5
    %p53 = por %p51, %p52
    %p55 = scmp.ne.s32.totalorder %s38, %s54
    %p56 = scmp.eq.s32.totalorder %s16, 0
    %p57 = por %p55, %p56
    %s59 = sadd.s32 %s58, 1
    %p62 = scmp.eq.s32.totalorder %s10, 5
    %p63 = scmp.ne.s32.totalorder %s58, %s60
    %p64 = scmp.eq.s32.totalorder %s10, 0
    %p65 = por %p63, %p64
    %p66 = scmp.ne.s32.totalorder %s58, %s60
    %p67 = scmp.eq.s32.totalorder %s15, 5
    %p68 = por %p66, %p67
    %p69 = scmp.ne.s32.totalorder %s60, %s61
    %p70 = scmp.eq.s32.totalorder %s15, 0
    %p71 = por %p69, %p70
    %p72 = scmp.ne.s32.totalorder %s60, %s61
    %p73 = scmp.eq.s32.totalorder %s16, 5
    %p74 = por %p72, %p73
    %p76 = scmp.ne.s32.totalorder %s61, %s75
    %p77 = scmp.eq.s32.totalorder %s16, 0
    %p78 = por %p76, %p77
    %s80 = sadd.s32 %s79, 1
    %p83 = scmp.eq.s32.totalorder %s10, 5
    %p84 = scmp.ne.s32.totalorder %s79, %s81
    %p85 = scmp.eq.s32.totalorder %s10, 0
    %p86 = por %p84, %p85
    %p87 = scmp.ne.s32.totalorder %s79, %s81
    %p88 = scmp.eq.s32.totalorder %s15, 5
    %p89 = por %p87, %p88
    %p90 = scmp.ne.s32.totalorder %s81, %s82
    %p91 = scmp.eq.s32.totalorder %s15, 0
    %p92 = por %p90, %p91
    %p93 = scmp.ne.s32.totalorder %s81, %s82
    %p94 = scmp.eq.s32.totalorder %s16, 5
    %p95 = por %p93, %p94
    %p97 = scmp.ne.s32.totalorder %s82, %s96
    %p98 = scmp.eq.s32.totalorder %s16, 0
    %p99 = por %p97, %p98
    %s101 = sadd.s32 %s100, 1
    %p104 = scmp.eq.s32.totalorder %s10, 5
    %p105 = scmp.ne.s32.totalorder %s100, %s102
    %p106 = scmp.eq.s32.totalorder %s10, 0
    %p107 = por %p105, %p106
    %p108 = scmp.ne.s32.totalorder %s100, %s102
    %p109 = scmp.eq.s32.totalorder %s15, 5
    %p110 = por %p108, %p109
    %p111 = scmp.ne.s32.totalorder %s102, %s103
    %p112 = scmp.eq.s32.totalorder %s15, 0
    %p113 = por %p111, %p112
    %p114 = scmp.ne.s32.totalorder %s102, %s103
    %p115 = scmp.eq.s32.totalorder %s16, 5
    %p116 = por %p114, %p115
    %p118 = scmp.ne.s32.totalorder %s103, %s117
    %p119 = scmp.eq.s32.totalorder %s16, 0
    %p120 = por %p118, %p119
    %s121 = ssub.s32 %s17, %s29
    %s122 = ssub.s32 %s18, %s25
    %s123 = sor.u32 %s121, %s122
    %p124 = scmp.eq.s32.totalorder %s123, 0
    %s126 = sadd.s32 %s125, 1
    %s127 = scalar_select %p124, %s125, %s126
    %p130 = pneg %p124
    %p131 = scmp.eq.s32.totalorder %s10, 5
    %p132 = por %p130, %p131
    %p133 = scmp.ne.s32.totalorder %s125, %s128
    %p134 = scmp.eq.s32.totalorder %s10, 0
    %p135 = por %p133, %p134
    %p136 = scmp.ne.s32.totalorder %s125, %s128
    %p137 = scmp.eq.s32.totalorder %s15, 5
    %p138 = por %p136, %p137
    %p139 = scmp.ne.s32.totalorder %s128, %s129
    %p140 = scmp.eq.s32.totalorder %s15, 0
    %p141 = por %p139, %p140
    %p142 = scmp.ne.s32.totalorder %s128, %s129
    %p143 = scmp.eq.s32.totalorder %s16, 5
    %p144 = por %p142, %p143
    %p146 = scmp.ne.s32.totalorder %s129, %s145
    %p147 = scmp.eq.s32.totalorder %s16, 0
    %p148 = por %p146, %p147
    %p149 = scmp.le.s32.totalorder 1, %s10
    %p150 = scmp.lt.s32.totalorder %s10, 7
    %p151 = pnand %p149, %p150
    %p152 = pneg %p151
    // Predicated region
    $region9: #{_lambda_.14} parent=5 // pred_check
      _
    $region10: #{_lambda_.14} parent=5 // pred_check_branch
      %154 = sbr.rel (%p151) target = $region12
    $region11: #{_lambda_.14} parent=5 // pred_region
      %s155 = ssub.s32 %s10, 1
      // Predicated region
      $region13: #{_lambda_.14} parent=11 // pred_check
        %p156 = pneg %p71
      $region14: #{_lambda_.14} parent=11 // pred_check_branch
        %158 = sbr.rel (%p156) target = $region16
      $region15: #{_lambda_.14} parent=11 // pred_region
        _
      $region16: #{_lambda_.14} parent=11 // pred_fallthru
        _
      // Predicated region
      $region17: #{_lambda_.14} parent=11 // pred_check
        %p159 = pneg %p92
      $region18: #{_lambda_.14} parent=11 // pred_check_branch
        %161 = sbr.rel (%p159) target = $region20
      $region19: #{_lambda_.14} parent=11 // pred_region
        _
      $region20: #{_lambda_.14} parent=11 // pred_fallthru
        _
      // Predicated region
      $region21: #{_lambda_.14} parent=11 // pred_check
        %p162 = pneg %p113
      $region22: #{_lambda_.14} parent=11 // pred_check_branch
        %164 = sbr.rel (%p162) target = $region24
      $region23: #{_lambda_.14} parent=11 // pred_region
        _
      $region24: #{_lambda_.14} parent=11 // pred_fallthru
        _
    $region12: #{_lambda_.14} parent=5 // pred_fallthru
      _
    %p165 = scmp.lt.s32.totalorder %s10, 6
    // Predicated region
    $region25: #{_lambda_.14} parent=5 // pred_check
      %p166 = pneg %p165
    $region26: #{_lambda_.14} parent=5 // pred_check_branch
      %168 = sbr.rel (%p166) target = $region28
    $region27: #{_lambda_.14} parent=5 // pred_region
      // Predicated region
      $region29: #{_lambda_.14} parent=27 // pred_check
        %p169 = pneg %p44
      $region30: #{_lambda_.14} parent=27 // pred_check_branch
        %171 = sbr.rel (%p169) target = $region32
      $region31: #{_lambda_.14} parent=27 // pred_region
        %p172 = scmp.lt.s32.totalorder %s17, 1
        %s173 = scalar_select %p172, %s17, 1
        %p174 = scmp.lt.s32.totalorder %s18, 2
        %s175 = scalar_select %p174, %s18, 2
        %s176 = smul.addr %s173, 3
        %s177 = sadd.s32 %s175, %s176
        %s178 = smul.addr %s177, 4
        %s179 = scalar_lea.vmem %s0, %s178
      $region32: #{_lambda_.14} parent=27 // pred_fallthru
        _
    $region28: #{_lambda_.14} parent=5 // pred_fallthru
      _
    %p180 = scmp.le.s32.totalorder 1, %s10
    %p181 = scmp.lt.s32.totalorder %s10, 7
    %p182 = pnand %p180, %p181
    %p183 = pneg %p182
    // Predicated region
    $region33: #{_lambda_.14} parent=5 // pred_check
      _
    $region34: #{_lambda_.14} parent=5 // pred_check_branch
      %185 = sbr.rel (%p182) target = $region36
    $region35: #{_lambda_.14} parent=5 // pred_region
      %s186 = ssub.s32 %s10, 1
      %p187 = scmp.lt.s32.totalorder %s19, 1
      %s188 = scalar_select %p187, %s19, 1
      %p189 = scmp.lt.s32.totalorder %s20, 2
      %s190 = scalar_select %p189, %s20, 2
      %s191 = smul.addr %s188, 3
      %s192 = sadd.s32 %s190, %s191
      %s193 = smul.addr %s192, 4
      %s194 = scalar_lea.vmem %s0, %s193
      %p195 = pneg %p50
      %p196 = pneg %p47
      %p197 = pneg %p71
      %p198 = pneg %p68
      %p199 = pneg %p92
      %p200 = pneg %p89
      %p201 = pneg %p113
      %p202 = pneg %p110
      %p203 = pneg %p141
      %p204 = pneg %p138
      %p205 = scmp.lt.s32.totalorder %s19, 1
      %s206 = scalar_select %p205, %s19, 1
      %p207 = scmp.lt.s32.totalorder %s20, 2
      %s208 = scalar_select %p207, %s20, 2
      %s209 = smul.addr %s206, 3
      %s210 = sadd.s32 %s208, %s209
      %s211 = smul.addr %s210, 2
      %s212 = scalar_lea.vmem %s4, %s211
      %p213 = scmp.lt.s32.totalorder %s19, 1
      %s214 = scalar_select %p213, %s19, 1
      %p215 = scmp.lt.s32.totalorder %s20, 2
      %s216 = scalar_select %p215, %s20, 2
      %s217 = smul.addr %s214, 3
      %s218 = sadd.s32 %s216, %s217
      %s219 = smul.addr %s218, 4
      %s220 = scalar_lea.vmem %s0, %s219
      %p221 = scmp.lt.s32.totalorder %s19, 1
      %s222 = scalar_select %p221, %s19, 1
      %p223 = scmp.lt.s32.totalorder %s20, 2
      %s224 = scalar_select %p223, %s20, 2
      %s225 = smul.addr %s222, 3
      %s226 = sadd.s32 %s224, %s225
      %s227 = smul.addr %s226, 2
      %s228 = scalar_lea.vmem %s4, %s227
      %v229 = vld [vmem:[%s220] sm:$0x7]
      %v230 = vld [vmem:[%s1] sm:$0x1]
      %v231 = vmul.f32 %v230, 0.055555556
      %v232 = vld [vmem:[%s1 + $0x1] sm:$0x1]
      %v233 = vmul.f32 %v232, 0.055555556
      %v234 = vmul.f32 %v231, %v231
      %v235 = vsub.f32 %v233, %v234
      %v236 = vlaneseq
      %v237 = vshrl.u32 %v236, 7
      %v238 = vsub.s32 0, %v237
      %v239 = vrot.slane %v231, %v238
      %v240 = vsub.f32 %v229, %v239
      %v241 = vadd.f32 %v235, 1e-05
      %v242 = vrsqrt.pop %v241
      %v243 = vlaneseq
      %v244 = vshrl.u32 %v243, 7
      %v245 = vsub.s32 0, %v244
      %v246 = vrot.slane %v242, %v245
      %v247 = vmul.f32 %v240, %v246
      %v248 = vld [vmem:[%s2] sm:$0x1]
      %v250 = vlaneseq
      %v251 = vshrl.u32 %v250, 7
      %v252 = vsub.s32 0, %v251
      %v253 = vrot.slane %v248, %v252
      %v255 = vmul.f32 %v247, %v253
      %v256 = vld [vmem:[%s3] sm:$0x1]
      %v258 = vlaneseq
      %v259 = vshrl.u32 %v258, 7
      %v260 = vsub.s32 0, %v259
      %v261 = vrot.slane %v256, %v260
      %v263 = vadd.f32 %v255, %v261
      %vm264 = vcmp.ge.f32.partialorder %v263, 0.0
      %v265 = vmul.f32 %v263, 0.2
      %v266 = vsel %vm264, %v263, %v265
      %v267 = vpack.c.bf16 %v266, %v266
      %vm268 = vcmask 517120
      %vm269 = vsmask.f32 1280
      %vm270 = vmand %vm268, %vm269
      %v271 = vld [vmem:[%s228] sm:$0x3]
      %v272 = vsel %vm270, %v267, %v271
      %273 = vst [vmem:[%s228] sm:$0x3] %v272
      %p274 = scmp.lt.s32.totalorder %s19, 1
      %s275 = scalar_select %p274, %s19, 1
      %p276 = scmp.lt.s32.totalorder %s20, 2
      %s277 = scalar_select %p276, %s20, 2
      %s278 = smul.addr %s275, 3
      %s279 = sadd.s32 %s277, %s278
      %s280 = smul.addr %s279, 2
      %s281 = scalar_lea.vmem %s4, %s280
      // Predicated region
      $region37: #{_lambda_.14} parent=35 // pred_check
        %p282 = pneg %p138
      $region38: #{_lambda_.14} parent=35 // pred_check_branch
        %284 = sbr.rel (%p282) target = $region40
      $region39: #{_lambda_.14} parent=35 // pred_region
        _
      $region40: #{_lambda_.14} parent=35 // pred_fallthru
        _
    $region36: #{_lambda_.14} parent=5 // pred_fallthru
      _
    %p285 = scmp.le.s32.totalorder 2, %s10
    // Predicated region
    $region41: #{_lambda_.14} parent=5 // pred_check
      %p286 = pneg %p285
    $region42: #{_lambda_.14} parent=5 // pred_check_branch
      %288 = sbr.rel (%p286) target = $region44
    $region43: #{_lambda_.14} parent=5 // pred_region
      %s289 = ssub.s32 %s10, 2
      // Predicated region
      $region45: #{_lambda_.14} parent=43 // pred_check
        %p290 = pneg %p144
      $region46: #{_lambda_.14} parent=43 // pred_check_branch
        %292 = sbr.rel (%p290) target = $region48
      $region47: #{_lambda_.14} parent=43 // pred_region
        %p293 = scmp.lt.s32.totalorder %s21, 1
        %s294 = scalar_select %p293, %s21, 1
        %p295 = scmp.lt.s32.totalorder %s22, 2
        %s296 = scalar_select %p295, %s22, 2
        %s297 = smul.addr %s294, 3
        %s298 = sadd.s32 %s296, %s297
        %s299 = smul.addr %s298, 2
        %s300 = scalar_lea.vmem %s4, %s299
      $region48: #{_lambda_.14} parent=43 // pred_fallthru
        _
    $region44: #{_lambda_.14} parent=5 // pred_fallthru
      _
  $region6: #{_lambda_.14} parent=0 // loop_footer
    %s14 = sadd.s32 1, %s10
  $region7: #{_lambda_.14} parent=0 // loop_footer_branch
    %9 = sbr.rel target = $region3
  $region8: #{_lambda_.14} parent=0 // loop_exit
    _

// kernel: _lambda_.11
$region0: #{_lambda_.11}
  #allocation0 [shape = 'u32[]', space=smem, size = 0x4, offset = 0x4, fixed_abs, tag = 'smem constant byte address 0x4 - core index']
  #allocation1 [shape = 'u32[144,128]{1,0:T(1,128)}', space=vmem, size = 0x12000, scoped, tag = 'internal scratch']
  %s0 = inlined_call_operand.vmem [shape: bf16[2,10,5,16], index: 0, kind: input, shape index: {}, may-alias: {0,1}]
  %s1 = inlined_call_operand.vmem [shape: bf16[2,10,5,16], index: 1, kind: input, shape index: {}, may-alias: {0,1}]
  %s2 = inlined_call_operand.vmem [shape: bf16[2,10,5,16], index: 2, kind: input, shape index: {}, may-alias: {2,3}]
  %s3 = inlined_call_operand.vmem [shape: bf16[2,10,5,16], index: 3, kind: input, shape index: {}, may-alias: {2,3}]
  %s4 = inlined_call_operand.vmem [shape: bf16[16,16,32], index: 4, kind: input, shape index: {}]
  %s5 = inlined_call_operand.vmem [shape: f32[1,32], index: 5, kind: input, shape index: {}]
  %s6 = inlined_call_operand.vmem [shape: f32[2,4,4,32], index: 6, kind: output, shape index: {0}]
  %s7 = inlined_call_operand.vmem [shape: f32[2,2,32], index: 7, kind: output, shape index: {1}]
  %8 = xla_tuple %s6, %s7
  %s9 = sld [smem:[#allocation0]]
  $region69: #{_lambda_.11} parent=0
    _
  %s11 = ssub.s32 1, %s9
  %s12 = scalar_select 0, %s11, %s9
  loop: start=0, step=1, limit=10
  $region2: #{_lambda_.11} parent=0 // loop_pre_header
    _
  $region3: #{_lambda_.11} parent=0 // loop_header
    %s14 = sphi 0, %s18
    %p15 = scmp.ge.s32.totalorder %s14, 10
    %s21 = sphi 0, %s33
    %s22 = sphi 0, %s29
    %s23 = sphi 0, %s21
    %s24 = sphi 0, %s22
    %s25 = sphi 0, %s23
    %s26 = sphi 0, %s24
    %s38 = sphi 0, %s40
    %s41 = sphi 0, %s38
    %s42 = sphi 0, %s41
    %s58 = sphi 0, %s42
    %s68 = sphi 0, %s70
    %s71 = sphi 0, %s68
    %s72 = sphi 0, %s71
    %s88 = sphi 0, %s72
    %s96 = sphi 0, %s98
    %s99 = sphi 0, %s96
    %s100 = sphi 0, %s99
    %s116 = sphi 0, %s100
    %s126 = sphi 0, %s128
    %s129 = sphi 0, %s126
    %s130 = sphi 0, %s129
    %s146 = sphi 0, %s130
    %s150 = sphi 0, %s150
    %s152 = sphi 0, %s150
    %s153 = sphi 0, %s152
    %s167 = sphi 0, %s153
    %s171 = sphi 0, %s171
    %s173 = sphi 0, %s171
    %s174 = sphi 0, %s173
    %s188 = sphi 0, %s174
    %s196 = sphi 0, %s198
    %s199 = sphi 0, %s196
    %s200 = sphi 0, %s199
    %s216 = sphi 0, %s200
    %s222 = sphi 0, %s224
    %s225 = sphi 0, %s222
    %s226 = sphi 0, %s225
    %s242 = sphi 0, %s226
  $region4: #{_lambda_.11} parent=0 // loop_header_branch
    %17 = sbr.rel (%p15) target = $region8
  $region5: #{_lambda_.11} parent=0 // loop_body
    %s19 = ssub.s32 %s14, 1
    %s20 = ssub.s32 %s14, 2
    %s27 = sadd.s32 1, %s22
    %p28 = scmp.ge.s32.totalorder %s27, 4
    %s29 = scalar_select %p28, 0, %s27
    %s30 = sadd.s32 1, %s21
    %s31 = scalar_select %p28, %s30, %s21
    %p32 = scmp.ge.s32.totalorder %s31, 2
    %s33 = scalar_select %p32, 0, %s31
    %s34 = ssub.s32 %s21, %s33
    %s35 = ssub.s32 %s22, %s29
    %s36 = sor.u32 %s34, %s35
    %p37 = scmp.eq.s32.totalorder %s36, 0
    %s39 = sadd.s32 %s38, 1
    %s40 = scalar_select %p37, %s38, %s39
    %p43 = pneg %p37
    %p44 = scmp.eq.s32.totalorder %s14, 7
    %p45 = por %p43, %p44
    %p46 = scmp.ne.s32.totalorder %s38, %s41
    %p47 = scmp.eq.s32.totalorder %s14, 0
    %p48 = por %p46, %p47
    %p49 = scmp.ne.s32.totalorder %s38, %s41
    %p50 = scmp.eq.s32.totalorder %s19, 7
    %p51 = por %p49, %p50
    %p52 = scmp.ne.s32.totalorder %s41, %s42
    %p53 = scmp.eq.s32.totalorder %s19, 0
    %p54 = por %p52, %p53
    %p55 = scmp.ne.s32.totalorder %s41, %s42
    %p56 = scmp.eq.s32.totalorder %s20, 7
    %p57 = por %p55, %p56
    %p59 = scmp.ne.s32.totalorder %s42, %s58
    %p60 = scmp.eq.s32.totalorder %s20, 0
    %p61 = por %p59, %p60
    %s62 = sadd.s32 %s22, 1
    %s63 = sadd.s32 %s29, 1
    %s64 = ssub.s32 %s21, %s33
    %s65 = ssub.s32 %s62, %s63
    %s66 = sor.u32 %s64, %s65
    %p67 = scmp.eq.s32.totalorder %s66, 0
    %s69 = sadd.s32 %s68, 1
    %s70 = scalar_select %p67, %s68, %s69
    %p73 = pneg %p67
    %p74 = scmp.eq.s32.totalorder %s14, 7
    %p75 = por %p73, %p74
    %p76 = scmp.ne.s32.totalorder %s68, %s71
    %p77 = scmp.eq.s32.totalorder %s14, 0
    %p78 = por %p76, %p77
    %p79 = scmp.ne.s32.totalorder %s68, %s71
    %p80 = scmp.eq.s32.totalorder %s19, 7
    %p81 = por %p79, %p80
    %p82 = scmp.ne.s32.totalorder %s71, %s72
    %p83 = scmp.eq.s32.totalorder %s19, 0
    %p84 = por %p82, %p83
    %p85 = scmp.ne.s32.totalorder %s71, %s72
    %p86 = scmp.eq.s32.totalorder %s20, 7
    %p87 = por %p85, %p86
    %p89 = scmp.ne.s32.totalorder %s72, %s88
    %p90 = scmp.eq.s32.totalorder %s20, 0
    %p91 = por %p89, %p90
    %s92 = ssub.s32 %s21, %s33
    %s93 = ssub.s32 %s22, %s29
    %s94 = sor.u32 %s92, %s93
    %p95 = scmp.eq.s32.totalorder %s94, 0
    %s97 = sadd.s32 %s96, 1
    %s98 = scalar_select %p95, %s96, %s97
    %p101 = pneg %p95
    %p102 = scmp.eq.s32.totalorder %s14, 7
    %p103 = por %p101, %p102
    %p104 = scmp.ne.s32.totalorder %s96, %s99
    %p105 = scmp.eq.s32.totalorder %s14, 0
    %p106 = por %p104, %p105
    %p107 = scmp.ne.s32.totalorder %s96, %s99
    %p108 = scmp.eq.s32.totalorder %s19, 7
    %p109 = por %p107, %p108
    %p110 = scmp.ne.s32.totalorder %s99, %s100
    %p111 = scmp.eq.s32.totalorder %s19, 0
    %p112 = por %p110, %p111
    %p113 = scmp.ne.s32.totalorder %s99, %s100
    %p114 = scmp.eq.s32.totalorder %s20, 7
    %p115 = por %p113, %p114
    %p117 = scmp.ne.s32.totalorder %s100, %s116
    %p118 = scmp.eq.s32.totalorder %s20, 0
    %p119 = por %p117, %p118
    %s120 = sadd.s32 %s22, 1
    %s121 = sadd.s32 %s29, 1
    %s122 = ssub.s32 %s21, %s33
    %s123 = ssub.s32 %s120, %s121
    %s124 = sor.u32 %s122, %s123
    %p125 = scmp.eq.s32.totalorder %s124, 0
    %s127 = sadd.s32 %s126, 1
    %s128 = scalar_select %p125, %s126, %s127
    %p131 = pneg %p125
    %p132 = scmp.eq.s32.totalorder %s14, 7
    %p133 = por %p131, %p132
    %p134 = scmp.ne.s32.totalorder %s126, %s129
    %p135 = scmp.eq.s32.totalorder %s14, 0
    %p136 = por %p134, %p135
    %p137 = scmp.ne.s32.totalorder %s126, %s129
    %p138 = scmp.eq.s32.totalorder %s19, 7
    %p139 = por %p137, %p138
    %p140 = scmp.ne.s32.totalorder %s129, %s130
    %p141 = scmp.eq.s32.totalorder %s19, 0
    %p142 = por %p140, %p141
    %p143 = scmp.ne.s32.totalorder %s129, %s130
    %p144 = scmp.eq.s32.totalorder %s20, 7
    %p145 = por %p143, %p144
    %p147 = scmp.ne.s32.totalorder %s130, %s146
    %p148 = scmp.eq.s32.totalorder %s20, 0
    %p149 = por %p147, %p148
    %s151 = sadd.s32 %s150, 1
    %p154 = scmp.eq.s32.totalorder %s14, 7
    %p155 = scmp.ne.s32.totalorder %s150, %s152
    %p156 = scmp.eq.s32.totalorder %s14, 0
    %p157 = por %p155, %p156
    %p158 = scmp.ne.s32.totalorder %s150, %s152
    %p159 = scmp.eq.s32.totalorder %s19, 7
    %p160 = por %p158, %p159
    %p161 = scmp.ne.s32.totalorder %s152, %s153
    %p162 = scmp.eq.s32.totalorder %s19, 0
    %p163 = por %p161, %p162
    %p164 = scmp.ne.s32.totalorder %s152, %s153
    %p165 = scmp.eq.s32.totalorder %s20, 7
    %p166 = por %p164, %p165
    %p168 = scmp.ne.s32.totalorder %s153, %s167
    %p169 = scmp.eq.s32.totalorder %s20, 0
    %p170 = por %p168, %p169
    %s172 = sadd.s32 %s171, 1
    %p175 = scmp.eq.s32.totalorder %s14, 7
    %p176 = scmp.ne.s32.totalorder %s171, %s173
    %p177 = scmp.eq.s32.totalorder %s14, 0
    %p178 = por %p176, %p177
    %p179 = scmp.ne.s32.totalorder %s171, %s173
    %p180 = scmp.eq.s32.totalorder %s19, 7
    %p181 = por %p179, %p180
    %p182 = scmp.ne.s32.totalorder %s173, %s174
    %p183 = scmp.eq.s32.totalorder %s19, 0
    %p184 = por %p182, %p183
    %p185 = scmp.ne.s32.totalorder %s173, %s174
    %p186 = scmp.eq.s32.totalorder %s20, 7
    %p187 = por %p185, %p186
    %p189 = scmp.ne.s32.totalorder %s174, %s188
    %p190 = scmp.eq.s32.totalorder %s20, 0
    %p191 = por %p189, %p190
    %s192 = ssub.s32 %s21, %s33
    %s193 = ssub.s32 %s22, %s29
    %s194 = sor.u32 %s192, %s193
    %p195 = scmp.eq.s32.totalorder %s194, 0
    %s197 = sadd.s32 %s196, 1
    %s198 = scalar_select %p195, %s196, %s197
    %p201 = pneg %p195
    %p202 = scmp.eq.s32.totalorder %s14, 7
    %p203 = por %p201, %p202
    %p204 = scmp.ne.s32.totalorder %s196, %s199
    %p205 = scmp.eq.s32.totalorder %s14, 0
    %p206 = por %p204, %p205
    %p207 = scmp.ne.s32.totalorder %s196, %s199
    %p208 = scmp.eq.s32.totalorder %s19, 7
    %p209 = por %p207, %p208
    %p210 = scmp.ne.s32.totalorder %s199, %s200
    %p211 = scmp.eq.s32.totalorder %s19, 0
    %p212 = por %p210, %p211
    %p213 = scmp.ne.s32.totalorder %s199, %s200
    %p214 = scmp.eq.s32.totalorder %s20, 7
    %p215 = por %p213, %p214
    %p217 = scmp.ne.s32.totalorder %s200, %s216
    %p218 = scmp.eq.s32.totalorder %s20, 0
    %p219 = por %p217, %p218
    %s220 = ssub.s32 %s21, %s33
    %p221 = scmp.eq.s32.totalorder %s220, 0
    %s223 = sadd.s32 %s222, 1
    %s224 = scalar_select %p221, %s222, %s223
    %p227 = pneg %p221
    %p228 = scmp.eq.s32.totalorder %s14, 7
    %p229 = por %p227, %p228
    %p230 = scmp.ne.s32.totalorder %s222, %s225
    %p231 = scmp.eq.s32.totalorder %s14, 0
    %p232 = por %p230, %p231
    %p233 = scmp.ne.s32.totalorder %s222, %s225
    %p234 = scmp.eq.s32.totalorder %s19, 7
    %p235 = por %p233, %p234
    %p236 = scmp.ne.s32.totalorder %s225, %s226
    %p237 = scmp.eq.s32.totalorder %s19, 0
    %p238 = por %p236, %p237
    %p239 = scmp.ne.s32.totalorder %s225, %s226
    %p240 = scmp.eq.s32.totalorder %s20, 7
    %p241 = por %p239, %p240
    %p243 = scmp.ne.s32.totalorder %s226, %s242
    %p244 = scmp.eq.s32.totalorder %s20, 0
    %p245 = por %p243, %p244
    %p246 = scmp.le.s32.totalorder 1, %s14
    %p247 = scmp.lt.s32.totalorder %s14, 9
    %p248 = pnand %p246, %p247
    %p249 = pneg %p248
    // Predicated region
    $region9: #{_lambda_.11} parent=5 // pred_check
      _
    $region10: #{_lambda_.11} parent=5 // pred_check_branch
      %251 = sbr.rel (%p248) target = $region12
    $region11: #{_lambda_.11} parent=5 // pred_region
      %s252 = ssub.s32 %s14, 1
      // Predicated region
      $region13: #{_lambda_.11} parent=11 // pred_check
        %p253 = pneg %p163
      $region14: #{_lambda_.11} parent=11 // pred_check_branch
        %255 = sbr.rel (%p253) target = $region16
      $region15: #{_lambda_.11} parent=11 // pred_region
        _
      $region16: #{_lambda_.11} parent=11 // pred_fallthru
        _
      // Predicated region
      $region17: #{_lambda_.11} parent=11 // pred_check
        %p256 = pneg %p184
      $region18: #{_lambda_.11} parent=11 // pred_check_branch
        %258 = sbr.rel (%p256) target = $region20
      $region19: #{_lambda_.11} parent=11 // pred_region
        _
      $region20: #{_lambda_.11} parent=11 // pred_fallthru
        _
    $region12: #{_lambda_.11} parent=5 // pred_fallthru
      _
    %p259 = scmp.lt.s32.totalorder %s14, 8
    // Predicated region
    $region21: #{_lambda_.11} parent=5 // pred_check
      %p260 = pneg %p259
    $region22: #{_lambda_.11} parent=5 // pred_check_branch
      %262 = sbr.rel (%p260) target = $region24
    $region23: #{_lambda_.11} parent=5 // pred_region
      // Predicated region
      $region25: #{_lambda_.11} parent=23 // pred_check
        %p263 = pneg %p48
      $region26: #{_lambda_.11} parent=23 // pred_check_branch
        %265 = sbr.rel (%p263) target = $region28
      $region27: #{_lambda_.11} parent=23 // pred_region
        %s266 = smul.u32 2, %s22
        %p267 = scmp.lt.s32.totalorder %s21, 1
        %s268 = scalar_select %p267, %s21, 1
        %p269 = scmp.lt.s32.totalorder %s266, 9
        %s270 = scalar_select %p269, %s266, 9
        %s271 = smul.addr %s268, 10
        %s272 = sadd.s32 %s270, %s271
        %s273 = smul.addr %s272, 4
        %s274 = scalar_lea.vmem %s0, %s273
        %s275 = smul.u32 2, %s22
      $region28: #{_lambda_.11} parent=23 // pred_fallthru
        _
      // Predicated region
      $region29: #{_lambda_.11} parent=23 // pred_check
        %p276 = pneg %p78
      $region30: #{_lambda_.11} parent=23 // pred_check_branch
        %278 = sbr.rel (%p276) target = $region32
      $region31: #{_lambda_.11} parent=23 // pred_region
        %s279 = sadd.s32 %s22, 1
        %s280 = smul.u32 2, %s279
        %p281 = scmp.lt.s32.totalorder %s21, 1
        %s282 = scalar_select %p281, %s21, 1
        %p283 = scmp.lt.s32.totalorder %s280, 9
        %s284 = scalar_select %p283, %s280, 9
        %s285 = smul.addr %s282, 10
        %s286 = sadd.s32 %s284, %s285
        %s287 = smul.addr %s286, 4
        %s288 = scalar_lea.vmem %s1, %s287
        %s289 = sadd.s32 %s22, 1
        %s290 = smul.u32 2, %s289
      $region32: #{_lambda_.11} parent=23 // pred_fallthru
        _
      // Predicated region
      $region33: #{_lambda_.11} parent=23 // pred_check
        %p291 = pneg %p106
      $region34: #{_lambda_.11} parent=23 // pred_check_branch
        %293 = sbr.rel (%p291) target = $region36
      $region35: #{_lambda_.11} parent=23 // pred_region
        %s294 = smul.u32 2, %s22
        %p295 = scmp.lt.s32.totalorder %s21, 1
        %s296 = scalar_select %p295, %s21, 1
        %p297 = scmp.lt.s32.totalorder %s294, 9
        %s298 = scalar_select %p297, %s294, 9
        %s299 = smul.addr %s296, 10
        %s300 = sadd.s32 %s298, %s299
        %s301 = smul.addr %s300, 4
        %s302 = scalar_lea.vmem %s2, %s301
        %s303 = smul.u32 2, %s22
      $region36: #{_lambda_.11} parent=23 // pred_fallthru
        _
      // Predicated region
      $region37: #{_lambda_.11} parent=23 // pred_check
        %p304 = pneg %p136
      $region38: #{_lambda_.11} parent=23 // pred_check_branch
        %306 = sbr.rel (%p304) target = $region40
      $region39: #{_lambda_.11} parent=23 // pred_region
        %s307 = sadd.s32 %s22, 1
        %s308 = smul.u32 2, %s307
        %p309 = scmp.lt.s32.totalorder %s21, 1
        %s310 = scalar_select %p309, %s21, 1
        %p311 = scmp.lt.s32.totalorder %s308, 9
        %s312 = scalar_select %p311, %s308, 9
        %s313 = smul.addr %s310, 10
        %s314 = sadd.s32 %s312, %s313
        %s315 = smul.addr %s314, 4
        %s316 = scalar_lea.vmem %s3, %s315
        %s317 = sadd.s32 %s22, 1
        %s318 = smul.u32 2, %s317
      $region40: #{_lambda_.11} parent=23 // pred_fallthru
        _
    $region24: #{_lambda_.11} parent=5 // pred_fallthru
      _
    %p319 = scmp.le.s32.totalorder 1, %s14
    %p320 = scmp.lt.s32.totalorder %s14, 9
    %p321 = pnand %p319, %p320
    %p322 = pneg %p321
    // Predicated region
    $region41: #{_lambda_.11} parent=5 // pred_check
      _
    $region42: #{_lambda_.11} parent=5 // pred_check_branch
      %324 = sbr.rel (%p321) target = $region44
    $region43: #{_lambda_.11} parent=5 // pred_region
      %s325 = ssub.s32 %s14, 1
      %s326 = smul.u32 2, %s24
      %p327 = scmp.lt.s32.totalorder %s23, 1
      %s328 = scalar_select %p327, %s23, 1
      %p329 = scmp.lt.s32.totalorder %s326, 9
      %s330 = scalar_select %p329, %s326, 9
      %s331 = smul.addr %s328, 10
      %s332 = sadd.s32 %s330, %s331
      %s333 = smul.addr %s332, 4
      %s334 = scalar_lea.vmem %s0, %s333
      %p335 = pneg %p54
      %p336 = pneg %p51
      %s337 = sadd.s32 %s24, 1
      %s338 = smul.u32 2, %s337
      %p339 = scmp.lt.s32.totalorder %s23, 1
      %s340 = scalar_select %p339, %s23, 1
      %p341 = scmp.lt.s32.totalorder %s338, 9
      %s342 = scalar_select %p341, %s338, 9
      %s343 = smul.addr %s340, 10
      %s344 = sadd.s32 %s342, %s343
      %s345 = smul.addr %s344, 4
      %s346 = scalar_lea.vmem %s1, %s345
      %p347 = pneg %p84
      %p348 = pneg %p81
      %s349 = smul.u32 2, %s24
      %p350 = scmp.lt.s32.totalorder %s23, 1
      %s351 = scalar_select %p350, %s23, 1
      %p352 = scmp.lt.s32.totalorder %s349, 9
      %s353 = scalar_select %p352, %s349, 9
      %s354 = smul.addr %s351, 10
      %s355 = sadd.s32 %s353, %s354
      %s356 = smul.addr %s355, 4
      %s357 = scalar_lea.vmem %s2, %s356
      %p358 = pneg %p112
      %p359 = pneg %p109
      %s360 = sadd.s32 %s24, 1
      %s361 = smul.u32 2, %s360
      %p362 = scmp.lt.s32.totalorder %s23, 1
      %s363 = scalar_select %p362, %s23, 1
      %p364 = scmp.lt.s32.totalorder %s361, 9
      %s365 = scalar_select %p364, %s361, 9
      %s366 = smul.addr %s363, 10
      %s367 = sadd.s32 %s365, %s366
      %s368 = smul.addr %s367, 4
      %s369 = scalar_lea.vmem %s3, %s368
      %p370 = pneg %p142
      %p371 = pneg %p139
      %p372 = pneg %p163
      %p373 = pneg %p160
      %p374 = pneg %p184
      %p375 = pneg %p181
      %p376 = pneg %p212
      %p377 = pneg %p209
      %p378 = scmp.lt.s32.totalorder %s23, 1
      %s379 = scalar_select %p378, %s23, 1
      %p380 = scmp.lt.s32.totalorder %s24, 3
      %s381 = scalar_select %p380, %s24, 3
      %s382 = smul.addr %s379, 4
      %s383 = sadd.s32 %s381, %s382
      %s384 = smul.addr %s383, 4
      %s385 = scalar_lea.vmem %s6, %s384
      %p386 = pneg %p238
      %p387 = pneg %p235
      %p388 = scmp.lt.s32.totalorder %s23, 1
      %s389 = scalar_select %p388, %s23, 1
      %s390 = smul.addr %s389, 2
      %s391 = scalar_lea.vmem %s7, %s390
      %s392 = smul.u32 2, %s24
      %p393 = scmp.lt.s32.totalorder %s23, 1
      %s394 = scalar_select %p393, %s23, 1
      %p395 = scmp.lt.s32.totalorder %s392, 9
      %s396 = scalar_select %p395, %s392, 9
      %s397 = smul.addr %s394, 10
      %s398 = sadd.s32 %s396, %s397
      %s399 = smul.addr %s398, 4
      %s400 = scalar_lea.vmem %s0, %s399
      %s401 = smul.u32 2, %s24
      %s402 = sadd.s32 %s24, 1
      %s403 = smul.u32 2, %s402
      %p404 = scmp.lt.s32.totalorder %s23, 1
      %s405 = scalar_select %p404, %s23, 1
      %p406 = scmp.lt.s32.totalorder %s403, 9
      %s407 = scalar_select %p406, %s403, 9
      %s408 = smul.addr %s405, 10
      %s409 = sadd.s32 %s407, %s408
      %s410 = smul.addr %s409, 4
      %s411 = scalar_lea.vmem %s1, %s410
      %s412 = sadd.s32 %s24, 1
      %s413 = smul.u32 2, %s412
      %s414 = smul.u32 2, %s24
      %p415 = scmp.lt.s32.totalorder %s23, 1
      %s416 = scalar_select %p415, %s23, 1
      %p417 = scmp.lt.s32.totalorder %s414, 9
      %s418 = scalar_select %p417, %s414, 9
      %s419 = smul.addr %s416, 10
      %s420 = sadd.s32 %s418, %s419
      %s421 = smul.addr %s420, 4
      %s422 = scalar_lea.vmem %s2, %s421
      %s423 = smul.u32 2, %s24
      %s424 = sadd.s32 %s24, 1
      %s425 = smul.u32 2, %s424
      %p426 = scmp.lt.s32.totalorder %s23, 1
      %s427 = scalar_select %p426, %s23, 1
      %p428 = scmp.lt.s32.totalorder %s425, 9
      %s429 = scalar_select %p428, %s425, 9
      %s430 = smul.addr %s427, 10
      %s431 = sadd.s32 %s429, %s430
      %s432 = smul.addr %s431, 4
      %s433 = scalar_lea.vmem %s3, %s432
      %s434 = sadd.s32 %s24, 1
      %s435 = smul.u32 2, %s434
      %p436 = scmp.lt.s32.totalorder %s23, 1
      %s437 = scalar_select %p436, %s23, 1
      %p438 = scmp.lt.s32.totalorder %s24, 3
      %s439 = scalar_select %p438, %s24, 3
      %s440 = smul.addr %s437, 4
      %s441 = sadd.s32 %s439, %s440
      %s442 = smul.addr %s441, 4
      %s443 = scalar_lea.vmem %s6, %s442
      %p444 = scmp.lt.s32.totalorder %s23, 1
      %s445 = scalar_select %p444, %s23, 1
      %s446 = smul.addr %s445, 2
      %s447 = scalar_lea.vmem %s7, %s446
      %v449 = vld [vmem:[%s400] sm:$0x7]
      %s450 = scalar_lea.vmem %s400, 4
      %v451 = vld [vmem:[%s450] sm:$0x7]
      %v452 = vld [vmem:[%s411] sm:$0x7]
      %s453 = scalar_lea.vmem %s411, 4
      %v454 = vld [vmem:[%s453] sm:$0x7]
      %v455 = vld [vmem:[%s422] sm:$0x7]
      %s456 = scalar_lea.vmem %s422, 4
      %v457 = vld [vmem:[%s456] sm:$0x7]
      %v458 = vld [vmem:[%s433] sm:$0x7]
      %s459 = scalar_lea.vmem %s433, 4
      %v460 = vld [vmem:[%s459] sm:$0x7]
      %v461 = vld [vmem:[%s4] sm:$0xf]
      %v462 = vld [vmem:[%s4 + $0x4] sm:$0xf]
      %s463 = scalar_lea.vmem %s4, 8
      %v464 = vld [vmem:[%s463] sm:$0xf]
      %v465 = vld [vmem:[%s463 + $0x4] sm:$0xf]
      %v468 = vunpack.c.l.b16 %v464
      %v469 = vunpack.c.l.b16 %v465
      %v470 = vpack.c.b16 %v469, %v468
      %vm472 = vcmask 130048
      %v474 = vsel %vm472, %v455, 0
      %476 = vmatprep.subr.bf16.mxu0 0
      %477 = vmatpush1.bf16.msra.mxu0 %v470
      %478 = vmatprep.subr.bf16.mxu0 0
      %479 = vmatpush1.bf16.msra.mxu0 0
      %480 = vmatprep.subr.bf16.mxu0 0
      %481 = vmatpush1.bf16.msra.mxu0 0
      %482 = vmatprep.subr.bf16.mxu0 0
      %483 = vmatpush1.bf16.msra.mxu0 0
      %484 = vmatprep.subr.bf16.mxu0 0
      %485 = vmatpush1.bf16.msra.mxu0 0
      %486 = vmatprep.subr.bf16.mxu0 0
      %487 = vmatpush1.bf16.msra.mxu0 0
      %488 = vmatprep.subr.bf16.mxu0 0
      %489 = vmatpush1.bf16.msra.mxu0 0
      %490 = vmatprep.subr.bf16.mxu0 0
      %491 = vmatpush1.bf16.msra.mxu0 0
      %492 = vmatprep.subr.bf16.mxu0 0
      %493 = vmatpush1.bf16.msra.mxu0 0
      %494 = vmatprep.subr.bf16.mxu0 0
      %495 = vmatpush1.bf16.msra.mxu0 0
      %496 = vmatprep.subr.bf16.mxu0 0
      %497 = vmatpush1.bf16.msra.mxu0 0
      %498 = vmatprep.subr.bf16.mxu0 0
      %499 = vmatpush1.bf16.msra.mxu0 0
      %500 = vmatprep.subr.bf16.mxu0 0
      %501 = vmatpush1.bf16.msra.mxu0 0
      %502 = vmatprep.subr.bf16.mxu0 0
      %503 = vmatpush1.bf16.msra.mxu0 0
      %504 = vmatprep.subr.bf16.mxu0 0
      %505 = vmatpush1.bf16.msra.mxu0 0
      %506 = vmatprep.subr.bf16.mxu0 0
      %507 = vmatpush1.bf16.msra.mxu0 0
      %508 = vmatprep.mubr.bf16.mxu0 0
      %509 = vmatmul.mubr.bf16.gmra.mrb[0].mxu0 %v474
      %v510 = vpop.f32.mrb[0].mxu0
      %v511 = vadd.f32 0.0, %v510
      %v512 = vpop.f32.mrb[0].mxu0
      %v513 = vpop.f32.mrb[0].mxu0
      %v514 = vpop.f32.mrb[0].mxu0
      %515 = vdwg.mxu0
      %v518 = vunpack.c.l.b16 %v461
      %v519 = vunpack.c.l.b16 %v462
      %v520 = vpack.c.b16 %v519, %v518
      %v523 = vsel %vm472, %v449, 0
      %525 = vmatprep.subr.bf16.mxu0 0
      %526 = vmatpush1.bf16.msra.mxu0 %v520
      %527 = vmatprep.subr.bf16.mxu0 0
      %528 = vmatpush1.bf16.msra.mxu0 0
      %529 = vmatprep.subr.bf16.mxu0 0
      %530 = vmatpush1.bf16.msra.mxu0 0
      %531 = vmatprep.subr.bf16.mxu0 0
      %532 = vmatpush1.bf16.msra.mxu0 0
      %533 = vmatprep.subr.bf16.mxu0 0
      %534 = vmatpush1.bf16.msra.mxu0 0
      %535 = vmatprep.subr.bf16.mxu0 0
      %536 = vmatpush1.bf16.msra.mxu0 0
      %537 = vmatprep.subr.bf16.mxu0 0
      %538 = vmatpush1.bf16.msra.mxu0 0
      %539 = vmatprep.subr.bf16.mxu0 0
      %540 = vmatpush1.bf16.msra.mxu0 0
      %541 = vmatprep.subr.bf16.mxu0 0
      %542 = vmatpush1.bf16.msra.mxu0 0
      %543 = vmatprep.subr.bf16.mxu0 0
      %544 = vmatpush1.bf16.msra.mxu0 0
      %545 = vmatprep.subr.bf16.mxu0 0
      %546 = vmatpush1.bf16.msra.mxu0 0
      %547 = vmatprep.subr.bf16.mxu0 0
      %548 = vmatpush1.bf16.msra.mxu0 0
      %549 = vmatprep.subr.bf16.mxu0 0
      %550 = vmatpush1.bf16.msra.mxu0 0
      %551 = vmatprep.subr.bf16.mxu0 0
      %552 = vmatpush1.bf16.msra.mxu0 0
      %553 = vmatprep.subr.bf16.mxu0 0
      %554 = vmatpush1.bf16.msra.mxu0 0
      %555 = vmatprep.subr.bf16.mxu0 0
      %556 = vmatpush1.bf16.msra.mxu0 0
      %557 = vmatprep.mubr.bf16.mxu0 0
      %558 = vmatmul.mubr.bf16.gmra.mrb[0].mxu0 %v523
      %v559 = vpop.f32.mrb[0].mxu0
      %v560 = vadd.f32 %v511, %v559
      %v561 = vpop.f32.mrb[0].mxu0
      %v562 = vpop.f32.mrb[0].mxu0
      %v563 = vpop.f32.mrb[0].mxu0
      %564 = vdwg.mxu0
      %s565 = scalar_lea.vmem %s4, 16
      %v566 = vld [vmem:[%s565] sm:$0xf]
      %v567 = vld [vmem:[%s565 + $0x4] sm:$0xf]
      %v569 = vunpack.c.l.b16 %v449
      %v570 = vpack.c.b16 %v569, %v569
      %v572 = vshrl.u32 %v570, 16
      %v574 = vshll.u32 %v570, 16
      %v576 = vrot.slane %v574, 1
      %v577 = vor.u32 %v572, %v576
      %v580 = vunpack.c.l.b16 %v566
      %v581 = vunpack.c.l.b16 %v567
      %v582 = vpack.c.b16 %v581, %v580
      %v585 = vsel %vm472, %v577, 0
      %587 = vmatprep.subr.bf16.mxu0 0
      %588 = vmatpush1.bf16.msra.mxu0 %v582
      %589 = vmatprep.subr.bf16.mxu0 0
      %590 = vmatpush1.bf16.msra.mxu0 0
      %591 = vmatprep.subr.bf16.mxu0 0
      %592 = vmatpush1.bf16.msra.mxu0 0
      %593 = vmatprep.subr.bf16.mxu0 0
      %594 = vmatpush1.bf16.msra.mxu0 0
      %595 = vmatprep.subr.bf16.mxu0 0
      %596 = vmatpush1.bf16.msra.mxu0 0
      %597 = vmatprep.subr.bf16.mxu0 0
      %598 = vmatpush1.bf16.msra.mxu0 0
      %599 = vmatprep.subr.bf16.mxu0 0
      %600 = vmatpush1.bf16.msra.mxu0 0
      %601 = vmatprep.subr.bf16.mxu0 0
      %602 = vmatpush1.bf16.msra.mxu0 0
      %603 = vmatprep.subr.bf16.mxu0 0
      %604 = vmatpush1.bf16.msra.mxu0 0
      %605 = vmatprep.subr.bf16.mxu0 0
      %606 = vmatpush1.bf16.msra.mxu0 0
      %607 = vmatprep.subr.bf16.mxu0 0
      %608 = vmatpush1.bf16.msra.mxu0 0
      %609 = vmatprep.subr.bf16.mxu0 0
      %610 = vmatpush1.bf16.msra.mxu0 0
      %611 = vmatprep.subr.bf16.mxu0 0
      %612 = vmatpush1.bf16.msra.mxu0 0
      %613 = vmatprep.subr.bf16.mxu0 0
      %614 = vmatpush1.bf16.msra.mxu0 0
      %615 = vmatprep.subr.bf16.mxu0 0
      %616 = vmatpush1.bf16.msra.mxu0 0
      %617 = vmatprep.subr.bf16.mxu0 0
      %618 = vmatpush1.bf16.msra.mxu0 0
      %619 = vmatprep.mubr.bf16.mxu0 0
      %620 = vmatmul.mubr.bf16.gmra.mrb[0].mxu0 %v585
      %v621 = vpop.f32.mrb[0].mxu0
      %v622 = vadd.f32 0.0, %v621
      %v623 = vpop.f32.mrb[0].mxu0
      %v624 = vpop.f32.mrb[0].mxu0
      %v625 = vpop.f32.mrb[0].mxu0
      %626 = vdwg.mxu0
      %v627 = vadd.f32 %v560, %v622
      %s628 = scalar_lea.vmem %s4, 24
      %v629 = vld [vmem:[%s628] sm:$0xf]
      %v630 = vld [vmem:[%s628 + $0x4] sm:$0xf]
      %v632 = vunpack.c.l.b16 %v455
      %v633 = vpack.c.b16 %v632, %v632
      %v635 = vshrl.u32 %v633, 16
      %v637 = vshll.u32 %v633, 16
      %v639 = vrot.slane %v637, 1
      %v640 = vor.u32 %v635, %v639
      %v643 = vunpack.c.l.b16 %v629
      %v644 = vunpack.c.l.b16 %v630
      %v645 = vpack.c.b16 %v644, %v643
      %v648 = vsel %vm472, %v640, 0
      %650 = vmatprep.subr.bf16.mxu0 0
      %651 = vmatpush1.bf16.msra.mxu0 %v645
      %652 = vmatprep.subr.bf16.mxu0 0
      %653 = vmatpush1.bf16.msra.mxu0 0
      %654 = vmatprep.subr.bf16.mxu0 0
      %655 = vmatpush1.bf16.msra.mxu0 0
      %656 = vmatprep.subr.bf16.mxu0 0
      %657 = vmatpush1.bf16.msra.mxu0 0
      %658 = vmatprep.subr.bf16.mxu0 0
      %659 = vmatpush1.bf16.msra.mxu0 0
      %660 = vmatprep.subr.bf16.mxu0 0
      %661 = vmatpush1.bf16.msra.mxu0 0
      %662 = vmatprep.subr.bf16.mxu0 0
      %663 = vmatpush1.bf16.msra.mxu0 0
      %664 = vmatprep.subr.bf16.mxu0 0
      %665 = vmatpush1.bf16.msra.mxu0 0
      %666 = vmatprep.subr.bf16.mxu0 0
      %667 = vmatpush1.bf16.msra.mxu0 0
      %668 = vmatprep.subr.bf16.mxu0 0
      %669 = vmatpush1.bf16.msra.mxu0 0
      %670 = vmatprep.subr.bf16.mxu0 0
      %671 = vmatpush1.bf16.msra.mxu0 0
      %672 = vmatprep.subr.bf16.mxu0 0
      %673 = vmatpush1.bf16.msra.mxu0 0
      %674 = vmatprep.subr.bf16.mxu0 0
      %675 = vmatpush1.bf16.msra.mxu0 0
      %676 = vmatprep.subr.bf16.mxu0 0
      %677 = vmatpush1.bf16.msra.mxu0 0
      %678 = vmatprep.subr.bf16.mxu0 0
      %679 = vmatpush1.bf16.msra.mxu0 0
      %680 = vmatprep.subr.bf16.mxu0 0
      %681 = vmatpush1.bf16.msra.mxu0 0
      %682 = vmatprep.mubr.bf16.mxu0 0
      %683 = vmatmul.mubr.bf16.gmra.mrb[0].mxu0 %v648
      %v684 = vpop.f32.mrb[0].mxu0
      %v685 = vadd.f32 0.0, %v684
      %v686 = vpop.f32.mrb[0].mxu0
      %v687 = vpop.f32.mrb[0].mxu0
      %v688 = vpop.f32.mrb[0].mxu0
      %689 = vdwg.mxu0
      %v690 = vadd.f32 %v627, %v685
      %s691 = scalar_lea.vmem %s4, 32
      %v692 = vld [vmem:[%s691] sm:$0xf]
      %v693 = vld [vmem:[%s691 + $0x4] sm:$0xf]
      %v696 = vunpack.c.l.b16 %v692
      %v697 = vunpack.c.l.b16 %v693
      %v698 = vpack.c.b16 %v697, %v696
      %v701 = vsel %vm472, %v451, 0
      %703 = vmatprep.subr.bf16.mxu0 0
      %704 = vmatpush1.bf16.msra.mxu0 %v698
      %705 = vmatprep.subr.bf16.mxu0 0
      %706 = vmatpush1.bf16.msra.mxu0 0
      %707 = vmatprep.subr.bf16.mxu0 0
      %708 = vmatpush1.bf16.msra.mxu0 0
      %709 = vmatprep.subr.bf16.mxu0 0
      %710 = vmatpush1.bf16.msra.mxu0 0
      %711 = vmatprep.subr.bf16.mxu0 0
      %712 = vmatpush1.bf16.msra.mxu0 0
      %713 = vmatprep.subr.bf16.mxu0 0
      %714 = vmatpush1.bf16.msra.mxu0 0
      %715 = vmatprep.subr.bf16.mxu0 0
      %716 = vmatpush1.bf16.msra.mxu0 0
      %717 = vmatprep.subr.bf16.mxu0 0
      %718 = vmatpush1.bf16.msra.mxu0 0
      %719 = vmatprep.subr.bf16.mxu0 0
      %720 = vmatpush1.bf16.msra.mxu0 0
      %721 = vmatprep.subr.bf16.mxu0 0
      %722 = vmatpush1.bf16.msra.mxu0 0
      %723 = vmatprep.subr.bf16.mxu0 0
      %724 = vmatpush1.bf16.msra.mxu0 0
      %725 = vmatprep.subr.bf16.mxu0 0
      %726 = vmatpush1.bf16.msra.mxu0 0
      %727 = vmatprep.subr.bf16.mxu0 0
      %728 = vmatpush1.bf16.msra.mxu0 0
      %729 = vmatprep.subr.bf16.mxu0 0
      %730 = vmatpush1.bf16.msra.mxu0 0
      %731 = vmatprep.subr.bf16.mxu0 0
      %732 = vmatpush1.bf16.msra.mxu0 0
      %733 = vmatprep.subr.bf16.mxu0 0
      %734 = vmatpush1.bf16.msra.mxu0 0
      %735 = vmatprep.mubr.bf16.mxu0 0
      %736 = vmatmul.mubr.bf16.gmra.mrb[0].mxu0 %v701
      %v737 = vpop.f32.mrb[0].mxu0
      %v738 = vadd.f32 0.0, %v737
      %v739 = vpop.f32.mrb[0].mxu0
      %v740 = vpop.f32.mrb[0].mxu0
      %v741 = vpop.f32.mrb[0].mxu0
      %742 = vdwg.mxu0
      %v743 = vadd.f32 %v690, %v738
      %s744 = scalar_lea.vmem %s4, 40
      %v745 = vld [vmem:[%s744] sm:$0xf]
      %v746 = vld [vmem:[%s744 + $0x4] sm:$0xf]
      %v749 = vunpack.c.l.b16 %v745
      %v750 = vunpack.c.l.b16 %v746
      %v751 = vpack.c.b16 %v750, %v749
      %v754 = vsel %vm472, %v457, 0
      %756 = vmatprep.subr.bf16.mxu0 0
      %757 = vmatpush1.bf16.msra.mxu0 %v751
      %758 = vmatprep.subr.bf16.mxu0 0
      %759 = vmatpush1.bf16.msra.mxu0 0
      %760 = vmatprep.subr.bf16.mxu0 0
      %761 = vmatpush1.bf16.msra.mxu0 0
      %762 = vmatprep.subr.bf16.mxu0 0
      %763 = vmatpush1.bf16.msra.mxu0 0
      %764 = vmatprep.subr.bf16.mxu0 0
      %765 = vmatpush1.bf16.msra.mxu0 0
      %766 = vmatprep.subr.bf16.mxu0 0
      %767 = vmatpush1.bf16.msra.mxu0 0
      %768 = vmatprep.subr.bf16.mxu0 0
      %769 = vmatpush1.bf16.msra.mxu0 0
      %770 = vmatprep.subr.bf16.mxu0 0
      %771 = vmatpush1.bf16.msra.mxu0 0
      %772 = vmatprep.subr.bf16.mxu0 0
      %773 = vmatpush1.bf16.msra.mxu0 0
      %774 = vmatprep.subr.bf16.mxu0 0
      %775 = vmatpush1.bf16.msra.mxu0 0
      %776 = vmatprep.subr.bf16.mxu0 0
      %777 = vmatpush1.bf16.msra.mxu0 0
      %778 = vmatprep.subr.bf16.mxu0 0
      %779 = vmatpush1.bf16.msra.mxu0 0
      %780 = vmatprep.subr.bf16.mxu0 0
      %781 = vmatpush1.bf16.msra.mxu0 0
      %782 = vmatprep.subr.bf16.mxu0 0
      %783 = vmatpush1.bf16.msra.mxu0 0
      %784 = vmatprep.subr.bf16.mxu0 0
      %785 = vmatpush1.bf16.msra.mxu0 0
      %786 = vmatprep.subr.bf16.mxu0 0
      %787 = vmatpush1.bf16.msra.mxu0 0
      %788 = vmatprep.mubr.bf16.mxu0 0
      %789 = vmatmul.mubr.bf16.gmra.mrb[0].mxu0 %v754
      %v790 = vpop.f32.mrb[0].mxu0
      %v791 = vadd.f32 0.0, %v790
      %v792 = vpop.f32.mrb[0].mxu0
      %v793 = vpop.f32.mrb[0].mxu0
      %v794 = vpop.f32.mrb[0].mxu0
      %795 = vdwg.mxu0
      %v796 = vadd.f32 %v743, %v791
      %s797 = scalar_lea.vmem %s4, 48
      %v798 = vld [vmem:[%s797] sm:$0xf]
      %v799 = vld [vmem:[%s797 + $0x4] sm:$0xf]
      %v801 = vunpack.c.l.b16 %v451
      %v802 = vpack.c.b16 %v801, %v801
      %v804 = vshrl.u32 %v802, 16
      %v806 = vshll.u32 %v802, 16
      %v808 = vrot.slane %v806, 1
      %v809 = vor.u32 %v804, %v808
      %v812 = vunpack.c.l.b16 %v798
      %v813 = vunpack.c.l.b16 %v799
      %v814 = vpack.c.b16 %v813, %v812
      %v817 = vsel %vm472, %v809, 0
      %819 = vmatprep.subr.bf16.mxu0 0
      %820 = vmatpush1.bf16.msra.mxu0 %v814
      %821 = vmatprep.subr.bf16.mxu0 0
      %822 = vmatpush1.bf16.msra.mxu0 0
      %823 = vmatprep.subr.bf16.mxu0 0
      %824 = vmatpush1.bf16.msra.mxu0 0
      %825 = vmatprep.subr.bf16.mxu0 0
      %826 = vmatpush1.bf16.msra.mxu0 0
      %827 = vmatprep.subr.bf16.mxu0 0
      %828 = vmatpush1.bf16.msra.mxu0 0
      %829 = vmatprep.subr.bf16.mxu0 0
      %830 = vmatpush1.bf16.msra.mxu0 0
      %831 = vmatprep.subr.bf16.mxu0 0
      %832 = vmatpush1.bf16.msra.mxu0 0
      %833 = vmatprep.subr.bf16.mxu0 0
      %834 = vmatpush1.bf16.msra.mxu0 0
      %835 = vmatprep.subr.bf16.mxu0 0
      %836 = vmatpush1.bf16.msra.mxu0 0
      %837 = vmatprep.subr.bf16.mxu0 0
      %838 = vmatpush1.bf16.msra.mxu0 0
      %839 = vmatprep.subr.bf16.mxu0 0
      %840 = vmatpush1.bf16.msra.mxu0 0
      %841 = vmatprep.subr.bf16.mxu0 0
      %842 = vmatpush1.bf16.msra.mxu0 0
      %843 = vmatprep.subr.bf16.mxu0 0
      %844 = vmatpush1.bf16.msra.mxu0 0
      %845 = vmatprep.subr.bf16.mxu0 0
      %846 = vmatpush1.bf16.msra.mxu0 0
      %847 = vmatprep.subr.bf16.mxu0 0
      %848 = vmatpush1.bf16.msra.mxu0 0
      %849 = vmatprep.subr.bf16.mxu0 0
      %850 = vmatpush1.bf16.msra.mxu0 0
      %851 = vmatprep.mubr.bf16.mxu0 0
      %852 = vmatmul.mubr.bf16.gmra.mrb[0].mxu0 %v817
      %v853 = vpop.f32.mrb[0].mxu0
      %v854 = vadd.f32 0.0, %v853
      %v855 = vpop.f32.mrb[0].mxu0
      %v856 = vpop.f32.mrb[0].mxu0
      %v857 = vpop.f32.mrb[0].mxu0
      %858 = vdwg.mxu0
      %v859 = vadd.f32 %v796, %v854
      %s860 = scalar_lea.vmem %s4, 56
      %v861 = vld [vmem:[%s860] sm:$0xf]
      %v862 = vld [vmem:[%s860 + $0x4] sm:$0xf]
      %v864 = vunpack.c.l.b16 %v457
      %v865 = vpack.c.b16 %v864, %v864
      %v867 = vshrl.u32 %v865, 16
      %v869 = vshll.u32 %v865, 16
      %v871 = vrot.slane %v869, 1
      %v872 = vor.u32 %v867, %v871
      %v875 = vunpack.c.l.b16 %v861
      %v876 = vunpack.c.l.b16 %v862
      %v877 = vpack.c.b16 %v876, %v875
      %v880 = vsel %vm472, %v872, 0
      %882 = vmatprep.subr.bf16.mxu0 0
      %883 = vmatpush1.bf16.msra.mxu0 %v877
      %884 = vmatprep.subr.bf16.mxu0 0
      %885 = vmatpush1.bf16.msra.mxu0 0
      %886 = vmatprep.subr.bf16.mxu0 0
      %887 = vmatpush1.bf16.msra.mxu0 0
      %888 = vmatprep.subr.bf16.mxu0 0
      %889 = vmatpush1.bf16.msra.mxu0 0
      %890 = vmatprep.subr.bf16.mxu0 0
      %891 = vmatpush1.bf16.msra.mxu0 0
      %892 = vmatprep.subr.bf16.mxu0 0
      %893 = vmatpush1.bf16.msra.mxu0 0
      %894 = vmatprep.subr.bf16.mxu0 0
      %895 = vmatpush1.bf16.msra.mxu0 0
      %896 = vmatprep.subr.bf16.mxu0 0
      %897 = vmatpush1.bf16.msra.mxu0 0
      %898 = vmatprep.subr.bf16.mxu0 0
      %899 = vmatpush1.bf16.msra.mxu0 0
      %900 = vmatprep.subr.bf16.mxu0 0
      %901 = vmatpush1.bf16.msra.mxu0 0
      %902 = vmatprep.subr.bf16.mxu0 0
      %903 = vmatpush1.bf16.msra.mxu0 0
      %904 = vmatprep.subr.bf16.mxu0 0
      %905 = vmatpush1.bf16.msra.mxu0 0
      %906 = vmatprep.subr.bf16.mxu0 0
      %907 = vmatpush1.bf16.msra.mxu0 0
      %908 = vmatprep.subr.bf16.mxu0 0
      %909 = vmatpush1.bf16.msra.mxu0 0
      %910 = vmatprep.subr.bf16.mxu0 0
      %911 = vmatpush1.bf16.msra.mxu0 0
      %912 = vmatprep.subr.bf16.mxu0 0
      %913 = vmatpush1.bf16.msra.mxu0 0
      %914 = vmatprep.mubr.bf16.mxu0 0
      %915 = vmatmul.mubr.bf16.gmra.mrb[0].mxu0 %v880
      %v916 = vpop.f32.mrb[0].mxu0
      %v917 = vadd.f32 0.0, %v916
      %v918 = vpop.f32.mrb[0].mxu0
      %v919 = vpop.f32.mrb[0].mxu0
      %v920 = vpop.f32.mrb[0].mxu0
      %921 = vdwg.mxu0
      %v922 = vadd.f32 %v859, %v917
      %s923 = scalar_lea.vmem %s4, 64
      %v924 = vld [vmem:[%s923] sm:$0xf]
      %v925 = vld [vmem:[%s923 + $0x4] sm:$0xf]
      %v928 = vunpack.c.l.b16 %v924
      %v929 = vunpack.c.l.b16 %v925
      %v930 = vpack.c.b16 %v929, %v928
      %v933 = vsel %vm472, %v452, 0
      %935 = vmatprep.subr.bf16.mxu0 0
      %936 = vmatpush1.bf16.msra.mxu0 %v930
      %937 = vmatprep.subr.bf16.mxu0 0
      %938 = vmatpush1.bf16.msra.mxu0 0
      %939 = vmatprep.subr.bf16.mxu0 0
      %940 = vmatpush1.bf16.msra.mxu0 0
      %941 = vmatprep.subr.bf16.mxu0 0
      %942 = vmatpush1.bf16.msra.mxu0 0
      %943 = vmatprep.subr.bf16.mxu0 0
      %944 = vmatpush1.bf16.msra.mxu0 0
      %945 = vmatprep.subr.bf16.mxu0 0
      %946 = vmatpush1.bf16.msra.mxu0 0
      %947 = vmatprep.subr.bf16.mxu0 0
      %948 = vmatpush1.bf16.msra.mxu0 0
      %949 = vmatprep.subr.bf16.mxu0 0
      %950 = vmatpush1.bf16.msra.mxu0 0
      %951 = vmatprep.subr.bf16.mxu0 0
      %952 = vmatpush1.bf16.msra.mxu0 0
      %953 = vmatprep.subr.bf16.mxu0 0
      %954 = vmatpush1.bf16.msra.mxu0 0
      %955 = vmatprep.subr.bf16.mxu0 0
      %956 = vmatpush1.bf16.msra.mxu0 0
      %957 = vmatprep.subr.bf16.mxu0 0
      %958 = vmatpush1.bf16.msra.mxu0 0
      %959 = vmatprep.subr.bf16.mxu0 0
      %960 = vmatpush1.bf16.msra.mxu0 0
      %961 = vmatprep.subr.bf16.mxu0 0
      %962 = vmatpush1.bf16.msra.mxu0 0
      %963 = vmatprep.subr.bf16.mxu0 0
      %964 = vmatpush1.bf16.msra.mxu0 0
      %965 = vmatprep.subr.bf16.mxu0 0
      %966 = vmatpush1.bf16.msra.mxu0 0
      %967 = vmatprep.mubr.bf16.mxu0 0
      %968 = vmatmul.mubr.bf16.gmra.mrb[0].mxu0 %v933
      %v969 = vpop.f32.mrb[0].mxu0
      %v970 = vadd.f32 0.0, %v969
      %v971 = vpop.f32.mrb[0].mxu0
      %v972 = vpop.f32.mrb[0].mxu0
      %v973 = vpop.f32.mrb[0].mxu0
      %974 = vdwg.mxu0
      %v975 = vadd.f32 %v922, %v970
      %s976 = scalar_lea.vmem %s4, 72
      %v977 = vld [vmem:[%s976] sm:$0xf]
      %v978 = vld [vmem:[%s976 + $0x4] sm:$0xf]
      %v981 = vunpack.c.l.b16 %v977
      %v982 = vunpack.c.l.b16 %v978
      %v983 = vpack.c.b16 %v982, %v981
      %v986 = vsel %vm472, %v458, 0
      %988 = vmatprep.subr.bf16.mxu0 0
      %989 = vmatpush1.bf16.msra.mxu0 %v983
      %990 = vmatprep.subr.bf16.mxu0 0
      %991 = vmatpush1.bf16.msra.mxu0 0
      %992 = vmatprep.subr.bf16.mxu0 0
      %993 = vmatpush1.bf16.msra.mxu0 0
      %994 = vmatprep.subr.bf16.mxu0 0
      %995 = vmatpush1.bf16.msra.mxu0 0
      %996 = vmatprep.subr.bf16.mxu0 0
      %997 = vmatpush1.bf16.msra.mxu0 0
      %998 = vmatprep.subr.bf16.mxu0 0
      %999 = vmatpush1.bf16.msra.mxu0 0
      %1000 = vmatprep.subr.bf16.mxu0 0
      %1001 = vmatpush1.bf16.msra.mxu0 0
      %1002 = vmatprep.subr.bf16.mxu0 0
      %1003 = vmatpush1.bf16.msra.mxu0 0
      %1004 = vmatprep.subr.bf16.mxu0 0
      %1005 = vmatpush1.bf16.msra.mxu0 0
      %1006 = vmatprep.subr.bf16.mxu0 0
      %1007 = vmatpush1.bf16.msra.mxu0 0
      %1008 = vmatprep.subr.bf16.mxu0 0
      %1009 = vmatpush1.bf16.msra.mxu0 0
      %1010 = vmatprep.subr.bf16.mxu0 0
      %1011 = vmatpush1.bf16.msra.mxu0 0
      %1012 = vmatprep.subr.bf16.mxu0 0
      %1013 = vmatpush1.bf16.msra.mxu0 0
      %1014 = vmatprep.subr.bf16.mxu0 0
      %1015 = vmatpush1.bf16.msra.mxu0 0
      %1016 = vmatprep.subr.bf16.mxu0 0
      %1017 = vmatpush1.bf16.msra.mxu0 0
      %1018 = vmatprep.subr.bf16.mxu0 0
      %1019 = vmatpush1.bf16.msra.mxu0 0
      %1020 = vmatprep.mubr.bf16.mxu0 0
      %1021 = vmatmul.mubr.bf16.gmra.mrb[0].mxu0 %v986
      %v1022 = vpop.f32.mrb[0].mxu0
      %v1023 = vadd.f32 0.0, %v1022
      %v1024 = vpop.f32.mrb[0].mxu0
      %v1025 = vpop.f32.mrb[0].mxu0
      %v1026 = vpop.f32.mrb[0].mxu0
      %1027 = vdwg.mxu0
      %v1028 = vadd.f32 %v975, %v1023
      %s1029 = scalar_lea.vmem %s4, 80
      %v1030 = vld [vmem:[%s1029] sm:$0xf]
      %v1031 = vld [vmem:[%s1029 + $0x4] sm:$0xf]
      %v1033 = vunpack.c.l.b16 %v452
      %v1034 = vpack.c.b16 %v1033, %v1033
      %v1036 = vshrl.u32 %v1034, 16
      %v1038 = vshll.u32 %v1034, 16
      %v1040 = vrot.slane %v1038, 1
      %v1041 = vor.u32 %v1036, %v1040
      %v1044 = vunpack.c.l.b16 %v1030
      %v1045 = vunpack.c.l.b16 %v1031
      %v1046 = vpack.c.b16 %v1045, %v1044
      %v1049 = vsel %vm472, %v1041, 0
      %1051 = vmatprep.subr.bf16.mxu0 0
      %1052 = vmatpush1.bf16.msra.mxu0 %v1046
      %1053 = vmatprep.subr.bf16.mxu0 0
      %1054 = vmatpush1.bf16.msra.mxu0 0
      %1055 = vmatprep.subr.bf16.mxu0 0
      %1056 = vmatpush1.bf16.msra.mxu0 0
      %1057 = vmatprep.subr.bf16.mxu0 0
      %1058 = vmatpush1.bf16.msra.mxu0 0
      %1059 = vmatprep.subr.bf16.mxu0 0
      %1060 = vmatpush1.bf16.msra.mxu0 0
      %1061 = vmatprep.subr.bf16.mxu0 0
      %1062 = vmatpush1.bf16.msra.mxu0 0
      %1063 = vmatprep.subr.bf16.mxu0 0
      %1064 = vmatpush1.bf16.msra.mxu0 0
      %1065 = vmatprep.subr.bf16.mxu0 0
      %1066 = vmatpush1.bf16.msra.mxu0 0
      %1067 = vmatprep.subr.bf16.mxu0 0
      %1068 = vmatpush1.bf16.msra.mxu0 0
      %1069 = vmatprep.subr.bf16.mxu0 0
      %1070 = vmatpush1.bf16.msra.mxu0 0
      %1071 = vmatprep.subr.bf16.mxu0 0
      %1072 = vmatpush1.bf16.msra.mxu0 0
      %1073 = vmatprep.subr.bf16.mxu0 0
      %1074 = vmatpush1.bf16.msra.mxu0 0
      %1075 = vmatprep.subr.bf16.mxu0 0
      %1076 = vmatpush1.bf16.msra.mxu0 0
      %1077 = vmatprep.subr.bf16.mxu0 0
      %1078 = vmatpush1.bf16.msra.mxu0 0
      %1079 = vmatprep.subr.bf16.mxu0 0
      %1080 = vmatpush1.bf16.msra.mxu0 0
      %1081 = vmatprep.subr.bf16.mxu0 0
      %1082 = vmatpush1.bf16.msra.mxu0 0
      %1083 = vmatprep.mubr.bf16.mxu0 0
      %1084 = vmatmul.mubr.bf16.gmra.mrb[0].mxu0 %v1049
      %v1085 = vpop.f32.mrb[0].mxu0
      %v1086 = vadd.f32 0.0, %v1085
      %v1087 = vpop.f32.mrb[0].mxu0
      %v1088 = vpop.f32.mrb[0].mxu0
      %v1089 = vpop.f32.mrb[0].mxu0
      %1090 = vdwg.mxu0
      %v1091 = vadd.f32 %v1028, %v1086
      %s1092 = scalar_lea.vmem %s4, 88
      %v1093 = vld [vmem:[%s1092] sm:$0xf]
      %v1094 = vld [vmem:[%s1092 + $0x4] sm:$0xf]
      %v1096 = vunpack.c.l.b16 %v458
      %v1097 = vpack.c.b16 %v1096, %v1096
      %v1099 = vshrl.u32 %v1097, 16
      %v1101 = vshll.u32 %v1097, 16
      %v1103 = vrot.slane %v1101, 1
      %v1104 = vor.u32 %v1099, %v1103
      %v1107 = vunpack.c.l.b16 %v1093
      %v1108 = vunpack.c.l.b16 %v1094
      %v1109 = vpack.c.b16 %v1108, %v1107
      %v1112 = vsel %vm472, %v1104, 0
      %1114 = vmatprep.subr.bf16.mxu0 0
      %1115 = vmatpush1.bf16.msra.mxu0 %v1109
      %1116 = vmatprep.subr.bf16.mxu0 0
      %1117 = vmatpush1.bf16.msra.mxu0 0
      %1118 = vmatprep.subr.bf16.mxu0 0
      %1119 = vmatpush1.bf16.msra.mxu0 0
      %1120 = vmatprep.subr.bf16.mxu0 0
      %1121 = vmatpush1.bf16.msra.mxu0 0
      %1122 = vmatprep.subr.bf16.mxu0 0
      %1123 = vmatpush1.bf16.msra.mxu0 0
      %1124 = vmatprep.subr.bf16.mxu0 0
      %1125 = vmatpush1.bf16.msra.mxu0 0
      %1126 = vmatprep.subr.bf16.mxu0 0
      %1127 = vmatpush1.bf16.msra.mxu0 0
      %1128 = vmatprep.subr.bf16.mxu0 0
      %1129 = vmatpush1.bf16.msra.mxu0 0
      %1130 = vmatprep.subr.bf16.mxu0 0
      %1131 = vmatpush1.bf16.msra.mxu0 0
      %1132 = vmatprep.subr.bf16.mxu0 0
      %1133 = vmatpush1.bf16.msra.mxu0 0
      %1134 = vmatprep.subr.bf16.mxu0 0
      %1135 = vmatpush1.bf16.msra.mxu0 0
      %1136 = vmatprep.subr.bf16.mxu0 0
      %1137 = vmatpush1.bf16.msra.mxu0 0
      %1138 = vmatprep.subr.bf16.mxu0 0
      %1139 = vmatpush1.bf16.msra.mxu0 0
      %1140 = vmatprep.subr.bf16.mxu0 0
      %1141 = vmatpush1.bf16.msra.mxu0 0
      %1142 = vmatprep.subr.bf16.mxu0 0
      %1143 = vmatpush1.bf16.msra.mxu0 0
      %1144 = vmatprep.subr.bf16.mxu0 0
      %1145 = vmatpush1.bf16.msra.mxu0 0
      %1146 = vmatprep.mubr.bf16.mxu0 0
      %1147 = vmatmul.mubr.bf16.gmra.mrb[0].mxu0 %v1112
      %v1148 = vpop.f32.mrb[0].mxu0
      %v1149 = vadd.f32 0.0, %v1148
      %v1150 = vpop.f32.mrb[0].mxu0
      %v1151 = vpop.f32.mrb[0].mxu0
      %v1152 = vpop.f32.mrb[0].mxu0
      %1153 = vdwg.mxu0
      %v1154 = vadd.f32 %v1091, %v1149
      %s1155 = scalar_lea.vmem %s4, 96
      %v1156 = vld [vmem:[%s1155] sm:$0xf]
      %v1157 = vld [vmem:[%s1155 + $0x4] sm:$0xf]
      %v1160 = vunpack.c.l.b16 %v1156
      %v1161 = vunpack.c.l.b16 %v1157
      %v1162 = vpack.c.b16 %v1161, %v1160
      %v1165 = vsel %vm472, %v454, 0
      %1167 = vmatprep.subr.bf16.mxu0 0
      %1168 = vmatpush1.bf16.msra.mxu0 %v1162
      %1169 = vmatprep.subr.bf16.mxu0 0
      %1170 = vmatpush1.bf16.msra.mxu0 0
      %1171 = vmatprep.subr.bf16.mxu0 0
      %1172 = vmatpush1.bf16.msra.mxu0 0
      %1173 = vmatprep.subr.bf16.mxu0 0
      %1174 = vmatpush1.bf16.msra.mxu0 0
      %1175 = vmatprep.subr.bf16.mxu0 0
      %1176 = vmatpush1.bf16.msra.mxu0 0
      %1177 = vmatprep.subr.bf16.mxu0 0
      %1178 = vmatpush1.bf16.msra.mxu0 0
      %1179 = vmatprep.subr.bf16.mxu0 0
      %1180 = vmatpush1.bf16.msra.mxu0 0
      %1181 = vmatprep.subr.bf16.mxu0 0
      %1182 = vmatpush1.bf16.msra.mxu0 0
      %1183 = vmatprep.subr.bf16.mxu0 0
      %1184 = vmatpush1.bf16.msra.mxu0 0
      %1185 = vmatprep.subr.bf16.mxu0 0
      %1186 = vmatpush1.bf16.msra.mxu0 0
      %1187 = vmatprep.subr.bf16.mxu0 0
      %1188 = vmatpush1.bf16.msra.mxu0 0
      %1189 = vmatprep.subr.bf16.mxu0 0
      %1190 = vmatpush1.bf16.msra.mxu0 0
      %1191 = vmatprep.subr.bf16.mxu0 0
      %1192 = vmatpush1.bf16.msra.mxu0 0
      %1193 = vmatprep.subr.bf16.mxu0 0
      %1194 = vmatpush1.bf16.msra.mxu0 0
      %1195 = vmatprep.subr.bf16.mxu0 0
      %1196 = vmatpush1.bf16.msra.mxu0 0
      %1197 = vmatprep.subr.bf16.mxu0 0
      %1198 = vmatpush1.bf16.msra.mxu0 0
      %1199 = vmatprep.mubr.bf16.mxu0 0
      %1200 = vmatmul.mubr.bf16.gmra.mrb[0].mxu0 %v1165
      %v1201 = vpop.f32.mrb[0].mxu0
      %v1202 = vadd.f32 0.0, %v1201
      %v1203 = vpop.f32.mrb[0].mxu0
      %v1204 = vpop.f32.mrb[0].mxu0
      %v1205 = vpop.f32.mrb[0].mxu0
      %1206 = vdwg.mxu0
      %v1207 = vadd.f32 %v1154, %v1202
      %s1208 = scalar_lea.vmem %s4, 104
      %v1209 = vld [vmem:[%s1208] sm:$0xf]
      %v1210 = vld [vmem:[%s1208 + $0x4] sm:$0xf]
      %v1213 = vunpack.c.l.b16 %v1209
      %v1214 = vunpack.c.l.b16 %v1210
      %v1215 = vpack.c.b16 %v1214, %v1213
      %v1218 = vsel %vm472, %v460, 0
      %1220 = vmatprep.subr.bf16.mxu0 0
      %1221 = vmatpush1.bf16.msra.mxu0 %v1215
      %1222 = vmatprep.subr.bf16.mxu0 0
      %1223 = vmatpush1.bf16.msra.mxu0 0
      %1224 = vmatprep.subr.bf16.mxu0 0
      %1225 = vmatpush1.bf16.msra.mxu0 0
      %1226 = vmatprep.subr.bf16.mxu0 0
      %1227 = vmatpush1.bf16.msra.mxu0 0
      %1228 = vmatprep.subr.bf16.mxu0 0
      %1229 = vmatpush1.bf16.msra.mxu0 0
      %1230 = vmatprep.subr.bf16.mxu0 0
      %1231 = vmatpush1.bf16.msra.mxu0 0
      %1232 = vmatprep.subr.bf16.mxu0 0
      %1233 = vmatpush1.bf16.msra.mxu0 0
      %1234 = vmatprep.subr.bf16.mxu0 0
      %1235 = vmatpush1.bf16.msra.mxu0 0
      %1236 = vmatprep.subr.bf16.mxu0 0
      %1237 = vmatpush1.bf16.msra.mxu0 0
      %1238 = vmatprep.subr.bf16.mxu0 0
      %1239 = vmatpush1.bf16.msra.mxu0 0
      %1240 = vmatprep.subr.bf16.mxu0 0
      %1241 = vmatpush1.bf16.msra.mxu0 0
      %1242 = vmatprep.subr.bf16.mxu0 0
      %1243 = vmatpush1.bf16.msra.mxu0 0
      %1244 = vmatprep.subr.bf16.mxu0 0
      %1245 = vmatpush1.bf16.msra.mxu0 0
      %1246 = vmatprep.subr.bf16.mxu0 0
      %1247 = vmatpush1.bf16.msra.mxu0 0
      %1248 = vmatprep.subr.bf16.mxu0 0
      %1249 = vmatpush1.bf16.msra.mxu0 0
      %1250 = vmatprep.subr.bf16.mxu0 0
      %1251 = vmatpush1.bf16.msra.mxu0 0
      %1252 = vmatprep.mubr.bf16.mxu0 0
      %1253 = vmatmul.mubr.bf16.gmra.mrb[0].mxu0 %v1218
      %v1254 = vpop.f32.mrb[0].mxu0
      %v1255 = vadd.f32 0.0, %v1254
      %v1256 = vpop.f32.mrb[0].mxu0
      %v1257 = vpop.f32.mrb[0].mxu0
      %v1258 = vpop.f32.mrb[0].mxu0
      %1259 = vdwg.mxu0
      %v1260 = vadd.f32 %v1207, %v1255
      %s1261 = scalar_lea.vmem %s4, 112
      %v1262 = vld [vmem:[%s1261] sm:$0xf]
      %v1263 = vld [vmem:[%s1261 + $0x4] sm:$0xf]
      %v1265 = vunpack.c.l.b16 %v454
      %v1266 = vpack.c.b16 %v1265, %v1265
      %v1268 = vshrl.u32 %v1266, 16
      %v1270 = vshll.u32 %v1266, 16
      %v1272 = vrot.slane %v1270, 1
      %v1273 = vor.u32 %v1268, %v1272
      %v1276 = vunpack.c.l.b16 %v1262
      %v1277 = vunpack.c.l.b16 %v1263
      %v1278 = vpack.c.b16 %v1277, %v1276
      %v1281 = vsel %vm472, %v1273, 0
      %1283 = vmatprep.subr.bf16.mxu0 0
      %1284 = vmatpush1.bf16.msra.mxu0 %v1278
      %1285 = vmatprep.subr.bf16.mxu0 0
      %1286 = vmatpush1.bf16.msra.mxu0 0
      %1287 = vmatprep.subr.bf16.mxu0 0
      %1288 = vmatpush1.bf16.msra.mxu0 0
      %1289 = vmatprep.subr.bf16.mxu0 0
      %1290 = vmatpush1.bf16.msra.mxu0 0
      %1291 = vmatprep.subr.bf16.mxu0 0
      %1292 = vmatpush1.bf16.msra.mxu0 0
      %1293 = vmatprep.subr.bf16.mxu0 0
      %1294 = vmatpush1.bf16.msra.mxu0 0
      %1295 = vmatprep.subr.bf16.mxu0 0
      %1296 = vmatpush1.bf16.msra.mxu0 0
      %1297 = vmatprep.subr.bf16.mxu0 0
      %1298 = vmatpush1.bf16.msra.mxu0 0
      %1299 = vmatprep.subr.bf16.mxu0 0
      %1300 = vmatpush1.bf16.msra.mxu0 0
      %1301 = vmatprep.subr.bf16.mxu0 0
      %1302 = vmatpush1.bf16.msra.mxu0 0
      %1303 = vmatprep.subr.bf16.mxu0 0
      %1304 = vmatpush1.bf16.msra.mxu0 0
      %1305 = vmatprep.subr.bf16.mxu0 0
      %1306 = vmatpush1.bf16.msra.mxu0 0
      %1307 = vmatprep.subr.bf16.mxu0 0
      %1308 = vmatpush1.bf16.msra.mxu0 0
      %1309 = vmatprep.subr.bf16.mxu0 0
      %1310 = vmatpush1.bf16.msra.mxu0 0
      %1311 = vmatprep.subr.bf16.mxu0 0
      %1312 = vmatpush1.bf16.msra.mxu0 0
      %1313 = vmatprep.subr.bf16.mxu0 0
      %1314 = vmatpush1.bf16.msra.mxu0 0
      %1315 = vmatprep.mubr.bf16.mxu0 0
      %1316 = vmatmul.mubr.bf16.gmra.mrb[0].mxu0 %v1281
      %v1317 = vpop.f32.mrb[0].mxu0
      %v1318 = vadd.f32 0.0, %v1317
      %v1319 = vpop.f32.mrb[0].mxu0
      %v1320 = vpop.f32.mrb[0].mxu0
      %v1321 = vpop.f32.mrb[0].mxu0
      %1322 = vdwg.mxu0
      %v1323 = vadd.f32 %v1260, %v1318
      %s1324 = scalar_lea.vmem %s4, 120
      %v1325 = vld [vmem:[%s1324] sm:$0xf]
      %v1326 = vld [vmem:[%s1324 + $0x4] sm:$0xf]
      %v1328 = vunpack.c.l.b16 %v460
      %v1329 = vpack.c.b16 %v1328, %v1328
      %v1331 = vshrl.u32 %v1329, 16
      %v1333 = vshll.u32 %v1329, 16
      %v1335 = vrot.slane %v1333, 1
      %v1336 = vor.u32 %v1331, %v1335
      %v1339 = vunpack.c.l.b16 %v1325
      %v1340 = vunpack.c.l.b16 %v1326
      %v1341 = vpack.c.b16 %v1340, %v1339
      %v1344 = vsel %vm472, %v1336, 0
      %1346 = vmatprep.subr.bf16.mxu0 0
      %1347 = vmatpush1.bf16.msra.mxu0 %v1341
      %1348 = vmatprep.subr.bf16.mxu0 0
      %1349 = vmatpush1.bf16.msra.mxu0 0
      %1350 = vmatprep.subr.bf16.mxu0 0
      %1351 = vmatpush1.bf16.msra.mxu0 0
      %1352 = vmatprep.subr.bf16.mxu0 0
      %1353 = vmatpush1.bf16.msra.mxu0 0
      %1354 = vmatprep.subr.bf16.mxu0 0
      %1355 = vmatpush1.bf16.msra.mxu0 0
      %1356 = vmatprep.subr.bf16.mxu0 0
      %1357 = vmatpush1.bf16.msra.mxu0 0
      %1358 = vmatprep.subr.bf16.mxu0 0
      %1359 = vmatpush1.bf16.msra.mxu0 0
      %1360 = vmatprep.subr.bf16.mxu0 0
      %1361 = vmatpush1.bf16.msra.mxu0 0
      %1362 = vmatprep.subr.bf16.mxu0 0
      %1363 = vmatpush1.bf16.msra.mxu0 0
      %1364 = vmatprep.subr.bf16.mxu0 0
      %1365 = vmatpush1.bf16.msra.mxu0 0
      %1366 = vmatprep.subr.bf16.mxu0 0
      %1367 = vmatpush1.bf16.msra.mxu0 0
      %1368 = vmatprep.subr.bf16.mxu0 0
      %1369 = vmatpush1.bf16.msra.mxu0 0
      %1370 = vmatprep.subr.bf16.mxu0 0
      %1371 = vmatpush1.bf16.msra.mxu0 0
      %1372 = vmatprep.subr.bf16.mxu0 0
      %1373 = vmatpush1.bf16.msra.mxu0 0
      %1374 = vmatprep.subr.bf16.mxu0 0
      %1375 = vmatpush1.bf16.msra.mxu0 0
      %1376 = vmatprep.subr.bf16.mxu0 0
      %1377 = vmatpush1.bf16.msra.mxu0 0
      %1378 = vmatprep.mubr.bf16.mxu0 0
      %1379 = vmatmul.mubr.bf16.gmra.mrb[0].mxu0 %v1344
      %v1380 = vpop.f32.mrb[0].mxu0
      %v1381 = vadd.f32 0.0, %v1380
      %v1382 = vpop.f32.mrb[0].mxu0
      %v1383 = vpop.f32.mrb[0].mxu0
      %v1384 = vpop.f32.mrb[0].mxu0
      %1385 = vdwg.mxu0
      %v1386 = vadd.f32 %v1323, %v1381
      %v1387 = vld [vmem:[%s5] sm:$0x1]
      %v1389 = vlaneseq
      %v1390 = vshrl.u32 %v1389, 7
      %v1391 = vsub.s32 0, %v1390
      %v1392 = vrot.slane %v1387, %v1391
      %v1394 = vadd.f32 %v1386, %v1392
      %p1395 = scmp.eq.s32.totalorder %s24, 0
      // Predicated region
      $region45: #{_lambda_.11} parent=43 // pred_check
        %p1396 = pneg %p1395
      $region46: #{_lambda_.11} parent=43 // pred_check_branch
        %1398 = sbr.rel (%p1396) target = $region48
      $region47: #{_lambda_.11} parent=43 // pred_region
        %vm1399 = vcmask 254976
        %1400 = vst.msk [vmem:[%s447] sm:$0x3] %vm1399, 0.0
      $region48: #{_lambda_.11} parent=43 // pred_fallthru
        _
      %v1401 = vld [vmem:[%s447] sm:$0x1]
      %vm1402 = vcmask 257024
      %v1403 = vsel %vm1402, %v1394, 0.0
      %v1404 = vrot.slane %v1403, 4
      %v1405 = vadd.f32 %v1403, %v1404
      %v1406 = vrot.slane %v1405, 2
      %v1407 = vadd.f32 %v1405, %v1406
      %v1408 = vrot.slane %v1407, 1
      %v1409 = vadd.f32 %v1407, %v1408
      %v1410 = vadd.f32 %v1401, %v1409
      %vm1411 = vcmask 253952
      %1412 = vst.msk [vmem:[%s447] sm:$0x1] %vm1411, %v1410
      %v1413 = vld [vmem:[%s447 + $0x1] sm:$0x1]
      %v1414 = vmul.f32 %v1394, %v1394
      %v1415 = vsel %vm1402, %v1414, 0.0
      %v1416 = vrot.slane %v1415, 4
      %v1417 = vadd.f32 %v1415, %v1416
      %v1418 = vrot.slane %v1417, 2
      %v1419 = vadd.f32 %v1417, %v1418
      %v1420 = vrot.slane %v1419, 1
      %v1421 = vadd.f32 %v1419, %v1420
      %v1422 = vadd.f32 %v1413, %v1421
      %1423 = vst.msk [vmem:[%s447 + $0x1] sm:$0x1] %vm1411, %v1422
      %1424 = vst.msk [vmem:[%s443] sm:$0xf] %vm1402, %v1394
      %p1425 = scmp.lt.s32.totalorder %s23, 1
      %s1426 = scalar_select %p1425, %s23, 1
      %p1427 = scmp.lt.s32.totalorder %s24, 3
      %s1428 = scalar_select %p1427, %s24, 3
      %s1429 = smul.addr %s1426, 4
      %s1430 = sadd.s32 %s1428, %s1429
      %s1431 = smul.addr %s1430, 4
      %s1432 = scalar_lea.vmem %s6, %s1431
      %p1433 = scmp.lt.s32.totalorder %s23, 1
      %s1434 = scalar_select %p1433, %s23, 1
      %s1435 = smul.addr %s1434, 2
      %s1436 = scalar_lea.vmem %s7, %s1435
      // Predicated region
      $region49: #{_lambda_.11} parent=43 // pred_check
        %p1437 = pneg %p209
      $region50: #{_lambda_.11} parent=43 // pred_check_branch
        %1439 = sbr.rel (%p1437) target = $region52
      $region51: #{_lambda_.11} parent=43 // pred_region
        _
      $region52: #{_lambda_.11} parent=43 // pred_fallthru
        _
      // Predicated region
      $region53: #{_lambda_.11} parent=43 // pred_check
        %p1440 = pneg %p235
      $region54: #{_lambda_.11} parent=43 // pred_check_branch
        %1442 = sbr.rel (%p1440) target = $region56
      $region55: #{_lambda_.11} parent=43 // pred_region
        _
      $region56: #{_lambda_.11} parent=43 // pred_fallthru
        _
    $region44: #{_lambda_.11} parent=5 // pred_fallthru
      _
    %p1443 = scmp.le.s32.totalorder 2, %s14
    // Predicated region
    $region57: #{_lambda_.11} parent=5 // pred_check
      %p1444 = pneg %p1443
    $region58: #{_lambda_.11} parent=5 // pred_check_branch
      %1446 = sbr.rel (%p1444) target = $region60
    $region59: #{_lambda_.11} parent=5 // pred_region
      %s1447 = ssub.s32 %s14, 2
      // Predicated region
      $region61: #{_lambda_.11} parent=59 // pred_check
        %p1448 = pneg %p215
      $region62: #{_lambda_.11} parent=59 // pred_check_branch
        %1450 = sbr.rel (%p1448) target = $region64
      $region63: #{_lambda_.11} parent=59 // pred_region
        %p1451 = scmp.lt.s32.totalorder %s25, 1
        %s1452 = scalar_select %p1451, %s25, 1
        %p1453 = scmp.lt.s32.totalorder %s26, 3
        %s1454 = scalar_select %p1453, %s26, 3
        %s1455 = smul.addr %s1452, 4
        %s1456 = sadd.s32 %s1454, %s1455
        %s1457 = smul.addr %s1456, 4
        %s1458 = scalar_lea.vmem %s6, %s1457
      $region64: #{_lambda_.11} parent=59 // pred_fallthru
        _
      // Predicated region
      $region65: #{_lambda_.11} parent=59 // pred_check
        %p1459 = pneg %p241
      $region66: #{_lambda_.11} parent=59 // pred_check_branch
        %1461 = sbr.rel (%p1459) target = $region68
      $region67: #{_lambda_.11} parent=59 // pred_region
        %p1462 = scmp.lt.s32.totalorder %s25, 1
        %s1463 = scalar_select %p1462, %s25, 1
        %s1464 = smul.addr %s1463, 2
        %s1465 = scalar_lea.vmem %s7, %s1464
      $region68: #{_lambda_.11} parent=59 // pred_fallthru
        _
    $region60: #{_lambda_.11} parent=5 // pred_fallthru
      _
  $region6: #{_lambda_.11} parent=0 // loop_footer
    %s18 = sadd.s32 1, %s14
  $region7: #{_lambda_.11} parent=0 // loop_footer_branch
    %13 = sbr.rel target = $region3
  $region8: #{_lambda_.11} parent=0 // loop_exit
    _

// kernel: _lambda_.13
$region0: #{_lambda_.13}
  #allocation0 [shape = 'u32[]', space=smem, size = 0x4, offset = 0x4, fixed_abs, tag = 'smem constant byte address 0x4 - core index']
  #allocation1 [shape = 'u32[144,128]{1,0:T(1,128)}', space=vmem, size = 0x12000, scoped, tag = 'internal scratch']
  %s0 = inlined_call_operand.vmem [shape: bf16[2,6,6,32], index: 0, kind: input, shape index: {}, may-alias: {0,1,2,3}]
  %s1 = inlined_call_operand.vmem [shape: bf16[2,6,6,32], index: 1, kind: input, shape index: {}, may-alias: {0,1,2,3}]
  %s2 = inlined_call_operand.vmem [shape: bf16[2,6,6,32], index: 2, kind: input, shape index: {}, may-alias: {0,1,2,3}]
  %s3 = inlined_call_operand.vmem [shape: bf16[2,6,6,32], index: 3, kind: input, shape index: {}, may-alias: {0,1,2,3}]
  %s4 = inlined_call_operand.vmem [shape: bf16[16,32,64], index: 4, kind: input, shape index: {}]
  %s5 = inlined_call_operand.vmem [shape: f32[1,64], index: 5, kind: input, shape index: {}]
  %s6 = inlined_call_operand.vmem [shape: f32[2,3,3,64], index: 6, kind: output, shape index: {0}]
  %s7 = inlined_call_operand.vmem [shape: f32[2,2,64], index: 7, kind: output, shape index: {1}]
  %8 = xla_tuple %s6, %s7
  %s9 = sld [smem:[#allocation0]]
  $region69: #{_lambda_.13} parent=0
    _
  %s11 = ssub.s32 1, %s9
  %s12 = scalar_select 0, %s11, %s9
  loop: start=0, step=1, limit=8
  $region2: #{_lambda_.13} parent=0 // loop_pre_header
    _
  $region3: #{_lambda_.13} parent=0 // loop_header
    %s14 = sphi 0, %s18
    %p15 = scmp.ge.s32.totalorder %s14, 8
    %s21 = sphi 0, %s33
    %s22 = sphi 0, %s29
    %s23 = sphi 0, %s21
    %s24 = sphi 0, %s22
    %s25 = sphi 0, %s23
    %s26 = sphi 0, %s24
    %s38 = sphi 0, %s40
    %s41 = sphi 0, %s38
    %s42 = sphi 0, %s41
    %s58 = sphi 0, %s42
    %s68 = sphi 0, %s70
    %s71 = sphi 0, %s68
    %s72 = sphi 0, %s71
    %s88 = sphi 0, %s72
    %s98 = sphi 0, %s100
    %s101 = sphi 0, %s98
    %s102 = sphi 0, %s101
    %s118 = sphi 0, %s102
    %s128 = sphi 0, %s130
    %s131 = sphi 0, %s128
    %s132 = sphi 0, %s131
    %s148 = sphi 0, %s132
    %s152 = sphi 0, %s152
    %s154 = sphi 0, %s152
    %s155 = sphi 0, %s154
    %s169 = sphi 0, %s155
    %s173 = sphi 0, %s173
    %s175 = sphi 0, %s173
    %s176 = sphi 0, %s175
    %s190 = sphi 0, %s176
    %s198 = sphi 0, %s200
    %s201 = sphi 0, %s198
    %s202 = sphi 0, %s201
    %s218 = sphi 0, %s202
    %s224 = sphi 0, %s226
    %s227 = sphi 0, %s224
    %s228 = sphi 0, %s227
    %s244 = sphi 0, %s228
  $region4: #{_lambda_.13} parent=0 // loop_header_branch
    %17 = sbr.rel (%p15) target = $region8
  $region5: #{_lambda_.13} parent=0 // loop_body
    %s19 = ssub.s32 %s14, 1
    %s20 = ssub.s32 %s14, 2
    %s27 = sadd.s32 1, %s22
    %p28 = scmp.ge.s32.totalorder %s27, 3
    %s29 = scalar_select %p28, 0, %s27
    %s30 = sadd.s32 1, %s21
    %s31 = scalar_select %p28, %s30, %s21
    %p32 = scmp.ge.s32.totalorder %s31, 2
    %s33 = scalar_select %p32, 0, %s31
    %s34 = ssub.s32 %s21, %s33
    %s35 = ssub.s32 %s22, %s29
    %s36 = sor.u32 %s34, %s35
    %p37 = scmp.eq.s32.totalorder %s36, 0
    %s39 = sadd.s32 %s38, 1
    %s40 = scalar_select %p37, %s38, %s39
    %p43 = pneg %p37
    %p44 = scmp.eq.s32.totalorder %s14, 5
    %p45 = por %p43, %p44
    %p46 = scmp.ne.s32.totalorder %s38, %s41
    %p47 = scmp.eq.s32.totalorder %s14, 0
    %p48 = por %p46, %p47
    %p49 = scmp.ne.s32.totalorder %s38, %s41
    %p50 = scmp.eq.s32.totalorder %s19, 5
    %p51 = por %p49, %p50
    %p52 = scmp.ne.s32.totalorder %s41, %s42
    %p53 = scmp.eq.s32.totalorder %s19, 0
    %p54 = por %p52, %p53
    %p55 = scmp.ne.s32.totalorder %s41, %s42
    %p56 = scmp.eq.s32.totalorder %s20, 5
    %p57 = por %p55, %p56
    %p59 = scmp.ne.s32.totalorder %s42, %s58
    %p60 = scmp.eq.s32.totalorder %s20, 0
    %p61 = por %p59, %p60
    %s62 = sadd.s32 %s22, 1
    %s63 = sadd.s32 %s29, 1
    %s64 = ssub.s32 %s21, %s33
    %s65 = ssub.s32 %s62, %s63
    %s66 = sor.u32 %s64, %s65
    %p67 = scmp.eq.s32.totalorder %s66, 0
    %s69 = sadd.s32 %s68, 1
    %s70 = scalar_select %p67, %s68, %s69
    %p73 = pneg %p67
    %p74 = scmp.eq.s32.totalorder %s14, 5
    %p75 = por %p73, %p74
    %p76 = scmp.ne.s32.totalorder %s68, %s71
    %p77 = scmp.eq.s32.totalorder %s14, 0
    %p78 = por %p76, %p77
    %p79 = scmp.ne.s32.totalorder %s68, %s71
    %p80 = scmp.eq.s32.totalorder %s19, 5
    %p81 = por %p79, %p80
    %p82 = scmp.ne.s32.totalorder %s71, %s72
    %p83 = scmp.eq.s32.totalorder %s19, 0
    %p84 = por %p82, %p83
    %p85 = scmp.ne.s32.totalorder %s71, %s72
    %p86 = scmp.eq.s32.totalorder %s20, 5
    %p87 = por %p85, %p86
    %p89 = scmp.ne.s32.totalorder %s72, %s88
    %p90 = scmp.eq.s32.totalorder %s20, 0
    %p91 = por %p89, %p90
    %s92 = sadd.s32 %s22, 2
    %s93 = sadd.s32 %s29, 2
    %s94 = ssub.s32 %s21, %s33
    %s95 = ssub.s32 %s92, %s93
    %s96 = sor.u32 %s94, %s95
    %p97 = scmp.eq.s32.totalorder %s96, 0
    %s99 = sadd.s32 %s98, 1
    %s100 = scalar_select %p97, %s98, %s99
    %p103 = pneg %p97
    %p104 = scmp.eq.s32.totalorder %s14, 5
    %p105 = por %p103, %p104
    %p106 = scmp.ne.s32.totalorder %s98, %s101
    %p107 = scmp.eq.s32.totalorder %s14, 0
    %p108 = por %p106, %p107
    %p109 = scmp.ne.s32.totalorder %s98, %s101
    %p110 = scmp.eq.s32.totalorder %s19, 5
    %p111 = por %p109, %p110
    %p112 = scmp.ne.s32.totalorder %s101, %s102
    %p113 = scmp.eq.s32.totalorder %s19, 0
    %p114 = por %p112, %p113
    %p115 = scmp.ne.s32.totalorder %s101, %s102
    %p116 = scmp.eq.s32.totalorder %s20, 5
    %p117 = por %p115, %p116
    %p119 = scmp.ne.s32.totalorder %s102, %s118
    %p120 = scmp.eq.s32.totalorder %s20, 0
    %p121 = por %p119, %p120
    %s122 = sadd.s32 %s22, 3
    %s123 = sadd.s32 %s29, 3
    %s124 = ssub.s32 %s21, %s33
    %s125 = ssub.s32 %s122, %s123
    %s126 = sor.u32 %s124, %s125
    %p127 = scmp.eq.s32.totalorder %s126, 0
    %s129 = sadd.s32 %s128, 1
    %s130 = scalar_select %p127, %s128, %s129
    %p133 = pneg %p127
    %p134 = scmp.eq.s32.totalorder %s14, 5
    %p135 = por %p133, %p134
    %p136 = scmp.ne.s32.totalorder %s128, %s131
    %p137 = scmp.eq.s32.totalorder %s14, 0
    %p138 = por %p136, %p137
    %p139 = scmp.ne.s32.totalorder %s128, %s131
    %p140 = scmp.eq.s32.totalorder %s19, 5
    %p141 = por %p139, %p140
    %p142 = scmp.ne.s32.totalorder %s131, %s132
    %p143 = scmp.eq.s32.totalorder %s19, 0
    %p144 = por %p142, %p143
    %p145 = scmp.ne.s32.totalorder %s131, %s132
    %p146 = scmp.eq.s32.totalorder %s20, 5
    %p147 = por %p145, %p146
    %p149 = scmp.ne.s32.totalorder %s132, %s148
    %p150 = scmp.eq.s32.totalorder %s20, 0
    %p151 = por %p149, %p150
    %s153 = sadd.s32 %s152, 1
    %p156 = scmp.eq.s32.totalorder %s14, 5
    %p157 = scmp.ne.s32.totalorder %s152, %s154
    %p158 = scmp.eq.s32.totalorder %s14, 0
    %p159 = por %p157, %p158
    %p160 = scmp.ne.s32.totalorder %s152, %s154
    %p161 = scmp.eq.s32.totalorder %s19, 5
    %p162 = por %p160, %p161
    %p163 = scmp.ne.s32.totalorder %s154, %s155
    %p164 = scmp.eq.s32.totalorder %s19, 0
    %p165 = por %p163, %p164
    %p166 = scmp.ne.s32.totalorder %s154, %s155
    %p167 = scmp.eq.s32.totalorder %s20, 5
    %p168 = por %p166, %p167
    %p170 = scmp.ne.s32.totalorder %s155, %s169
    %p171 = scmp.eq.s32.totalorder %s20, 0
    %p172 = por %p170, %p171
    %s174 = sadd.s32 %s173, 1
    %p177 = scmp.eq.s32.totalorder %s14, 5
    %p178 = scmp.ne.s32.totalorder %s173, %s175
    %p179 = scmp.eq.s32.totalorder %s14, 0
    %p180 = por %p178, %p179
    %p181 = scmp.ne.s32.totalorder %s173, %s175
    %p182 = scmp.eq.s32.totalorder %s19, 5
    %p183 = por %p181, %p182
    %p184 = scmp.ne.s32.totalorder %s175, %s176
    %p185 = scmp.eq.s32.totalorder %s19, 0
    %p186 = por %p184, %p185
    %p187 = scmp.ne.s32.totalorder %s175, %s176
    %p188 = scmp.eq.s32.totalorder %s20, 5
    %p189 = por %p187, %p188
    %p191 = scmp.ne.s32.totalorder %s176, %s190
    %p192 = scmp.eq.s32.totalorder %s20, 0
    %p193 = por %p191, %p192
    %s194 = ssub.s32 %s21, %s33
    %s195 = ssub.s32 %s22, %s29
    %s196 = sor.u32 %s194, %s195
    %p197 = scmp.eq.s32.totalorder %s196, 0
    %s199 = sadd.s32 %s198, 1
    %s200 = scalar_select %p197, %s198, %s199
    %p203 = pneg %p197
    %p204 = scmp.eq.s32.totalorder %s14, 5
    %p205 = por %p203, %p204
    %p206 = scmp.ne.s32.totalorder %s198, %s201
    %p207 = scmp.eq.s32.totalorder %s14, 0
    %p208 = por %p206, %p207
    %p209 = scmp.ne.s32.totalorder %s198, %s201
    %p210 = scmp.eq.s32.totalorder %s19, 5
    %p211 = por %p209, %p210
    %p212 = scmp.ne.s32.totalorder %s201, %s202
    %p213 = scmp.eq.s32.totalorder %s19, 0
    %p214 = por %p212, %p213
    %p215 = scmp.ne.s32.totalorder %s201, %s202
    %p216 = scmp.eq.s32.totalorder %s20, 5
    %p217 = por %p215, %p216
    %p219 = scmp.ne.s32.totalorder %s202, %s218
    %p220 = scmp.eq.s32.totalorder %s20, 0
    %p221 = por %p219, %p220
    %s222 = ssub.s32 %s21, %s33
    %p223 = scmp.eq.s32.totalorder %s222, 0
    %s225 = sadd.s32 %s224, 1
    %s226 = scalar_select %p223, %s224, %s225
    %p229 = pneg %p223
    %p230 = scmp.eq.s32.totalorder %s14, 5
    %p231 = por %p229, %p230
    %p232 = scmp.ne.s32.totalorder %s224, %s227
    %p233 = scmp.eq.s32.totalorder %s14, 0
    %p234 = por %p232, %p233
    %p235 = scmp.ne.s32.totalorder %s224, %s227
    %p236 = scmp.eq.s32.totalorder %s19, 5
    %p237 = por %p235, %p236
    %p238 = scmp.ne.s32.totalorder %s227, %s228
    %p239 = scmp.eq.s32.totalorder %s19, 0
    %p240 = por %p238, %p239
    %p241 = scmp.ne.s32.totalorder %s227, %s228
    %p242 = scmp.eq.s32.totalorder %s20, 5
    %p243 = por %p241, %p242
    %p245 = scmp.ne.s32.totalorder %s228, %s244
    %p246 = scmp.eq.s32.totalorder %s20, 0
    %p247 = por %p245, %p246
    %p248 = scmp.le.s32.totalorder 1, %s14
    %p249 = scmp.lt.s32.totalorder %s14, 7
    %p250 = pnand %p248, %p249
    %p251 = pneg %p250
    // Predicated region
    $region9: #{_lambda_.13} parent=5 // pred_check
      _
    $region10: #{_lambda_.13} parent=5 // pred_check_branch
      %253 = sbr.rel (%p250) target = $region12
    $region11: #{_lambda_.13} parent=5 // pred_region
      %s254 = ssub.s32 %s14, 1
      // Predicated region
      $region13: #{_lambda_.13} parent=11 // pred_check
        %p255 = pneg %p165
      $region14: #{_lambda_.13} parent=11 // pred_check_branch
        %257 = sbr.rel (%p255) target = $region16
      $region15: #{_lambda_.13} parent=11 // pred_region
        _
      $region16: #{_lambda_.13} parent=11 // pred_fallthru
        _
      // Predicated region
      $region17: #{_lambda_.13} parent=11 // pred_check
        %p258 = pneg %p186
      $region18: #{_lambda_.13} parent=11 // pred_check_branch
        %260 = sbr.rel (%p258) target = $region20
      $region19: #{_lambda_.13} parent=11 // pred_region
        _
      $region20: #{_lambda_.13} parent=11 // pred_fallthru
        _
    $region12: #{_lambda_.13} parent=5 // pred_fallthru
      _
    %p261 = scmp.lt.s32.totalorder %s14, 6
    // Predicated region
    $region21: #{_lambda_.13} parent=5 // pred_check
      %p262 = pneg %p261
    $region22: #{_lambda_.13} parent=5 // pred_check_branch
      %264 = sbr.rel (%p262) target = $region24
    $region23: #{_lambda_.13} parent=5 // pred_region
      // Predicated region
      $region25: #{_lambda_.13} parent=23 // pred_check
        %p265 = pneg %p48
      $region26: #{_lambda_.13} parent=23 // pred_check_branch
        %267 = sbr.rel (%p265) target = $region28
      $region27: #{_lambda_.13} parent=23 // pred_region
        %p268 = scmp.lt.s32.totalorder %s21, 1
        %s269 = scalar_select %p268, %s21, 1
        %p270 = scmp.lt.s32.totalorder %s22, 5
        %s271 = scalar_select %p270, %s22, 5
        %s272 = smul.addr %s269, 6
        %s273 = sadd.s32 %s271, %s272
        %s274 = smul.addr %s273, 4
        %s275 = scalar_lea.vmem %s0, %s274
      $region28: #{_lambda_.13} parent=23 // pred_fallthru
        _
      // Predicated region
      $region29: #{_lambda_.13} parent=23 // pred_check
        %p276 = pneg %p78
      $region30: #{_lambda_.13} parent=23 // pred_check_branch
        %278 = sbr.rel (%p276) target = $region32
      $region31: #{_lambda_.13} parent=23 // pred_region
        %s279 = sadd.s32 %s22, 1
        %p280 = scmp.lt.s32.totalorder %s21, 1
        %s281 = scalar_select %p280, %s21, 1
        %p282 = scmp.lt.s32.totalorder %s279, 5
        %s283 = scalar_select %p282, %s279, 5
        %s284 = smul.addr %s281, 6
        %s285 = sadd.s32 %s283, %s284
        %s286 = smul.addr %s285, 4
        %s287 = scalar_lea.vmem %s1, %s286
        %s288 = sadd.s32 %s22, 1
      $region32: #{_lambda_.13} parent=23 // pred_fallthru
        _
      // Predicated region
      $region33: #{_lambda_.13} parent=23 // pred_check
        %p289 = pneg %p108
      $region34: #{_lambda_.13} parent=23 // pred_check_branch
        %291 = sbr.rel (%p289) target = $region36
      $region35: #{_lambda_.13} parent=23 // pred_region
        %s292 = sadd.s32 %s22, 2
        %p293 = scmp.lt.s32.totalorder %s21, 1
        %s294 = scalar_select %p293, %s21, 1
        %p295 = scmp.lt.s32.totalorder %s292, 5
        %s296 = scalar_select %p295, %s292, 5
        %s297 = smul.addr %s294, 6
        %s298 = sadd.s32 %s296, %s297
        %s299 = smul.addr %s298, 4
        %s300 = scalar_lea.vmem %s2, %s299
        %s301 = sadd.s32 %s22, 2
      $region36: #{_lambda_.13} parent=23 // pred_fallthru
        _
      // Predicated region
      $region37: #{_lambda_.13} parent=23 // pred_check
        %p302 = pneg %p138
      $region38: #{_lambda_.13} parent=23 // pred_check_branch
        %304 = sbr.rel (%p302) target = $region40
      $region39: #{_lambda_.13} parent=23 // pred_region
        %s305 = sadd.s32 %s22, 3
        %p306 = scmp.lt.s32.totalorder %s21, 1
        %s307 = scalar_select %p306, %s21, 1
        %p308 = scmp.lt.s32.totalorder %s305, 5
        %s309 = scalar_select %p308, %s305, 5
        %s310 = smul.addr %s307, 6
        %s311 = sadd.s32 %s309, %s310
        %s312 = smul.addr %s311, 4
        %s313 = scalar_lea.vmem %s3, %s312
        %s314 = sadd.s32 %s22, 3
      $region40: #{_lambda_.13} parent=23 // pred_fallthru
        _
    $region24: #{_lambda_.13} parent=5 // pred_fallthru
      _
    %p315 = scmp.le.s32.totalorder 1, %s14
    %p316 = scmp.lt.s32.totalorder %s14, 7
    %p317 = pnand %p315, %p316
    %p318 = pneg %p317
    // Predicated region
    $region41: #{_lambda_.13} parent=5 // pred_check
      _
    $region42: #{_lambda_.13} parent=5 // pred_check_branch
      %320 = sbr.rel (%p317) target = $region44
    $region43: #{_lambda_.13} parent=5 // pred_region
      %s321 = ssub.s32 %s14, 1
      %p322 = scmp.lt.s32.totalorder %s23, 1
      %s323 = scalar_select %p322, %s23, 1
      %p324 = scmp.lt.s32.totalorder %s24, 5
      %s325 = scalar_select %p324, %s24, 5
      %s326 = smul.addr %s323, 6
      %s327 = sadd.s32 %s325, %s326
      %s328 = smul.addr %s327, 4
      %s329 = scalar_lea.vmem %s0, %s328
      %p330 = pneg %p54
      %p331 = pneg %p51
      %s332 = sadd.s32 %s24, 1
      %p333 = scmp.lt.s32.totalorder %s23, 1
      %s334 = scalar_select %p333, %s23, 1
      %p335 = scmp.lt.s32.totalorder %s332, 5
      %s336 = scalar_select %p335, %s332, 5
      %s337 = smul.addr %s334, 6
      %s338 = sadd.s32 %s336, %s337
      %s339 = smul.addr %s338, 4
      %s340 = scalar_lea.vmem %s1, %s339
      %p341 = pneg %p84
      %p342 = pneg %p81
      %s343 = sadd.s32 %s24, 2
      %p344 = scmp.lt.s32.totalorder %s23, 1
      %s345 = scalar_select %p344, %s23, 1
      %p346 = scmp.lt.s32.totalorder %s343, 5
      %s347 = scalar_select %p346, %s343, 5
      %s348 = smul.addr %s345, 6
      %s349 = sadd.s32 %s347, %s348
      %s350 = smul.addr %s349, 4
      %s351 = scalar_lea.vmem %s2, %s350
      %p352 = pneg %p114
      %p353 = pneg %p111
      %s354 = sadd.s32 %s24, 3
      %p355 = scmp.lt.s32.totalorder %s23, 1
      %s356 = scalar_select %p355, %s23, 1
      %p357 = scmp.lt.s32.totalorder %s354, 5
      %s358 = scalar_select %p357, %s354, 5
      %s359 = smul.addr %s356, 6
      %s360 = sadd.s32 %s358, %s359
      %s361 = smul.addr %s360, 4
      %s362 = scalar_lea.vmem %s3, %s361
      %p363 = pneg %p144
      %p364 = pneg %p141
      %p365 = pneg %p165
      %p366 = pneg %p162
      %p367 = pneg %p186
      %p368 = pneg %p183
      %p369 = pneg %p214
      %p370 = pneg %p211
      %p371 = scmp.lt.s32.totalorder %s23, 1
      %s372 = scalar_select %p371, %s23, 1
      %p373 = scmp.lt.s32.totalorder %s24, 2
      %s374 = scalar_select %p373, %s24, 2
      %s375 = smul.addr %s372, 3
      %s376 = sadd.s32 %s374, %s375
      %s377 = smul.addr %s376, 4
      %s378 = scalar_lea.vmem %s6, %s377
      %p379 = pneg %p240
      %p380 = pneg %p237
      %p381 = scmp.lt.s32.totalorder %s23, 1
      %s382 = scalar_select %p381, %s23, 1
      %s383 = smul.addr %s382, 2
      %s384 = scalar_lea.vmem %s7, %s383
      %p385 = scmp.lt.s32.totalorder %s23, 1
      %s386 = scalar_select %p385, %s23, 1
      %p387 = scmp.lt.s32.totalorder %s24, 5
      %s388 = scalar_select %p387, %s24, 5
      %s389 = smul.addr %s386, 6
      %s390 = sadd.s32 %s388, %s389
      %s391 = smul.addr %s390, 4
      %s392 = scalar_lea.vmem %s0, %s391
      %s393 = sadd.s32 %s24, 1
      %p394 = scmp.lt.s32.totalorder %s23, 1
      %s395 = scalar_select %p394, %s23, 1
      %p396 = scmp.lt.s32.totalorder %s393, 5
      %s397 = scalar_select %p396, %s393, 5
      %s398 = smul.addr %s395, 6
      %s399 = sadd.s32 %s397, %s398
      %s400 = smul.addr %s399, 4
      %s401 = scalar_lea.vmem %s1, %s400
      %s402 = sadd.s32 %s24, 1
      %s403 = sadd.s32 %s24, 2
      %p404 = scmp.lt.s32.totalorder %s23, 1
      %s405 = scalar_select %p404, %s23, 1
      %p406 = scmp.lt.s32.totalorder %s403, 5
      %s407 = scalar_select %p406, %s403, 5
      %s408 = smul.addr %s405, 6
      %s409 = sadd.s32 %s407, %s408
      %s410 = smul.addr %s409, 4
      %s411 = scalar_lea.vmem %s2, %s410
      %s412 = sadd.s32 %s24, 2
      %s413 = sadd.s32 %s24, 3
      %p414 = scmp.lt.s32.totalorder %s23, 1
      %s415 = scalar_select %p414, %s23, 1
      %p416 = scmp.lt.s32.totalorder %s413, 5
      %s417 = scalar_select %p416, %s413, 5
      %s418 = smul.addr %s415, 6
      %s419 = sadd.s32 %s417, %s418
      %s420 = smul.addr %s419, 4
      %s421 = scalar_lea.vmem %s3, %s420
      %s422 = sadd.s32 %s24, 3
      %p423 = scmp.lt.s32.totalorder %s23, 1
      %s424 = scalar_select %p423, %s23, 1
      %p425 = scmp.lt.s32.totalorder %s24, 2
      %s426 = scalar_select %p425, %s24, 2
      %s427 = smul.addr %s424, 3
      %s428 = sadd.s32 %s426, %s427
      %s429 = smul.addr %s428, 4
      %s430 = scalar_lea.vmem %s6, %s429
      %p431 = scmp.lt.s32.totalorder %s23, 1
      %s432 = scalar_select %p431, %s23, 1
      %s433 = smul.addr %s432, 2
      %s434 = scalar_lea.vmem %s7, %s433
      %v436 = vld [vmem:[%s392] sm:$0x7]
      %v437 = vld [vmem:[%s401] sm:$0x7]
      %v438 = vld [vmem:[%s411] sm:$0x7]
      %v439 = vld [vmem:[%s421] sm:$0x7]
      %v440 = vld [vmem:[%s4] sm:$0xf]
      %v441 = vld [vmem:[%s4 + $0x4] sm:$0xf]
      %v442 = vld [vmem:[%s4 + $0x8] sm:$0xf]
      %v443 = vld [vmem:[%s4 + $0xc] sm:$0xf]
      %s444 = scalar_lea.vmem %s4, 16
      %v445 = vld [vmem:[%s444] sm:$0xf]
      %v446 = vld [vmem:[%s444 + $0x4] sm:$0xf]
      %v447 = vld [vmem:[%s444 + $0x8] sm:$0xf]
      %v448 = vld [vmem:[%s444 + $0xc] sm:$0xf]
      %v450 = vunpack.c.l.b16 %v436
      %v451 = vpack.c.b16 %v450, %v450
      %v453 = vshrl.u32 %v451, 16
      %v455 = vshll.u32 %v451, 16
      %v457 = vrot.slane %v455, 1
      %v458 = vor.u32 %v453, %v457
      %v463 = vunpack.c.l.b16 %v445
      %v464 = vunpack.c.l.b16 %v446
      %v465 = vunpack.c.l.b16 %v447
      %v466 = vunpack.c.l.b16 %v448
      %v467 = vpack.c.b16 %v464, %v463
      %v468 = vpack.c.b16 %v466, %v465
      %vm471 = vcmask 261120
      %v473 = vsel %vm471, %v458, 0
      %475 = vmatprep.subr.bf16.mxu0 0
      %476 = vmatpush1.bf16.msra.mxu0 %v467
      %477 = vmatprep.subr.bf16.mxu0 0
      %478 = vmatpush1.bf16.msra.mxu0 %v468
      %479 = vmatprep.subr.bf16.mxu0 0
      %480 = vmatpush1.bf16.msra.mxu0 0
      %481 = vmatprep.subr.bf16.mxu0 0
      %482 = vmatpush1.bf16.msra.mxu0 0
      %483 = vmatprep.subr.bf16.mxu0 0
      %484 = vmatpush1.bf16.msra.mxu0 0
      %485 = vmatprep.subr.bf16.mxu0 0
      %486 = vmatpush1.bf16.msra.mxu0 0
      %487 = vmatprep.subr.bf16.mxu0 0
      %488 = vmatpush1.bf16.msra.mxu0 0
      %489 = vmatprep.subr.bf16.mxu0 0
      %490 = vmatpush1.bf16.msra.mxu0 0
      %491 = vmatprep.subr.bf16.mxu0 0
      %492 = vmatpush1.bf16.msra.mxu0 0
      %493 = vmatprep.subr.bf16.mxu0 0
      %494 = vmatpush1.bf16.msra.mxu0 0
      %495 = vmatprep.subr.bf16.mxu0 0
      %496 = vmatpush1.bf16.msra.mxu0 0
      %497 = vmatprep.subr.bf16.mxu0 0
      %498 = vmatpush1.bf16.msra.mxu0 0
      %499 = vmatprep.subr.bf16.mxu0 0
      %500 = vmatpush1.bf16.msra.mxu0 0
      %501 = vmatprep.subr.bf16.mxu0 0
      %502 = vmatpush1.bf16.msra.mxu0 0
      %503 = vmatprep.subr.bf16.mxu0 0
      %504 = vmatpush1.bf16.msra.mxu0 0
      %505 = vmatprep.subr.bf16.mxu0 0
      %506 = vmatpush1.bf16.msra.mxu0 0
      %507 = vmatprep.mubr.bf16.mxu0 0
      %508 = vmatmul.mubr.bf16.gmra.mrb[0].mxu0 %v473
      %v509 = vpop.f32.mrb[0].mxu0
      %v510 = vadd.f32 0.0, %v509
      %v511 = vpop.f32.mrb[0].mxu0
      %v512 = vpop.f32.mrb[0].mxu0
      %v513 = vpop.f32.mrb[0].mxu0
      %514 = vdwg.mxu0
      %v519 = vunpack.c.l.b16 %v440
      %v520 = vunpack.c.l.b16 %v441
      %v521 = vunpack.c.l.b16 %v442
      %v522 = vunpack.c.l.b16 %v443
      %v523 = vpack.c.b16 %v520, %v519
      %v524 = vpack.c.b16 %v522, %v521
      %v528 = vsel %vm471, %v436, 0
      %530 = vmatprep.subr.bf16.mxu0 0
      %531 = vmatpush1.bf16.msra.mxu0 %v523
      %532 = vmatprep.subr.bf16.mxu0 0
      %533 = vmatpush1.bf16.msra.mxu0 %v524
      %534 = vmatprep.subr.bf16.mxu0 0
      %535 = vmatpush1.bf16.msra.mxu0 0
      %536 = vmatprep.subr.bf16.mxu0 0
      %537 = vmatpush1.bf16.msra.mxu0 0
      %538 = vmatprep.subr.bf16.mxu0 0
      %539 = vmatpush1.bf16.msra.mxu0 0
      %540 = vmatprep.subr.bf16.mxu0 0
      %541 = vmatpush1.bf16.msra.mxu0 0
      %542 = vmatprep.subr.bf16.mxu0 0
      %543 = vmatpush1.bf16.msra.mxu0 0
      %544 = vmatprep.subr.bf16.mxu0 0
      %545 = vmatpush1.bf16.msra.mxu0 0
      %546 = vmatprep.subr.bf16.mxu0 0
      %547 = vmatpush1.bf16.msra.mxu0 0
      %548 = vmatprep.subr.bf16.mxu0 0
      %549 = vmatpush1.bf16.msra.mxu0 0
      %550 = vmatprep.subr.bf16.mxu0 0
      %551 = vmatpush1.bf16.msra.mxu0 0
      %552 = vmatprep.subr.bf16.mxu0 0
      %553 = vmatpush1.bf16.msra.mxu0 0
      %554 = vmatprep.subr.bf16.mxu0 0
      %555 = vmatpush1.bf16.msra.mxu0 0
      %556 = vmatprep.subr.bf16.mxu0 0
      %557 = vmatpush1.bf16.msra.mxu0 0
      %558 = vmatprep.subr.bf16.mxu0 0
      %559 = vmatpush1.bf16.msra.mxu0 0
      %560 = vmatprep.subr.bf16.mxu0 0
      %561 = vmatpush1.bf16.msra.mxu0 0
      %562 = vmatprep.mubr.bf16.mxu0 0
      %563 = vmatmul.mubr.bf16.gmra.mrb[0].mxu0 %v528
      %v564 = vpop.f32.mrb[0].mxu0
      %v565 = vadd.f32 %v510, %v564
      %v566 = vpop.f32.mrb[0].mxu0
      %v567 = vpop.f32.mrb[0].mxu0
      %v568 = vpop.f32.mrb[0].mxu0
      %569 = vdwg.mxu0
      %s570 = scalar_lea.vmem %s4, 32
      %v571 = vld [vmem:[%s570] sm:$0xf]
      %v572 = vld [vmem:[%s570 + $0x4] sm:$0xf]
      %v573 = vld [vmem:[%s570 + $0x8] sm:$0xf]
      %v574 = vld [vmem:[%s570 + $0xc] sm:$0xf]
      %v575 = vrot.slane %v451, 1
      %v580 = vunpack.c.l.b16 %v571
      %v581 = vunpack.c.l.b16 %v572
      %v582 = vunpack.c.l.b16 %v573
      %v583 = vunpack.c.l.b16 %v574
      %v584 = vpack.c.b16 %v581, %v580
      %v585 = vpack.c.b16 %v583, %v582
      %v589 = vsel %vm471, %v575, 0
      %591 = vmatprep.subr.bf16.mxu0 0
      %592 = vmatpush1.bf16.msra.mxu0 %v584
      %593 = vmatprep.subr.bf16.mxu0 0
      %594 = vmatpush1.bf16.msra.mxu0 %v585
      %595 = vmatprep.subr.bf16.mxu0 0
      %596 = vmatpush1.bf16.msra.mxu0 0
      %597 = vmatprep.subr.bf16.mxu0 0
      %598 = vmatpush1.bf16.msra.mxu0 0
      %599 = vmatprep.subr.bf16.mxu0 0
      %600 = vmatpush1.bf16.msra.mxu0 0
      %601 = vmatprep.subr.bf16.mxu0 0
      %602 = vmatpush1.bf16.msra.mxu0 0
      %603 = vmatprep.subr.bf16.mxu0 0
      %604 = vmatpush1.bf16.msra.mxu0 0
      %605 = vmatprep.subr.bf16.mxu0 0
      %606 = vmatpush1.bf16.msra.mxu0 0
      %607 = vmatprep.subr.bf16.mxu0 0
      %608 = vmatpush1.bf16.msra.mxu0 0
      %609 = vmatprep.subr.bf16.mxu0 0
      %610 = vmatpush1.bf16.msra.mxu0 0
      %611 = vmatprep.subr.bf16.mxu0 0
      %612 = vmatpush1.bf16.msra.mxu0 0
      %613 = vmatprep.subr.bf16.mxu0 0
      %614 = vmatpush1.bf16.msra.mxu0 0
      %615 = vmatprep.subr.bf16.mxu0 0
      %616 = vmatpush1.bf16.msra.mxu0 0
      %617 = vmatprep.subr.bf16.mxu0 0
      %618 = vmatpush1.bf16.msra.mxu0 0
      %619 = vmatprep.subr.bf16.mxu0 0
      %620 = vmatpush1.bf16.msra.mxu0 0
      %621 = vmatprep.subr.bf16.mxu0 0
      %622 = vmatpush1.bf16.msra.mxu0 0
      %623 = vmatprep.mubr.bf16.mxu0 0
      %624 = vmatmul.mubr.bf16.gmra.mrb[0].mxu0 %v589
      %v625 = vpop.f32.mrb[0].mxu0
      %v626 = vadd.f32 0.0, %v625
      %v627 = vpop.f32.mrb[0].mxu0
      %v628 = vpop.f32.mrb[0].mxu0
      %v629 = vpop.f32.mrb[0].mxu0
      %630 = vdwg.mxu0
      %v631 = vadd.f32 %v565, %v626
      %s632 = scalar_lea.vmem %s4, 48
      %v633 = vld [vmem:[%s632] sm:$0xf]
      %v634 = vld [vmem:[%s632 + $0x4] sm:$0xf]
      %v635 = vld [vmem:[%s632 + $0x8] sm:$0xf]
      %v636 = vld [vmem:[%s632 + $0xc] sm:$0xf]
      %v637 = vrot.slane %v453, 1
      %v638 = vrot.slane %v455, 2
      %v639 = vor.u32 %v637, %v638
      %v644 = vunpack.c.l.b16 %v633
      %v645 = vunpack.c.l.b16 %v634
      %v646 = vunpack.c.l.b16 %v635
      %v647 = vunpack.c.l.b16 %v636
      %v648 = vpack.c.b16 %v645, %v644
      %v649 = vpack.c.b16 %v647, %v646
      %v653 = vsel %vm471, %v639, 0
      %655 = vmatprep.subr.bf16.mxu0 0
      %656 = vmatpush1.bf16.msra.mxu0 %v648
      %657 = vmatprep.subr.bf16.mxu0 0
      %658 = vmatpush1.bf16.msra.mxu0 %v649
      %659 = vmatprep.subr.bf16.mxu0 0
      %660 = vmatpush1.bf16.msra.mxu0 0
      %661 = vmatprep.subr.bf16.mxu0 0
      %662 = vmatpush1.bf16.msra.mxu0 0
      %663 = vmatprep.subr.bf16.mxu0 0
      %664 = vmatpush1.bf16.msra.mxu0 0
      %665 = vmatprep.subr.bf16.mxu0 0
      %666 = vmatpush1.bf16.msra.mxu0 0
      %667 = vmatprep.subr.bf16.mxu0 0
      %668 = vmatpush1.bf16.msra.mxu0 0
      %669 = vmatprep.subr.bf16.mxu0 0
      %670 = vmatpush1.bf16.msra.mxu0 0
      %671 = vmatprep.subr.bf16.mxu0 0
      %672 = vmatpush1.bf16.msra.mxu0 0
      %673 = vmatprep.subr.bf16.mxu0 0
      %674 = vmatpush1.bf16.msra.mxu0 0
      %675 = vmatprep.subr.bf16.mxu0 0
      %676 = vmatpush1.bf16.msra.mxu0 0
      %677 = vmatprep.subr.bf16.mxu0 0
      %678 = vmatpush1.bf16.msra.mxu0 0
      %679 = vmatprep.subr.bf16.mxu0 0
      %680 = vmatpush1.bf16.msra.mxu0 0
      %681 = vmatprep.subr.bf16.mxu0 0
      %682 = vmatpush1.bf16.msra.mxu0 0
      %683 = vmatprep.subr.bf16.mxu0 0
      %684 = vmatpush1.bf16.msra.mxu0 0
      %685 = vmatprep.subr.bf16.mxu0 0
      %686 = vmatpush1.bf16.msra.mxu0 0
      %687 = vmatprep.mubr.bf16.mxu0 0
      %688 = vmatmul.mubr.bf16.gmra.mrb[0].mxu0 %v653
      %v689 = vpop.f32.mrb[0].mxu0
      %v690 = vadd.f32 0.0, %v689
      %v691 = vpop.f32.mrb[0].mxu0
      %v692 = vpop.f32.mrb[0].mxu0
      %v693 = vpop.f32.mrb[0].mxu0
      %694 = vdwg.mxu0
      %v695 = vadd.f32 %v631, %v690
      %s696 = scalar_lea.vmem %s4, 64
      %v697 = vld [vmem:[%s696] sm:$0xf]
      %v698 = vld [vmem:[%s696 + $0x4] sm:$0xf]
      %v699 = vld [vmem:[%s696 + $0x8] sm:$0xf]
      %v700 = vld [vmem:[%s696 + $0xc] sm:$0xf]
      %v705 = vunpack.c.l.b16 %v697
      %v706 = vunpack.c.l.b16 %v698
      %v707 = vunpack.c.l.b16 %v699
      %v708 = vunpack.c.l.b16 %v700
      %v709 = vpack.c.b16 %v706, %v705
      %v710 = vpack.c.b16 %v708, %v707
      %v714 = vsel %vm471, %v437, 0
      %716 = vmatprep.subr.bf16.mxu0 0
      %717 = vmatpush1.bf16.msra.mxu0 %v709
      %718 = vmatprep.subr.bf16.mxu0 0
      %719 = vmatpush1.bf16.msra.mxu0 %v710
      %720 = vmatprep.subr.bf16.mxu0 0
      %721 = vmatpush1.bf16.msra.mxu0 0
      %722 = vmatprep.subr.bf16.mxu0 0
      %723 = vmatpush1.bf16.msra.mxu0 0
      %724 = vmatprep.subr.bf16.mxu0 0
      %725 = vmatpush1.bf16.msra.mxu0 0
      %726 = vmatprep.subr.bf16.mxu0 0
      %727 = vmatpush1.bf16.msra.mxu0 0
      %728 = vmatprep.subr.bf16.mxu0 0
      %729 = vmatpush1.bf16.msra.mxu0 0
      %730 = vmatprep.subr.bf16.mxu0 0
      %731 = vmatpush1.bf16.msra.mxu0 0
      %732 = vmatprep.subr.bf16.mxu0 0
      %733 = vmatpush1.bf16.msra.mxu0 0
      %734 = vmatprep.subr.bf16.mxu0 0
      %735 = vmatpush1.bf16.msra.mxu0 0
      %736 = vmatprep.subr.bf16.mxu0 0
      %737 = vmatpush1.bf16.msra.mxu0 0
      %738 = vmatprep.subr.bf16.mxu0 0
      %739 = vmatpush1.bf16.msra.mxu0 0
      %740 = vmatprep.subr.bf16.mxu0 0
      %741 = vmatpush1.bf16.msra.mxu0 0
      %742 = vmatprep.subr.bf16.mxu0 0
      %743 = vmatpush1.bf16.msra.mxu0 0
      %744 = vmatprep.subr.bf16.mxu0 0
      %745 = vmatpush1.bf16.msra.mxu0 0
      %746 = vmatprep.subr.bf16.mxu0 0
      %747 = vmatpush1.bf16.msra.mxu0 0
      %748 = vmatprep.mubr.bf16.mxu0 0
      %749 = vmatmul.mubr.bf16.gmra.mrb[0].mxu0 %v714
      %v750 = vpop.f32.mrb[0].mxu0
      %v751 = vadd.f32 0.0, %v750
      %v752 = vpop.f32.mrb[0].mxu0
      %v753 = vpop.f32.mrb[0].mxu0
      %v754 = vpop.f32.mrb[0].mxu0
      %755 = vdwg.mxu0
      %v756 = vadd.f32 %v695, %v751
      %s757 = scalar_lea.vmem %s4, 80
      %v758 = vld [vmem:[%s757] sm:$0xf]
      %v759 = vld [vmem:[%s757 + $0x4] sm:$0xf]
      %v760 = vld [vmem:[%s757 + $0x8] sm:$0xf]
      %v761 = vld [vmem:[%s757 + $0xc] sm:$0xf]
      %v763 = vunpack.c.l.b16 %v437
      %v764 = vpack.c.b16 %v763, %v763
      %v766 = vshrl.u32 %v764, 16
      %v768 = vshll.u32 %v764, 16
      %v770 = vrot.slane %v768, 1
      %v771 = vor.u32 %v766, %v770
      %v776 = vunpack.c.l.b16 %v758
      %v777 = vunpack.c.l.b16 %v759
      %v778 = vunpack.c.l.b16 %v760
      %v779 = vunpack.c.l.b16 %v761
      %v780 = vpack.c.b16 %v777, %v776
      %v781 = vpack.c.b16 %v779, %v778
      %v785 = vsel %vm471, %v771, 0
      %787 = vmatprep.subr.bf16.mxu0 0
      %788 = vmatpush1.bf16.msra.mxu0 %v780
      %789 = vmatprep.subr.bf16.mxu0 0
      %790 = vmatpush1.bf16.msra.mxu0 %v781
      %791 = vmatprep.subr.bf16.mxu0 0
      %792 = vmatpush1.bf16.msra.mxu0 0
      %793 = vmatprep.subr.bf16.mxu0 0
      %794 = vmatpush1.bf16.msra.mxu0 0
      %795 = vmatprep.subr.bf16.mxu0 0
      %796 = vmatpush1.bf16.msra.mxu0 0
      %797 = vmatprep.subr.bf16.mxu0 0
      %798 = vmatpush1.bf16.msra.mxu0 0
      %799 = vmatprep.subr.bf16.mxu0 0
      %800 = vmatpush1.bf16.msra.mxu0 0
      %801 = vmatprep.subr.bf16.mxu0 0
      %802 = vmatpush1.bf16.msra.mxu0 0
      %803 = vmatprep.subr.bf16.mxu0 0
      %804 = vmatpush1.bf16.msra.mxu0 0
      %805 = vmatprep.subr.bf16.mxu0 0
      %806 = vmatpush1.bf16.msra.mxu0 0
      %807 = vmatprep.subr.bf16.mxu0 0
      %808 = vmatpush1.bf16.msra.mxu0 0
      %809 = vmatprep.subr.bf16.mxu0 0
      %810 = vmatpush1.bf16.msra.mxu0 0
      %811 = vmatprep.subr.bf16.mxu0 0
      %812 = vmatpush1.bf16.msra.mxu0 0
      %813 = vmatprep.subr.bf16.mxu0 0
      %814 = vmatpush1.bf16.msra.mxu0 0
      %815 = vmatprep.subr.bf16.mxu0 0
      %816 = vmatpush1.bf16.msra.mxu0 0
      %817 = vmatprep.subr.bf16.mxu0 0
      %818 = vmatpush1.bf16.msra.mxu0 0
      %819 = vmatprep.mubr.bf16.mxu0 0
      %820 = vmatmul.mubr.bf16.gmra.mrb[0].mxu0 %v785
      %v821 = vpop.f32.mrb[0].mxu0
      %v822 = vadd.f32 0.0, %v821
      %v823 = vpop.f32.mrb[0].mxu0
      %v824 = vpop.f32.mrb[0].mxu0
      %v825 = vpop.f32.mrb[0].mxu0
      %826 = vdwg.mxu0
      %v827 = vadd.f32 %v756, %v822
      %s828 = scalar_lea.vmem %s4, 96
      %v829 = vld [vmem:[%s828] sm:$0xf]
      %v830 = vld [vmem:[%s828 + $0x4] sm:$0xf]
      %v831 = vld [vmem:[%s828 + $0x8] sm:$0xf]
      %v832 = vld [vmem:[%s828 + $0xc] sm:$0xf]
      %v833 = vrot.slane %v764, 1
      %v838 = vunpack.c.l.b16 %v829
      %v839 = vunpack.c.l.b16 %v830
      %v840 = vunpack.c.l.b16 %v831
      %v841 = vunpack.c.l.b16 %v832
      %v842 = vpack.c.b16 %v839, %v838
      %v843 = vpack.c.b16 %v841, %v840
      %v847 = vsel %vm471, %v833, 0
      %849 = vmatprep.subr.bf16.mxu0 0
      %850 = vmatpush1.bf16.msra.mxu0 %v842
      %851 = vmatprep.subr.bf16.mxu0 0
      %852 = vmatpush1.bf16.msra.mxu0 %v843
      %853 = vmatprep.subr.bf16.mxu0 0
      %854 = vmatpush1.bf16.msra.mxu0 0
      %855 = vmatprep.subr.bf16.mxu0 0
      %856 = vmatpush1.bf16.msra.mxu0 0
      %857 = vmatprep.subr.bf16.mxu0 0
      %858 = vmatpush1.bf16.msra.mxu0 0
      %859 = vmatprep.subr.bf16.mxu0 0
      %860 = vmatpush1.bf16.msra.mxu0 0
      %861 = vmatprep.subr.bf16.mxu0 0
      %862 = vmatpush1.bf16.msra.mxu0 0
      %863 = vmatprep.subr.bf16.mxu0 0
      %864 = vmatpush1.bf16.msra.mxu0 0
      %865 = vmatprep.subr.bf16.mxu0 0
      %866 = vmatpush1.bf16.msra.mxu0 0
      %867 = vmatprep.subr.bf16.mxu0 0
      %868 = vmatpush1.bf16.msra.mxu0 0
      %869 = vmatprep.subr.bf16.mxu0 0
      %870 = vmatpush1.bf16.msra.mxu0 0
      %871 = vmatprep.subr.bf16.mxu0 0
      %872 = vmatpush1.bf16.msra.mxu0 0
      %873 = vmatprep.subr.bf16.mxu0 0
      %874 = vmatpush1.bf16.msra.mxu0 0
      %875 = vmatprep.subr.bf16.mxu0 0
      %876 = vmatpush1.bf16.msra.mxu0 0
      %877 = vmatprep.subr.bf16.mxu0 0
      %878 = vmatpush1.bf16.msra.mxu0 0
      %879 = vmatprep.subr.bf16.mxu0 0
      %880 = vmatpush1.bf16.msra.mxu0 0
      %881 = vmatprep.mubr.bf16.mxu0 0
      %882 = vmatmul.mubr.bf16.gmra.mrb[0].mxu0 %v847
      %v883 = vpop.f32.mrb[0].mxu0
      %v884 = vadd.f32 0.0, %v883
      %v885 = vpop.f32.mrb[0].mxu0
      %v886 = vpop.f32.mrb[0].mxu0
      %v887 = vpop.f32.mrb[0].mxu0
      %888 = vdwg.mxu0
      %v889 = vadd.f32 %v827, %v884
      %s890 = scalar_lea.vmem %s4, 112
      %v891 = vld [vmem:[%s890] sm:$0xf]
      %v892 = vld [vmem:[%s890 + $0x4] sm:$0xf]
      %v893 = vld [vmem:[%s890 + $0x8] sm:$0xf]
      %v894 = vld [vmem:[%s890 + $0xc] sm:$0xf]
      %v895 = vrot.slane %v766, 1
      %v896 = vrot.slane %v768, 2
      %v897 = vor.u32 %v895, %v896
      %v902 = vunpack.c.l.b16 %v891
      %v903 = vunpack.c.l.b16 %v892
      %v904 = vunpack.c.l.b16 %v893
      %v905 = vunpack.c.l.b16 %v894
      %v906 = vpack.c.b16 %v903, %v902
      %v907 = vpack.c.b16 %v905, %v904
      %v911 = vsel %vm471, %v897, 0
      %913 = vmatprep.subr.bf16.mxu0 0
      %914 = vmatpush1.bf16.msra.mxu0 %v906
      %915 = vmatprep.subr.bf16.mxu0 0
      %916 = vmatpush1.bf16.msra.mxu0 %v907
      %917 = vmatprep.subr.bf16.mxu0 0
      %918 = vmatpush1.bf16.msra.mxu0 0
      %919 = vmatprep.subr.bf16.mxu0 0
      %920 = vmatpush1.bf16.msra.mxu0 0
      %921 = vmatprep.subr.bf16.mxu0 0
      %922 = vmatpush1.bf16.msra.mxu0 0
      %923 = vmatprep.subr.bf16.mxu0 0
      %924 = vmatpush1.bf16.msra.mxu0 0
      %925 = vmatprep.subr.bf16.mxu0 0
      %926 = vmatpush1.bf16.msra.mxu0 0
      %927 = vmatprep.subr.bf16.mxu0 0
      %928 = vmatpush1.bf16.msra.mxu0 0
      %929 = vmatprep.subr.bf16.mxu0 0
      %930 = vmatpush1.bf16.msra.mxu0 0
      %931 = vmatprep.subr.bf16.mxu0 0
      %932 = vmatpush1.bf16.msra.mxu0 0
      %933 = vmatprep.subr.bf16.mxu0 0
      %934 = vmatpush1.bf16.msra.mxu0 0
      %935 = vmatprep.subr.bf16.mxu0 0
      %936 = vmatpush1.bf16.msra.mxu0 0
      %937 = vmatprep.subr.bf16.mxu0 0
      %938 = vmatpush1.bf16.msra.mxu0 0
      %939 = vmatprep.subr.bf16.mxu0 0
      %940 = vmatpush1.bf16.msra.mxu0 0
      %941 = vmatprep.subr.bf16.mxu0 0
      %942 = vmatpush1.bf16.msra.mxu0 0
      %943 = vmatprep.subr.bf16.mxu0 0
      %944 = vmatpush1.bf16.msra.mxu0 0
      %945 = vmatprep.mubr.bf16.mxu0 0
      %946 = vmatmul.mubr.bf16.gmra.mrb[0].mxu0 %v911
      %v947 = vpop.f32.mrb[0].mxu0
      %v948 = vadd.f32 0.0, %v947
      %v949 = vpop.f32.mrb[0].mxu0
      %v950 = vpop.f32.mrb[0].mxu0
      %v951 = vpop.f32.mrb[0].mxu0
      %952 = vdwg.mxu0
      %v953 = vadd.f32 %v889, %v948
      %s954 = scalar_lea.vmem %s4, 128
      %v955 = vld [vmem:[%s954] sm:$0xf]
      %v956 = vld [vmem:[%s954 + $0x4] sm:$0xf]
      %v957 = vld [vmem:[%s954 + $0x8] sm:$0xf]
      %v958 = vld [vmem:[%s954 + $0xc] sm:$0xf]
      %v963 = vunpack.c.l.b16 %v955
      %v964 = vunpack.c.l.b16 %v956
      %v965 = vunpack.c.l.b16 %v957
      %v966 = vunpack.c.l.b16 %v958
      %v967 = vpack.c.b16 %v964, %v963
      %v968 = vpack.c.b16 %v966, %v965
      %v972 = vsel %vm471, %v438, 0
      %974 = vmatprep.subr.bf16.mxu0 0
      %975 = vmatpush1.bf16.msra.mxu0 %v967
      %976 = vmatprep.subr.bf16.mxu0 0
      %977 = vmatpush1.bf16.msra.mxu0 %v968
      %978 = vmatprep.subr.bf16.mxu0 0
      %979 = vmatpush1.bf16.msra.mxu0 0
      %980 = vmatprep.subr.bf16.mxu0 0
      %981 = vmatpush1.bf16.msra.mxu0 0
      %982 = vmatprep.subr.bf16.mxu0 0
      %983 = vmatpush1.bf16.msra.mxu0 0
      %984 = vmatprep.subr.bf16.mxu0 0
      %985 = vmatpush1.bf16.msra.mxu0 0
      %986 = vmatprep.subr.bf16.mxu0 0
      %987 = vmatpush1.bf16.msra.mxu0 0
      %988 = vmatprep.subr.bf16.mxu0 0
      %989 = vmatpush1.bf16.msra.mxu0 0
      %990 = vmatprep.subr.bf16.mxu0 0
      %991 = vmatpush1.bf16.msra.mxu0 0
      %992 = vmatprep.subr.bf16.mxu0 0
      %993 = vmatpush1.bf16.msra.mxu0 0
      %994 = vmatprep.subr.bf16.mxu0 0
      %995 = vmatpush1.bf16.msra.mxu0 0
      %996 = vmatprep.subr.bf16.mxu0 0
      %997 = vmatpush1.bf16.msra.mxu0 0
      %998 = vmatprep.subr.bf16.mxu0 0
      %999 = vmatpush1.bf16.msra.mxu0 0
      %1000 = vmatprep.subr.bf16.mxu0 0
      %1001 = vmatpush1.bf16.msra.mxu0 0
      %1002 = vmatprep.subr.bf16.mxu0 0
      %1003 = vmatpush1.bf16.msra.mxu0 0
      %1004 = vmatprep.subr.bf16.mxu0 0
      %1005 = vmatpush1.bf16.msra.mxu0 0
      %1006 = vmatprep.mubr.bf16.mxu0 0
      %1007 = vmatmul.mubr.bf16.gmra.mrb[0].mxu0 %v972
      %v1008 = vpop.f32.mrb[0].mxu0
      %v1009 = vadd.f32 0.0, %v1008
      %v1010 = vpop.f32.mrb[0].mxu0
      %v1011 = vpop.f32.mrb[0].mxu0
      %v1012 = vpop.f32.mrb[0].mxu0
      %1013 = vdwg.mxu0
      %v1014 = vadd.f32 %v953, %v1009
      %s1015 = scalar_lea.vmem %s4, 144
      %v1016 = vld [vmem:[%s1015] sm:$0xf]
      %v1017 = vld [vmem:[%s1015 + $0x4] sm:$0xf]
      %v1018 = vld [vmem:[%s1015 + $0x8] sm:$0xf]
      %v1019 = vld [vmem:[%s1015 + $0xc] sm:$0xf]
      %v1021 = vunpack.c.l.b16 %v438
      %v1022 = vpack.c.b16 %v1021, %v1021
      %v1024 = vshrl.u32 %v1022, 16
      %v1026 = vshll.u32 %v1022, 16
      %v1028 = vrot.slane %v1026, 1
      %v1029 = vor.u32 %v1024, %v1028
      %v1034 = vunpack.c.l.b16 %v1016
      %v1035 = vunpack.c.l.b16 %v1017
      %v1036 = vunpack.c.l.b16 %v1018
      %v1037 = vunpack.c.l.b16 %v1019
      %v1038 = vpack.c.b16 %v1035, %v1034
      %v1039 = vpack.c.b16 %v1037, %v1036
      %v1043 = vsel %vm471, %v1029, 0
      %1045 = vmatprep.subr.bf16.mxu0 0
      %1046 = vmatpush1.bf16.msra.mxu0 %v1038
      %1047 = vmatprep.subr.bf16.mxu0 0
      %1048 = vmatpush1.bf16.msra.mxu0 %v1039
      %1049 = vmatprep.subr.bf16.mxu0 0
      %1050 = vmatpush1.bf16.msra.mxu0 0
      %1051 = vmatprep.subr.bf16.mxu0 0
      %1052 = vmatpush1.bf16.msra.mxu0 0
      %1053 = vmatprep.subr.bf16.mxu0 0
      %1054 = vmatpush1.bf16.msra.mxu0 0
      %1055 = vmatprep.subr.bf16.mxu0 0
      %1056 = vmatpush1.bf16.msra.mxu0 0
      %1057 = vmatprep.subr.bf16.mxu0 0
      %1058 = vmatpush1.bf16.msra.mxu0 0
      %1059 = vmatprep.subr.bf16.mxu0 0
      %1060 = vmatpush1.bf16.msra.mxu0 0
      %1061 = vmatprep.subr.bf16.mxu0 0
      %1062 = vmatpush1.bf16.msra.mxu0 0
      %1063 = vmatprep.subr.bf16.mxu0 0
      %1064 = vmatpush1.bf16.msra.mxu0 0
      %1065 = vmatprep.subr.bf16.mxu0 0
      %1066 = vmatpush1.bf16.msra.mxu0 0
      %1067 = vmatprep.subr.bf16.mxu0 0
      %1068 = vmatpush1.bf16.msra.mxu0 0
      %1069 = vmatprep.subr.bf16.mxu0 0
      %1070 = vmatpush1.bf16.msra.mxu0 0
      %1071 = vmatprep.subr.bf16.mxu0 0
      %1072 = vmatpush1.bf16.msra.mxu0 0
      %1073 = vmatprep.subr.bf16.mxu0 0
      %1074 = vmatpush1.bf16.msra.mxu0 0
      %1075 = vmatprep.subr.bf16.mxu0 0
      %1076 = vmatpush1.bf16.msra.mxu0 0
      %1077 = vmatprep.mubr.bf16.mxu0 0
      %1078 = vmatmul.mubr.bf16.gmra.mrb[0].mxu0 %v1043
      %v1079 = vpop.f32.mrb[0].mxu0
      %v1080 = vadd.f32 0.0, %v1079
      %v1081 = vpop.f32.mrb[0].mxu0
      %v1082 = vpop.f32.mrb[0].mxu0
      %v1083 = vpop.f32.mrb[0].mxu0
      %1084 = vdwg.mxu0
      %v1085 = vadd.f32 %v1014, %v1080
      %s1086 = scalar_lea.vmem %s4, 160
      %v1087 = vld [vmem:[%s1086] sm:$0xf]
      %v1088 = vld [vmem:[%s1086 + $0x4] sm:$0xf]
      %v1089 = vld [vmem:[%s1086 + $0x8] sm:$0xf]
      %v1090 = vld [vmem:[%s1086 + $0xc] sm:$0xf]
      %v1091 = vrot.slane %v1022, 1
      %v1096 = vunpack.c.l.b16 %v1087
      %v1097 = vunpack.c.l.b16 %v1088
      %v1098 = vunpack.c.l.b16 %v1089
      %v1099 = vunpack.c.l.b16 %v1090
      %v1100 = vpack.c.b16 %v1097, %v1096
      %v1101 = vpack.c.b16 %v1099, %v1098
      %v1105 = vsel %vm471, %v1091, 0
      %1107 = vmatprep.subr.bf16.mxu0 0
      %1108 = vmatpush1.bf16.msra.mxu0 %v1100
      %1109 = vmatprep.subr.bf16.mxu0 0
      %1110 = vmatpush1.bf16.msra.mxu0 %v1101
      %1111 = vmatprep.subr.bf16.mxu0 0
      %1112 = vmatpush1.bf16.msra.mxu0 0
      %1113 = vmatprep.subr.bf16.mxu0 0
      %1114 = vmatpush1.bf16.msra.mxu0 0
      %1115 = vmatprep.subr.bf16.mxu0 0
      %1116 = vmatpush1.bf16.msra.mxu0 0
      %1117 = vmatprep.subr.bf16.mxu0 0
      %1118 = vmatpush1.bf16.msra.mxu0 0
      %1119 = vmatprep.subr.bf16.mxu0 0
      %1120 = vmatpush1.bf16.msra.mxu0 0
      %1121 = vmatprep.subr.bf16.mxu0 0
      %1122 = vmatpush1.bf16.msra.mxu0 0
      %1123 = vmatprep.subr.bf16.mxu0 0
      %1124 = vmatpush1.bf16.msra.mxu0 0
      %1125 = vmatprep.subr.bf16.mxu0 0
      %1126 = vmatpush1.bf16.msra.mxu0 0
      %1127 = vmatprep.subr.bf16.mxu0 0
      %1128 = vmatpush1.bf16.msra.mxu0 0
      %1129 = vmatprep.subr.bf16.mxu0 0
      %1130 = vmatpush1.bf16.msra.mxu0 0
      %1131 = vmatprep.subr.bf16.mxu0 0
      %1132 = vmatpush1.bf16.msra.mxu0 0
      %1133 = vmatprep.subr.bf16.mxu0 0
      %1134 = vmatpush1.bf16.msra.mxu0 0
      %1135 = vmatprep.subr.bf16.mxu0 0
      %1136 = vmatpush1.bf16.msra.mxu0 0
      %1137 = vmatprep.subr.bf16.mxu0 0
      %1138 = vmatpush1.bf16.msra.mxu0 0
      %1139 = vmatprep.mubr.bf16.mxu0 0
      %1140 = vmatmul.mubr.bf16.gmra.mrb[0].mxu0 %v1105
      %v1141 = vpop.f32.mrb[0].mxu0
      %v1142 = vadd.f32 0.0, %v1141
      %v1143 = vpop.f32.mrb[0].mxu0
      %v1144 = vpop.f32.mrb[0].mxu0
      %v1145 = vpop.f32.mrb[0].mxu0
      %1146 = vdwg.mxu0
      %v1147 = vadd.f32 %v1085, %v1142
      %s1148 = scalar_lea.vmem %s4, 176
      %v1149 = vld [vmem:[%s1148] sm:$0xf]
      %v1150 = vld [vmem:[%s1148 + $0x4] sm:$0xf]
      %v1151 = vld [vmem:[%s1148 + $0x8] sm:$0xf]
      %v1152 = vld [vmem:[%s1148 + $0xc] sm:$0xf]
      %v1153 = vrot.slane %v1024, 1
      %v1154 = vrot.slane %v1026, 2
      %v1155 = vor.u32 %v1153, %v1154
      %v1160 = vunpack.c.l.b16 %v1149
      %v1161 = vunpack.c.l.b16 %v1150
      %v1162 = vunpack.c.l.b16 %v1151
      %v1163 = vunpack.c.l.b16 %v1152
      %v1164 = vpack.c.b16 %v1161, %v1160
      %v1165 = vpack.c.b16 %v1163, %v1162
      %v1169 = vsel %vm471, %v1155, 0
      %1171 = vmatprep.subr.bf16.mxu0 0
      %1172 = vmatpush1.bf16.msra.mxu0 %v1164
      %1173 = vmatprep.subr.bf16.mxu0 0
      %1174 = vmatpush1.bf16.msra.mxu0 %v1165
      %1175 = vmatprep.subr.bf16.mxu0 0
      %1176 = vmatpush1.bf16.msra.mxu0 0
      %1177 = vmatprep.subr.bf16.mxu0 0
      %1178 = vmatpush1.bf16.msra.mxu0 0
      %1179 = vmatprep.subr.bf16.mxu0 0
      %1180 = vmatpush1.bf16.msra.mxu0 0
      %1181 = vmatprep.subr.bf16.mxu0 0
      %1182 = vmatpush1.bf16.msra.mxu0 0
      %1183 = vmatprep.subr.bf16.mxu0 0
      %1184 = vmatpush1.bf16.msra.mxu0 0
      %1185 = vmatprep.subr.bf16.mxu0 0
      %1186 = vmatpush1.bf16.msra.mxu0 0
      %1187 = vmatprep.subr.bf16.mxu0 0
      %1188 = vmatpush1.bf16.msra.mxu0 0
      %1189 = vmatprep.subr.bf16.mxu0 0
      %1190 = vmatpush1.bf16.msra.mxu0 0
      %1191 = vmatprep.subr.bf16.mxu0 0
      %1192 = vmatpush1.bf16.msra.mxu0 0
      %1193 = vmatprep.subr.bf16.mxu0 0
      %1194 = vmatpush1.bf16.msra.mxu0 0
      %1195 = vmatprep.subr.bf16.mxu0 0
      %1196 = vmatpush1.bf16.msra.mxu0 0
      %1197 = vmatprep.subr.bf16.mxu0 0
      %1198 = vmatpush1.bf16.msra.mxu0 0
      %1199 = vmatprep.subr.bf16.mxu0 0
      %1200 = vmatpush1.bf16.msra.mxu0 0
      %1201 = vmatprep.subr.bf16.mxu0 0
      %1202 = vmatpush1.bf16.msra.mxu0 0
      %1203 = vmatprep.mubr.bf16.mxu0 0
      %1204 = vmatmul.mubr.bf16.gmra.mrb[0].mxu0 %v1169
      %v1205 = vpop.f32.mrb[0].mxu0
      %v1206 = vadd.f32 0.0, %v1205
      %v1207 = vpop.f32.mrb[0].mxu0
      %v1208 = vpop.f32.mrb[0].mxu0
      %v1209 = vpop.f32.mrb[0].mxu0
      %1210 = vdwg.mxu0
      %v1211 = vadd.f32 %v1147, %v1206
      %s1212 = scalar_lea.vmem %s4, 192
      %v1213 = vld [vmem:[%s1212] sm:$0xf]
      %v1214 = vld [vmem:[%s1212 + $0x4] sm:$0xf]
      %v1215 = vld [vmem:[%s1212 + $0x8] sm:$0xf]
      %v1216 = vld [vmem:[%s1212 + $0xc] sm:$0xf]
      %v1221 = vunpack.c.l.b16 %v1213
      %v1222 = vunpack.c.l.b16 %v1214
      %v1223 = vunpack.c.l.b16 %v1215
      %v1224 = vunpack.c.l.b16 %v1216
      %v1225 = vpack.c.b16 %v1222, %v1221
      %v1226 = vpack.c.b16 %v1224, %v1223
      %v1230 = vsel %vm471, %v439, 0
      %1232 = vmatprep.subr.bf16.mxu0 0
      %1233 = vmatpush1.bf16.msra.mxu0 %v1225
      %1234 = vmatprep.subr.bf16.mxu0 0
      %1235 = vmatpush1.bf16.msra.mxu0 %v1226
      %1236 = vmatprep.subr.bf16.mxu0 0
      %1237 = vmatpush1.bf16.msra.mxu0 0
      %1238 = vmatprep.subr.bf16.mxu0 0
      %1239 = vmatpush1.bf16.msra.mxu0 0
      %1240 = vmatprep.subr.bf16.mxu0 0
      %1241 = vmatpush1.bf16.msra.mxu0 0
      %1242 = vmatprep.subr.bf16.mxu0 0
      %1243 = vmatpush1.bf16.msra.mxu0 0
      %1244 = vmatprep.subr.bf16.mxu0 0
      %1245 = vmatpush1.bf16.msra.mxu0 0
      %1246 = vmatprep.subr.bf16.mxu0 0
      %1247 = vmatpush1.bf16.msra.mxu0 0
      %1248 = vmatprep.subr.bf16.mxu0 0
      %1249 = vmatpush1.bf16.msra.mxu0 0
      %1250 = vmatprep.subr.bf16.mxu0 0
      %1251 = vmatpush1.bf16.msra.mxu0 0
      %1252 = vmatprep.subr.bf16.mxu0 0
      %1253 = vmatpush1.bf16.msra.mxu0 0
      %1254 = vmatprep.subr.bf16.mxu0 0
      %1255 = vmatpush1.bf16.msra.mxu0 0
      %1256 = vmatprep.subr.bf16.mxu0 0
      %1257 = vmatpush1.bf16.msra.mxu0 0
      %1258 = vmatprep.subr.bf16.mxu0 0
      %1259 = vmatpush1.bf16.msra.mxu0 0
      %1260 = vmatprep.subr.bf16.mxu0 0
      %1261 = vmatpush1.bf16.msra.mxu0 0
      %1262 = vmatprep.subr.bf16.mxu0 0
      %1263 = vmatpush1.bf16.msra.mxu0 0
      %1264 = vmatprep.mubr.bf16.mxu0 0
      %1265 = vmatmul.mubr.bf16.gmra.mrb[0].mxu0 %v1230
      %v1266 = vpop.f32.mrb[0].mxu0
      %v1267 = vadd.f32 0.0, %v1266
      %v1268 = vpop.f32.mrb[0].mxu0
      %v1269 = vpop.f32.mrb[0].mxu0
      %v1270 = vpop.f32.mrb[0].mxu0
      %1271 = vdwg.mxu0
      %v1272 = vadd.f32 %v1211, %v1267
      %s1273 = scalar_lea.vmem %s4, 208
      %v1274 = vld [vmem:[%s1273] sm:$0xf]
      %v1275 = vld [vmem:[%s1273 + $0x4] sm:$0xf]
      %v1276 = vld [vmem:[%s1273 + $0x8] sm:$0xf]
      %v1277 = vld [vmem:[%s1273 + $0xc] sm:$0xf]
      %v1279 = vunpack.c.l.b16 %v439
      %v1280 = vpack.c.b16 %v1279, %v1279
      %v1282 = vshrl.u32 %v1280, 16
      %v1284 = vshll.u32 %v1280, 16
      %v1286 = vrot.slane %v1284, 1
      %v1287 = vor.u32 %v1282, %v1286
      %v1292 = vunpack.c.l.b16 %v1274
      %v1293 = vunpack.c.l.b16 %v1275
      %v1294 = vunpack.c.l.b16 %v1276
      %v1295 = vunpack.c.l.b16 %v1277
      %v1296 = vpack.c.b16 %v1293, %v1292
      %v1297 = vpack.c.b16 %v1295, %v1294
      %v1301 = vsel %vm471, %v1287, 0
      %1303 = vmatprep.subr.bf16.mxu0 0
      %1304 = vmatpush1.bf16.msra.mxu0 %v1296
      %1305 = vmatprep.subr.bf16.mxu0 0
      %1306 = vmatpush1.bf16.msra.mxu0 %v1297
      %1307 = vmatprep.subr.bf16.mxu0 0
      %1308 = vmatpush1.bf16.msra.mxu0 0
      %1309 = vmatprep.subr.bf16.mxu0 0
      %1310 = vmatpush1.bf16.msra.mxu0 0
      %1311 = vmatprep.subr.bf16.mxu0 0
      %1312 = vmatpush1.bf16.msra.mxu0 0
      %1313 = vmatprep.subr.bf16.mxu0 0
      %1314 = vmatpush1.bf16.msra.mxu0 0
      %1315 = vmatprep.subr.bf16.mxu0 0
      %1316 = vmatpush1.bf16.msra.mxu0 0
      %1317 = vmatprep.subr.bf16.mxu0 0
      %1318 = vmatpush1.bf16.msra.mxu0 0
      %1319 = vmatprep.subr.bf16.mxu0 0
      %1320 = vmatpush1.bf16.msra.mxu0 0
      %1321 = vmatprep.subr.bf16.mxu0 0
      %1322 = vmatpush1.bf16.msra.mxu0 0
      %1323 = vmatprep.subr.bf16.mxu0 0
      %1324 = vmatpush1.bf16.msra.mxu0 0
      %1325 = vmatprep.subr.bf16.mxu0 0
      %1326 = vmatpush1.bf16.msra.mxu0 0
      %1327 = vmatprep.subr.bf16.mxu0 0
      %1328 = vmatpush1.bf16.msra.mxu0 0
      %1329 = vmatprep.subr.bf16.mxu0 0
      %1330 = vmatpush1.bf16.msra.mxu0 0
      %1331 = vmatprep.subr.bf16.mxu0 0
      %1332 = vmatpush1.bf16.msra.mxu0 0
      %1333 = vmatprep.subr.bf16.mxu0 0
      %1334 = vmatpush1.bf16.msra.mxu0 0
      %1335 = vmatprep.mubr.bf16.mxu0 0
      %1336 = vmatmul.mubr.bf16.gmra.mrb[0].mxu0 %v1301
      %v1337 = vpop.f32.mrb[0].mxu0
      %v1338 = vadd.f32 0.0, %v1337
      %v1339 = vpop.f32.mrb[0].mxu0
      %v1340 = vpop.f32.mrb[0].mxu0
      %v1341 = vpop.f32.mrb[0].mxu0
      %1342 = vdwg.mxu0
      %v1343 = vadd.f32 %v1272, %v1338
      %s1344 = scalar_lea.vmem %s4, 224
      %v1345 = vld [vmem:[%s1344] sm:$0xf]
      %v1346 = vld [vmem:[%s1344 + $0x4] sm:$0xf]
      %v1347 = vld [vmem:[%s1344 + $0x8] sm:$0xf]
      %v1348 = vld [vmem:[%s1344 + $0xc] sm:$0xf]
      %v1349 = vrot.slane %v1280, 1
      %v1354 = vunpack.c.l.b16 %v1345
      %v1355 = vunpack.c.l.b16 %v1346
      %v1356 = vunpack.c.l.b16 %v1347
      %v1357 = vunpack.c.l.b16 %v1348
      %v1358 = vpack.c.b16 %v1355, %v1354
      %v1359 = vpack.c.b16 %v1357, %v1356
      %v1363 = vsel %vm471, %v1349, 0
      %1365 = vmatprep.subr.bf16.mxu0 0
      %1366 = vmatpush1.bf16.msra.mxu0 %v1358
      %1367 = vmatprep.subr.bf16.mxu0 0
      %1368 = vmatpush1.bf16.msra.mxu0 %v1359
      %1369 = vmatprep.subr.bf16.mxu0 0
      %1370 = vmatpush1.bf16.msra.mxu0 0
      %1371 = vmatprep.subr.bf16.mxu0 0
      %1372 = vmatpush1.bf16.msra.mxu0 0
      %1373 = vmatprep.subr.bf16.mxu0 0
      %1374 = vmatpush1.bf16.msra.mxu0 0
      %1375 = vmatprep.subr.bf16.mxu0 0
      %1376 = vmatpush1.bf16.msra.mxu0 0
      %1377 = vmatprep.subr.bf16.mxu0 0
      %1378 = vmatpush1.bf16.msra.mxu0 0
      %1379 = vmatprep.subr.bf16.mxu0 0
      %1380 = vmatpush1.bf16.msra.mxu0 0
      %1381 = vmatprep.subr.bf16.mxu0 0
      %1382 = vmatpush1.bf16.msra.mxu0 0
      %1383 = vmatprep.subr.bf16.mxu0 0
      %1384 = vmatpush1.bf16.msra.mxu0 0
      %1385 = vmatprep.subr.bf16.mxu0 0
      %1386 = vmatpush1.bf16.msra.mxu0 0
      %1387 = vmatprep.subr.bf16.mxu0 0
      %1388 = vmatpush1.bf16.msra.mxu0 0
      %1389 = vmatprep.subr.bf16.mxu0 0
      %1390 = vmatpush1.bf16.msra.mxu0 0
      %1391 = vmatprep.subr.bf16.mxu0 0
      %1392 = vmatpush1.bf16.msra.mxu0 0
      %1393 = vmatprep.subr.bf16.mxu0 0
      %1394 = vmatpush1.bf16.msra.mxu0 0
      %1395 = vmatprep.subr.bf16.mxu0 0
      %1396 = vmatpush1.bf16.msra.mxu0 0
      %1397 = vmatprep.mubr.bf16.mxu0 0
      %1398 = vmatmul.mubr.bf16.gmra.mrb[0].mxu0 %v1363
      %v1399 = vpop.f32.mrb[0].mxu0
      %v1400 = vadd.f32 0.0, %v1399
      %v1401 = vpop.f32.mrb[0].mxu0
      %v1402 = vpop.f32.mrb[0].mxu0
      %v1403 = vpop.f32.mrb[0].mxu0
      %1404 = vdwg.mxu0
      %v1405 = vadd.f32 %v1343, %v1400
      %s1406 = scalar_lea.vmem %s4, 240
      %v1407 = vld [vmem:[%s1406] sm:$0xf]
      %v1408 = vld [vmem:[%s1406 + $0x4] sm:$0xf]
      %v1409 = vld [vmem:[%s1406 + $0x8] sm:$0xf]
      %v1410 = vld [vmem:[%s1406 + $0xc] sm:$0xf]
      %v1411 = vrot.slane %v1282, 1
      %v1412 = vrot.slane %v1284, 2
      %v1413 = vor.u32 %v1411, %v1412
      %v1418 = vunpack.c.l.b16 %v1407
      %v1419 = vunpack.c.l.b16 %v1408
      %v1420 = vunpack.c.l.b16 %v1409
      %v1421 = vunpack.c.l.b16 %v1410
      %v1422 = vpack.c.b16 %v1419, %v1418
      %v1423 = vpack.c.b16 %v1421, %v1420
      %v1427 = vsel %vm471, %v1413, 0
      %1429 = vmatprep.subr.bf16.mxu0 0
      %1430 = vmatpush1.bf16.msra.mxu0 %v1422
      %1431 = vmatprep.subr.bf16.mxu0 0
      %1432 = vmatpush1.bf16.msra.mxu0 %v1423
      %1433 = vmatprep.subr.bf16.mxu0 0
      %1434 = vmatpush1.bf16.msra.mxu0 0
      %1435 = vmatprep.subr.bf16.mxu0 0
      %1436 = vmatpush1.bf16.msra.mxu0 0
      %1437 = vmatprep.subr.bf16.mxu0 0
      %1438 = vmatpush1.bf16.msra.mxu0 0
      %1439 = vmatprep.subr.bf16.mxu0 0
      %1440 = vmatpush1.bf16.msra.mxu0 0
      %1441 = vmatprep.subr.bf16.mxu0 0
      %1442 = vmatpush1.bf16.msra.mxu0 0
      %1443 = vmatprep.subr.bf16.mxu0 0
      %1444 = vmatpush1.bf16.msra.mxu0 0
      %1445 = vmatprep.subr.bf16.mxu0 0
      %1446 = vmatpush1.bf16.msra.mxu0 0
      %1447 = vmatprep.subr.bf16.mxu0 0
      %1448 = vmatpush1.bf16.msra.mxu0 0
      %1449 = vmatprep.subr.bf16.mxu0 0
      %1450 = vmatpush1.bf16.msra.mxu0 0
      %1451 = vmatprep.subr.bf16.mxu0 0
      %1452 = vmatpush1.bf16.msra.mxu0 0
      %1453 = vmatprep.subr.bf16.mxu0 0
      %1454 = vmatpush1.bf16.msra.mxu0 0
      %1455 = vmatprep.subr.bf16.mxu0 0
      %1456 = vmatpush1.bf16.msra.mxu0 0
      %1457 = vmatprep.subr.bf16.mxu0 0
      %1458 = vmatpush1.bf16.msra.mxu0 0
      %1459 = vmatprep.subr.bf16.mxu0 0
      %1460 = vmatpush1.bf16.msra.mxu0 0
      %1461 = vmatprep.mubr.bf16.mxu0 0
      %1462 = vmatmul.mubr.bf16.gmra.mrb[0].mxu0 %v1427
      %v1463 = vpop.f32.mrb[0].mxu0
      %v1464 = vadd.f32 0.0, %v1463
      %v1465 = vpop.f32.mrb[0].mxu0
      %v1466 = vpop.f32.mrb[0].mxu0
      %v1467 = vpop.f32.mrb[0].mxu0
      %1468 = vdwg.mxu0
      %v1469 = vadd.f32 %v1405, %v1464
      %v1470 = vld [vmem:[%s5] sm:$0x1]
      %v1472 = vlaneseq
      %v1473 = vshrl.u32 %v1472, 7
      %v1474 = vsub.s32 0, %v1473
      %v1475 = vrot.slane %v1470, %v1474
      %v1477 = vadd.f32 %v1469, %v1475
      %p1478 = scmp.eq.s32.totalorder %s24, 0
      // Predicated region
      $region45: #{_lambda_.13} parent=43 // pred_check
        %p1479 = pneg %p1478
      $region46: #{_lambda_.13} parent=43 // pred_check_branch
        %1481 = sbr.rel (%p1479) target = $region48
      $region47: #{_lambda_.13} parent=43 // pred_region
        %vm1482 = vcmask 517120
        %1483 = vst.msk [vmem:[%s434] sm:$0x3] %vm1482, 0.0
      $region48: #{_lambda_.13} parent=43 // pred_fallthru
        _
      %v1484 = vld [vmem:[%s434] sm:$0x1]
      %vm1485 = vcmask 518144
      %v1486 = vsel %vm1485, %v1477, 0.0
      %v1487 = vrot.slane %v1486, 4
      %v1488 = vadd.f32 %v1486, %v1487
      %v1489 = vrot.slane %v1488, 2
      %v1490 = vadd.f32 %v1488, %v1489
      %v1491 = vrot.slane %v1490, 1
      %v1492 = vadd.f32 %v1490, %v1491
      %v1493 = vadd.f32 %v1484, %v1492
      %vm1494 = vcmask 516096
      %1495 = vst.msk [vmem:[%s434] sm:$0x1] %vm1494, %v1493
      %v1496 = vld [vmem:[%s434 + $0x1] sm:$0x1]
      %v1497 = vmul.f32 %v1477, %v1477
      %v1498 = vsel %vm1485, %v1497, 0.0
      %v1499 = vrot.slane %v1498, 4
      %v1500 = vadd.f32 %v1498, %v1499
      %v1501 = vrot.slane %v1500, 2
      %v1502 = vadd.f32 %v1500, %v1501
      %v1503 = vrot.slane %v1502, 1
      %v1504 = vadd.f32 %v1502, %v1503
      %v1505 = vadd.f32 %v1496, %v1504
      %1506 = vst.msk [vmem:[%s434 + $0x1] sm:$0x1] %vm1494, %v1505
      %1507 = vst.msk [vmem:[%s430] sm:$0x7] %vm1485, %v1477
      %p1508 = scmp.lt.s32.totalorder %s23, 1
      %s1509 = scalar_select %p1508, %s23, 1
      %p1510 = scmp.lt.s32.totalorder %s24, 2
      %s1511 = scalar_select %p1510, %s24, 2
      %s1512 = smul.addr %s1509, 3
      %s1513 = sadd.s32 %s1511, %s1512
      %s1514 = smul.addr %s1513, 4
      %s1515 = scalar_lea.vmem %s6, %s1514
      %p1516 = scmp.lt.s32.totalorder %s23, 1
      %s1517 = scalar_select %p1516, %s23, 1
      %s1518 = smul.addr %s1517, 2
      %s1519 = scalar_lea.vmem %s7, %s1518
      // Predicated region
      $region49: #{_lambda_.13} parent=43 // pred_check
        %p1520 = pneg %p211
      $region50: #{_lambda_.13} parent=43 // pred_check_branch
        %1522 = sbr.rel (%p1520) target = $region52
      $region51: #{_lambda_.13} parent=43 // pred_region
        _
      $region52: #{_lambda_.13} parent=43 // pred_fallthru
        _
      // Predicated region
      $region53: #{_lambda_.13} parent=43 // pred_check
        %p1523 = pneg %p237
      $region54: #{_lambda_.13} parent=43 // pred_check_branch
        %1525 = sbr.rel (%p1523) target = $region56
      $region55: #{_lambda_.13} parent=43 // pred_region
        _
      $region56: #{_lambda_.13} parent=43 // pred_fallthru
        _
    $region44: #{_lambda_.13} parent=5 // pred_fallthru
      _
    %p1526 = scmp.le.s32.totalorder 2, %s14
    // Predicated region
    $region57: #{_lambda_.13} parent=5 // pred_check
      %p1527 = pneg %p1526
    $region58: #{_lambda_.13} parent=5 // pred_check_branch
      %1529 = sbr.rel (%p1527) target = $region60
    $region59: #{_lambda_.13} parent=5 // pred_region
      %s1530 = ssub.s32 %s14, 2
      // Predicated region
      $region61: #{_lambda_.13} parent=59 // pred_check
        %p1531 = pneg %p217
      $region62: #{_lambda_.13} parent=59 // pred_check_branch
        %1533 = sbr.rel (%p1531) target = $region64
      $region63: #{_lambda_.13} parent=59 // pred_region
        %p1534 = scmp.lt.s32.totalorder %s25, 1
        %s1535 = scalar_select %p1534, %s25, 1
        %p1536 = scmp.lt.s32.totalorder %s26, 2
        %s1537 = scalar_select %p1536, %s26, 2
        %s1538 = smul.addr %s1535, 3
        %s1539 = sadd.s32 %s1537, %s1538
        %s1540 = smul.addr %s1539, 4
        %s1541 = scalar_lea.vmem %s6, %s1540
      $region64: #{_lambda_.13} parent=59 // pred_fallthru
        _
      // Predicated region
      $region65: #{_lambda_.13} parent=59 // pred_check
        %p1542 = pneg %p243
      $region66: #{_lambda_.13} parent=59 // pred_check_branch
        %1544 = sbr.rel (%p1542) target = $region68
      $region67: #{_lambda_.13} parent=59 // pred_region
        %p1545 = scmp.lt.s32.totalorder %s25, 1
        %s1546 = scalar_select %p1545, %s25, 1
        %s1547 = smul.addr %s1546, 2
        %s1548 = scalar_lea.vmem %s7, %s1547
      $region68: #{_lambda_.13} parent=59 // pred_fallthru
        _
    $region60: #{_lambda_.13} parent=5 // pred_fallthru
      _
  $region6: #{_lambda_.13} parent=0 // loop_footer
    %s18 = sadd.s32 1, %s14
  $region7: #{_lambda_.13} parent=0 // loop_footer_branch
    %13 = sbr.rel target = $region3
  $region8: #{_lambda_.13} parent=0 // loop_exit
    _

// kernel: _lambda_.15
$region0: #{_lambda_.15}
  #allocation0 [shape = 'u32[]', space=smem, size = 0x4, offset = 0x4, fixed_abs, tag = 'smem constant byte address 0x4 - core index']
  #allocation1 [shape = 'u32[144,128]{1,0:T(1,128)}', space=vmem, size = 0x12000, scoped, tag = 'internal scratch']
  #allocation2 [shape = 'f32[1,1]{1,0:T(1,128)S(1)}', space=vmem, size = 0x200, scoped, tag = 'scoped memory for _lambda_.15']
  %s0 = inlined_call_operand.vmem [shape: bf16[2,5,5,64], index: 0, kind: input, shape index: {}, may-alias: {0,1,2,3}]
  %s1 = inlined_call_operand.vmem [shape: bf16[2,5,5,64], index: 1, kind: input, shape index: {}, may-alias: {0,1,2,3}]
  %s2 = inlined_call_operand.vmem [shape: bf16[2,5,5,64], index: 2, kind: input, shape index: {}, may-alias: {0,1,2,3}]
  %s3 = inlined_call_operand.vmem [shape: bf16[2,5,5,64], index: 3, kind: input, shape index: {}, may-alias: {0,1,2,3}]
  %s4 = inlined_call_operand.vmem [shape: bf16[16,64,1], index: 4, kind: input, shape index: {}]
  %s5 = inlined_call_operand.<no memory space> [shape: f32[1,1], index: 5, kind: input, shape index: {}]
  %s6 = inlined_call_operand.vmem [shape: f32[2,2,2,1], index: 6, kind: output, shape index: {}]
  %s7 = sld [smem:[#allocation0]]
  $region57: #{_lambda_.15} parent=0
    _
  %s9 = ssub.s32 1, %s7
  %s10 = scalar_select 0, %s9, %s7
  %v11 = vstv %s5
  %12 = vst [vmem:[#allocation2] sm:$0x1] %v11
  loop: start=0, step=1, limit=6
  $region2: #{_lambda_.15} parent=0 // loop_pre_header
    _
  $region3: #{_lambda_.15} parent=0 // loop_header
    %s14 = sphi 0, %s18
    %p15 = scmp.ge.s32.totalorder %s14, 6
    %s21 = sphi 0, %s33
    %s22 = sphi 0, %s29
    %s23 = sphi 0, %s21
    %s24 = sphi 0, %s22
    %s25 = sphi 0, %s23
    %s26 = sphi 0, %s24
    %s38 = sphi 0, %s40
    %s41 = sphi 0, %s38
    %s42 = sphi 0, %s41
    %s58 = sphi 0, %s42
    %s68 = sphi 0, %s70
    %s71 = sphi 0, %s68
    %s72 = sphi 0, %s71
    %s88 = sphi 0, %s72
    %s98 = sphi 0, %s100
    %s101 = sphi 0, %s98
    %s102 = sphi 0, %s101
    %s118 = sphi 0, %s102
    %s128 = sphi 0, %s130
    %s131 = sphi 0, %s128
    %s132 = sphi 0, %s131
    %s148 = sphi 0, %s132
    %s152 = sphi 0, %s152
    %s154 = sphi 0, %s152
    %s155 = sphi 0, %s154
    %s169 = sphi 0, %s155
    %s173 = sphi 0, %s173
    %s175 = sphi 0, %s173
    %s176 = sphi 0, %s175
    %s190 = sphi 0, %s176
    %s198 = sphi 0, %s200
    %s201 = sphi 0, %s198
    %s202 = sphi 0, %s201
    %s218 = sphi 0, %s202
  $region4: #{_lambda_.15} parent=0 // loop_header_branch
    %17 = sbr.rel (%p15) target = $region8
  $region5: #{_lambda_.15} parent=0 // loop_body
    %s19 = ssub.s32 %s14, 1
    %s20 = ssub.s32 %s14, 2
    %s27 = sadd.s32 1, %s22
    %p28 = scmp.ge.s32.totalorder %s27, 2
    %s29 = scalar_select %p28, 0, %s27
    %s30 = sadd.s32 1, %s21
    %s31 = scalar_select %p28, %s30, %s21
    %p32 = scmp.ge.s32.totalorder %s31, 2
    %s33 = scalar_select %p32, 0, %s31
    %s34 = ssub.s32 %s21, %s33
    %s35 = ssub.s32 %s22, %s29
    %s36 = sor.u32 %s34, %s35
    %p37 = scmp.eq.s32.totalorder %s36, 0
    %s39 = sadd.s32 %s38, 1
    %s40 = scalar_select %p37, %s38, %s39
    %p43 = pneg %p37
    %p44 = scmp.eq.s32.totalorder %s14, 3
    %p45 = por %p43, %p44
    %p46 = scmp.ne.s32.totalorder %s38, %s41
    %p47 = scmp.eq.s32.totalorder %s14, 0
    %p48 = por %p46, %p47
    %p49 = scmp.ne.s32.totalorder %s38, %s41
    %p50 = scmp.eq.s32.totalorder %s19, 3
    %p51 = por %p49, %p50
    %p52 = scmp.ne.s32.totalorder %s41, %s42
    %p53 = scmp.eq.s32.totalorder %s19, 0
    %p54 = por %p52, %p53
    %p55 = scmp.ne.s32.totalorder %s41, %s42
    %p56 = scmp.eq.s32.totalorder %s20, 3
    %p57 = por %p55, %p56
    %p59 = scmp.ne.s32.totalorder %s42, %s58
    %p60 = scmp.eq.s32.totalorder %s20, 0
    %p61 = por %p59, %p60
    %s62 = sadd.s32 %s22, 1
    %s63 = sadd.s32 %s29, 1
    %s64 = ssub.s32 %s21, %s33
    %s65 = ssub.s32 %s62, %s63
    %s66 = sor.u32 %s64, %s65
    %p67 = scmp.eq.s32.totalorder %s66, 0
    %s69 = sadd.s32 %s68, 1
    %s70 = scalar_select %p67, %s68, %s69
    %p73 = pneg %p67
    %p74 = scmp.eq.s32.totalorder %s14, 3
    %p75 = por %p73, %p74
    %p76 = scmp.ne.s32.totalorder %s68, %s71
    %p77 = scmp.eq.s32.totalorder %s14, 0
    %p78 = por %p76, %p77
    %p79 = scmp.ne.s32.totalorder %s68, %s71
    %p80 = scmp.eq.s32.totalorder %s19, 3
    %p81 = por %p79, %p80
    %p82 = scmp.ne.s32.totalorder %s71, %s72
    %p83 = scmp.eq.s32.totalorder %s19, 0
    %p84 = por %p82, %p83
    %p85 = scmp.ne.s32.totalorder %s71, %s72
    %p86 = scmp.eq.s32.totalorder %s20, 3
    %p87 = por %p85, %p86
    %p89 = scmp.ne.s32.totalorder %s72, %s88
    %p90 = scmp.eq.s32.totalorder %s20, 0
    %p91 = por %p89, %p90
    %s92 = sadd.s32 %s22, 2
    %s93 = sadd.s32 %s29, 2
    %s94 = ssub.s32 %s21, %s33
    %s95 = ssub.s32 %s92, %s93
    %s96 = sor.u32 %s94, %s95
    %p97 = scmp.eq.s32.totalorder %s96, 0
    %s99 = sadd.s32 %s98, 1
    %s100 = scalar_select %p97, %s98, %s99
    %p103 = pneg %p97
    %p104 = scmp.eq.s32.totalorder %s14, 3
    %p105 = por %p103, %p104
    %p106 = scmp.ne.s32.totalorder %s98, %s101
    %p107 = scmp.eq.s32.totalorder %s14, 0
    %p108 = por %p106, %p107
    %p109 = scmp.ne.s32.totalorder %s98, %s101
    %p110 = scmp.eq.s32.totalorder %s19, 3
    %p111 = por %p109, %p110
    %p112 = scmp.ne.s32.totalorder %s101, %s102
    %p113 = scmp.eq.s32.totalorder %s19, 0
    %p114 = por %p112, %p113
    %p115 = scmp.ne.s32.totalorder %s101, %s102
    %p116 = scmp.eq.s32.totalorder %s20, 3
    %p117 = por %p115, %p116
    %p119 = scmp.ne.s32.totalorder %s102, %s118
    %p120 = scmp.eq.s32.totalorder %s20, 0
    %p121 = por %p119, %p120
    %s122 = sadd.s32 %s22, 3
    %s123 = sadd.s32 %s29, 3
    %s124 = ssub.s32 %s21, %s33
    %s125 = ssub.s32 %s122, %s123
    %s126 = sor.u32 %s124, %s125
    %p127 = scmp.eq.s32.totalorder %s126, 0
    %s129 = sadd.s32 %s128, 1
    %s130 = scalar_select %p127, %s128, %s129
    %p133 = pneg %p127
    %p134 = scmp.eq.s32.totalorder %s14, 3
    %p135 = por %p133, %p134
    %p136 = scmp.ne.s32.totalorder %s128, %s131
    %p137 = scmp.eq.s32.totalorder %s14, 0
    %p138 = por %p136, %p137
    %p139 = scmp.ne.s32.totalorder %s128, %s131
    %p140 = scmp.eq.s32.totalorder %s19, 3
    %p141 = por %p139, %p140
    %p142 = scmp.ne.s32.totalorder %s131, %s132
    %p143 = scmp.eq.s32.totalorder %s19, 0
    %p144 = por %p142, %p143
    %p145 = scmp.ne.s32.totalorder %s131, %s132
    %p146 = scmp.eq.s32.totalorder %s20, 3
    %p147 = por %p145, %p146
    %p149 = scmp.ne.s32.totalorder %s132, %s148
    %p150 = scmp.eq.s32.totalorder %s20, 0
    %p151 = por %p149, %p150
    %s153 = sadd.s32 %s152, 1
    %p156 = scmp.eq.s32.totalorder %s14, 3
    %p157 = scmp.ne.s32.totalorder %s152, %s154
    %p158 = scmp.eq.s32.totalorder %s14, 0
    %p159 = por %p157, %p158
    %p160 = scmp.ne.s32.totalorder %s152, %s154
    %p161 = scmp.eq.s32.totalorder %s19, 3
    %p162 = por %p160, %p161
    %p163 = scmp.ne.s32.totalorder %s154, %s155
    %p164 = scmp.eq.s32.totalorder %s19, 0
    %p165 = por %p163, %p164
    %p166 = scmp.ne.s32.totalorder %s154, %s155
    %p167 = scmp.eq.s32.totalorder %s20, 3
    %p168 = por %p166, %p167
    %p170 = scmp.ne.s32.totalorder %s155, %s169
    %p171 = scmp.eq.s32.totalorder %s20, 0
    %p172 = por %p170, %p171
    %s174 = sadd.s32 %s173, 1
    %p177 = scmp.eq.s32.totalorder %s14, 3
    %p178 = scmp.ne.s32.totalorder %s173, %s175
    %p179 = scmp.eq.s32.totalorder %s14, 0
    %p180 = por %p178, %p179
    %p181 = scmp.ne.s32.totalorder %s173, %s175
    %p182 = scmp.eq.s32.totalorder %s19, 3
    %p183 = por %p181, %p182
    %p184 = scmp.ne.s32.totalorder %s175, %s176
    %p185 = scmp.eq.s32.totalorder %s19, 0
    %p186 = por %p184, %p185
    %p187 = scmp.ne.s32.totalorder %s175, %s176
    %p188 = scmp.eq.s32.totalorder %s20, 3
    %p189 = por %p187, %p188
    %p191 = scmp.ne.s32.totalorder %s176, %s190
    %p192 = scmp.eq.s32.totalorder %s20, 0
    %p193 = por %p191, %p192
    %s194 = ssub.s32 %s21, %s33
    %s195 = ssub.s32 %s22, %s29
    %s196 = sor.u32 %s194, %s195
    %p197 = scmp.eq.s32.totalorder %s196, 0
    %s199 = sadd.s32 %s198, 1
    %s200 = scalar_select %p197, %s198, %s199
    %p203 = pneg %p197
    %p204 = scmp.eq.s32.totalorder %s14, 3
    %p205 = por %p203, %p204
    %p206 = scmp.ne.s32.totalorder %s198, %s201
    %p207 = scmp.eq.s32.totalorder %s14, 0
    %p208 = por %p206, %p207
    %p209 = scmp.ne.s32.totalorder %s198, %s201
    %p210 = scmp.eq.s32.totalorder %s19, 3
    %p211 = por %p209, %p210
    %p212 = scmp.ne.s32.totalorder %s201, %s202
    %p213 = scmp.eq.s32.totalorder %s19, 0
    %p214 = por %p212, %p213
    %p215 = scmp.ne.s32.totalorder %s201, %s202
    %p216 = scmp.eq.s32.totalorder %s20, 3
    %p217 = por %p215, %p216
    %p219 = scmp.ne.s32.totalorder %s202, %s218
    %p220 = scmp.eq.s32.totalorder %s20, 0
    %p221 = por %p219, %p220
    %p222 = scmp.le.s32.totalorder 1, %s14
    %p223 = scmp.lt.s32.totalorder %s14, 5
    %p224 = pnand %p222, %p223
    %p225 = pneg %p224
    // Predicated region
    $region9: #{_lambda_.15} parent=5 // pred_check
      _
    $region10: #{_lambda_.15} parent=5 // pred_check_branch
      %227 = sbr.rel (%p224) target = $region12
    $region11: #{_lambda_.15} parent=5 // pred_region
      %s228 = ssub.s32 %s14, 1
      // Predicated region
      $region13: #{_lambda_.15} parent=11 // pred_check
        %p229 = pneg %p165
      $region14: #{_lambda_.15} parent=11 // pred_check_branch
        %231 = sbr.rel (%p229) target = $region16
      $region15: #{_lambda_.15} parent=11 // pred_region
        _
      $region16: #{_lambda_.15} parent=11 // pred_fallthru
        _
      // Predicated region
      $region17: #{_lambda_.15} parent=11 // pred_check
        %p232 = pneg %p186
      $region18: #{_lambda_.15} parent=11 // pred_check_branch
        %234 = sbr.rel (%p232) target = $region20
      $region19: #{_lambda_.15} parent=11 // pred_region
        _
      $region20: #{_lambda_.15} parent=11 // pred_fallthru
        _
    $region12: #{_lambda_.15} parent=5 // pred_fallthru
      _
    %p235 = scmp.lt.s32.totalorder %s14, 4
    // Predicated region
    $region21: #{_lambda_.15} parent=5 // pred_check
      %p236 = pneg %p235
    $region22: #{_lambda_.15} parent=5 // pred_check_branch
      %238 = sbr.rel (%p236) target = $region24
    $region23: #{_lambda_.15} parent=5 // pred_region
      // Predicated region
      $region25: #{_lambda_.15} parent=23 // pred_check
        %p239 = pneg %p48
      $region26: #{_lambda_.15} parent=23 // pred_check_branch
        %241 = sbr.rel (%p239) target = $region28
      $region27: #{_lambda_.15} parent=23 // pred_region
        %p242 = scmp.lt.s32.totalorder %s21, 1
        %s243 = scalar_select %p242, %s21, 1
        %p244 = scmp.lt.s32.totalorder %s22, 4
        %s245 = scalar_select %p244, %s22, 4
        %s246 = smul.addr %s243, 5
        %s247 = sadd.s32 %s245, %s246
        %s248 = smul.addr %s247, 4
        %s249 = scalar_lea.vmem %s0, %s248
      $region28: #{_lambda_.15} parent=23 // pred_fallthru
        _
      // Predicated region
      $region29: #{_lambda_.15} parent=23 // pred_check
        %p250 = pneg %p78
      $region30: #{_lambda_.15} parent=23 // pred_check_branch
        %252 = sbr.rel (%p250) target = $region32
      $region31: #{_lambda_.15} parent=23 // pred_region
        %s253 = sadd.s32 %s22, 1
        %p254 = scmp.lt.s32.totalorder %s21, 1
        %s255 = scalar_select %p254, %s21, 1
        %p256 = scmp.lt.s32.totalorder %s253, 4
        %s257 = scalar_select %p256, %s253, 4
        %s258 = smul.addr %s255, 5
        %s259 = sadd.s32 %s257, %s258
        %s260 = smul.addr %s259, 4
        %s261 = scalar_lea.vmem %s1, %s260
        %s262 = sadd.s32 %s22, 1
      $region32: #{_lambda_.15} parent=23 // pred_fallthru
        _
      // Predicated region
      $region33: #{_lambda_.15} parent=23 // pred_check
        %p263 = pneg %p108
      $region34: #{_lambda_.15} parent=23 // pred_check_branch
        %265 = sbr.rel (%p263) target = $region36
      $region35: #{_lambda_.15} parent=23 // pred_region
        %s266 = sadd.s32 %s22, 2
        %p267 = scmp.lt.s32.totalorder %s21, 1
        %s268 = scalar_select %p267, %s21, 1
        %p269 = scmp.lt.s32.totalorder %s266, 4
        %s270 = scalar_select %p269, %s266, 4
        %s271 = smul.addr %s268, 5
        %s272 = sadd.s32 %s270, %s271
        %s273 = smul.addr %s272, 4
        %s274 = scalar_lea.vmem %s2, %s273
        %s275 = sadd.s32 %s22, 2
      $region36: #{_lambda_.15} parent=23 // pred_fallthru
        _
      // Predicated region
      $region37: #{_lambda_.15} parent=23 // pred_check
        %p276 = pneg %p138
      $region38: #{_lambda_.15} parent=23 // pred_check_branch
        %278 = sbr.rel (%p276) target = $region40
      $region39: #{_lambda_.15} parent=23 // pred_region
        %s279 = sadd.s32 %s22, 3
        %p280 = scmp.lt.s32.totalorder %s21, 1
        %s281 = scalar_select %p280, %s21, 1
        %p282 = scmp.lt.s32.totalorder %s279, 4
        %s283 = scalar_select %p282, %s279, 4
        %s284 = smul.addr %s281, 5
        %s285 = sadd.s32 %s283, %s284
        %s286 = smul.addr %s285, 4
        %s287 = scalar_lea.vmem %s3, %s286
        %s288 = sadd.s32 %s22, 3
      $region40: #{_lambda_.15} parent=23 // pred_fallthru
        _
    $region24: #{_lambda_.15} parent=5 // pred_fallthru
      _
    %p289 = scmp.le.s32.totalorder 1, %s14
    %p290 = scmp.lt.s32.totalorder %s14, 5
    %p291 = pnand %p289, %p290
    %p292 = pneg %p291
    // Predicated region
    $region41: #{_lambda_.15} parent=5 // pred_check
      _
    $region42: #{_lambda_.15} parent=5 // pred_check_branch
      %294 = sbr.rel (%p291) target = $region44
    $region43: #{_lambda_.15} parent=5 // pred_region
      %s295 = ssub.s32 %s14, 1
      %p296 = scmp.lt.s32.totalorder %s23, 1
      %s297 = scalar_select %p296, %s23, 1
      %p298 = scmp.lt.s32.totalorder %s24, 4
      %s299 = scalar_select %p298, %s24, 4
      %s300 = smul.addr %s297, 5
      %s301 = sadd.s32 %s299, %s300
      %s302 = smul.addr %s301, 4
      %s303 = scalar_lea.vmem %s0, %s302
      %p304 = pneg %p54
      %p305 = pneg %p51
      %s306 = sadd.s32 %s24, 1
      %p307 = scmp.lt.s32.totalorder %s23, 1
      %s308 = scalar_select %p307, %s23, 1
      %p309 = scmp.lt.s32.totalorder %s306, 4
      %s310 = scalar_select %p309, %s306, 4
      %s311 = smul.addr %s308, 5
      %s312 = sadd.s32 %s310, %s311
      %s313 = smul.addr %s312, 4
      %s314 = scalar_lea.vmem %s1, %s313
      %p315 = pneg %p84
      %p316 = pneg %p81
      %s317 = sadd.s32 %s24, 2
      %p318 = scmp.lt.s32.totalorder %s23, 1
      %s319 = scalar_select %p318, %s23, 1
      %p320 = scmp.lt.s32.totalorder %s317, 4
      %s321 = scalar_select %p320, %s317, 4
      %s322 = smul.addr %s319, 5
      %s323 = sadd.s32 %s321, %s322
      %s324 = smul.addr %s323, 4
      %s325 = scalar_lea.vmem %s2, %s324
      %p326 = pneg %p114
      %p327 = pneg %p111
      %s328 = sadd.s32 %s24, 3
      %p329 = scmp.lt.s32.totalorder %s23, 1
      %s330 = scalar_select %p329, %s23, 1
      %p331 = scmp.lt.s32.totalorder %s328, 4
      %s332 = scalar_select %p331, %s328, 4
      %s333 = smul.addr %s330, 5
      %s334 = sadd.s32 %s332, %s333
      %s335 = smul.addr %s334, 4
      %s336 = scalar_lea.vmem %s3, %s335
      %p337 = pneg %p144
      %p338 = pneg %p141
      %p339 = pneg %p165
      %p340 = pneg %p162
      %p341 = pneg %p186
      %p342 = pneg %p183
      %p343 = pneg %p214
      %p344 = pneg %p211
      %p345 = scmp.lt.s32.totalorder %s23, 1
      %s346 = scalar_select %p345, %s23, 1
      %p347 = scmp.lt.s32.totalorder %s24, 1
      %s348 = scalar_select %p347, %s24, 1
      %s349 = smul.addr %s346, 2
      %s350 = sadd.s32 %s348, %s349
      %s351 = smul.addr %s350, 2
      %s352 = scalar_lea.vmem %s6, %s351
      %p353 = scmp.lt.s32.totalorder %s23, 1
      %s354 = scalar_select %p353, %s23, 1
      %p355 = scmp.lt.s32.totalorder %s24, 4
      %s356 = scalar_select %p355, %s24, 4
      %s357 = smul.addr %s354, 5
      %s358 = sadd.s32 %s356, %s357
      %s359 = smul.addr %s358, 4
      %s360 = scalar_lea.vmem %s0, %s359
      %s361 = sadd.s32 %s24, 1
      %p362 = scmp.lt.s32.totalorder %s23, 1
      %s363 = scalar_select %p362, %s23, 1
      %p364 = scmp.lt.s32.totalorder %s361, 4
      %s365 = scalar_select %p364, %s361, 4
      %s366 = smul.addr %s363, 5
      %s367 = sadd.s32 %s365, %s366
      %s368 = smul.addr %s367, 4
      %s369 = scalar_lea.vmem %s1, %s368
      %s370 = sadd.s32 %s24, 1
      %s371 = sadd.s32 %s24, 2
      %p372 = scmp.lt.s32.totalorder %s23, 1
      %s373 = scalar_select %p372, %s23, 1
      %p374 = scmp.lt.s32.totalorder %s371, 4
      %s375 = scalar_select %p374, %s371, 4
      %s376 = smul.addr %s373, 5
      %s377 = sadd.s32 %s375, %s376
      %s378 = smul.addr %s377, 4
      %s379 = scalar_lea.vmem %s2, %s378
      %s380 = sadd.s32 %s24, 2
      %s381 = sadd.s32 %s24, 3
      %p382 = scmp.lt.s32.totalorder %s23, 1
      %s383 = scalar_select %p382, %s23, 1
      %p384 = scmp.lt.s32.totalorder %s381, 4
      %s385 = scalar_select %p384, %s381, 4
      %s386 = smul.addr %s383, 5
      %s387 = sadd.s32 %s385, %s386
      %s388 = smul.addr %s387, 4
      %s389 = scalar_lea.vmem %s3, %s388
      %s390 = sadd.s32 %s24, 3
      %p391 = scmp.lt.s32.totalorder %s23, 1
      %s392 = scalar_select %p391, %s23, 1
      %p393 = scmp.lt.s32.totalorder %s24, 1
      %s394 = scalar_select %p393, %s24, 1
      %s395 = smul.addr %s392, 2
      %s396 = sadd.s32 %s394, %s395
      %s397 = smul.addr %s396, 2
      %s398 = scalar_lea.vmem %s6, %s397
      %v400 = vld [vmem:[%s360] sm:$0x7]
      %v401 = vld [vmem:[%s369] sm:$0x7]
      %v402 = vld [vmem:[%s379] sm:$0x7]
      %v403 = vld [vmem:[%s389] sm:$0x7]
      %v404 = vld [vmem:[%s4] sm:$0xf]
      %v405 = vld [vmem:[%s4 + $0x4] sm:$0xf]
      %v406 = vld [vmem:[%s4 + $0x8] sm:$0xf]
      %v407 = vld [vmem:[%s4 + $0xc] sm:$0xf]
      %v408 = vld [vmem:[%s4 + $0x10] sm:$0xf]
      %v409 = vld [vmem:[%s4 + $0x14] sm:$0xf]
      %v410 = vld [vmem:[%s4 + $0x18] sm:$0xf]
      %v411 = vld [vmem:[%s4 + $0x1c] sm:$0xf]
      %s412 = scalar_lea.vmem %s4, 32
      %v413 = vld [vmem:[%s412] sm:$0xf]
      %v414 = vld [vmem:[%s412 + $0x4] sm:$0xf]
      %v415 = vld [vmem:[%s412 + $0x8] sm:$0xf]
      %v416 = vld [vmem:[%s412 + $0xc] sm:$0xf]
      %v417 = vld [vmem:[%s412 + $0x10] sm:$0xf]
      %v418 = vld [vmem:[%s412 + $0x14] sm:$0xf]
      %v419 = vld [vmem:[%s412 + $0x18] sm:$0xf]
      %v420 = vld [vmem:[%s412 + $0x1c] sm:$0xf]
      %v422 = vunpack.c.l.b16 %v400
      %v423 = vpack.c.b16 %v422, %v422
      %v425 = vshrl.u32 %v423, 16
      %v427 = vshll.u32 %v423, 16
      %v429 = vrot.slane %v427, 1
      %v430 = vor.u32 %v425, %v429
      %v439 = vunpack.c.l.b16 %v413
      %v440 = vunpack.c.l.b16 %v414
      %v441 = vunpack.c.l.b16 %v415
      %v442 = vunpack.c.l.b16 %v416
      %v443 = vunpack.c.l.b16 %v417
      %v444 = vunpack.c.l.b16 %v418
      %v445 = vunpack.c.l.b16 %v419
      %v446 = vunpack.c.l.b16 %v420
      %v447 = vpack.c.b16 %v440, %v439
      %v448 = vpack.c.b16 %v442, %v441
      %v449 = vpack.c.b16 %v444, %v443
      %v450 = vpack.c.b16 %v446, %v445
      %vm455 = vcmask 523264
      %v457 = vsel %vm455, %v430, 0
      %459 = vmatprep.subr.bf16.mxu0 0
      %460 = vmatpush1.bf16.msra.mxu0 %v447
      %461 = vmatprep.subr.bf16.mxu0 0
      %462 = vmatpush1.bf16.msra.mxu0 %v448
      %463 = vmatprep.subr.bf16.mxu0 0
      %464 = vmatpush1.bf16.msra.mxu0 %v449
      %465 = vmatprep.subr.bf16.mxu0 0
      %466 = vmatpush1.bf16.msra.mxu0 %v450
      %467 = vmatprep.subr.bf16.mxu0 0
      %468 = vmatpush1.bf16.msra.mxu0 0
      %469 = vmatprep.subr.bf16.mxu0 0
      %470 = vmatpush1.bf16.msra.mxu0 0
      %471 = vmatprep.subr.bf16.mxu0 0
      %472 = vmatpush1.bf16.msra.mxu0 0
      %473 = vmatprep.subr.bf16.mxu0 0
      %474 = vmatpush1.bf16.msra.mxu0 0
      %475 = vmatprep.subr.bf16.mxu0 0
      %476 = vmatpush1.bf16.msra.mxu0 0
      %477 = vmatprep.subr.bf16.mxu0 0
      %478 = vmatpush1.bf16.msra.mxu0 0
      %479 = vmatprep.subr.bf16.mxu0 0
      %480 = vmatpush1.bf16.msra.mxu0 0
      %481 = vmatprep.subr.bf16.mxu0 0
      %482 = vmatpush1.bf16.msra.mxu0 0
      %483 = vmatprep.subr.bf16.mxu0 0
      %484 = vmatpush1.bf16.msra.mxu0 0
      %485 = vmatprep.subr.bf16.mxu0 0
      %486 = vmatpush1.bf16.msra.mxu0 0
      %487 = vmatprep.subr.bf16.mxu0 0
      %488 = vmatpush1.bf16.msra.mxu0 0
      %489 = vmatprep.subr.bf16.mxu0 0
      %490 = vmatpush1.bf16.msra.mxu0 0
      %491 = vmatprep.mubr.bf16.mxu0 0
      %492 = vmatmul.mubr.bf16.gmra.mrb[0].mxu0 %v457
      %v493 = vpop.f32.mrb[0].mxu0
      %v494 = vadd.f32 0.0, %v493
      %v495 = vpop.f32.mrb[0].mxu0
      %v496 = vpop.f32.mrb[0].mxu0
      %v497 = vpop.f32.mrb[0].mxu0
      %498 = vdwg.mxu0
      %v507 = vunpack.c.l.b16 %v404
      %v508 = vunpack.c.l.b16 %v405
      %v509 = vunpack.c.l.b16 %v406
      %v510 = vunpack.c.l.b16 %v407
      %v511 = vunpack.c.l.b16 %v408
      %v512 = vunpack.c.l.b16 %v409
      %v513 = vunpack.c.l.b16 %v410
      %v514 = vunpack.c.l.b16 %v411
      %v515 = vpack.c.b16 %v508, %v507
      %v516 = vpack.c.b16 %v510, %v509
      %v517 = vpack.c.b16 %v512, %v511
      %v518 = vpack.c.b16 %v514, %v513
      %v524 = vsel %vm455, %v400, 0
      %526 = vmatprep.subr.bf16.mxu0 0
      %527 = vmatpush1.bf16.msra.mxu0 %v515
      %528 = vmatprep.subr.bf16.mxu0 0
      %529 = vmatpush1.bf16.msra.mxu0 %v516
      %530 = vmatprep.subr.bf16.mxu0 0
      %531 = vmatpush1.bf16.msra.mxu0 %v517
      %532 = vmatprep.subr.bf16.mxu0 0
      %533 = vmatpush1.bf16.msra.mxu0 %v518
      %534 = vmatprep.subr.bf16.mxu0 0
      %535 = vmatpush1.bf16.msra.mxu0 0
      %536 = vmatprep.subr.bf16.mxu0 0
      %537 = vmatpush1.bf16.msra.mxu0 0
      %538 = vmatprep.subr.bf16.mxu0 0
      %539 = vmatpush1.bf16.msra.mxu0 0
      %540 = vmatprep.subr.bf16.mxu0 0
      %541 = vmatpush1.bf16.msra.mxu0 0
      %542 = vmatprep.subr.bf16.mxu0 0
      %543 = vmatpush1.bf16.msra.mxu0 0
      %544 = vmatprep.subr.bf16.mxu0 0
      %545 = vmatpush1.bf16.msra.mxu0 0
      %546 = vmatprep.subr.bf16.mxu0 0
      %547 = vmatpush1.bf16.msra.mxu0 0
      %548 = vmatprep.subr.bf16.mxu0 0
      %549 = vmatpush1.bf16.msra.mxu0 0
      %550 = vmatprep.subr.bf16.mxu0 0
      %551 = vmatpush1.bf16.msra.mxu0 0
      %552 = vmatprep.subr.bf16.mxu0 0
      %553 = vmatpush1.bf16.msra.mxu0 0
      %554 = vmatprep.subr.bf16.mxu0 0
      %555 = vmatpush1.bf16.msra.mxu0 0
      %556 = vmatprep.subr.bf16.mxu0 0
      %557 = vmatpush1.bf16.msra.mxu0 0
      %558 = vmatprep.mubr.bf16.mxu0 0
      %559 = vmatmul.mubr.bf16.gmra.mrb[0].mxu0 %v524
      %v560 = vpop.f32.mrb[0].mxu0
      %v561 = vadd.f32 %v494, %v560
      %v562 = vpop.f32.mrb[0].mxu0
      %v563 = vpop.f32.mrb[0].mxu0
      %v564 = vpop.f32.mrb[0].mxu0
      %565 = vdwg.mxu0
      %s566 = scalar_lea.vmem %s4, 64
      %v567 = vld [vmem:[%s566] sm:$0xf]
      %v568 = vld [vmem:[%s566 + $0x4] sm:$0xf]
      %v569 = vld [vmem:[%s566 + $0x8] sm:$0xf]
      %v570 = vld [vmem:[%s566 + $0xc] sm:$0xf]
      %v571 = vld [vmem:[%s566 + $0x10] sm:$0xf]
      %v572 = vld [vmem:[%s566 + $0x14] sm:$0xf]
      %v573 = vld [vmem:[%s566 + $0x18] sm:$0xf]
      %v574 = vld [vmem:[%s566 + $0x1c] sm:$0xf]
      %v575 = vrot.slane %v423, 1
      %v584 = vunpack.c.l.b16 %v567
      %v585 = vunpack.c.l.b16 %v568
      %v586 = vunpack.c.l.b16 %v569
      %v587 = vunpack.c.l.b16 %v570
      %v588 = vunpack.c.l.b16 %v571
      %v589 = vunpack.c.l.b16 %v572
      %v590 = vunpack.c.l.b16 %v573
      %v591 = vunpack.c.l.b16 %v574
      %v592 = vpack.c.b16 %v585, %v584
      %v593 = vpack.c.b16 %v587, %v586
      %v594 = vpack.c.b16 %v589, %v588
      %v595 = vpack.c.b16 %v591, %v590
      %v601 = vsel %vm455, %v575, 0
      %603 = vmatprep.subr.bf16.mxu0 0
      %604 = vmatpush1.bf16.msra.mxu0 %v592
      %605 = vmatprep.subr.bf16.mxu0 0
      %606 = vmatpush1.bf16.msra.mxu0 %v593
      %607 = vmatprep.subr.bf16.mxu0 0
      %608 = vmatpush1.bf16.msra.mxu0 %v594
      %609 = vmatprep.subr.bf16.mxu0 0
      %610 = vmatpush1.bf16.msra.mxu0 %v595
      %611 = vmatprep.subr.bf16.mxu0 0
      %612 = vmatpush1.bf16.msra.mxu0 0
      %613 = vmatprep.subr.bf16.mxu0 0
      %614 = vmatpush1.bf16.msra.mxu0 0
      %615 = vmatprep.subr.bf16.mxu0 0
      %616 = vmatpush1.bf16.msra.mxu0 0
      %617 = vmatprep.subr.bf16.mxu0 0
      %618 = vmatpush1.bf16.msra.mxu0 0
      %619 = vmatprep.subr.bf16.mxu0 0
      %620 = vmatpush1.bf16.msra.mxu0 0
      %621 = vmatprep.subr.bf16.mxu0 0
      %622 = vmatpush1.bf16.msra.mxu0 0
      %623 = vmatprep.subr.bf16.mxu0 0
      %624 = vmatpush1.bf16.msra.mxu0 0
      %625 = vmatprep.subr.bf16.mxu0 0
      %626 = vmatpush1.bf16.msra.mxu0 0
      %627 = vmatprep.subr.bf16.mxu0 0
      %628 = vmatpush1.bf16.msra.mxu0 0
      %629 = vmatprep.subr.bf16.mxu0 0
      %630 = vmatpush1.bf16.msra.mxu0 0
      %631 = vmatprep.subr.bf16.mxu0 0
      %632 = vmatpush1.bf16.msra.mxu0 0
      %633 = vmatprep.subr.bf16.mxu0 0
      %634 = vmatpush1.bf16.msra.mxu0 0
      %635 = vmatprep.mubr.bf16.mxu0 0
      %636 = vmatmul.mubr.bf16.gmra.mrb[0].mxu0 %v601
      %v637 = vpop.f32.mrb[0].mxu0
      %v638 = vadd.f32 0.0, %v637
      %v639 = vpop.f32.mrb[0].mxu0
      %v640 = vpop.f32.mrb[0].mxu0
      %v641 = vpop.f32.mrb[0].mxu0
      %642 = vdwg.mxu0
      %v643 = vadd.f32 %v561, %v638
      %s644 = scalar_lea.vmem %s4, 96
      %v645 = vld [vmem:[%s644] sm:$0xf]
      %v646 = vld [vmem:[%s644 + $0x4] sm:$0xf]
      %v647 = vld [vmem:[%s644 + $0x8] sm:$0xf]
      %v648 = vld [vmem:[%s644 + $0xc] sm:$0xf]
      %v649 = vld [vmem:[%s644 + $0x10] sm:$0xf]
      %v650 = vld [vmem:[%s644 + $0x14] sm:$0xf]
      %v651 = vld [vmem:[%s644 + $0x18] sm:$0xf]
      %v652 = vld [vmem:[%s644 + $0x1c] sm:$0xf]
      %v653 = vrot.slane %v425, 1
      %v654 = vrot.slane %v427, 2
      %v655 = vor.u32 %v653, %v654
      %v664 = vunpack.c.l.b16 %v645
      %v665 = vunpack.c.l.b16 %v646
      %v666 = vunpack.c.l.b16 %v647
      %v667 = vunpack.c.l.b16 %v648
      %v668 = vunpack.c.l.b16 %v649
      %v669 = vunpack.c.l.b16 %v650
      %v670 = vunpack.c.l.b16 %v651
      %v671 = vunpack.c.l.b16 %v652
      %v672 = vpack.c.b16 %v665, %v664
      %v673 = vpack.c.b16 %v667, %v666
      %v674 = vpack.c.b16 %v669, %v668
      %v675 = vpack.c.b16 %v671, %v670
      %v681 = vsel %vm455, %v655, 0
      %683 = vmatprep.subr.bf16.mxu0 0
      %684 = vmatpush1.bf16.msra.mxu0 %v672
      %685 = vmatprep.subr.bf16.mxu0 0
      %686 = vmatpush1.bf16.msra.mxu0 %v673
      %687 = vmatprep.subr.bf16.mxu0 0
      %688 = vmatpush1.bf16.msra.mxu0 %v674
      %689 = vmatprep.subr.bf16.mxu0 0
      %690 = vmatpush1.bf16.msra.mxu0 %v675
      %691 = vmatprep.subr.bf16.mxu0 0
      %692 = vmatpush1.bf16.msra.mxu0 0
      %693 = vmatprep.subr.bf16.mxu0 0
      %694 = vmatpush1.bf16.msra.mxu0 0
      %695 = vmatprep.subr.bf16.mxu0 0
      %696 = vmatpush1.bf16.msra.mxu0 0
      %697 = vmatprep.subr.bf16.mxu0 0
      %698 = vmatpush1.bf16.msra.mxu0 0
      %699 = vmatprep.subr.bf16.mxu0 0
      %700 = vmatpush1.bf16.msra.mxu0 0
      %701 = vmatprep.subr.bf16.mxu0 0
      %702 = vmatpush1.bf16.msra.mxu0 0
      %703 = vmatprep.subr.bf16.mxu0 0
      %704 = vmatpush1.bf16.msra.mxu0 0
      %705 = vmatprep.subr.bf16.mxu0 0
      %706 = vmatpush1.bf16.msra.mxu0 0
      %707 = vmatprep.subr.bf16.mxu0 0
      %708 = vmatpush1.bf16.msra.mxu0 0
      %709 = vmatprep.subr.bf16.mxu0 0
      %710 = vmatpush1.bf16.msra.mxu0 0
      %711 = vmatprep.subr.bf16.mxu0 0
      %712 = vmatpush1.bf16.msra.mxu0 0
      %713 = vmatprep.subr.bf16.mxu0 0
      %714 = vmatpush1.bf16.msra.mxu0 0
      %715 = vmatprep.mubr.bf16.mxu0 0
      %716 = vmatmul.mubr.bf16.gmra.mrb[0].mxu0 %v681
      %v717 = vpop.f32.mrb[0].mxu0
      %v718 = vadd.f32 0.0, %v717
      %v719 = vpop.f32.mrb[0].mxu0
      %v720 = vpop.f32.mrb[0].mxu0
      %v721 = vpop.f32.mrb[0].mxu0
      %722 = vdwg.mxu0
      %v723 = vadd.f32 %v643, %v718
      %s724 = scalar_lea.vmem %s4, 128
      %v725 = vld [vmem:[%s724] sm:$0xf]
      %v726 = vld [vmem:[%s724 + $0x4] sm:$0xf]
      %v727 = vld [vmem:[%s724 + $0x8] sm:$0xf]
      %v728 = vld [vmem:[%s724 + $0xc] sm:$0xf]
      %v729 = vld [vmem:[%s724 + $0x10] sm:$0xf]
      %v730 = vld [vmem:[%s724 + $0x14] sm:$0xf]
      %v731 = vld [vmem:[%s724 + $0x18] sm:$0xf]
      %v732 = vld [vmem:[%s724 + $0x1c] sm:$0xf]
      %v741 = vunpack.c.l.b16 %v725
      %v742 = vunpack.c.l.b16 %v726
      %v743 = vunpack.c.l.b16 %v727
      %v744 = vunpack.c.l.b16 %v728
      %v745 = vunpack.c.l.b16 %v729
      %v746 = vunpack.c.l.b16 %v730
      %v747 = vunpack.c.l.b16 %v731
      %v748 = vunpack.c.l.b16 %v732
      %v749 = vpack.c.b16 %v742, %v741
      %v750 = vpack.c.b16 %v744, %v743
      %v751 = vpack.c.b16 %v746, %v745
      %v752 = vpack.c.b16 %v748, %v747
      %v758 = vsel %vm455, %v401, 0
      %760 = vmatprep.subr.bf16.mxu0 0
      %761 = vmatpush1.bf16.msra.mxu0 %v749
      %762 = vmatprep.subr.bf16.mxu0 0
      %763 = vmatpush1.bf16.msra.mxu0 %v750
      %764 = vmatprep.subr.bf16.mxu0 0
      %765 = vmatpush1.bf16.msra.mxu0 %v751
      %766 = vmatprep.subr.bf16.mxu0 0
      %767 = vmatpush1.bf16.msra.mxu0 %v752
      %768 = vmatprep.subr.bf16.mxu0 0
      %769 = vmatpush1.bf16.msra.mxu0 0
      %770 = vmatprep.subr.bf16.mxu0 0
      %771 = vmatpush1.bf16.msra.mxu0 0
      %772 = vmatprep.subr.bf16.mxu0 0
      %773 = vmatpush1.bf16.msra.mxu0 0
      %774 = vmatprep.subr.bf16.mxu0 0
      %775 = vmatpush1.bf16.msra.mxu0 0
      %776 = vmatprep.subr.bf16.mxu0 0
      %777 = vmatpush1.bf16.msra.mxu0 0
      %778 = vmatprep.subr.bf16.mxu0 0
      %779 = vmatpush1.bf16.msra.mxu0 0
      %780 = vmatprep.subr.bf16.mxu0 0
      %781 = vmatpush1.bf16.msra.mxu0 0
      %782 = vmatprep.subr.bf16.mxu0 0
      %783 = vmatpush1.bf16.msra.mxu0 0
      %784 = vmatprep.subr.bf16.mxu0 0
      %785 = vmatpush1.bf16.msra.mxu0 0
      %786 = vmatprep.subr.bf16.mxu0 0
      %787 = vmatpush1.bf16.msra.mxu0 0
      %788 = vmatprep.subr.bf16.mxu0 0
      %789 = vmatpush1.bf16.msra.mxu0 0
      %790 = vmatprep.subr.bf16.mxu0 0
      %791 = vmatpush1.bf16.msra.mxu0 0
      %792 = vmatprep.mubr.bf16.mxu0 0
      %793 = vmatmul.mubr.bf16.gmra.mrb[0].mxu0 %v758
      %v794 = vpop.f32.mrb[0].mxu0
      %v795 = vadd.f32 0.0, %v794
      %v796 = vpop.f32.mrb[0].mxu0
      %v797 = vpop.f32.mrb[0].mxu0
      %v798 = vpop.f32.mrb[0].mxu0
      %799 = vdwg.mxu0
      %v800 = vadd.f32 %v723, %v795
      %s801 = scalar_lea.vmem %s4, 160
      %v802 = vld [vmem:[%s801] sm:$0xf]
      %v803 = vld [vmem:[%s801 + $0x4] sm:$0xf]
      %v804 = vld [vmem:[%s801 + $0x8] sm:$0xf]
      %v805 = vld [vmem:[%s801 + $0xc] sm:$0xf]
      %v806 = vld [vmem:[%s801 + $0x10] sm:$0xf]
      %v807 = vld [vmem:[%s801 + $0x14] sm:$0xf]
      %v808 = vld [vmem:[%s801 + $0x18] sm:$0xf]
      %v809 = vld [vmem:[%s801 + $0x1c] sm:$0xf]
      %v811 = vunpack.c.l.b16 %v401
      %v812 = vpack.c.b16 %v811, %v811
      %v814 = vshrl.u32 %v812, 16
      %v816 = vshll.u32 %v812, 16
      %v818 = vrot.slane %v816, 1
      %v819 = vor.u32 %v814, %v818
      %v828 = vunpack.c.l.b16 %v802
      %v829 = vunpack.c.l.b16 %v803
      %v830 = vunpack.c.l.b16 %v804
      %v831 = vunpack.c.l.b16 %v805
      %v832 = vunpack.c.l.b16 %v806
      %v833 = vunpack.c.l.b16 %v807
      %v834 = vunpack.c.l.b16 %v808
      %v835 = vunpack.c.l.b16 %v809
      %v836 = vpack.c.b16 %v829, %v828
      %v837 = vpack.c.b16 %v831, %v830
      %v838 = vpack.c.b16 %v833, %v832
      %v839 = vpack.c.b16 %v835, %v834
      %v845 = vsel %vm455, %v819, 0
      %847 = vmatprep.subr.bf16.mxu0 0
      %848 = vmatpush1.bf16.msra.mxu0 %v836
      %849 = vmatprep.subr.bf16.mxu0 0
      %850 = vmatpush1.bf16.msra.mxu0 %v837
      %851 = vmatprep.subr.bf16.mxu0 0
      %852 = vmatpush1.bf16.msra.mxu0 %v838
      %853 = vmatprep.subr.bf16.mxu0 0
      %854 = vmatpush1.bf16.msra.mxu0 %v839
      %855 = vmatprep.subr.bf16.mxu0 0
      %856 = vmatpush1.bf16.msra.mxu0 0
      %857 = vmatprep.subr.bf16.mxu0 0
      %858 = vmatpush1.bf16.msra.mxu0 0
      %859 = vmatprep.subr.bf16.mxu0 0
      %860 = vmatpush1.bf16.msra.mxu0 0
      %861 = vmatprep.subr.bf16.mxu0 0
      %862 = vmatpush1.bf16.msra.mxu0 0
      %863 = vmatprep.subr.bf16.mxu0 0
      %864 = vmatpush1.bf16.msra.mxu0 0
      %865 = vmatprep.subr.bf16.mxu0 0
      %866 = vmatpush1.bf16.msra.mxu0 0
      %867 = vmatprep.subr.bf16.mxu0 0
      %868 = vmatpush1.bf16.msra.mxu0 0
      %869 = vmatprep.subr.bf16.mxu0 0
      %870 = vmatpush1.bf16.msra.mxu0 0
      %871 = vmatprep.subr.bf16.mxu0 0
      %872 = vmatpush1.bf16.msra.mxu0 0
      %873 = vmatprep.subr.bf16.mxu0 0
      %874 = vmatpush1.bf16.msra.mxu0 0
      %875 = vmatprep.subr.bf16.mxu0 0
      %876 = vmatpush1.bf16.msra.mxu0 0
      %877 = vmatprep.subr.bf16.mxu0 0
      %878 = vmatpush1.bf16.msra.mxu0 0
      %879 = vmatprep.mubr.bf16.mxu0 0
      %880 = vmatmul.mubr.bf16.gmra.mrb[0].mxu0 %v845
      %v881 = vpop.f32.mrb[0].mxu0
      %v882 = vadd.f32 0.0, %v881
      %v883 = vpop.f32.mrb[0].mxu0
      %v884 = vpop.f32.mrb[0].mxu0
      %v885 = vpop.f32.mrb[0].mxu0
      %886 = vdwg.mxu0
      %v887 = vadd.f32 %v800, %v882
      %s888 = scalar_lea.vmem %s4, 192
      %v889 = vld [vmem:[%s888] sm:$0xf]
      %v890 = vld [vmem:[%s888 + $0x4] sm:$0xf]
      %v891 = vld [vmem:[%s888 + $0x8] sm:$0xf]
      %v892 = vld [vmem:[%s888 + $0xc] sm:$0xf]
      %v893 = vld [vmem:[%s888 + $0x10] sm:$0xf]
      %v894 = vld [vmem:[%s888 + $0x14] sm:$0xf]
      %v895 = vld [vmem:[%s888 + $0x18] sm:$0xf]
      %v896 = vld [vmem:[%s888 + $0x1c] sm:$0xf]
      %v897 = vrot.slane %v812, 1
      %v906 = vunpack.c.l.b16 %v889
      %v907 = vunpack.c.l.b16 %v890
      %v908 = vunpack.c.l.b16 %v891
      %v909 = vunpack.c.l.b16 %v892
      %v910 = vunpack.c.l.b16 %v893
      %v911 = vunpack.c.l.b16 %v894
      %v912 = vunpack.c.l.b16 %v895
      %v913 = vunpack.c.l.b16 %v896
      %v914 = vpack.c.b16 %v907, %v906
      %v915 = vpack.c.b16 %v909, %v908
      %v916 = vpack.c.b16 %v911, %v910
      %v917 = vpack.c.b16 %v913, %v912
      %v923 = vsel %vm455, %v897, 0
      %925 = vmatprep.subr.bf16.mxu0 0
      %926 = vmatpush1.bf16.msra.mxu0 %v914
      %927 = vmatprep.subr.bf16.mxu0 0
      %928 = vmatpush1.bf16.msra.mxu0 %v915
      %929 = vmatprep.subr.bf16.mxu0 0
      %930 = vmatpush1.bf16.msra.mxu0 %v916
      %931 = vmatprep.subr.bf16.mxu0 0
      %932 = vmatpush1.bf16.msra.mxu0 %v917
      %933 = vmatprep.subr.bf16.mxu0 0
      %934 = vmatpush1.bf16.msra.mxu0 0
      %935 = vmatprep.subr.bf16.mxu0 0
      %936 = vmatpush1.bf16.msra.mxu0 0
      %937 = vmatprep.subr.bf16.mxu0 0
      %938 = vmatpush1.bf16.msra.mxu0 0
      %939 = vmatprep.subr.bf16.mxu0 0
      %940 = vmatpush1.bf16.msra.mxu0 0
      %941 = vmatprep.subr.bf16.mxu0 0
      %942 = vmatpush1.bf16.msra.mxu0 0
      %943 = vmatprep.subr.bf16.mxu0 0
      %944 = vmatpush1.bf16.msra.mxu0 0
      %945 = vmatprep.subr.bf16.mxu0 0
      %946 = vmatpush1.bf16.msra.mxu0 0
      %947 = vmatprep.subr.bf16.mxu0 0
      %948 = vmatpush1.bf16.msra.mxu0 0
      %949 = vmatprep.subr.bf16.mxu0 0
      %950 = vmatpush1.bf16.msra.mxu0 0
      %951 = vmatprep.subr.bf16.mxu0 0
      %952 = vmatpush1.bf16.msra.mxu0 0
      %953 = vmatprep.subr.bf16.mxu0 0
      %954 = vmatpush1.bf16.msra.mxu0 0
      %955 = vmatprep.subr.bf16.mxu0 0
      %956 = vmatpush1.bf16.msra.mxu0 0
      %957 = vmatprep.mubr.bf16.mxu0 0
      %958 = vmatmul.mubr.bf16.gmra.mrb[0].mxu0 %v923
      %v959 = vpop.f32.mrb[0].mxu0
      %v960 = vadd.f32 0.0, %v959
      %v961 = vpop.f32.mrb[0].mxu0
      %v962 = vpop.f32.mrb[0].mxu0
      %v963 = vpop.f32.mrb[0].mxu0
      %964 = vdwg.mxu0
      %v965 = vadd.f32 %v887, %v960
      %s966 = scalar_lea.vmem %s4, 224
      %v967 = vld [vmem:[%s966] sm:$0xf]
      %v968 = vld [vmem:[%s966 + $0x4] sm:$0xf]
      %v969 = vld [vmem:[%s966 + $0x8] sm:$0xf]
      %v970 = vld [vmem:[%s966 + $0xc] sm:$0xf]
      %v971 = vld [vmem:[%s966 + $0x10] sm:$0xf]
      %v972 = vld [vmem:[%s966 + $0x14] sm:$0xf]
      %v973 = vld [vmem:[%s966 + $0x18] sm:$0xf]
      %v974 = vld [vmem:[%s966 + $0x1c] sm:$0xf]
      %v975 = vrot.slane %v814, 1
      %v976 = vrot.slane %v816, 2
      %v977 = vor.u32 %v975, %v976
      %v986 = vunpack.c.l.b16 %v967
      %v987 = vunpack.c.l.b16 %v968
      %v988 = vunpack.c.l.b16 %v969
      %v989 = vunpack.c.l.b16 %v970
      %v990 = vunpack.c.l.b16 %v971
      %v991 = vunpack.c.l.b16 %v972
      %v992 = vunpack.c.l.b16 %v973
      %v993 = vunpack.c.l.b16 %v974
      %v994 = vpack.c.b16 %v987, %v986
      %v995 = vpack.c.b16 %v989, %v988
      %v996 = vpack.c.b16 %v991, %v990
      %v997 = vpack.c.b16 %v993, %v992
      %v1003 = vsel %vm455, %v977, 0
      %1005 = vmatprep.subr.bf16.mxu0 0
      %1006 = vmatpush1.bf16.msra.mxu0 %v994
      %1007 = vmatprep.subr.bf16.mxu0 0
      %1008 = vmatpush1.bf16.msra.mxu0 %v995
      %1009 = vmatprep.subr.bf16.mxu0 0
      %1010 = vmatpush1.bf16.msra.mxu0 %v996
      %1011 = vmatprep.subr.bf16.mxu0 0
      %1012 = vmatpush1.bf16.msra.mxu0 %v997
      %1013 = vmatprep.subr.bf16.mxu0 0
      %1014 = vmatpush1.bf16.msra.mxu0 0
      %1015 = vmatprep.subr.bf16.mxu0 0
      %1016 = vmatpush1.bf16.msra.mxu0 0
      %1017 = vmatprep.subr.bf16.mxu0 0
      %1018 = vmatpush1.bf16.msra.mxu0 0
      %1019 = vmatprep.subr.bf16.mxu0 0
      %1020 = vmatpush1.bf16.msra.mxu0 0
      %1021 = vmatprep.subr.bf16.mxu0 0
      %1022 = vmatpush1.bf16.msra.mxu0 0
      %1023 = vmatprep.subr.bf16.mxu0 0
      %1024 = vmatpush1.bf16.msra.mxu0 0
      %1025 = vmatprep.subr.bf16.mxu0 0
      %1026 = vmatpush1.bf16.msra.mxu0 0
      %1027 = vmatprep.subr.bf16.mxu0 0
      %1028 = vmatpush1.bf16.msra.mxu0 0
      %1029 = vmatprep.subr.bf16.mxu0 0
      %1030 = vmatpush1.bf16.msra.mxu0 0
      %1031 = vmatprep.subr.bf16.mxu0 0
      %1032 = vmatpush1.bf16.msra.mxu0 0
      %1033 = vmatprep.subr.bf16.mxu0 0
      %1034 = vmatpush1.bf16.msra.mxu0 0
      %1035 = vmatprep.subr.bf16.mxu0 0
      %1036 = vmatpush1.bf16.msra.mxu0 0
      %1037 = vmatprep.mubr.bf16.mxu0 0
      %1038 = vmatmul.mubr.bf16.gmra.mrb[0].mxu0 %v1003
      %v1039 = vpop.f32.mrb[0].mxu0
      %v1040 = vadd.f32 0.0, %v1039
      %v1041 = vpop.f32.mrb[0].mxu0
      %v1042 = vpop.f32.mrb[0].mxu0
      %v1043 = vpop.f32.mrb[0].mxu0
      %1044 = vdwg.mxu0
      %v1045 = vadd.f32 %v965, %v1040
      %s1046 = scalar_lea.vmem %s4, 256
      %v1047 = vld [vmem:[%s1046] sm:$0xf]
      %v1048 = vld [vmem:[%s1046 + $0x4] sm:$0xf]
      %v1049 = vld [vmem:[%s1046 + $0x8] sm:$0xf]
      %v1050 = vld [vmem:[%s1046 + $0xc] sm:$0xf]
      %v1051 = vld [vmem:[%s1046 + $0x10] sm:$0xf]
      %v1052 = vld [vmem:[%s1046 + $0x14] sm:$0xf]
      %v1053 = vld [vmem:[%s1046 + $0x18] sm:$0xf]
      %v1054 = vld [vmem:[%s1046 + $0x1c] sm:$0xf]
      %v1063 = vunpack.c.l.b16 %v1047
      %v1064 = vunpack.c.l.b16 %v1048
      %v1065 = vunpack.c.l.b16 %v1049
      %v1066 = vunpack.c.l.b16 %v1050
      %v1067 = vunpack.c.l.b16 %v1051
      %v1068 = vunpack.c.l.b16 %v1052
      %v1069 = vunpack.c.l.b16 %v1053
      %v1070 = vunpack.c.l.b16 %v1054
      %v1071 = vpack.c.b16 %v1064, %v1063
      %v1072 = vpack.c.b16 %v1066, %v1065
      %v1073 = vpack.c.b16 %v1068, %v1067
      %v1074 = vpack.c.b16 %v1070, %v1069
      %v1080 = vsel %vm455, %v402, 0
      %1082 = vmatprep.subr.bf16.mxu0 0
      %1083 = vmatpush1.bf16.msra.mxu0 %v1071
      %1084 = vmatprep.subr.bf16.mxu0 0
      %1085 = vmatpush1.bf16.msra.mxu0 %v1072
      %1086 = vmatprep.subr.bf16.mxu0 0
      %1087 = vmatpush1.bf16.msra.mxu0 %v1073
      %1088 = vmatprep.subr.bf16.mxu0 0
      %1089 = vmatpush1.bf16.msra.mxu0 %v1074
      %1090 = vmatprep.subr.bf16.mxu0 0
      %1091 = vmatpush1.bf16.msra.mxu0 0
      %1092 = vmatprep.subr.bf16.mxu0 0
      %1093 = vmatpush1.bf16.msra.mxu0 0
      %1094 = vmatprep.subr.bf16.mxu0 0
      %1095 = vmatpush1.bf16.msra.mxu0 0
      %1096 = vmatprep.subr.bf16.mxu0 0
      %1097 = vmatpush1.bf16.msra.mxu0 0
      %1098 = vmatprep.subr.bf16.mxu0 0
      %1099 = vmatpush1.bf16.msra.mxu0 0
      %1100 = vmatprep.subr.bf16.mxu0 0
      %1101 = vmatpush1.bf16.msra.mxu0 0
      %1102 = vmatprep.subr.bf16.mxu0 0
      %1103 = vmatpush1.bf16.msra.mxu0 0
      %1104 = vmatprep.subr.bf16.mxu0 0
      %1105 = vmatpush1.bf16.msra.mxu0 0
      %1106 = vmatprep.subr.bf16.mxu0 0
      %1107 = vmatpush1.bf16.msra.mxu0 0
      %1108 = vmatprep.subr.bf16.mxu0 0
      %1109 = vmatpush1.bf16.msra.mxu0 0
      %1110 = vmatprep.subr.bf16.mxu0 0
      %1111 = vmatpush1.bf16.msra.mxu0 0
      %1112 = vmatprep.subr.bf16.mxu0 0
      %1113 = vmatpush1.bf16.msra.mxu0 0
      %1114 = vmatprep.mubr.bf16.mxu0 0
      %1115 = vmatmul.mubr.bf16.gmra.mrb[0].mxu0 %v1080
      %v1116 = vpop.f32.mrb[0].mxu0
      %v1117 = vadd.f32 0.0, %v1116
      %v1118 = vpop.f32.mrb[0].mxu0
      %v1119 = vpop.f32.mrb[0].mxu0
      %v1120 = vpop.f32.mrb[0].mxu0
      %1121 = vdwg.mxu0
      %v1122 = vadd.f32 %v1045, %v1117
      %s1123 = scalar_lea.vmem %s4, 288
      %v1124 = vld [vmem:[%s1123] sm:$0xf]
      %v1125 = vld [vmem:[%s1123 + $0x4] sm:$0xf]
      %v1126 = vld [vmem:[%s1123 + $0x8] sm:$0xf]
      %v1127 = vld [vmem:[%s1123 + $0xc] sm:$0xf]
      %v1128 = vld [vmem:[%s1123 + $0x10] sm:$0xf]
      %v1129 = vld [vmem:[%s1123 + $0x14] sm:$0xf]
      %v1130 = vld [vmem:[%s1123 + $0x18] sm:$0xf]
      %v1131 = vld [vmem:[%s1123 + $0x1c] sm:$0xf]
      %v1133 = vunpack.c.l.b16 %v402
      %v1134 = vpack.c.b16 %v1133, %v1133
      %v1136 = vshrl.u32 %v1134, 16
      %v1138 = vshll.u32 %v1134, 16
      %v1140 = vrot.slane %v1138, 1
      %v1141 = vor.u32 %v1136, %v1140
      %v1150 = vunpack.c.l.b16 %v1124
      %v1151 = vunpack.c.l.b16 %v1125
      %v1152 = vunpack.c.l.b16 %v1126
      %v1153 = vunpack.c.l.b16 %v1127
      %v1154 = vunpack.c.l.b16 %v1128
      %v1155 = vunpack.c.l.b16 %v1129
      %v1156 = vunpack.c.l.b16 %v1130
      %v1157 = vunpack.c.l.b16 %v1131
      %v1158 = vpack.c.b16 %v1151, %v1150
      %v1159 = vpack.c.b16 %v1153, %v1152
      %v1160 = vpack.c.b16 %v1155, %v1154
      %v1161 = vpack.c.b16 %v1157, %v1156
      %v1167 = vsel %vm455, %v1141, 0
      %1169 = vmatprep.subr.bf16.mxu0 0
      %1170 = vmatpush1.bf16.msra.mxu0 %v1158
      %1171 = vmatprep.subr.bf16.mxu0 0
      %1172 = vmatpush1.bf16.msra.mxu0 %v1159
      %1173 = vmatprep.subr.bf16.mxu0 0
      %1174 = vmatpush1.bf16.msra.mxu0 %v1160
      %1175 = vmatprep.subr.bf16.mxu0 0
      %1176 = vmatpush1.bf16.msra.mxu0 %v1161
      %1177 = vmatprep.subr.bf16.mxu0 0
      %1178 = vmatpush1.bf16.msra.mxu0 0
      %1179 = vmatprep.subr.bf16.mxu0 0
      %1180 = vmatpush1.bf16.msra.mxu0 0
      %1181 = vmatprep.subr.bf16.mxu0 0
      %1182 = vmatpush1.bf16.msra.mxu0 0
      %1183 = vmatprep.subr.bf16.mxu0 0
      %1184 = vmatpush1.bf16.msra.mxu0 0
      %1185 = vmatprep.subr.bf16.mxu0 0
      %1186 = vmatpush1.bf16.msra.mxu0 0
      %1187 = vmatprep.subr.bf16.mxu0 0
      %1188 = vmatpush1.bf16.msra.mxu0 0
      %1189 = vmatprep.subr.bf16.mxu0 0
      %1190 = vmatpush1.bf16.msra.mxu0 0
      %1191 = vmatprep.subr.bf16.mxu0 0
      %1192 = vmatpush1.bf16.msra.mxu0 0
      %1193 = vmatprep.subr.bf16.mxu0 0
      %1194 = vmatpush1.bf16.msra.mxu0 0
      %1195 = vmatprep.subr.bf16.mxu0 0
      %1196 = vmatpush1.bf16.msra.mxu0 0
      %1197 = vmatprep.subr.bf16.mxu0 0
      %1198 = vmatpush1.bf16.msra.mxu0 0
      %1199 = vmatprep.subr.bf16.mxu0 0
      %1200 = vmatpush1.bf16.msra.mxu0 0
      %1201 = vmatprep.mubr.bf16.mxu0 0
      %1202 = vmatmul.mubr.bf16.gmra.mrb[0].mxu0 %v1167
      %v1203 = vpop.f32.mrb[0].mxu0
      %v1204 = vadd.f32 0.0, %v1203
      %v1205 = vpop.f32.mrb[0].mxu0
      %v1206 = vpop.f32.mrb[0].mxu0
      %v1207 = vpop.f32.mrb[0].mxu0
      %1208 = vdwg.mxu0
      %v1209 = vadd.f32 %v1122, %v1204
      %s1210 = scalar_lea.vmem %s4, 320
      %v1211 = vld [vmem:[%s1210] sm:$0xf]
      %v1212 = vld [vmem:[%s1210 + $0x4] sm:$0xf]
      %v1213 = vld [vmem:[%s1210 + $0x8] sm:$0xf]
      %v1214 = vld [vmem:[%s1210 + $0xc] sm:$0xf]
      %v1215 = vld [vmem:[%s1210 + $0x10] sm:$0xf]
      %v1216 = vld [vmem:[%s1210 + $0x14] sm:$0xf]
      %v1217 = vld [vmem:[%s1210 + $0x18] sm:$0xf]
      %v1218 = vld [vmem:[%s1210 + $0x1c] sm:$0xf]
      %v1219 = vrot.slane %v1134, 1
      %v1228 = vunpack.c.l.b16 %v1211
      %v1229 = vunpack.c.l.b16 %v1212
      %v1230 = vunpack.c.l.b16 %v1213
      %v1231 = vunpack.c.l.b16 %v1214
      %v1232 = vunpack.c.l.b16 %v1215
      %v1233 = vunpack.c.l.b16 %v1216
      %v1234 = vunpack.c.l.b16 %v1217
      %v1235 = vunpack.c.l.b16 %v1218
      %v1236 = vpack.c.b16 %v1229, %v1228
      %v1237 = vpack.c.b16 %v1231, %v1230
      %v1238 = vpack.c.b16 %v1233, %v1232
      %v1239 = vpack.c.b16 %v1235, %v1234
      %v1245 = vsel %vm455, %v1219, 0
      %1247 = vmatprep.subr.bf16.mxu0 0
      %1248 = vmatpush1.bf16.msra.mxu0 %v1236
      %1249 = vmatprep.subr.bf16.mxu0 0
      %1250 = vmatpush1.bf16.msra.mxu0 %v1237
      %1251 = vmatprep.subr.bf16.mxu0 0
      %1252 = vmatpush1.bf16.msra.mxu0 %v1238
      %1253 = vmatprep.subr.bf16.mxu0 0
      %1254 = vmatpush1.bf16.msra.mxu0 %v1239
      %1255 = vmatprep.subr.bf16.mxu0 0
      %1256 = vmatpush1.bf16.msra.mxu0 0
      %1257 = vmatprep.subr.bf16.mxu0 0
      %1258 = vmatpush1.bf16.msra.mxu0 0
      %1259 = vmatprep.subr.bf16.mxu0 0
      %1260 = vmatpush1.bf16.msra.mxu0 0
      %1261 = vmatprep.subr.bf16.mxu0 0
      %1262 = vmatpush1.bf16.msra.mxu0 0
      %1263 = vmatprep.subr.bf16.mxu0 0
      %1264 = vmatpush1.bf16.msra.mxu0 0
      %1265 = vmatprep.subr.bf16.mxu0 0
      %1266 = vmatpush1.bf16.msra.mxu0 0
      %1267 = vmatprep.subr.bf16.mxu0 0
      %1268 = vmatpush1.bf16.msra.mxu0 0
      %1269 = vmatprep.subr.bf16.mxu0 0
      %1270 = vmatpush1.bf16.msra.mxu0 0
      %1271 = vmatprep.subr.bf16.mxu0 0
      %1272 = vmatpush1.bf16.msra.mxu0 0
      %1273 = vmatprep.subr.bf16.mxu0 0
      %1274 = vmatpush1.bf16.msra.mxu0 0
      %1275 = vmatprep.subr.bf16.mxu0 0
      %1276 = vmatpush1.bf16.msra.mxu0 0
      %1277 = vmatprep.subr.bf16.mxu0 0
      %1278 = vmatpush1.bf16.msra.mxu0 0
      %1279 = vmatprep.mubr.bf16.mxu0 0
      %1280 = vmatmul.mubr.bf16.gmra.mrb[0].mxu0 %v1245
      %v1281 = vpop.f32.mrb[0].mxu0
      %v1282 = vadd.f32 0.0, %v1281
      %v1283 = vpop.f32.mrb[0].mxu0
      %v1284 = vpop.f32.mrb[0].mxu0
      %v1285 = vpop.f32.mrb[0].mxu0
      %1286 = vdwg.mxu0
      %v1287 = vadd.f32 %v1209, %v1282
      %s1288 = scalar_lea.vmem %s4, 352
      %v1289 = vld [vmem:[%s1288] sm:$0xf]
      %v1290 = vld [vmem:[%s1288 + $0x4] sm:$0xf]
      %v1291 = vld [vmem:[%s1288 + $0x8] sm:$0xf]
      %v1292 = vld [vmem:[%s1288 + $0xc] sm:$0xf]
      %v1293 = vld [vmem:[%s1288 + $0x10] sm:$0xf]
      %v1294 = vld [vmem:[%s1288 + $0x14] sm:$0xf]
      %v1295 = vld [vmem:[%s1288 + $0x18] sm:$0xf]
      %v1296 = vld [vmem:[%s1288 + $0x1c] sm:$0xf]
      %v1297 = vrot.slane %v1136, 1
      %v1298 = vrot.slane %v1138, 2
      %v1299 = vor.u32 %v1297, %v1298
      %v1308 = vunpack.c.l.b16 %v1289
      %v1309 = vunpack.c.l.b16 %v1290
      %v1310 = vunpack.c.l.b16 %v1291
      %v1311 = vunpack.c.l.b16 %v1292
      %v1312 = vunpack.c.l.b16 %v1293
      %v1313 = vunpack.c.l.b16 %v1294
      %v1314 = vunpack.c.l.b16 %v1295
      %v1315 = vunpack.c.l.b16 %v1296
      %v1316 = vpack.c.b16 %v1309, %v1308
      %v1317 = vpack.c.b16 %v1311, %v1310
      %v1318 = vpack.c.b16 %v1313, %v1312
      %v1319 = vpack.c.b16 %v1315, %v1314
      %v1325 = vsel %vm455, %v1299, 0
      %1327 = vmatprep.subr.bf16.mxu0 0
      %1328 = vmatpush1.bf16.msra.mxu0 %v1316
      %1329 = vmatprep.subr.bf16.mxu0 0
      %1330 = vmatpush1.bf16.msra.mxu0 %v1317
      %1331 = vmatprep.subr.bf16.mxu0 0
      %1332 = vmatpush1.bf16.msra.mxu0 %v1318
      %1333 = vmatprep.subr.bf16.mxu0 0
      %1334 = vmatpush1.bf16.msra.mxu0 %v1319
      %1335 = vmatprep.subr.bf16.mxu0 0
      %1336 = vmatpush1.bf16.msra.mxu0 0
      %1337 = vmatprep.subr.bf16.mxu0 0
      %1338 = vmatpush1.bf16.msra.mxu0 0
      %1339 = vmatprep.subr.bf16.mxu0 0
      %1340 = vmatpush1.bf16.msra.mxu0 0
      %1341 = vmatprep.subr.bf16.mxu0 0
      %1342 = vmatpush1.bf16.msra.mxu0 0
      %1343 = vmatprep.subr.bf16.mxu0 0
      %1344 = vmatpush1.bf16.msra.mxu0 0
      %1345 = vmatprep.subr.bf16.mxu0 0
      %1346 = vmatpush1.bf16.msra.mxu0 0
      %1347 = vmatprep.subr.bf16.mxu0 0
      %1348 = vmatpush1.bf16.msra.mxu0 0
      %1349 = vmatprep.subr.bf16.mxu0 0
      %1350 = vmatpush1.bf16.msra.mxu0 0
      %1351 = vmatprep.subr.bf16.mxu0 0
      %1352 = vmatpush1.bf16.msra.mxu0 0
      %1353 = vmatprep.subr.bf16.mxu0 0
      %1354 = vmatpush1.bf16.msra.mxu0 0
      %1355 = vmatprep.subr.bf16.mxu0 0
      %1356 = vmatpush1.bf16.msra.mxu0 0
      %1357 = vmatprep.subr.bf16.mxu0 0
      %1358 = vmatpush1.bf16.msra.mxu0 0
      %1359 = vmatprep.mubr.bf16.mxu0 0
      %1360 = vmatmul.mubr.bf16.gmra.mrb[0].mxu0 %v1325
      %v1361 = vpop.f32.mrb[0].mxu0
      %v1362 = vadd.f32 0.0, %v1361
      %v1363 = vpop.f32.mrb[0].mxu0
      %v1364 = vpop.f32.mrb[0].mxu0
      %v1365 = vpop.f32.mrb[0].mxu0
      %1366 = vdwg.mxu0
      %v1367 = vadd.f32 %v1287, %v1362
      %s1368 = scalar_lea.vmem %s4, 384
      %v1369 = vld [vmem:[%s1368] sm:$0xf]
      %v1370 = vld [vmem:[%s1368 + $0x4] sm:$0xf]
      %v1371 = vld [vmem:[%s1368 + $0x8] sm:$0xf]
      %v1372 = vld [vmem:[%s1368 + $0xc] sm:$0xf]
      %v1373 = vld [vmem:[%s1368 + $0x10] sm:$0xf]
      %v1374 = vld [vmem:[%s1368 + $0x14] sm:$0xf]
      %v1375 = vld [vmem:[%s1368 + $0x18] sm:$0xf]
      %v1376 = vld [vmem:[%s1368 + $0x1c] sm:$0xf]
      %v1385 = vunpack.c.l.b16 %v1369
      %v1386 = vunpack.c.l.b16 %v1370
      %v1387 = vunpack.c.l.b16 %v1371
      %v1388 = vunpack.c.l.b16 %v1372
      %v1389 = vunpack.c.l.b16 %v1373
      %v1390 = vunpack.c.l.b16 %v1374
      %v1391 = vunpack.c.l.b16 %v1375
      %v1392 = vunpack.c.l.b16 %v1376
      %v1393 = vpack.c.b16 %v1386, %v1385
      %v1394 = vpack.c.b16 %v1388, %v1387
      %v1395 = vpack.c.b16 %v1390, %v1389
      %v1396 = vpack.c.b16 %v1392, %v1391
      %v1402 = vsel %vm455, %v403, 0
      %1404 = vmatprep.subr.bf16.mxu0 0
      %1405 = vmatpush1.bf16.msra.mxu0 %v1393
      %1406 = vmatprep.subr.bf16.mxu0 0
      %1407 = vmatpush1.bf16.msra.mxu0 %v1394
      %1408 = vmatprep.subr.bf16.mxu0 0
      %1409 = vmatpush1.bf16.msra.mxu0 %v1395
      %1410 = vmatprep.subr.bf16.mxu0 0
      %1411 = vmatpush1.bf16.msra.mxu0 %v1396
      %1412 = vmatprep.subr.bf16.mxu0 0
      %1413 = vmatpush1.bf16.msra.mxu0 0
      %1414 = vmatprep.subr.bf16.mxu0 0
      %1415 = vmatpush1.bf16.msra.mxu0 0
      %1416 = vmatprep.subr.bf16.mxu0 0
      %1417 = vmatpush1.bf16.msra.mxu0 0
      %1418 = vmatprep.subr.bf16.mxu0 0
      %1419 = vmatpush1.bf16.msra.mxu0 0
      %1420 = vmatprep.subr.bf16.mxu0 0
      %1421 = vmatpush1.bf16.msra.mxu0 0
      %1422 = vmatprep.subr.bf16.mxu0 0
      %1423 = vmatpush1.bf16.msra.mxu0 0
      %1424 = vmatprep.subr.bf16.mxu0 0
      %1425 = vmatpush1.bf16.msra.mxu0 0
      %1426 = vmatprep.subr.bf16.mxu0 0
      %1427 = vmatpush1.bf16.msra.mxu0 0
      %1428 = vmatprep.subr.bf16.mxu0 0
      %1429 = vmatpush1.bf16.msra.mxu0 0
      %1430 = vmatprep.subr.bf16.mxu0 0
      %1431 = vmatpush1.bf16.msra.mxu0 0
      %1432 = vmatprep.subr.bf16.mxu0 0
      %1433 = vmatpush1.bf16.msra.mxu0 0
      %1434 = vmatprep.subr.bf16.mxu0 0
      %1435 = vmatpush1.bf16.msra.mxu0 0
      %1436 = vmatprep.mubr.bf16.mxu0 0
      %1437 = vmatmul.mubr.bf16.gmra.mrb[0].mxu0 %v1402
      %v1438 = vpop.f32.mrb[0].mxu0
      %v1439 = vadd.f32 0.0, %v1438
      %v1440 = vpop.f32.mrb[0].mxu0
      %v1441 = vpop.f32.mrb[0].mxu0
      %v1442 = vpop.f32.mrb[0].mxu0
      %1443 = vdwg.mxu0
      %v1444 = vadd.f32 %v1367, %v1439
      %s1445 = scalar_lea.vmem %s4, 416
      %v1446 = vld [vmem:[%s1445] sm:$0xf]
      %v1447 = vld [vmem:[%s1445 + $0x4] sm:$0xf]
      %v1448 = vld [vmem:[%s1445 + $0x8] sm:$0xf]
      %v1449 = vld [vmem:[%s1445 + $0xc] sm:$0xf]
      %v1450 = vld [vmem:[%s1445 + $0x10] sm:$0xf]
      %v1451 = vld [vmem:[%s1445 + $0x14] sm:$0xf]
      %v1452 = vld [vmem:[%s1445 + $0x18] sm:$0xf]
      %v1453 = vld [vmem:[%s1445 + $0x1c] sm:$0xf]
      %v1455 = vunpack.c.l.b16 %v403
      %v1456 = vpack.c.b16 %v1455, %v1455
      %v1458 = vshrl.u32 %v1456, 16
      %v1460 = vshll.u32 %v1456, 16
      %v1462 = vrot.slane %v1460, 1
      %v1463 = vor.u32 %v1458, %v1462
      %v1472 = vunpack.c.l.b16 %v1446
      %v1473 = vunpack.c.l.b16 %v1447
      %v1474 = vunpack.c.l.b16 %v1448
      %v1475 = vunpack.c.l.b16 %v1449
      %v1476 = vunpack.c.l.b16 %v1450
      %v1477 = vunpack.c.l.b16 %v1451
      %v1478 = vunpack.c.l.b16 %v1452
      %v1479 = vunpack.c.l.b16 %v1453
      %v1480 = vpack.c.b16 %v1473, %v1472
      %v1481 = vpack.c.b16 %v1475, %v1474
      %v1482 = vpack.c.b16 %v1477, %v1476
      %v1483 = vpack.c.b16 %v1479, %v1478
      %v1489 = vsel %vm455, %v1463, 0
      %1491 = vmatprep.subr.bf16.mxu0 0
      %1492 = vmatpush1.bf16.msra.mxu0 %v1480
      %1493 = vmatprep.subr.bf16.mxu0 0
      %1494 = vmatpush1.bf16.msra.mxu0 %v1481
      %1495 = vmatprep.subr.bf16.mxu0 0
      %1496 = vmatpush1.bf16.msra.mxu0 %v1482
      %1497 = vmatprep.subr.bf16.mxu0 0
      %1498 = vmatpush1.bf16.msra.mxu0 %v1483
      %1499 = vmatprep.subr.bf16.mxu0 0
      %1500 = vmatpush1.bf16.msra.mxu0 0
      %1501 = vmatprep.subr.bf16.mxu0 0
      %1502 = vmatpush1.bf16.msra.mxu0 0
      %1503 = vmatprep.subr.bf16.mxu0 0
      %1504 = vmatpush1.bf16.msra.mxu0 0
      %1505 = vmatprep.subr.bf16.mxu0 0
      %1506 = vmatpush1.bf16.msra.mxu0 0
      %1507 = vmatprep.subr.bf16.mxu0 0
      %1508 = vmatpush1.bf16.msra.mxu0 0
      %1509 = vmatprep.subr.bf16.mxu0 0
      %1510 = vmatpush1.bf16.msra.mxu0 0
      %1511 = vmatprep.subr.bf16.mxu0 0
      %1512 = vmatpush1.bf16.msra.mxu0 0
      %1513 = vmatprep.subr.bf16.mxu0 0
      %1514 = vmatpush1.bf16.msra.mxu0 0
      %1515 = vmatprep.subr.bf16.mxu0 0
      %1516 = vmatpush1.bf16.msra.mxu0 0
      %1517 = vmatprep.subr.bf16.mxu0 0
      %1518 = vmatpush1.bf16.msra.mxu0 0
      %1519 = vmatprep.subr.bf16.mxu0 0
      %1520 = vmatpush1.bf16.msra.mxu0 0
      %1521 = vmatprep.subr.bf16.mxu0 0
      %1522 = vmatpush1.bf16.msra.mxu0 0
      %1523 = vmatprep.mubr.bf16.mxu0 0
      %1524 = vmatmul.mubr.bf16.gmra.mrb[0].mxu0 %v1489
      %v1525 = vpop.f32.mrb[0].mxu0
      %v1526 = vadd.f32 0.0, %v1525
      %v1527 = vpop.f32.mrb[0].mxu0
      %v1528 = vpop.f32.mrb[0].mxu0
      %v1529 = vpop.f32.mrb[0].mxu0
      %1530 = vdwg.mxu0
      %v1531 = vadd.f32 %v1444, %v1526
      %s1532 = scalar_lea.vmem %s4, 448
      %v1533 = vld [vmem:[%s1532] sm:$0xf]
      %v1534 = vld [vmem:[%s1532 + $0x4] sm:$0xf]
      %v1535 = vld [vmem:[%s1532 + $0x8] sm:$0xf]
      %v1536 = vld [vmem:[%s1532 + $0xc] sm:$0xf]
      %v1537 = vld [vmem:[%s1532 + $0x10] sm:$0xf]
      %v1538 = vld [vmem:[%s1532 + $0x14] sm:$0xf]
      %v1539 = vld [vmem:[%s1532 + $0x18] sm:$0xf]
      %v1540 = vld [vmem:[%s1532 + $0x1c] sm:$0xf]
      %v1541 = vrot.slane %v1456, 1
      %v1550 = vunpack.c.l.b16 %v1533
      %v1551 = vunpack.c.l.b16 %v1534
      %v1552 = vunpack.c.l.b16 %v1535
      %v1553 = vunpack.c.l.b16 %v1536
      %v1554 = vunpack.c.l.b16 %v1537
      %v1555 = vunpack.c.l.b16 %v1538
      %v1556 = vunpack.c.l.b16 %v1539
      %v1557 = vunpack.c.l.b16 %v1540
      %v1558 = vpack.c.b16 %v1551, %v1550
      %v1559 = vpack.c.b16 %v1553, %v1552
      %v1560 = vpack.c.b16 %v1555, %v1554
      %v1561 = vpack.c.b16 %v1557, %v1556
      %v1567 = vsel %vm455, %v1541, 0
      %1569 = vmatprep.subr.bf16.mxu0 0
      %1570 = vmatpush1.bf16.msra.mxu0 %v1558
      %1571 = vmatprep.subr.bf16.mxu0 0
      %1572 = vmatpush1.bf16.msra.mxu0 %v1559
      %1573 = vmatprep.subr.bf16.mxu0 0
      %1574 = vmatpush1.bf16.msra.mxu0 %v1560
      %1575 = vmatprep.subr.bf16.mxu0 0
      %1576 = vmatpush1.bf16.msra.mxu0 %v1561
      %1577 = vmatprep.subr.bf16.mxu0 0
      %1578 = vmatpush1.bf16.msra.mxu0 0
      %1579 = vmatprep.subr.bf16.mxu0 0
      %1580 = vmatpush1.bf16.msra.mxu0 0
      %1581 = vmatprep.subr.bf16.mxu0 0
      %1582 = vmatpush1.bf16.msra.mxu0 0
      %1583 = vmatprep.subr.bf16.mxu0 0
      %1584 = vmatpush1.bf16.msra.mxu0 0
      %1585 = vmatprep.subr.bf16.mxu0 0
      %1586 = vmatpush1.bf16.msra.mxu0 0
      %1587 = vmatprep.subr.bf16.mxu0 0
      %1588 = vmatpush1.bf16.msra.mxu0 0
      %1589 = vmatprep.subr.bf16.mxu0 0
      %1590 = vmatpush1.bf16.msra.mxu0 0
      %1591 = vmatprep.subr.bf16.mxu0 0
      %1592 = vmatpush1.bf16.msra.mxu0 0
      %1593 = vmatprep.subr.bf16.mxu0 0
      %1594 = vmatpush1.bf16.msra.mxu0 0
      %1595 = vmatprep.subr.bf16.mxu0 0
      %1596 = vmatpush1.bf16.msra.mxu0 0
      %1597 = vmatprep.subr.bf16.mxu0 0
      %1598 = vmatpush1.bf16.msra.mxu0 0
      %1599 = vmatprep.subr.bf16.mxu0 0
      %1600 = vmatpush1.bf16.msra.mxu0 0
      %1601 = vmatprep.mubr.bf16.mxu0 0
      %1602 = vmatmul.mubr.bf16.gmra.mrb[0].mxu0 %v1567
      %v1603 = vpop.f32.mrb[0].mxu0
      %v1604 = vadd.f32 0.0, %v1603
      %v1605 = vpop.f32.mrb[0].mxu0
      %v1606 = vpop.f32.mrb[0].mxu0
      %v1607 = vpop.f32.mrb[0].mxu0
      %1608 = vdwg.mxu0
      %v1609 = vadd.f32 %v1531, %v1604
      %s1610 = scalar_lea.vmem %s4, 480
      %v1611 = vld [vmem:[%s1610] sm:$0xf]
      %v1612 = vld [vmem:[%s1610 + $0x4] sm:$0xf]
      %v1613 = vld [vmem:[%s1610 + $0x8] sm:$0xf]
      %v1614 = vld [vmem:[%s1610 + $0xc] sm:$0xf]
      %v1615 = vld [vmem:[%s1610 + $0x10] sm:$0xf]
      %v1616 = vld [vmem:[%s1610 + $0x14] sm:$0xf]
      %v1617 = vld [vmem:[%s1610 + $0x18] sm:$0xf]
      %v1618 = vld [vmem:[%s1610 + $0x1c] sm:$0xf]
      %v1619 = vrot.slane %v1458, 1
      %v1620 = vrot.slane %v1460, 2
      %v1621 = vor.u32 %v1619, %v1620
      %v1630 = vunpack.c.l.b16 %v1611
      %v1631 = vunpack.c.l.b16 %v1612
      %v1632 = vunpack.c.l.b16 %v1613
      %v1633 = vunpack.c.l.b16 %v1614
      %v1634 = vunpack.c.l.b16 %v1615
      %v1635 = vunpack.c.l.b16 %v1616
      %v1636 = vunpack.c.l.b16 %v1617
      %v1637 = vunpack.c.l.b16 %v1618
      %v1638 = vpack.c.b16 %v1631, %v1630
      %v1639 = vpack.c.b16 %v1633, %v1632
      %v1640 = vpack.c.b16 %v1635, %v1634
      %v1641 = vpack.c.b16 %v1637, %v1636
      %v1647 = vsel %vm455, %v1621, 0
      %1649 = vmatprep.subr.bf16.mxu0 0
      %1650 = vmatpush1.bf16.msra.mxu0 %v1638
      %1651 = vmatprep.subr.bf16.mxu0 0
      %1652 = vmatpush1.bf16.msra.mxu0 %v1639
      %1653 = vmatprep.subr.bf16.mxu0 0
      %1654 = vmatpush1.bf16.msra.mxu0 %v1640
      %1655 = vmatprep.subr.bf16.mxu0 0
      %1656 = vmatpush1.bf16.msra.mxu0 %v1641
      %1657 = vmatprep.subr.bf16.mxu0 0
      %1658 = vmatpush1.bf16.msra.mxu0 0
      %1659 = vmatprep.subr.bf16.mxu0 0
      %1660 = vmatpush1.bf16.msra.mxu0 0
      %1661 = vmatprep.subr.bf16.mxu0 0
      %1662 = vmatpush1.bf16.msra.mxu0 0
      %1663 = vmatprep.subr.bf16.mxu0 0
      %1664 = vmatpush1.bf16.msra.mxu0 0
      %1665 = vmatprep.subr.bf16.mxu0 0
      %1666 = vmatpush1.bf16.msra.mxu0 0
      %1667 = vmatprep.subr.bf16.mxu0 0
      %1668 = vmatpush1.bf16.msra.mxu0 0
      %1669 = vmatprep.subr.bf16.mxu0 0
      %1670 = vmatpush1.bf16.msra.mxu0 0
      %1671 = vmatprep.subr.bf16.mxu0 0
      %1672 = vmatpush1.bf16.msra.mxu0 0
      %1673 = vmatprep.subr.bf16.mxu0 0
      %1674 = vmatpush1.bf16.msra.mxu0 0
      %1675 = vmatprep.subr.bf16.mxu0 0
      %1676 = vmatpush1.bf16.msra.mxu0 0
      %1677 = vmatprep.subr.bf16.mxu0 0
      %1678 = vmatpush1.bf16.msra.mxu0 0
      %1679 = vmatprep.subr.bf16.mxu0 0
      %1680 = vmatpush1.bf16.msra.mxu0 0
      %1681 = vmatprep.mubr.bf16.mxu0 0
      %1682 = vmatmul.mubr.bf16.gmra.mrb[0].mxu0 %v1647
      %v1683 = vpop.f32.mrb[0].mxu0
      %v1684 = vadd.f32 0.0, %v1683
      %v1685 = vpop.f32.mrb[0].mxu0
      %v1686 = vpop.f32.mrb[0].mxu0
      %v1687 = vpop.f32.mrb[0].mxu0
      %1688 = vdwg.mxu0
      %v1689 = vadd.f32 %v1609, %v1684
      %v1690 = vld [vmem:[#allocation2] sm:$0x1]
      %v1692 = vlaneseq
      %v1693 = vshrl.u32 %v1692, 7
      %v1694 = vsub.s32 0, %v1693
      %v1695 = vrot.slane %v1690, %v1694
      %v1697 = vadd.f32 %v1689, %v1695
      %vm1698 = vcmask 1024
      %1699 = vst.msk [vmem:[%s398] sm:$0x3] %vm1698, %v1697
      %p1700 = scmp.lt.s32.totalorder %s23, 1
      %s1701 = scalar_select %p1700, %s23, 1
      %p1702 = scmp.lt.s32.totalorder %s24, 1
      %s1703 = scalar_select %p1702, %s24, 1
      %s1704 = smul.addr %s1701, 2
      %s1705 = sadd.s32 %s1703, %s1704
      %s1706 = smul.addr %s1705, 2
      %s1707 = scalar_lea.vmem %s6, %s1706
      // Predicated region
      $region45: #{_lambda_.15} parent=43 // pred_check
        %p1708 = pneg %p211
      $region46: #{_lambda_.15} parent=43 // pred_check_branch
        %1710 = sbr.rel (%p1708) target = $region48
      $region47: #{_lambda_.15} parent=43 // pred_region
        _
      $region48: #{_lambda_.15} parent=43 // pred_fallthru
        _
    $region44: #{_lambda_.15} parent=5 // pred_fallthru
      _
    %p1711 = scmp.le.s32.totalorder 2, %s14
    // Predicated region
    $region49: #{_lambda_.15} parent=5 // pred_check
      %p1712 = pneg %p1711
    $region50: #{_lambda_.15} parent=5 // pred_check_branch
      %1714 = sbr.rel (%p1712) target = $region52
    $region51: #{_lambda_.15} parent=5 // pred_region
      %s1715 = ssub.s32 %s14, 2
      // Predicated region
      $region53: #{_lambda_.15} parent=51 // pred_check
        %p1716 = pneg %p217
      $region54: #{_lambda_.15} parent=51 // pred_check_branch
        %1718 = sbr.rel (%p1716) target = $region56
      $region55: #{_lambda_.15} parent=51 // pred_region
        %p1719 = scmp.lt.s32.totalorder %s25, 1
        %s1720 = scalar_select %p1719, %s25, 1
        %p1721 = scmp.lt.s32.totalorder %s26, 1
        %s1722 = scalar_select %p1721, %s26, 1
        %s1723 = smul.addr %s1720, 2
        %s1724 = sadd.s32 %s1722, %s1723
        %s1725 = smul.addr %s1724, 2
        %s1726 = scalar_lea.vmem %s6, %s1725
      $region56: #{_lambda_.15} parent=51 // pred_fallthru
        _
    $region52: #{_lambda_.15} parent=5 // pred_fallthru
      _
  $region6: #{_lambda_.15} parent=0 // loop_footer
    %s18 = sadd.s32 1, %s14
  $region7: #{_lambda_.15} parent=0 // loop_footer_branch
    %13 = sbr.rel target = $region3
  $region8: #{_lambda_.15} parent=0 // loop_exit
    _

</llo_original>
